<compile_context>
chip_gen: v7x
topology: tpu7x:2x2x1
jax: 0.10.0
libtpu: 0.0.40
codegen_flags: <defaults>
</compile_context>

<pallas_src>
from collections import namedtuple

import jax
import jax.numpy as jnp
from jax.experimental import pallas as pl
from jax.experimental.pallas import tpu as pltpu


MixtureParams = namedtuple("MixtureParams", ["log_weights", "means", "variance_scalar"])

# Finite "minus infinity" for padded mixture components.  Keeping it finite
# (instead of -inf) guarantees tile_max / m_new stay finite on every component
# tile, so the online-LSE rescale exp(m_old - m_new) can never hit
# (-inf) - (-inf) = NaN, while exp(-1e30 - m) still underflows to exactly 0.
_NEG_BIG = -1e30


# ---------------------------------------------------------------------------
# Fused mixture-of-Gaussians log-prob kernel (online logsumexp over components)
# ---------------------------------------------------------------------------
def _gmm_logprob_kernel(x_ref, zt_ref, b_ref, logweff_ref, qj_ref, scal_ref,
                        lq_ref, lqj_ref, m_sc, l_sc):
    ii = pl.program_id(1)                       # component-tile index (reduction)

    x = x_ref[...]                              # (T, Sb, D)
    T, Sb, D = x.shape
    Ib = zt_ref.shape[1]

    # Cross term as ONE 2-D MXU matmul (M = T*Sb amortizes the RHS push across
    # trajectories; z is t-independent after the x.mu decomposition).  The z
    # tile already carries the (-2 * nhiv * mean_scalar) scalar factor.
    cross = jnp.dot(x.reshape(T * Sb, D), zt_ref[...],
                    preferred_element_type=jnp.float32).reshape(T, Sb, Ib)

    # logw_eff = log_w + nhiv*||mu||^2 precomputed in the wrapper: only a bias
    # add + online logsumexp remains on the (T, Sb, Ib) tensor.
    logits = logweff_ref[...][:, None, :] + cross            # (T, Sb, Ib)

    @pl.when(ii == 0)
    def _init():
        m_sc[...] = jnp.full(m_sc.shape, -jnp.inf, jnp.float32)
        l_sc[...] = jnp.zeros(l_sc.shape, jnp.float32)

    tile_max = jnp.max(logits, axis=-1)                      # (T, Sb), finite
    m_old = m_sc[...]
    m_new = jnp.maximum(m_old, tile_max)                     # finite after tile 0
    alpha = jnp.exp(m_old - m_new)                           # 0 on tile 0, no NaN
    p_sum = jnp.sum(jnp.exp(logits - m_new[:, :, None]), axis=-1)
    l_sc[...] = alpha * l_sc[...] + p_sum
    m_sc[...] = m_new

    @pl.when(ii == pl.num_programs(1) - 1)
    def _finalize():
        two_c = scal_ref[0]                    # 2 * mean_scalar
        nhiv = scal_ref[1]                     # -0.5 / var
        lnc = scal_ref[2]                      # -0.5 * D * log(2*pi*var)
        b = b_ref[...]                         # (T, D)
        # i-invariant part of the exponent, hoisted out of the logsumexp:
        #   lnc + nhiv*(||x||^2 + 2*c*(x.b))   (done once per MC-sample tile)
        hoist = lnc + nhiv * jnp.sum(x * (x + two_c * b[:, None, :]), axis=-1)
        lq = m_sc[...] + jnp.log(l_sc[...]) + hoist
        lq_ref[...] = lq
        lqj_ref[...] = lq + qj_ref[...]        # (T, 1) broadcasts over Sb


# ---------------------------------------------------------------------------
# Tiling helpers
# ---------------------------------------------------------------------------
def _round_up(a, m):
    return ((a + m - 1) // m) * m


def _shrink128(b):
    return max(128, (b // 2) // 128 * 128)


def _pick_tiles(S, I, T, s_block, i_block):
    # Tiles are always multiples of 128 (lane-dense stores, full MXU N dim).
    s_blk = min(_round_up(s_block, 128), _round_up(S, 128))
    i_blk = min(_round_up(i_block, 128), _round_up(I, 128))
    # v7x has 2 TensorCores: give the "parallel" (MC-sample) grid axis >= 2
    # tiles when there is enough work; never below 128 lanes for the stores.
    if s_blk > 128 and (S + s_blk - 1) // s_blk < 2:
        s_blk = _shrink128(s_blk)
    # VMEM guard (v7x: 64 MiB physical / 32 MiB scoped default): keep the
    # (T, s_blk, i_blk) logits intermediate modest.
    budget = 12 * 1024 * 1024
    while T * s_blk * i_blk * 4 > budget and (s_blk > 128 or i_blk > 128):
        if i_blk >= s_blk and i_blk > 128:
            i_blk = _shrink128(i_blk)
        else:
            s_blk = _shrink128(s_blk)
    return s_blk, i_blk


# ---------------------------------------------------------------------------
# Wrapper: fused GMM log-prob
# ---------------------------------------------------------------------------
def gmm_mixture_log_prob(x, z, b_k, log_w, q_joint_history,
                         mean_scalar, variance_scalar, means=None,
                         *, s_block=256, i_block=256):
    """log_q[s,t], log_q_joint[s,t] of MC samples x under the GMM posterior.

    x: (S, T, D), z: (I, D), b_k: (T, D), log_w: (T, I), q_joint_history: (T,)
    """
    S, T, D = x.shape
    I = z.shape[0]
    f32 = jnp.float32

    mean_scalar = jnp.asarray(mean_scalar, f32)
    var = jnp.asarray(variance_scalar, f32)
    nhiv = -0.5 / var
    lnc = -0.5 * D * jnp.log(2.0 * jnp.pi * var)

    z = jnp.asarray(z, f32)
    b_k = jnp.asarray(b_k, f32)
    log_w = jnp.asarray(log_w, f32)

    # ||mu||^2 folded into the mixing weights once in the wrapper (means is
    # already materialized in forward() for dist_params, so no extra HBM cost);
    # removes all per-tile mu recomputation from the kernel.
    if means is None:
        means = (z[None, :, :] - b_k[:, None, :]) * mean_scalar
    mu_sq = jnp.sum(jnp.asarray(means, f32) ** 2, axis=-1)            # (T, I)
    logw_eff = log_w + nhiv * mu_sq                                    # (T, I)

    # Scale z once by (-2*nhiv*mean_scalar) and pre-transpose to (D, I): the
    # kernel then does a single (T*Sb, D) @ (D, Ib) matmul with no in-kernel
    # transpose and no full-size scalar multiply on the (T, Sb, Ib) tensor.
    z_scaled_t = (z * (-2.0 * nhiv * mean_scalar)).T                   # (D, I)

    s_blk, i_blk = _pick_tiles(S, I, T, s_block, i_block)
    S_pad = _round_up(S, s_blk)
    I_pad = _round_up(I, i_blk)

    # Lane-dense layout: trajectories on sublanes, MC samples on lanes.
    x_t = jnp.transpose(jnp.asarray(x, f32), (1, 0, 2))                # (T, S, D)
    x_t = jnp.pad(x_t, ((0, 0), (0, S_pad - S), (0, 0)))
    zt_p = jnp.pad(z_scaled_t, ((0, 0), (0, I_pad - I)))               # zero cols
    logweff_p = jnp.pad(logw_eff, ((0, 0), (0, I_pad - I)),
                        constant_values=_NEG_BIG)
    qj = jnp.reshape(jnp.asarray(q_joint_history, f32), (T, 1))
    scalars = jnp.stack([2.0 * mean_scalar, nhiv, lnc])                # -> SMEM

    grid = (S_pad // s_blk, I_pad // i_blk)

    lq_t, lqj_t = pl.pallas_call(
        _gmm_logprob_kernel,
        out_shape=(jax.ShapeDtypeStruct((T, S_pad), f32),
                   jax.ShapeDtypeStruct((T, S_pad), f32)),
        grid=grid,
        in_specs=[
            pl.BlockSpec((T, s_blk, D), lambda si, ii: (0, si, 0)),    # MC samples
            pl.BlockSpec((D, i_blk), lambda si, ii: (0, ii)),          # scaled z^T
            pl.BlockSpec((T, D), lambda si, ii: (0, 0)),               # b_k
            pl.BlockSpec((T, i_blk), lambda si, ii: (0, ii)),          # logw_eff
            pl.BlockSpec((T, 1), lambda si, ii: (0, 0)),               # q_joint_hist
            pl.BlockSpec(memory_space=pltpu.MemorySpace.SMEM),         # scalars
        ],
        out_specs=(
            pl.BlockSpec((T, s_blk), lambda si, ii: (0, si)),          # lane-dense
            pl.BlockSpec((T, s_blk), lambda si, ii: (0, si)),
        ),
        scratch_shapes=[pltpu.VMEM((T, s_blk), f32),    # running max
                        pltpu.VMEM((T, s_blk), f32)],   # running sum
        compiler_params=pltpu.CompilerParams(
            dimension_semantics=("parallel", "arbitrary"),
            vmem_limit_bytes=32 * 1024 * 1024),
    )(x_t, zt_p, b_k, logweff_p, qj, scalars)

    log_q = jnp.transpose(lq_t, (1, 0))[:S]
    log_q_joint = jnp.transpose(lqj_t, (1, 0))[:S]
    return log_q, log_q_joint


# ---------------------------------------------------------------------------
# Module-level forward (glue + fused kernel)
# ---------------------------------------------------------------------------
class GMMPosteriorDist:
    def __init__(self, empirical_samples):
        # empirical_samples plays the role of target.sample((n_samples_from_target,))
        self.empirical_samples = jnp.asarray(empirical_samples, jnp.float32)
        self.n_samples_from_target = self.empirical_samples.shape[0]
        self.dim = self.empirical_samples.shape[-1]

    def forward(self, sigmas, aux_trajectories, index, aux_component_hist,
                q_joint_history, rng_key, n_mc_samples=100):
        sigmas = jnp.asarray(sigmas, jnp.float32)
        n_traj = aux_trajectories.shape[0]

        # --- q_ak_given_history (distribution parameters) --------------------
        # mixing weights: softmax over empirical-sample axis (log_prob=True path)
        log_w = jax.nn.log_softmax(jnp.asarray(aux_component_hist, jnp.float32), axis=1)

        # scalar Gaussian params (index is a static python int)
        s_k_minus_one = jnp.sum(sigmas[index:])
        s_k = jnp.sum(sigmas[index + 1:])
        mean_scalar = sigmas[index] / s_k_minus_one
        variance_scalar = sigmas[index] * s_k / s_k_minus_one

        # b_k = sum over auxiliary-history axis
        b_k = jnp.sum(jnp.asarray(aux_trajectories, jnp.float32), axis=1)  # (T, D)

        # Component means (T, I, D): trivial broadcast in plain JAX; needed for
        # sampling / dist_params, and reused by the wrapper to build logw_eff.
        means = (self.empirical_samples[None, :, :] - b_k[:, None, :]) * mean_scalar

        dist_params = MixtureParams(log_w, means, variance_scalar)

        # --- sampling ---------------------------------------------------------
        # TODO(synk): jax.random stands in for torch.distributions RNG
        # (same semantics, not bit-identical bits).
        k_cat, k_norm = jax.random.split(rng_key)
        comp = jax.random.categorical(
            k_cat, log_w[None, :, :], axis=-1, shape=(n_mc_samples, n_traj))
        mu_sel = means[jnp.arange(n_traj)[None, :], comp]                  # (S, T, D)
        eps = jax.random.normal(k_norm, (n_mc_samples, n_traj, self.dim), jnp.float32)
        samples = mu_sel + jnp.sqrt(variance_scalar) * eps

        # --- fused mixture log-prob (Pallas) ------------------------------------
        log_q, log_q_joint = gmm_mixture_log_prob(
            samples, self.empirical_samples, b_k, log_w,
            jnp.asarray(q_joint_history, jnp.float32),
            mean_scalar, variance_scalar, means=means)

        return samples, log_q, log_q_joint, dist_params


# ---------------------------------------------------------------------------
# Pure-JAX reference for correctness check
# ---------------------------------------------------------------------------
def _ref_log_prob(x, means, log_w, var):
    dim = x.shape[-1]
    diff = x[:, :, None, :] - means[None, :, :, :]
    sq = jnp.sum(diff * diff, axis=-1)
    log_gauss = -0.5 * dim * jnp.log(2.0 * jnp.pi * var) - 0.5 * sq / var
    return jax.scipy.special.logsumexp(log_w[None, :, :] + log_gauss, axis=-1)


if __name__ == "__main__":
    key = jax.random.PRNGKey(0)
    k_emp, k_sig, k_aux, k_hist, k_qj, k_fwd = jax.random.split(key, 6)

    # Small but grid-exercising shapes: 2 MC-sample tiles x 1 component tile.
    n_emp, dim = 256, 8
    n_traj, n_aux = 8, 4
    n_sigmas, index = 5, 2
    n_mc_samples = 256

    empirical_samples = jax.random.normal(k_emp, (n_emp, dim), jnp.float32)
    sigmas = jax.random.uniform(k_sig, (n_sigmas,), jnp.float32, 0.1, 1.0)
    aux_trajectories = 0.1 * jax.random.normal(k_aux, (n_traj, n_aux, dim), jnp.float32)
    aux_component_hist = jax.random.normal(k_hist, (n_traj, n_emp), jnp.float32)
    q_joint_history = jax.random.normal(k_qj, (n_traj,), jnp.float32)

    module = GMMPosteriorDist(empirical_samples)
    samples, log_q, log_q_joint, dist_params = module.forward(
        sigmas, aux_trajectories, index, aux_component_hist, q_joint_history,
        rng_key=k_fwd, n_mc_samples=n_mc_samples)
    jax.block_until_ready((samples, log_q, log_q_joint))

    ref_lq = _ref_log_prob(samples, dist_params.means, dist_params.log_weights,
                           dist_params.variance_scalar)
    ref_lqj = ref_lq + q_joint_history[None, :]

    assert samples.shape == (n_mc_samples, n_traj, dim)
    assert log_q.shape == (n_mc_samples, n_traj)
    assert log_q_joint.shape == (n_mc_samples, n_traj)
    assert bool(jnp.all(jnp.isfinite(log_q))), "non-finite log_q"
    assert jnp.allclose(log_q, ref_lq, atol=1e-3, rtol=1e-3), "log_q mismatch"
    assert jnp.allclose(log_q_joint, ref_lqj, atol=1e-3, rtol=1e-3), "log_q_joint mismatch"

    # Second config: non-tile-aligned sizes exercise the padding paths
    # (S=37 -> sub-block MC tile, I=50 -> padded component tile).
    module2 = GMMPosteriorDist(empirical_samples[:50])
    samples2, log_q2, log_q_joint2, dp2 = module2.forward(
        sigmas, aux_trajectories, index, aux_component_hist[:, :50], q_joint_history,
        rng_key=jax.random.PRNGKey(1), n_mc_samples=37)
    jax.block_until_ready((samples2, log_q2, log_q_joint2))

    ref_lq2 = _ref_log_prob(samples2, dp2.means, dp2.log_weights, dp2.variance_scalar)
    assert bool(jnp.all(jnp.isfinite(log_q2))), "non-finite log_q (padded path)"
    assert jnp.allclose(log_q2, ref_lq2, atol=1e-3, rtol=1e-3), "padded log_q mismatch"
    assert jnp.allclose(log_q_joint2, ref_lq2 + q_joint_history[None, :],
                        atol=1e-3, rtol=1e-3), "padded log_q_joint mismatch"

    print("KERNEL_OK")
</pallas_src>

<mosaic_0001>
module attributes {stable_mosaic.version = 11 : i64} {
  func.func @_gmm_logprob_kernel(%arg0: i32, %arg1: i32, %arg2: memref<8x128x8xf32, #tpu.memory_space<vmem>>, %arg3: memref<8x256xf32, #tpu.memory_space<vmem>>, %arg4: memref<8x8xf32, #tpu.memory_space<vmem>>, %arg5: memref<8x256xf32, #tpu.memory_space<vmem>>, %arg6: memref<8x1xf32, #tpu.memory_space<vmem>>, %arg7: memref<3xf32, #tpu.memory_space<smem>>, %arg8: memref<8x128xf32, #tpu.memory_space<vmem>>, %arg9: memref<8x128xf32, #tpu.memory_space<vmem>>, %arg10: memref<8x128xf32, #tpu.memory_space<vmem>>, %arg11: memref<8x128xf32, #tpu.memory_space<vmem>>) attributes {dimension_semantics = [#tpu.dimension_semantics<parallel>, #tpu.dimension_semantics<arbitrary>], iteration_bounds = array<i64: 2, 1>, scalar_prefetch = 0 : i64, scratch_operands = 2 : i64, tpu.core_type = #tpu.core_type<tc>, window_params = [{transform_indices = @transform_0, window_bounds = array<i64: 8, 128, 8>}, {transform_indices = @transform_1, window_bounds = array<i64: 8, 256>}, {pipeline_mode = #tpu.pipeline_mode<synchronous>, transform_indices = @transform_2, window_bounds = array<i64: 8, 8>}, {transform_indices = @transform_3, window_bounds = array<i64: 8, 256>}, {pipeline_mode = #tpu.pipeline_mode<synchronous>, transform_indices = @transform_4, window_bounds = array<i64: 8, 1>}, {transform_indices = @transform_5, window_bounds = array<i64: 3>}, {transform_indices = @transform_6, window_bounds = array<i64: 8, 128>}, {transform_indices = @transform_7, window_bounds = array<i64: 8, 128>}]} {
    %c0 = arith.constant 0 : index
    %c0_0 = arith.constant 0 : index
    %c0_1 = arith.constant 0 : index
    %0 = vector.load %arg2[%c0, %c0_0, %c0_1] : memref<8x128x8xf32, #tpu.memory_space<vmem>>, vector<8x128x8xf32>
    %1 = vector.shape_cast %0 : vector<8x128x8xf32> to vector<1024x8xf32>
    %c0_2 = arith.constant 0 : index
    %c0_3 = arith.constant 0 : index
    %2 = vector.load %arg3[%c0_2, %c0_3] : memref<8x256xf32, #tpu.memory_space<vmem>>, vector<8x256xf32>
    %cst = arith.constant dense<0.000000e+00> : vector<1024x256xf32>
    %3 = tpu.matmul %1, %2, %cst {dimension_numbers = #tpu.dot_dimension_numbers<[1], [0], [0], [1], [0, 0, 1, 1], [], []>} : vector<1024x8xf32>, vector<8x256xf32>, vector<1024x256xf32> -> vector<1024x256xf32>
    %4 = vector.shape_cast %3 : vector<1024x256xf32> to vector<8x128x256xf32>
    %c0_4 = arith.constant 0 : index
    %c0_5 = arith.constant 0 : index
    %5 = vector.load %arg5[%c0_4, %c0_5] : memref<8x256xf32, #tpu.memory_space<vmem>>, vector<8x256xf32>
    %6 = vector.shape_cast %5 : vector<8x256xf32> to vector<8x1x256xf32>
    %7 = vector.broadcast %6 : vector<8x1x256xf32> to vector<8x128x256xf32>
    %8 = arith.addf %7, %4 : vector<8x128x256xf32>
    %c0_i32 = arith.constant 0 : i32
    %9 = arith.cmpi eq, %arg1, %c0_i32 : i32
    %10 = arith.extui %9 : i1 to i32
    %c0_i32_6 = arith.constant 0 : i32
    %11 = arith.cmpi ne, %10, %c0_i32_6 : i32
    scf.if %11 {
      %cst_19 = arith.constant 0xFF800000 : f32
      %30 = vector.broadcast %cst_19 : f32 to vector<8x128xf32>
      %c0_20 = arith.constant 0 : index
      %c0_21 = arith.constant 0 : index
      %31 = vector.load %arg10[%c0_20, %c0_21] : memref<8x128xf32, #tpu.memory_space<vmem>>, vector<8x128xf32>
      tpu.vector_store %arg10[%c0_20, %c0_21], %30 {strides = array<i32>} : memref<8x128xf32, #tpu.memory_space<vmem>>, vector<8x128xf32>,
      %cst_22 = arith.constant 0.000000e+00 : f32
      %32 = vector.broadcast %cst_22 : f32 to vector<8x128xf32>
      %c0_23 = arith.constant 0 : index
      %c0_24 = arith.constant 0 : index
      %33 = vector.load %arg11[%c0_23, %c0_24] : memref<8x128xf32, #tpu.memory_space<vmem>>, vector<8x128xf32>
      tpu.vector_store %arg11[%c0_23, %c0_24], %32 {strides = array<i32>} : memref<8x128xf32, #tpu.memory_space<vmem>>, vector<8x128xf32>,
    } else {
    }
    %cst_7 = arith.constant dense<0xFF800000> : vector<8x128xf32>
    %12 = vector.multi_reduction <maximumf>, %8, %cst_7 [2] : vector<8x128x256xf32> to vector<8x128xf32>
    %c0_8 = arith.constant 0 : index
    %c0_9 = arith.constant 0 : index
    %13 = vector.load %arg10[%c0_8, %c0_9] : memref<8x128xf32, #tpu.memory_space<vmem>>, vector<8x128xf32>
    %14 = arith.maximumf %13, %12 : vector<8x128xf32>
    %15 = arith.subf %13, %14 : vector<8x128xf32>
    %16 = math.exp %15 : vector<8x128xf32>
    %17 = vector.shape_cast %14 : vector<8x128xf32> to vector<8x128x1xf32>
    %18 = vector.broadcast %17 : vector<8x128x1xf32> to vector<8x128x256xf32>
    %19 = arith.subf %8, %18 : vector<8x128x256xf32>
    %20 = math.exp %19 : vector<8x128x256xf32>
    %cst_10 = arith.constant dense<0.000000e+00> : vector<8x128xf32>
    %21 = vector.multi_reduction <add>, %20, %cst_10 [2] : vector<8x128x256xf32> to vector<8x128xf32>
    %c0_11 = arith.constant 0 : index
    %c0_12 = arith.constant 0 : index
    %22 = vector.load %arg11[%c0_11, %c0_12] : memref<8x128xf32, #tpu.memory_space<vmem>>, vector<8x128xf32>
    %23 = arith.mulf %16, %22 : vector<8x128xf32>
    %24 = arith.addf %23, %21 : vector<8x128xf32>
    %c0_13 = arith.constant 0 : index
    %c0_14 = arith.constant 0 : index
    %25 = vector.load %arg11[%c0_13, %c0_14] : memref<8x128xf32, #tpu.memory_space<vmem>>, vector<8x128xf32>
    tpu.vector_store %arg11[%c0_13, %c0_14], %24 {strides = array<i32>} : memref<8x128xf32, #tpu.memory_space<vmem>>, vector<8x128xf32>,
    %c0_15 = arith.constant 0 : index
    %c0_16 = arith.constant 0 : index
    %26 = vector.load %arg10[%c0_15, %c0_16] : memref<8x128xf32, #tpu.memory_space<vmem>>, vector<8x128xf32>
    tpu.vector_store %arg10[%c0_15, %c0_16], %14 {strides = array<i32>} : memref<8x128xf32, #tpu.memory_space<vmem>>, vector<8x128xf32>,
    %c0_i32_17 = arith.constant 0 : i32
    %27 = arith.cmpi eq, %arg1, %c0_i32_17 : i32
    %28 = arith.extui %27 : i1 to i32
    %c0_i32_18 = arith.constant 0 : i32
    %29 = arith.cmpi ne, %28, %c0_i32_18 : i32
    scf.if %29 {
      %c0_19 = arith.constant 0 : index
      %30 = memref.load %arg7[%c0_19] : memref<3xf32, #tpu.memory_space<smem>>
      %c1 = arith.constant 1 : index
      %31 = memref.load %arg7[%c1] : memref<3xf32, #tpu.memory_space<smem>>
      %c2 = arith.constant 2 : index
      %32 = memref.load %arg7[%c2] : memref<3xf32, #tpu.memory_space<smem>>
      %c0_20 = arith.constant 0 : index
      %c0_21 = arith.constant 0 : index
      %33 = vector.load %arg4[%c0_20, %c0_21] : memref<8x8xf32, #tpu.memory_space<vmem>>, vector<8x8xf32>
      %34 = vector.shape_cast %33 : vector<8x8xf32> to vector<8x1x8xf32>
      %35 = vector.broadcast %30 : f32 to vector<8x1x8xf32>
      %36 = arith.mulf %35, %34 : vector<8x1x8xf32>
      %37 = vector.broadcast %36 : vector<8x1x8xf32> to vector<8x128x8xf32>
      %38 = arith.addf %0, %37 : vector<8x128x8xf32>
      %39 = arith.mulf %0, %38 : vector<8x128x8xf32>
      %cst_22 = arith.constant dense<0.000000e+00> : vector<8x128xf32>
      %40 = vector.multi_reduction <add>, %39, %cst_22 [2] : vector<8x128x8xf32> to vector<8x128xf32>
      %41 = vector.broadcast %31 : f32 to vector<8x128xf32>
      %42 = arith.mulf %41, %40 : vector<8x128xf32>
      %43 = vector.broadcast %32 : f32 to vector<8x128xf32>
      %44 = arith.addf %43, %42 : vector<8x128xf32>
      %c0_23 = arith.constant 0 : index
      %c0_24 = arith.constant 0 : index
      %45 = vector.load %arg10[%c0_23, %c0_24] : memref<8x128xf32, #tpu.memory_space<vmem>>, vector<8x128xf32>
      %c0_25 = arith.constant 0 : index
      %c0_26 = arith.constant 0 : index
      %46 = vector.load %arg11[%c0_25, %c0_26] : memref<8x128xf32, #tpu.memory_space<vmem>>, vector<8x128xf32>
      %47 = math.log %46 : vector<8x128xf32>
      %48 = arith.addf %45, %47 : vector<8x128xf32>
      %49 = arith.addf %48, %44 : vector<8x128xf32>
      %c0_27 = arith.constant 0 : index
      %c0_28 = arith.constant 0 : index
      %50 = vector.load %arg8[%c0_27, %c0_28] : memref<8x128xf32, #tpu.memory_space<vmem>>, vector<8x128xf32>
      tpu.vector_store %arg8[%c0_27, %c0_28], %49 {strides = array<i32>} : memref<8x128xf32, #tpu.memory_space<vmem>>, vector<8x128xf32>,
      %c0_29 = arith.constant 0 : index
      %c0_30 = arith.constant 0 : index
      %51 = vector.load %arg6[%c0_29, %c0_30] : memref<8x1xf32, #tpu.memory_space<vmem>>, vector<8x1xf32>
      %52 = vector.broadcast %51 : vector<8x1xf32> to vector<8x128xf32>
      %53 = arith.addf %49, %52 : vector<8x128xf32>
      %c0_31 = arith.constant 0 : index
      %c0_32 = arith.constant 0 : index
      %54 = vector.load %arg9[%c0_31, %c0_32] : memref<8x128xf32, #tpu.memory_space<vmem>>, vector<8x128xf32>
      tpu.vector_store %arg9[%c0_31, %c0_32], %53 {strides = array<i32>} : memref<8x128xf32, #tpu.memory_space<vmem>>, vector<8x128xf32>,
    } else {
    }
    return
  }
  func.func @transform_0(%arg0: i32, %arg1: i32) -> (i32, i32, i32) {
    %c0_i32 = arith.constant 0 : i32
    %c0_i32_0 = arith.constant 0 : i32
    %c0_i32_1 = arith.constant 0 : i32
    return %c0_i32, %arg0, %c0_i32_0 : i32, i32, i32
  }
  func.func @transform_1(%arg0: i32, %arg1: i32) -> (i32, i32) {
    %c0_i32 = arith.constant 0 : i32
    %c0_i32_0 = arith.constant 0 : i32
    return %c0_i32, %arg1 : i32, i32
  }
  func.func @transform_2(%arg0: i32, %arg1: i32) -> (i32, i32) {
    %c0_i32 = arith.constant 0 : i32
    %c0_i32_0 = arith.constant 0 : i32
    %c0_i32_1 = arith.constant 0 : i32
    return %c0_i32, %c0_i32_0 : i32, i32
  }
  func.func @transform_3(%arg0: i32, %arg1: i32) -> (i32, i32) {
    %c0_i32 = arith.constant 0 : i32
    %c0_i32_0 = arith.constant 0 : i32
    return %c0_i32, %arg1 : i32, i32
  }
  func.func @transform_4(%arg0: i32, %arg1: i32) -> (i32, i32) {
    %c0_i32 = arith.constant 0 : i32
    %c0_i32_0 = arith.constant 0 : i32
    %c0_i32_1 = arith.constant 0 : i32
    return %c0_i32, %c0_i32_0 : i32, i32
  }
  func.func @transform_5(%arg0: i32, %arg1: i32) -> i32 {
    %c0_i32 = arith.constant 0 : i32
    %c0_i32_0 = arith.constant 0 : i32
    return %c0_i32 : i32
  }
  func.func @transform_6(%arg0: i32, %arg1: i32) -> (i32, i32) {
    %c0_i32 = arith.constant 0 : i32
    %c0_i32_0 = arith.constant 0 : i32
    return %c0_i32, %arg0 : i32, i32
  }
  func.func @transform_7(%arg0: i32, %arg1: i32) -> (i32, i32) {
    %c0_i32 = arith.constant 0 : i32
    %c0_i32_0 = arith.constant 0 : i32
    return %c0_i32, %arg0 : i32, i32
  }
}

</mosaic_0001>

<llo_original>
// kernel: tpu_custom_call.1
$region0: #{tpu_custom_call.1}
  #allocation0 [shape = 'u32[]', space=smem, size = 0x4, offset = 0x4, fixed_abs, tag = 'smem constant byte address 0x4 - core index']
  #allocation1 [shape = 'u32[144,128]{1,0:T(1,128)}', space=vmem, size = 0x12000, scoped, tag = 'internal scratch']
  #allocation2 [shape = 'f32[8,128]{1,0:T(8,128)}', space=vmem, size = 0x1000, scoped, tag = 'scratch operand']
  #allocation3 [shape = 'f32[8,128]{1,0:T(8,128)}', space=vmem, size = 0x1000, scoped, tag = 'scratch operand']
  %s0 = inlined_call_operand.vmem [shape: f32[8,256,8], index: 0, kind: input, shape index: {}]
  %s1 = inlined_call_operand.vmem [shape: f32[8,256], index: 1, kind: input, shape index: {}]
  %s2 = inlined_call_operand.vmem [shape: f32[8,8], index: 2, kind: input, shape index: {}]
  %s3 = inlined_call_operand.vmem [shape: f32[8,256], index: 3, kind: input, shape index: {}]
  %s4 = inlined_call_operand.vmem [shape: f32[8,1], index: 4, kind: input, shape index: {}]
  %s5 = inlined_call_operand.vmem [shape: f32[3], index: 5, kind: input, shape index: {}]
  %s6 = inlined_call_operand.hbm [shape: f32[8,256], index: 6, kind: output, shape index: {0}]
  %s7 = inlined_call_operand.hbm [shape: f32[8,256], index: 7, kind: output, shape index: {1}]
  %8 = xla_tuple %s6, %s7
  %s9 = sld [smem:[#allocation0]]
  $region115: #{tpu_custom_call.1} parent=0
    _
  %s11 = ssub.s32 1, %s9
  %s12 = scalar_select 0, %s11, %s9
  $region1: #{tpu_custom_call.1} parent=0
    #allocation4 [shape = 'u8[1048576]{0}', space=vmem, size = 0x100000, scoped, tag = 'input window, operand 0']
    #allocation5 [shape = 'u8[512]{0}', space=smem, size = 0x200, scoped, tag = 'input window, operand 5, single buffered']
    #allocation6 [shape = 's32[2]{0}', space=sflag, size = 0x8, scoped, tag = 'scoped memory for tpu_custom_call.1']
    #allocation7 [shape = 's32[2]{0}', space=sflag, size = 0x8, scoped, tag = 'scoped memory for tpu_custom_call.1']
    #allocation8 [shape = 'u8[8192]{0}', space=vmem, size = 0x2000, scoped, tag = 'output window, operand 0']
    #allocation9 [shape = 'u8[8192]{0}', space=vmem, size = 0x2000, scoped, tag = 'output window, operand 1']
    #allocation10 [shape = 's32[2]{0}', space=sflag, size = 0x8, scoped, tag = 'scoped memory for tpu_custom_call.1']
    %13 = vsyncpa [#allocation7], 0
    %14 = vsyncpa [#allocation6], 0
    %s15 = scalar_lea.sflag [#allocation6], 1
    %16 = vsyncpa %s15, 0
    %17 = vsyncpa [#allocation10], 0
    %s18 = scalar_lea.sflag [#allocation10], 1
    %19 = vsyncpa %s18, 0
    loop: start=0, step=1, limit=4
    $region2: #{tpu_custom_call.1} parent=1 // loop_pre_header
      _
    $region3: #{tpu_custom_call.1} parent=1 // loop_header
      %s21 = sphi 0, %s25
      %p22 = scmp.ge.s32.totalorder %s21, 4
      %s28 = sphi 0, %s40
      %s29 = sphi 0, %s36
      %s30 = sphi 0, %s28
      %s31 = sphi 0, %s29
      %s32 = sphi 0, %s30
      %s33 = sphi 0, %s31
      %s43 = sphi 0, %s45
      %s46 = sphi 0, %s43
      %s47 = sphi 0, %s46
      %s63 = sphi 0, %s47
      %s69 = sphi 0, %s71
      %s72 = sphi 0, %s69
      %s73 = sphi 0, %s72
      %s89 = sphi 0, %s73
      %s93 = sphi 0, %s93
      %s95 = sphi 0, %s93
      %s96 = sphi 0, %s95
      %s110 = sphi 0, %s96
      %s116 = sphi 0, %s118
      %s119 = sphi 0, %s116
      %s120 = sphi 0, %s119
      %s136 = sphi 0, %s120
      %s140 = sphi 0, %s140
      %s142 = sphi 0, %s140
      %s143 = sphi 0, %s142
      %s157 = sphi 0, %s143
      %s161 = sphi 0, %s161
      %s163 = sphi 0, %s161
      %s164 = sphi 0, %s163
      %s178 = sphi 0, %s164
      %s184 = sphi 0, %s186
      %s187 = sphi 0, %s184
      %s188 = sphi 0, %s187
      %s204 = sphi 0, %s188
      %s210 = sphi 0, %s212
      %s213 = sphi 0, %s210
      %s214 = sphi 0, %s213
      %s230 = sphi 0, %s214
    $region4: #{tpu_custom_call.1} parent=1 // loop_header_branch
      %24 = sbr.rel (%p22) target = $region8
    $region5: #{tpu_custom_call.1} parent=1 // loop_body
      %s26 = ssub.s32 %s21, 1
      %s27 = ssub.s32 %s21, 2
      %s34 = sadd.s32 1, %s29
      %p35 = scmp.ge.s32.totalorder %s34, 1
      %s36 = scalar_select %p35, 0, %s34
      %s37 = sadd.s32 1, %s28
      %s38 = scalar_select %p35, %s37, %s28
      %p39 = scmp.ge.s32.totalorder %s38, 2
      %s40 = scalar_select %p39, 0, %s38
      %s41 = ssub.s32 %s28, %s40
      %p42 = scmp.eq.s32.totalorder %s41, 0
      %s44 = sadd.s32 %s43, 1
      %s45 = scalar_select %p42, %s43, %s44
      %p48 = pneg %p42
      %p49 = scmp.eq.s32.totalorder %s21, 1
      %p50 = por %p48, %p49
      %p51 = scmp.ne.s32.totalorder %s43, %s46
      %p52 = scmp.eq.s32.totalorder %s21, 0
      %p53 = por %p51, %p52
      %p54 = scmp.ne.s32.totalorder %s43, %s46
      %p55 = scmp.eq.s32.totalorder %s26, 1
      %p56 = por %p54, %p55
      %p57 = scmp.ne.s32.totalorder %s46, %s47
      %p58 = scmp.eq.s32.totalorder %s26, 0
      %p59 = por %p57, %p58
      %p60 = scmp.ne.s32.totalorder %s46, %s47
      %p61 = scmp.eq.s32.totalorder %s27, 1
      %p62 = por %p60, %p61
      %p64 = scmp.ne.s32.totalorder %s47, %s63
      %p65 = scmp.eq.s32.totalorder %s27, 0
      %p66 = por %p64, %p65
      %s67 = ssub.s32 %s29, %s36
      %p68 = scmp.eq.s32.totalorder %s67, 0
      %s70 = sadd.s32 %s69, 1
      %s71 = scalar_select %p68, %s69, %s70
      %p74 = pneg %p68
      %p75 = scmp.eq.s32.totalorder %s21, 1
      %p76 = por %p74, %p75
      %p77 = scmp.ne.s32.totalorder %s69, %s72
      %p78 = scmp.eq.s32.totalorder %s21, 0
      %p79 = por %p77, %p78
      %p80 = scmp.ne.s32.totalorder %s69, %s72
      %p81 = scmp.eq.s32.totalorder %s26, 1
      %p82 = por %p80, %p81
      %p83 = scmp.ne.s32.totalorder %s72, %s73
      %p84 = scmp.eq.s32.totalorder %s26, 0
      %p85 = por %p83, %p84
      %p86 = scmp.ne.s32.totalorder %s72, %s73
      %p87 = scmp.eq.s32.totalorder %s27, 1
      %p88 = por %p86, %p87
      %p90 = scmp.ne.s32.totalorder %s73, %s89
      %p91 = scmp.eq.s32.totalorder %s27, 0
      %p92 = por %p90, %p91
      %s94 = sadd.s32 %s93, 1
      %p97 = scmp.eq.s32.totalorder %s21, 1
      %p98 = scmp.ne.s32.totalorder %s93, %s95
      %p99 = scmp.eq.s32.totalorder %s21, 0
      %p100 = por %p98, %p99
      %p101 = scmp.ne.s32.totalorder %s93, %s95
      %p102 = scmp.eq.s32.totalorder %s26, 1
      %p103 = por %p101, %p102
      %p104 = scmp.ne.s32.totalorder %s95, %s96
      %p105 = scmp.eq.s32.totalorder %s26, 0
      %p106 = por %p104, %p105
      %p107 = scmp.ne.s32.totalorder %s95, %s96
      %p108 = scmp.eq.s32.totalorder %s27, 1
      %p109 = por %p107, %p108
      %p111 = scmp.ne.s32.totalorder %s96, %s110
      %p112 = scmp.eq.s32.totalorder %s27, 0
      %p113 = por %p111, %p112
      %s114 = ssub.s32 %s29, %s36
      %p115 = scmp.eq.s32.totalorder %s114, 0
      %s117 = sadd.s32 %s116, 1
      %s118 = scalar_select %p115, %s116, %s117
      %p121 = pneg %p115
      %p122 = scmp.eq.s32.totalorder %s21, 1
      %p123 = por %p121, %p122
      %p124 = scmp.ne.s32.totalorder %s116, %s119
      %p125 = scmp.eq.s32.totalorder %s21, 0
      %p126 = por %p124, %p125
      %p127 = scmp.ne.s32.totalorder %s116, %s119
      %p128 = scmp.eq.s32.totalorder %s26, 1
      %p129 = por %p127, %p128
      %p130 = scmp.ne.s32.totalorder %s119, %s120
      %p131 = scmp.eq.s32.totalorder %s26, 0
      %p132 = por %p130, %p131
      %p133 = scmp.ne.s32.totalorder %s119, %s120
      %p134 = scmp.eq.s32.totalorder %s27, 1
      %p135 = por %p133, %p134
      %p137 = scmp.ne.s32.totalorder %s120, %s136
      %p138 = scmp.eq.s32.totalorder %s27, 0
      %p139 = por %p137, %p138
      %s141 = sadd.s32 %s140, 1
      %p144 = scmp.eq.s32.totalorder %s21, 1
      %p145 = scmp.ne.s32.totalorder %s140, %s142
      %p146 = scmp.eq.s32.totalorder %s21, 0
      %p147 = por %p145, %p146
      %p148 = scmp.ne.s32.totalorder %s140, %s142
      %p149 = scmp.eq.s32.totalorder %s26, 1
      %p150 = por %p148, %p149
      %p151 = scmp.ne.s32.totalorder %s142, %s143
      %p152 = scmp.eq.s32.totalorder %s26, 0
      %p153 = por %p151, %p152
      %p154 = scmp.ne.s32.totalorder %s142, %s143
      %p155 = scmp.eq.s32.totalorder %s27, 1
      %p156 = por %p154, %p155
      %p158 = scmp.ne.s32.totalorder %s143, %s157
      %p159 = scmp.eq.s32.totalorder %s27, 0
      %p160 = por %p158, %p159
      %s162 = sadd.s32 %s161, 1
      %p165 = scmp.eq.s32.totalorder %s21, 1
      %p166 = scmp.ne.s32.totalorder %s161, %s163
      %p167 = scmp.eq.s32.totalorder %s21, 0
      %p168 = por %p166, %p167
      %p169 = scmp.ne.s32.totalorder %s161, %s163
      %p170 = scmp.eq.s32.totalorder %s26, 1
      %p171 = por %p169, %p170
      %p172 = scmp.ne.s32.totalorder %s163, %s164
      %p173 = scmp.eq.s32.totalorder %s26, 0
      %p174 = por %p172, %p173
      %p175 = scmp.ne.s32.totalorder %s163, %s164
      %p176 = scmp.eq.s32.totalorder %s27, 1
      %p177 = por %p175, %p176
      %p179 = scmp.ne.s32.totalorder %s164, %s178
      %p180 = scmp.eq.s32.totalorder %s27, 0
      %p181 = por %p179, %p180
      %s182 = ssub.s32 %s28, %s40
      %p183 = scmp.eq.s32.totalorder %s182, 0
      %s185 = sadd.s32 %s184, 1
      %s186 = scalar_select %p183, %s184, %s185
      %p189 = pneg %p183
      %p190 = scmp.eq.s32.totalorder %s21, 1
      %p191 = por %p189, %p190
      %p192 = scmp.ne.s32.totalorder %s184, %s187
      %p193 = scmp.eq.s32.totalorder %s21, 0
      %p194 = por %p192, %p193
      %p195 = scmp.ne.s32.totalorder %s184, %s187
      %p196 = scmp.eq.s32.totalorder %s26, 1
      %p197 = por %p195, %p196
      %p198 = scmp.ne.s32.totalorder %s187, %s188
      %p199 = scmp.eq.s32.totalorder %s26, 0
      %p200 = por %p198, %p199
      %p201 = scmp.ne.s32.totalorder %s187, %s188
      %p202 = scmp.eq.s32.totalorder %s27, 1
      %p203 = por %p201, %p202
      %p205 = scmp.ne.s32.totalorder %s188, %s204
      %p206 = scmp.eq.s32.totalorder %s27, 0
      %p207 = por %p205, %p206
      %s208 = ssub.s32 %s28, %s40
      %p209 = scmp.eq.s32.totalorder %s208, 0
      %s211 = sadd.s32 %s210, 1
      %s212 = scalar_select %p209, %s210, %s211
      %p215 = pneg %p209
      %p216 = scmp.eq.s32.totalorder %s21, 1
      %p217 = por %p215, %p216
      %p218 = scmp.ne.s32.totalorder %s210, %s213
      %p219 = scmp.eq.s32.totalorder %s21, 0
      %p220 = por %p218, %p219
      %p221 = scmp.ne.s32.totalorder %s210, %s213
      %p222 = scmp.eq.s32.totalorder %s26, 1
      %p223 = por %p221, %p222
      %p224 = scmp.ne.s32.totalorder %s213, %s214
      %p225 = scmp.eq.s32.totalorder %s26, 0
      %p226 = por %p224, %p225
      %p227 = scmp.ne.s32.totalorder %s213, %s214
      %p228 = scmp.eq.s32.totalorder %s27, 1
      %p229 = por %p227, %p228
      %p231 = scmp.ne.s32.totalorder %s214, %s230
      %p232 = scmp.eq.s32.totalorder %s27, 0
      %p233 = por %p231, %p232
      %p234 = scmp.le.s32.totalorder 1, %s21
      %p235 = scmp.lt.s32.totalorder %s21, 3
      %p236 = pnand %p234, %p235
      %p237 = pneg %p236
      // Predicated region
      $region9: #{tpu_custom_call.1} parent=5 // pred_check
        _
      $region10: #{tpu_custom_call.1} parent=5 // pred_check_branch
        %239 = sbr.rel (%p236) target = $region12
      $region11: #{tpu_custom_call.1} parent=5 // pred_region
        %s240 = ssub.s32 %s21, 1
        // Predicated region
        $region13: #{tpu_custom_call.1} parent=11 // pred_check
          %p241 = pneg %p85
        $region14: #{tpu_custom_call.1} parent=11 // pred_check_branch
          %243 = sbr.rel (%p241) target = $region16
        $region15: #{tpu_custom_call.1} parent=11 // pred_region
          %s244 = smul.u32 2, %s31
          %p245 = scmp.lt.s32.totalorder %s244, 1
          %s246 = scalar_select %p245, %s244, 1
          %s247 = smul.addr %s246, 8
          %s248 = scalar_lea.vmem %s1, %s247
          %s249 = smul.u32 2, %s31
        $region16: #{tpu_custom_call.1} parent=11 // pred_fallthru
          _
        // Predicated region
        $region17: #{tpu_custom_call.1} parent=11 // pred_check
          %p250 = pneg %p106
        $region18: #{tpu_custom_call.1} parent=11 // pred_check_branch
          %252 = sbr.rel (%p250) target = $region20
        $region19: #{tpu_custom_call.1} parent=11 // pred_region
          _
        $region20: #{tpu_custom_call.1} parent=11 // pred_fallthru
          _
        // Predicated region
        $region21: #{tpu_custom_call.1} parent=11 // pred_check
          %p253 = pneg %p132
        $region22: #{tpu_custom_call.1} parent=11 // pred_check_branch
          %255 = sbr.rel (%p253) target = $region24
        $region23: #{tpu_custom_call.1} parent=11 // pred_region
          %s256 = smul.u32 2, %s31
          %p257 = scmp.lt.s32.totalorder %s256, 1
          %s258 = scalar_select %p257, %s256, 1
          %s259 = smul.addr %s258, 8
          %s260 = scalar_lea.vmem %s3, %s259
          %s261 = smul.u32 2, %s31
        $region24: #{tpu_custom_call.1} parent=11 // pred_fallthru
          _
        // Predicated region
        $region25: #{tpu_custom_call.1} parent=11 // pred_check
          %p262 = pneg %p153
        $region26: #{tpu_custom_call.1} parent=11 // pred_check_branch
          %264 = sbr.rel (%p262) target = $region28
        $region27: #{tpu_custom_call.1} parent=11 // pred_region
          _
        $region28: #{tpu_custom_call.1} parent=11 // pred_fallthru
          _
        // Predicated region
        $region29: #{tpu_custom_call.1} parent=11 // pred_check
          %p265 = pneg %p174
        $region30: #{tpu_custom_call.1} parent=11 // pred_check_branch
          %267 = sbr.rel (%p265) target = $region32
        $region31: #{tpu_custom_call.1} parent=11 // pred_region
          %s269 = ssub.s32 16, 16
          %270 = vsyncadd [#allocation7], %s269
          %s272 = sshll.u32 %s5, 4
          %s273 = int_to_ptr.vmem [resolvable:$true] %s272
          %275 = dma.vmem_to_smem %s273, 16, [#allocation5], [#allocation7]
        $region32: #{tpu_custom_call.1} parent=11 // pred_fallthru
          _
      $region12: #{tpu_custom_call.1} parent=5 // pred_fallthru
        _
      %p276 = scmp.lt.s32.totalorder %s21, 2
      // Predicated region
      $region33: #{tpu_custom_call.1} parent=5 // pred_check
        %p277 = pneg %p276
      $region34: #{tpu_custom_call.1} parent=5 // pred_check_branch
        %279 = sbr.rel (%p277) target = $region36
      $region35: #{tpu_custom_call.1} parent=5 // pred_region
        // Predicated region
        $region37: #{tpu_custom_call.1} parent=35 // pred_check
          %p280 = pneg %p53
        $region38: #{tpu_custom_call.1} parent=35 // pred_check_branch
          %282 = sbr.rel (%p280) target = $region40
        $region39: #{tpu_custom_call.1} parent=35 // pred_region
          %s283 = sand.u32 %s43, 1
          %s284 = sand.u32 %s43, 1
          %s285 = smul.addr %s284, 1024
          %s286 = scalar_lea.vmem [#allocation4], %s285
          %s287 = smul.u32 16, %s28
          %s288 = smul.addr %s287, 8
          %s289 = scalar_lea.vmem %s0, %s288
          // Predicated region
          $region41: #{tpu_custom_call.1} parent=39 // pred_check
            _
          $region42: #{tpu_custom_call.1} parent=39 // pred_check_branch
            %291 = sbr.rel (0) target = $region44
          $region43: #{tpu_custom_call.1} parent=39 // pred_region
            // Predicated region
            $region45: #{tpu_custom_call.1} parent=43 // pred_check
              _
            $region46: #{tpu_custom_call.1} parent=43 // pred_check_branch
              %293 = sbr.rel (0) target = $region48
            $region47: #{tpu_custom_call.1} parent=43 // pred_region
              // Predicated region
              $region60: #{tpu_custom_call.1} parent=47 // pred_check
                _
              $region61: #{tpu_custom_call.1} parent=47 // pred_check_branch
                %562 = sbr.rel (0) target = $region63
              $region62: #{tpu_custom_call.1} parent=47 // pred_region
                loop: start=0, step=1, limit=1
                $region64: #{tpu_custom_call.1} parent=62 // loop_pre_header
                  _
                $region65: #{tpu_custom_call.1} parent=62 // loop_header
                  %s564 = sphi 0, %s568
                  %p565 = scmp.ge.s32.totalorder %s564, 1
                  %s569 = sphi %s289, %s289
                  %s570 = sphi %s286, %s286
                $region66: #{tpu_custom_call.1} parent=62 // loop_header_branch
                  %567 = sbr.rel (%p565) target = $region70
                $region67: #{tpu_custom_call.1} parent=62 // loop_body
                  %v571 = vld [vmem:[%s569] sm:$0xff]
                  %572 = vst [vmem:[%s570] sm:$0xff] %v571
                  %v573 = vld [vmem:[%s569 + $0x8] sm:$0xff]
                  %574 = vst [vmem:[%s570 + $0x8] sm:$0xff] %v573
                  %v575 = vld [vmem:[%s569 + $0x10] sm:$0xff]
                  %576 = vst [vmem:[%s570 + $0x10] sm:$0xff] %v575
                  %v577 = vld [vmem:[%s569 + $0x18] sm:$0xff]
                  %578 = vst [vmem:[%s570 + $0x18] sm:$0xff] %v577
                  %v579 = vld [vmem:[%s569 + $0x20] sm:$0xff]
                  %580 = vst [vmem:[%s570 + $0x20] sm:$0xff] %v579
                  %v581 = vld [vmem:[%s569 + $0x28] sm:$0xff]
                  %582 = vst [vmem:[%s570 + $0x28] sm:$0xff] %v581
                  %v583 = vld [vmem:[%s569 + $0x30] sm:$0xff]
                  %584 = vst [vmem:[%s570 + $0x30] sm:$0xff] %v583
                  %v585 = vld [vmem:[%s569 + $0x38] sm:$0xff]
                  %586 = vst [vmem:[%s570 + $0x38] sm:$0xff] %v585
                  %v587 = vld [vmem:[%s569 + $0x40] sm:$0xff]
                  %588 = vst [vmem:[%s570 + $0x40] sm:$0xff] %v587
                  %v589 = vld [vmem:[%s569 + $0x48] sm:$0xff]
                  %590 = vst [vmem:[%s570 + $0x48] sm:$0xff] %v589
                  %v591 = vld [vmem:[%s569 + $0x50] sm:$0xff]
                  %592 = vst [vmem:[%s570 + $0x50] sm:$0xff] %v591
                  %v593 = vld [vmem:[%s569 + $0x58] sm:$0xff]
                  %594 = vst [vmem:[%s570 + $0x58] sm:$0xff] %v593
                  %v595 = vld [vmem:[%s569 + $0x60] sm:$0xff]
                  %596 = vst [vmem:[%s570 + $0x60] sm:$0xff] %v595
                  %v597 = vld [vmem:[%s569 + $0x68] sm:$0xff]
                  %598 = vst [vmem:[%s570 + $0x68] sm:$0xff] %v597
                  %v599 = vld [vmem:[%s569 + $0x70] sm:$0xff]
                  %600 = vst [vmem:[%s570 + $0x70] sm:$0xff] %v599
                  %v601 = vld [vmem:[%s569 + $0x78] sm:$0xff]
                  %602 = vst [vmem:[%s570 + $0x78] sm:$0xff] %v601
                  %v603 = vld [vmem:[%s569 + $0x100] sm:$0xff]
                  %604 = vst [vmem:[%s570 + $0x80] sm:$0xff] %v603
                  %v605 = vld [vmem:[%s569 + $0x108] sm:$0xff]
                  %606 = vst [vmem:[%s570 + $0x88] sm:$0xff] %v605
                  %v607 = vld [vmem:[%s569 + $0x110] sm:$0xff]
                  %608 = vst [vmem:[%s570 + $0x90] sm:$0xff] %v607
                  %v609 = vld [vmem:[%s569 + $0x118] sm:$0xff]
                  %610 = vst [vmem:[%s570 + $0x98] sm:$0xff] %v609
                  %v611 = vld [vmem:[%s569 + $0x120] sm:$0xff]
                  %612 = vst [vmem:[%s570 + $0xa0] sm:$0xff] %v611
                  %v613 = vld [vmem:[%s569 + $0x128] sm:$0xff]
                  %614 = vst [vmem:[%s570 + $0xa8] sm:$0xff] %v613
                  %v615 = vld [vmem:[%s569 + $0x130] sm:$0xff]
                  %616 = vst [vmem:[%s570 + $0xb0] sm:$0xff] %v615
                  %v617 = vld [vmem:[%s569 + $0x138] sm:$0xff]
                  %618 = vst [vmem:[%s570 + $0xb8] sm:$0xff] %v617
                  %v619 = vld [vmem:[%s569 + $0x140] sm:$0xff]
                  %620 = vst [vmem:[%s570 + $0xc0] sm:$0xff] %v619
                  %v621 = vld [vmem:[%s569 + $0x148] sm:$0xff]
                  %622 = vst [vmem:[%s570 + $0xc8] sm:$0xff] %v621
                  %v623 = vld [vmem:[%s569 + $0x150] sm:$0xff]
                  %624 = vst [vmem:[%s570 + $0xd0] sm:$0xff] %v623
                  %v625 = vld [vmem:[%s569 + $0x158] sm:$0xff]
                  %626 = vst [vmem:[%s570 + $0xd8] sm:$0xff] %v625
                  %v627 = vld [vmem:[%s569 + $0x160] sm:$0xff]
                  %628 = vst [vmem:[%s570 + $0xe0] sm:$0xff] %v627
                  %v629 = vld [vmem:[%s569 + $0x168] sm:$0xff]
                  %630 = vst [vmem:[%s570 + $0xe8] sm:$0xff] %v629
                  %v631 = vld [vmem:[%s569 + $0x170] sm:$0xff]
                  %632 = vst [vmem:[%s570 + $0xf0] sm:$0xff] %v631
                  %v633 = vld [vmem:[%s569 + $0x178] sm:$0xff]
                  %634 = vst [vmem:[%s570 + $0xf8] sm:$0xff] %v633
                  %v635 = vld [vmem:[%s569 + $0x200] sm:$0xff]
                  %636 = vst [vmem:[%s570 + $0x100] sm:$0xff] %v635
                  %v637 = vld [vmem:[%s569 + $0x208] sm:$0xff]
                  %638 = vst [vmem:[%s570 + $0x108] sm:$0xff] %v637
                  %v639 = vld [vmem:[%s569 + $0x210] sm:$0xff]
                  %640 = vst [vmem:[%s570 + $0x110] sm:$0xff] %v639
                  %v641 = vld [vmem:[%s569 + $0x218] sm:$0xff]
                  %642 = vst [vmem:[%s570 + $0x118] sm:$0xff] %v641
                  %v643 = vld [vmem:[%s569 + $0x220] sm:$0xff]
                  %644 = vst [vmem:[%s570 + $0x120] sm:$0xff] %v643
                  %v645 = vld [vmem:[%s569 + $0x228] sm:$0xff]
                  %646 = vst [vmem:[%s570 + $0x128] sm:$0xff] %v645
                  %v647 = vld [vmem:[%s569 + $0x230] sm:$0xff]
                  %648 = vst [vmem:[%s570 + $0x130] sm:$0xff] %v647
                  %v649 = vld [vmem:[%s569 + $0x238] sm:$0xff]
                  %650 = vst [vmem:[%s570 + $0x138] sm:$0xff] %v649
                  %v651 = vld [vmem:[%s569 + $0x240] sm:$0xff]
                  %652 = vst [vmem:[%s570 + $0x140] sm:$0xff] %v651
                  %v653 = vld [vmem:[%s569 + $0x248] sm:$0xff]
                  %654 = vst [vmem:[%s570 + $0x148] sm:$0xff] %v653
                  %v655 = vld [vmem:[%s569 + $0x250] sm:$0xff]
                  %656 = vst [vmem:[%s570 + $0x150] sm:$0xff] %v655
                  %v657 = vld [vmem:[%s569 + $0x258] sm:$0xff]
                  %658 = vst [vmem:[%s570 + $0x158] sm:$0xff] %v657
                  %v659 = vld [vmem:[%s569 + $0x260] sm:$0xff]
                  %660 = vst [vmem:[%s570 + $0x160] sm:$0xff] %v659
                  %v661 = vld [vmem:[%s569 + $0x268] sm:$0xff]
                  %662 = vst [vmem:[%s570 + $0x168] sm:$0xff] %v661
                  %v663 = vld [vmem:[%s569 + $0x270] sm:$0xff]
                  %664 = vst [vmem:[%s570 + $0x170] sm:$0xff] %v663
                  %v665 = vld [vmem:[%s569 + $0x278] sm:$0xff]
                  %666 = vst [vmem:[%s570 + $0x178] sm:$0xff] %v665
                  %v667 = vld [vmem:[%s569 + $0x300] sm:$0xff]
                  %668 = vst [vmem:[%s570 + $0x180] sm:$0xff] %v667
                  %v669 = vld [vmem:[%s569 + $0x308] sm:$0xff]
                  %670 = vst [vmem:[%s570 + $0x188] sm:$0xff] %v669
                  %v671 = vld [vmem:[%s569 + $0x310] sm:$0xff]
                  %672 = vst [vmem:[%s570 + $0x190] sm:$0xff] %v671
                  %v673 = vld [vmem:[%s569 + $0x318] sm:$0xff]
                  %674 = vst [vmem:[%s570 + $0x198] sm:$0xff] %v673
                  %v675 = vld [vmem:[%s569 + $0x320] sm:$0xff]
                  %676 = vst [vmem:[%s570 + $0x1a0] sm:$0xff] %v675
                  %v677 = vld [vmem:[%s569 + $0x328] sm:$0xff]
                  %678 = vst [vmem:[%s570 + $0x1a8] sm:$0xff] %v677
                  %v679 = vld [vmem:[%s569 + $0x330] sm:$0xff]
                  %680 = vst [vmem:[%s570 + $0x1b0] sm:$0xff] %v679
                  %v681 = vld [vmem:[%s569 + $0x338] sm:$0xff]
                  %682 = vst [vmem:[%s570 + $0x1b8] sm:$0xff] %v681
                  %v683 = vld [vmem:[%s569 + $0x340] sm:$0xff]
                  %684 = vst [vmem:[%s570 + $0x1c0] sm:$0xff] %v683
                  %v685 = vld [vmem:[%s569 + $0x348] sm:$0xff]
                  %686 = vst [vmem:[%s570 + $0x1c8] sm:$0xff] %v685
                  %v687 = vld [vmem:[%s569 + $0x350] sm:$0xff]
                  %688 = vst [vmem:[%s570 + $0x1d0] sm:$0xff] %v687
                  %v689 = vld [vmem:[%s569 + $0x358] sm:$0xff]
                  %690 = vst [vmem:[%s570 + $0x1d8] sm:$0xff] %v689
                  %v691 = vld [vmem:[%s569 + $0x360] sm:$0xff]
                  %692 = vst [vmem:[%s570 + $0x1e0] sm:$0xff] %v691
                  %v693 = vld [vmem:[%s569 + $0x368] sm:$0xff]
                  %694 = vst [vmem:[%s570 + $0x1e8] sm:$0xff] %v693
                  %v695 = vld [vmem:[%s569 + $0x370] sm:$0xff]
                  %696 = vst [vmem:[%s570 + $0x1f0] sm:$0xff] %v695
                  %v697 = vld [vmem:[%s569 + $0x378] sm:$0xff]
                  %698 = vst [vmem:[%s570 + $0x1f8] sm:$0xff] %v697
                  %v699 = vld [vmem:[%s569 + $0x400] sm:$0xff]
                  %700 = vst [vmem:[%s570 + $0x200] sm:$0xff] %v699
                  %v701 = vld [vmem:[%s569 + $0x408] sm:$0xff]
                  %702 = vst [vmem:[%s570 + $0x208] sm:$0xff] %v701
                  %v703 = vld [vmem:[%s569 + $0x410] sm:$0xff]
                  %704 = vst [vmem:[%s570 + $0x210] sm:$0xff] %v703
                  %v705 = vld [vmem:[%s569 + $0x418] sm:$0xff]
                  %706 = vst [vmem:[%s570 + $0x218] sm:$0xff] %v705
                  %v707 = vld [vmem:[%s569 + $0x420] sm:$0xff]
                  %708 = vst [vmem:[%s570 + $0x220] sm:$0xff] %v707
                  %v709 = vld [vmem:[%s569 + $0x428] sm:$0xff]
                  %710 = vst [vmem:[%s570 + $0x228] sm:$0xff] %v709
                  %v711 = vld [vmem:[%s569 + $0x430] sm:$0xff]
                  %712 = vst [vmem:[%s570 + $0x230] sm:$0xff] %v711
                  %v713 = vld [vmem:[%s569 + $0x438] sm:$0xff]
                  %714 = vst [vmem:[%s570 + $0x238] sm:$0xff] %v713
                  %v715 = vld [vmem:[%s569 + $0x440] sm:$0xff]
                  %716 = vst [vmem:[%s570 + $0x240] sm:$0xff] %v715
                  %v717 = vld [vmem:[%s569 + $0x448] sm:$0xff]
                  %718 = vst [vmem:[%s570 + $0x248] sm:$0xff] %v717
                  %v719 = vld [vmem:[%s569 + $0x450] sm:$0xff]
                  %720 = vst [vmem:[%s570 + $0x250] sm:$0xff] %v719
                  %v721 = vld [vmem:[%s569 + $0x458] sm:$0xff]
                  %722 = vst [vmem:[%s570 + $0x258] sm:$0xff] %v721
                  %v723 = vld [vmem:[%s569 + $0x460] sm:$0xff]
                  %724 = vst [vmem:[%s570 + $0x260] sm:$0xff] %v723
                  %v725 = vld [vmem:[%s569 + $0x468] sm:$0xff]
                  %726 = vst [vmem:[%s570 + $0x268] sm:$0xff] %v725
                  %v727 = vld [vmem:[%s569 + $0x470] sm:$0xff]
                  %728 = vst [vmem:[%s570 + $0x270] sm:$0xff] %v727
                  %v729 = vld [vmem:[%s569 + $0x478] sm:$0xff]
                  %730 = vst [vmem:[%s570 + $0x278] sm:$0xff] %v729
                  %v731 = vld [vmem:[%s569 + $0x500] sm:$0xff]
                  %732 = vst [vmem:[%s570 + $0x280] sm:$0xff] %v731
                  %v733 = vld [vmem:[%s569 + $0x508] sm:$0xff]
                  %734 = vst [vmem:[%s570 + $0x288] sm:$0xff] %v733
                  %v735 = vld [vmem:[%s569 + $0x510] sm:$0xff]
                  %736 = vst [vmem:[%s570 + $0x290] sm:$0xff] %v735
                  %v737 = vld [vmem:[%s569 + $0x518] sm:$0xff]
                  %738 = vst [vmem:[%s570 + $0x298] sm:$0xff] %v737
                  %v739 = vld [vmem:[%s569 + $0x520] sm:$0xff]
                  %740 = vst [vmem:[%s570 + $0x2a0] sm:$0xff] %v739
                  %v741 = vld [vmem:[%s569 + $0x528] sm:$0xff]
                  %742 = vst [vmem:[%s570 + $0x2a8] sm:$0xff] %v741
                  %v743 = vld [vmem:[%s569 + $0x530] sm:$0xff]
                  %744 = vst [vmem:[%s570 + $0x2b0] sm:$0xff] %v743
                  %v745 = vld [vmem:[%s569 + $0x538] sm:$0xff]
                  %746 = vst [vmem:[%s570 + $0x2b8] sm:$0xff] %v745
                  %v747 = vld [vmem:[%s569 + $0x540] sm:$0xff]
                  %748 = vst [vmem:[%s570 + $0x2c0] sm:$0xff] %v747
                  %v749 = vld [vmem:[%s569 + $0x548] sm:$0xff]
                  %750 = vst [vmem:[%s570 + $0x2c8] sm:$0xff] %v749
                  %v751 = vld [vmem:[%s569 + $0x550] sm:$0xff]
                  %752 = vst [vmem:[%s570 + $0x2d0] sm:$0xff] %v751
                  %v753 = vld [vmem:[%s569 + $0x558] sm:$0xff]
                  %754 = vst [vmem:[%s570 + $0x2d8] sm:$0xff] %v753
                  %v755 = vld [vmem:[%s569 + $0x560] sm:$0xff]
                  %756 = vst [vmem:[%s570 + $0x2e0] sm:$0xff] %v755
                  %v757 = vld [vmem:[%s569 + $0x568] sm:$0xff]
                  %758 = vst [vmem:[%s570 + $0x2e8] sm:$0xff] %v757
                  %v759 = vld [vmem:[%s569 + $0x570] sm:$0xff]
                  %760 = vst [vmem:[%s570 + $0x2f0] sm:$0xff] %v759
                  %v761 = vld [vmem:[%s569 + $0x578] sm:$0xff]
                  %762 = vst [vmem:[%s570 + $0x2f8] sm:$0xff] %v761
                  %v763 = vld [vmem:[%s569 + $0x600] sm:$0xff]
                  %764 = vst [vmem:[%s570 + $0x300] sm:$0xff] %v763
                  %v765 = vld [vmem:[%s569 + $0x608] sm:$0xff]
                  %766 = vst [vmem:[%s570 + $0x308] sm:$0xff] %v765
                  %v767 = vld [vmem:[%s569 + $0x610] sm:$0xff]
                  %768 = vst [vmem:[%s570 + $0x310] sm:$0xff] %v767
                  %v769 = vld [vmem:[%s569 + $0x618] sm:$0xff]
                  %770 = vst [vmem:[%s570 + $0x318] sm:$0xff] %v769
                  %v771 = vld [vmem:[%s569 + $0x620] sm:$0xff]
                  %772 = vst [vmem:[%s570 + $0x320] sm:$0xff] %v771
                  %v773 = vld [vmem:[%s569 + $0x628] sm:$0xff]
                  %774 = vst [vmem:[%s570 + $0x328] sm:$0xff] %v773
                  %v775 = vld [vmem:[%s569 + $0x630] sm:$0xff]
                  %776 = vst [vmem:[%s570 + $0x330] sm:$0xff] %v775
                  %v777 = vld [vmem:[%s569 + $0x638] sm:$0xff]
                  %778 = vst [vmem:[%s570 + $0x338] sm:$0xff] %v777
                  %v779 = vld [vmem:[%s569 + $0x640] sm:$0xff]
                  %780 = vst [vmem:[%s570 + $0x340] sm:$0xff] %v779
                  %v781 = vld [vmem:[%s569 + $0x648] sm:$0xff]
                  %782 = vst [vmem:[%s570 + $0x348] sm:$0xff] %v781
                  %v783 = vld [vmem:[%s569 + $0x650] sm:$0xff]
                  %784 = vst [vmem:[%s570 + $0x350] sm:$0xff] %v783
                  %v785 = vld [vmem:[%s569 + $0x658] sm:$0xff]
                  %786 = vst [vmem:[%s570 + $0x358] sm:$0xff] %v785
                  %v787 = vld [vmem:[%s569 + $0x660] sm:$0xff]
                  %788 = vst [vmem:[%s570 + $0x360] sm:$0xff] %v787
                  %v789 = vld [vmem:[%s569 + $0x668] sm:$0xff]
                  %790 = vst [vmem:[%s570 + $0x368] sm:$0xff] %v789
                  %v791 = vld [vmem:[%s569 + $0x670] sm:$0xff]
                  %792 = vst [vmem:[%s570 + $0x370] sm:$0xff] %v791
                  %v793 = vld [vmem:[%s569 + $0x678] sm:$0xff]
                  %794 = vst [vmem:[%s570 + $0x378] sm:$0xff] %v793
                  %v795 = vld [vmem:[%s569 + $0x700] sm:$0xff]
                  %796 = vst [vmem:[%s570 + $0x380] sm:$0xff] %v795
                  %v797 = vld [vmem:[%s569 + $0x708] sm:$0xff]
                  %798 = vst [vmem:[%s570 + $0x388] sm:$0xff] %v797
                  %v799 = vld [vmem:[%s569 + $0x710] sm:$0xff]
                  %800 = vst [vmem:[%s570 + $0x390] sm:$0xff] %v799
                  %v801 = vld [vmem:[%s569 + $0x718] sm:$0xff]
                  %802 = vst [vmem:[%s570 + $0x398] sm:$0xff] %v801
                  %v803 = vld [vmem:[%s569 + $0x720] sm:$0xff]
                  %804 = vst [vmem:[%s570 + $0x3a0] sm:$0xff] %v803
                  %v805 = vld [vmem:[%s569 + $0x728] sm:$0xff]
                  %806 = vst [vmem:[%s570 + $0x3a8] sm:$0xff] %v805
                  %v807 = vld [vmem:[%s569 + $0x730] sm:$0xff]
                  %808 = vst [vmem:[%s570 + $0x3b0] sm:$0xff] %v807
                  %v809 = vld [vmem:[%s569 + $0x738] sm:$0xff]
                  %810 = vst [vmem:[%s570 + $0x3b8] sm:$0xff] %v809
                  %v811 = vld [vmem:[%s569 + $0x740] sm:$0xff]
                  %812 = vst [vmem:[%s570 + $0x3c0] sm:$0xff] %v811
                  %v813 = vld [vmem:[%s569 + $0x748] sm:$0xff]
                  %814 = vst [vmem:[%s570 + $0x3c8] sm:$0xff] %v813
                  %v815 = vld [vmem:[%s569 + $0x750] sm:$0xff]
                  %816 = vst [vmem:[%s570 + $0x3d0] sm:$0xff] %v815
                  %v817 = vld [vmem:[%s569 + $0x758] sm:$0xff]
                  %818 = vst [vmem:[%s570 + $0x3d8] sm:$0xff] %v817
                  %v819 = vld [vmem:[%s569 + $0x760] sm:$0xff]
                  %820 = vst [vmem:[%s570 + $0x3e0] sm:$0xff] %v819
                  %v821 = vld [vmem:[%s569 + $0x768] sm:$0xff]
                  %822 = vst [vmem:[%s570 + $0x3e8] sm:$0xff] %v821
                  %v823 = vld [vmem:[%s569 + $0x770] sm:$0xff]
                  %824 = vst [vmem:[%s570 + $0x3f0] sm:$0xff] %v823
                  %v825 = vld [vmem:[%s569 + $0x778] sm:$0xff]
                  %826 = vst [vmem:[%s570 + $0x3f8] sm:$0xff] %v825
                $region68: #{tpu_custom_call.1} parent=62 // loop_footer
                  %s568 = sadd.s32 1, %s564
                $region69: #{tpu_custom_call.1} parent=62 // loop_footer_branch
                  %563 = sbr.rel target = $region65
                $region70: #{tpu_custom_call.1} parent=62 // loop_exit
                  _
              $region63: #{tpu_custom_call.1} parent=47 // pred_fallthru
                _
              // Predicated region
              $region71: #{tpu_custom_call.1} parent=47 // pred_check
                _
              $region72: #{tpu_custom_call.1} parent=47 // pred_check_branch
                %828 = sbr.rel target = $region74
              $region73: #{tpu_custom_call.1} parent=47 // pred_region
                _
              $region74: #{tpu_custom_call.1} parent=47 // pred_fallthru
                _
            $region48: #{tpu_custom_call.1} parent=43 // pred_fallthru
              _
            // Predicated region
            $region49: #{tpu_custom_call.1} parent=43 // pred_check
              _
            $region50: #{tpu_custom_call.1} parent=43 // pred_check_branch
              %295 = sbr.rel target = $region52
            $region51: #{tpu_custom_call.1} parent=43 // pred_region
              loop: start=0, step=1, limit=1
              $region53: #{tpu_custom_call.1} parent=51 // loop_pre_header
                _
              $region54: #{tpu_custom_call.1} parent=51 // loop_header
                %s298 = sphi 0, %s302
                %p299 = scmp.ge.s32.totalorder %s298, 1
                %s303 = sphi %s289, %s289
                %s304 = sphi %s286, %s286
              $region55: #{tpu_custom_call.1} parent=51 // loop_header_branch
                %301 = sbr.rel (%p299) target = $region59
              $region56: #{tpu_custom_call.1} parent=51 // loop_body
                %v305 = vld [vmem:[%s303] sm:$0xff]
                %306 = vst [vmem:[%s304] sm:$0xff] %v305
                %v307 = vld [vmem:[%s303 + $0x8] sm:$0xff]
                %308 = vst [vmem:[%s304 + $0x8] sm:$0xff] %v307
                %v309 = vld [vmem:[%s303 + $0x10] sm:$0xff]
                %310 = vst [vmem:[%s304 + $0x10] sm:$0xff] %v309
                %v311 = vld [vmem:[%s303 + $0x18] sm:$0xff]
                %312 = vst [vmem:[%s304 + $0x18] sm:$0xff] %v311
                %v313 = vld [vmem:[%s303 + $0x20] sm:$0xff]
                %314 = vst [vmem:[%s304 + $0x20] sm:$0xff] %v313
                %v315 = vld [vmem:[%s303 + $0x28] sm:$0xff]
                %316 = vst [vmem:[%s304 + $0x28] sm:$0xff] %v315
                %v317 = vld [vmem:[%s303 + $0x30] sm:$0xff]
                %318 = vst [vmem:[%s304 + $0x30] sm:$0xff] %v317
                %v319 = vld [vmem:[%s303 + $0x38] sm:$0xff]
                %320 = vst [vmem:[%s304 + $0x38] sm:$0xff] %v319
                %v321 = vld [vmem:[%s303 + $0x40] sm:$0xff]
                %322 = vst [vmem:[%s304 + $0x40] sm:$0xff] %v321
                %v323 = vld [vmem:[%s303 + $0x48] sm:$0xff]
                %324 = vst [vmem:[%s304 + $0x48] sm:$0xff] %v323
                %v325 = vld [vmem:[%s303 + $0x50] sm:$0xff]
                %326 = vst [vmem:[%s304 + $0x50] sm:$0xff] %v325
                %v327 = vld [vmem:[%s303 + $0x58] sm:$0xff]
                %328 = vst [vmem:[%s304 + $0x58] sm:$0xff] %v327
                %v329 = vld [vmem:[%s303 + $0x60] sm:$0xff]
                %330 = vst [vmem:[%s304 + $0x60] sm:$0xff] %v329
                %v331 = vld [vmem:[%s303 + $0x68] sm:$0xff]
                %332 = vst [vmem:[%s304 + $0x68] sm:$0xff] %v331
                %v333 = vld [vmem:[%s303 + $0x70] sm:$0xff]
                %334 = vst [vmem:[%s304 + $0x70] sm:$0xff] %v333
                %v335 = vld [vmem:[%s303 + $0x78] sm:$0xff]
                %336 = vst [vmem:[%s304 + $0x78] sm:$0xff] %v335
                %v337 = vld [vmem:[%s303 + $0x100] sm:$0xff]
                %338 = vst [vmem:[%s304 + $0x80] sm:$0xff] %v337
                %v339 = vld [vmem:[%s303 + $0x108] sm:$0xff]
                %340 = vst [vmem:[%s304 + $0x88] sm:$0xff] %v339
                %v341 = vld [vmem:[%s303 + $0x110] sm:$0xff]
                %342 = vst [vmem:[%s304 + $0x90] sm:$0xff] %v341
                %v343 = vld [vmem:[%s303 + $0x118] sm:$0xff]
                %344 = vst [vmem:[%s304 + $0x98] sm:$0xff] %v343
                %v345 = vld [vmem:[%s303 + $0x120] sm:$0xff]
                %346 = vst [vmem:[%s304 + $0xa0] sm:$0xff] %v345
                %v347 = vld [vmem:[%s303 + $0x128] sm:$0xff]
                %348 = vst [vmem:[%s304 + $0xa8] sm:$0xff] %v347
                %v349 = vld [vmem:[%s303 + $0x130] sm:$0xff]
                %350 = vst [vmem:[%s304 + $0xb0] sm:$0xff] %v349
                %v351 = vld [vmem:[%s303 + $0x138] sm:$0xff]
                %352 = vst [vmem:[%s304 + $0xb8] sm:$0xff] %v351
                %v353 = vld [vmem:[%s303 + $0x140] sm:$0xff]
                %354 = vst [vmem:[%s304 + $0xc0] sm:$0xff] %v353
                %v355 = vld [vmem:[%s303 + $0x148] sm:$0xff]
                %356 = vst [vmem:[%s304 + $0xc8] sm:$0xff] %v355
                %v357 = vld [vmem:[%s303 + $0x150] sm:$0xff]
                %358 = vst [vmem:[%s304 + $0xd0] sm:$0xff] %v357
                %v359 = vld [vmem:[%s303 + $0x158] sm:$0xff]
                %360 = vst [vmem:[%s304 + $0xd8] sm:$0xff] %v359
                %v361 = vld [vmem:[%s303 + $0x160] sm:$0xff]
                %362 = vst [vmem:[%s304 + $0xe0] sm:$0xff] %v361
                %v363 = vld [vmem:[%s303 + $0x168] sm:$0xff]
                %364 = vst [vmem:[%s304 + $0xe8] sm:$0xff] %v363
                %v365 = vld [vmem:[%s303 + $0x170] sm:$0xff]
                %366 = vst [vmem:[%s304 + $0xf0] sm:$0xff] %v365
                %v367 = vld [vmem:[%s303 + $0x178] sm:$0xff]
                %368 = vst [vmem:[%s304 + $0xf8] sm:$0xff] %v367
                %v369 = vld [vmem:[%s303 + $0x200] sm:$0xff]
                %370 = vst [vmem:[%s304 + $0x100] sm:$0xff] %v369
                %v371 = vld [vmem:[%s303 + $0x208] sm:$0xff]
                %372 = vst [vmem:[%s304 + $0x108] sm:$0xff] %v371
                %v373 = vld [vmem:[%s303 + $0x210] sm:$0xff]
                %374 = vst [vmem:[%s304 + $0x110] sm:$0xff] %v373
                %v375 = vld [vmem:[%s303 + $0x218] sm:$0xff]
                %376 = vst [vmem:[%s304 + $0x118] sm:$0xff] %v375
                %v377 = vld [vmem:[%s303 + $0x220] sm:$0xff]
                %378 = vst [vmem:[%s304 + $0x120] sm:$0xff] %v377
                %v379 = vld [vmem:[%s303 + $0x228] sm:$0xff]
                %380 = vst [vmem:[%s304 + $0x128] sm:$0xff] %v379
                %v381 = vld [vmem:[%s303 + $0x230] sm:$0xff]
                %382 = vst [vmem:[%s304 + $0x130] sm:$0xff] %v381
                %v383 = vld [vmem:[%s303 + $0x238] sm:$0xff]
                %384 = vst [vmem:[%s304 + $0x138] sm:$0xff] %v383
                %v385 = vld [vmem:[%s303 + $0x240] sm:$0xff]
                %386 = vst [vmem:[%s304 + $0x140] sm:$0xff] %v385
                %v387 = vld [vmem:[%s303 + $0x248] sm:$0xff]
                %388 = vst [vmem:[%s304 + $0x148] sm:$0xff] %v387
                %v389 = vld [vmem:[%s303 + $0x250] sm:$0xff]
                %390 = vst [vmem:[%s304 + $0x150] sm:$0xff] %v389
                %v391 = vld [vmem:[%s303 + $0x258] sm:$0xff]
                %392 = vst [vmem:[%s304 + $0x158] sm:$0xff] %v391
                %v393 = vld [vmem:[%s303 + $0x260] sm:$0xff]
                %394 = vst [vmem:[%s304 + $0x160] sm:$0xff] %v393
                %v395 = vld [vmem:[%s303 + $0x268] sm:$0xff]
                %396 = vst [vmem:[%s304 + $0x168] sm:$0xff] %v395
                %v397 = vld [vmem:[%s303 + $0x270] sm:$0xff]
                %398 = vst [vmem:[%s304 + $0x170] sm:$0xff] %v397
                %v399 = vld [vmem:[%s303 + $0x278] sm:$0xff]
                %400 = vst [vmem:[%s304 + $0x178] sm:$0xff] %v399
                %v401 = vld [vmem:[%s303 + $0x300] sm:$0xff]
                %402 = vst [vmem:[%s304 + $0x180] sm:$0xff] %v401
                %v403 = vld [vmem:[%s303 + $0x308] sm:$0xff]
                %404 = vst [vmem:[%s304 + $0x188] sm:$0xff] %v403
                %v405 = vld [vmem:[%s303 + $0x310] sm:$0xff]
                %406 = vst [vmem:[%s304 + $0x190] sm:$0xff] %v405
                %v407 = vld [vmem:[%s303 + $0x318] sm:$0xff]
                %408 = vst [vmem:[%s304 + $0x198] sm:$0xff] %v407
                %v409 = vld [vmem:[%s303 + $0x320] sm:$0xff]
                %410 = vst [vmem:[%s304 + $0x1a0] sm:$0xff] %v409
                %v411 = vld [vmem:[%s303 + $0x328] sm:$0xff]
                %412 = vst [vmem:[%s304 + $0x1a8] sm:$0xff] %v411
                %v413 = vld [vmem:[%s303 + $0x330] sm:$0xff]
                %414 = vst [vmem:[%s304 + $0x1b0] sm:$0xff] %v413
                %v415 = vld [vmem:[%s303 + $0x338] sm:$0xff]
                %416 = vst [vmem:[%s304 + $0x1b8] sm:$0xff] %v415
                %v417 = vld [vmem:[%s303 + $0x340] sm:$0xff]
                %418 = vst [vmem:[%s304 + $0x1c0] sm:$0xff] %v417
                %v419 = vld [vmem:[%s303 + $0x348] sm:$0xff]
                %420 = vst [vmem:[%s304 + $0x1c8] sm:$0xff] %v419
                %v421 = vld [vmem:[%s303 + $0x350] sm:$0xff]
                %422 = vst [vmem:[%s304 + $0x1d0] sm:$0xff] %v421
                %v423 = vld [vmem:[%s303 + $0x358] sm:$0xff]
                %424 = vst [vmem:[%s304 + $0x1d8] sm:$0xff] %v423
                %v425 = vld [vmem:[%s303 + $0x360] sm:$0xff]
                %426 = vst [vmem:[%s304 + $0x1e0] sm:$0xff] %v425
                %v427 = vld [vmem:[%s303 + $0x368] sm:$0xff]
                %428 = vst [vmem:[%s304 + $0x1e8] sm:$0xff] %v427
                %v429 = vld [vmem:[%s303 + $0x370] sm:$0xff]
                %430 = vst [vmem:[%s304 + $0x1f0] sm:$0xff] %v429
                %v431 = vld [vmem:[%s303 + $0x378] sm:$0xff]
                %432 = vst [vmem:[%s304 + $0x1f8] sm:$0xff] %v431
                %v433 = vld [vmem:[%s303 + $0x400] sm:$0xff]
                %434 = vst [vmem:[%s304 + $0x200] sm:$0xff] %v433
                %v435 = vld [vmem:[%s303 + $0x408] sm:$0xff]
                %436 = vst [vmem:[%s304 + $0x208] sm:$0xff] %v435
                %v437 = vld [vmem:[%s303 + $0x410] sm:$0xff]
                %438 = vst [vmem:[%s304 + $0x210] sm:$0xff] %v437
                %v439 = vld [vmem:[%s303 + $0x418] sm:$0xff]
                %440 = vst [vmem:[%s304 + $0x218] sm:$0xff] %v439
                %v441 = vld [vmem:[%s303 + $0x420] sm:$0xff]
                %442 = vst [vmem:[%s304 + $0x220] sm:$0xff] %v441
                %v443 = vld [vmem:[%s303 + $0x428] sm:$0xff]
                %444 = vst [vmem:[%s304 + $0x228] sm:$0xff] %v443
                %v445 = vld [vmem:[%s303 + $0x430] sm:$0xff]
                %446 = vst [vmem:[%s304 + $0x230] sm:$0xff] %v445
                %v447 = vld [vmem:[%s303 + $0x438] sm:$0xff]
                %448 = vst [vmem:[%s304 + $0x238] sm:$0xff] %v447
                %v449 = vld [vmem:[%s303 + $0x440] sm:$0xff]
                %450 = vst [vmem:[%s304 + $0x240] sm:$0xff] %v449
                %v451 = vld [vmem:[%s303 + $0x448] sm:$0xff]
                %452 = vst [vmem:[%s304 + $0x248] sm:$0xff] %v451
                %v453 = vld [vmem:[%s303 + $0x450] sm:$0xff]
                %454 = vst [vmem:[%s304 + $0x250] sm:$0xff] %v453
                %v455 = vld [vmem:[%s303 + $0x458] sm:$0xff]
                %456 = vst [vmem:[%s304 + $0x258] sm:$0xff] %v455
                %v457 = vld [vmem:[%s303 + $0x460] sm:$0xff]
                %458 = vst [vmem:[%s304 + $0x260] sm:$0xff] %v457
                %v459 = vld [vmem:[%s303 + $0x468] sm:$0xff]
                %460 = vst [vmem:[%s304 + $0x268] sm:$0xff] %v459
                %v461 = vld [vmem:[%s303 + $0x470] sm:$0xff]
                %462 = vst [vmem:[%s304 + $0x270] sm:$0xff] %v461
                %v463 = vld [vmem:[%s303 + $0x478] sm:$0xff]
                %464 = vst [vmem:[%s304 + $0x278] sm:$0xff] %v463
                %v465 = vld [vmem:[%s303 + $0x500] sm:$0xff]
                %466 = vst [vmem:[%s304 + $0x280] sm:$0xff] %v465
                %v467 = vld [vmem:[%s303 + $0x508] sm:$0xff]
                %468 = vst [vmem:[%s304 + $0x288] sm:$0xff] %v467
                %v469 = vld [vmem:[%s303 + $0x510] sm:$0xff]
                %470 = vst [vmem:[%s304 + $0x290] sm:$0xff] %v469
                %v471 = vld [vmem:[%s303 + $0x518] sm:$0xff]
                %472 = vst [vmem:[%s304 + $0x298] sm:$0xff] %v471
                %v473 = vld [vmem:[%s303 + $0x520] sm:$0xff]
                %474 = vst [vmem:[%s304 + $0x2a0] sm:$0xff] %v473
                %v475 = vld [vmem:[%s303 + $0x528] sm:$0xff]
                %476 = vst [vmem:[%s304 + $0x2a8] sm:$0xff] %v475
                %v477 = vld [vmem:[%s303 + $0x530] sm:$0xff]
                %478 = vst [vmem:[%s304 + $0x2b0] sm:$0xff] %v477
                %v479 = vld [vmem:[%s303 + $0x538] sm:$0xff]
                %480 = vst [vmem:[%s304 + $0x2b8] sm:$0xff] %v479
                %v481 = vld [vmem:[%s303 + $0x540] sm:$0xff]
                %482 = vst [vmem:[%s304 + $0x2c0] sm:$0xff] %v481
                %v483 = vld [vmem:[%s303 + $0x548] sm:$0xff]
                %484 = vst [vmem:[%s304 + $0x2c8] sm:$0xff] %v483
                %v485 = vld [vmem:[%s303 + $0x550] sm:$0xff]
                %486 = vst [vmem:[%s304 + $0x2d0] sm:$0xff] %v485
                %v487 = vld [vmem:[%s303 + $0x558] sm:$0xff]
                %488 = vst [vmem:[%s304 + $0x2d8] sm:$0xff] %v487
                %v489 = vld [vmem:[%s303 + $0x560] sm:$0xff]
                %490 = vst [vmem:[%s304 + $0x2e0] sm:$0xff] %v489
                %v491 = vld [vmem:[%s303 + $0x568] sm:$0xff]
                %492 = vst [vmem:[%s304 + $0x2e8] sm:$0xff] %v491
                %v493 = vld [vmem:[%s303 + $0x570] sm:$0xff]
                %494 = vst [vmem:[%s304 + $0x2f0] sm:$0xff] %v493
                %v495 = vld [vmem:[%s303 + $0x578] sm:$0xff]
                %496 = vst [vmem:[%s304 + $0x2f8] sm:$0xff] %v495
                %v497 = vld [vmem:[%s303 + $0x600] sm:$0xff]
                %498 = vst [vmem:[%s304 + $0x300] sm:$0xff] %v497
                %v499 = vld [vmem:[%s303 + $0x608] sm:$0xff]
                %500 = vst [vmem:[%s304 + $0x308] sm:$0xff] %v499
                %v501 = vld [vmem:[%s303 + $0x610] sm:$0xff]
                %502 = vst [vmem:[%s304 + $0x310] sm:$0xff] %v501
                %v503 = vld [vmem:[%s303 + $0x618] sm:$0xff]
                %504 = vst [vmem:[%s304 + $0x318] sm:$0xff] %v503
                %v505 = vld [vmem:[%s303 + $0x620] sm:$0xff]
                %506 = vst [vmem:[%s304 + $0x320] sm:$0xff] %v505
                %v507 = vld [vmem:[%s303 + $0x628] sm:$0xff]
                %508 = vst [vmem:[%s304 + $0x328] sm:$0xff] %v507
                %v509 = vld [vmem:[%s303 + $0x630] sm:$0xff]
                %510 = vst [vmem:[%s304 + $0x330] sm:$0xff] %v509
                %v511 = vld [vmem:[%s303 + $0x638] sm:$0xff]
                %512 = vst [vmem:[%s304 + $0x338] sm:$0xff] %v511
                %v513 = vld [vmem:[%s303 + $0x640] sm:$0xff]
                %514 = vst [vmem:[%s304 + $0x340] sm:$0xff] %v513
                %v515 = vld [vmem:[%s303 + $0x648] sm:$0xff]
                %516 = vst [vmem:[%s304 + $0x348] sm:$0xff] %v515
                %v517 = vld [vmem:[%s303 + $0x650] sm:$0xff]
                %518 = vst [vmem:[%s304 + $0x350] sm:$0xff] %v517
                %v519 = vld [vmem:[%s303 + $0x658] sm:$0xff]
                %520 = vst [vmem:[%s304 + $0x358] sm:$0xff] %v519
                %v521 = vld [vmem:[%s303 + $0x660] sm:$0xff]
                %522 = vst [vmem:[%s304 + $0x360] sm:$0xff] %v521
                %v523 = vld [vmem:[%s303 + $0x668] sm:$0xff]
                %524 = vst [vmem:[%s304 + $0x368] sm:$0xff] %v523
                %v525 = vld [vmem:[%s303 + $0x670] sm:$0xff]
                %526 = vst [vmem:[%s304 + $0x370] sm:$0xff] %v525
                %v527 = vld [vmem:[%s303 + $0x678] sm:$0xff]
                %528 = vst [vmem:[%s304 + $0x378] sm:$0xff] %v527
                %v529 = vld [vmem:[%s303 + $0x700] sm:$0xff]
                %530 = vst [vmem:[%s304 + $0x380] sm:$0xff] %v529
                %v531 = vld [vmem:[%s303 + $0x708] sm:$0xff]
                %532 = vst [vmem:[%s304 + $0x388] sm:$0xff] %v531
                %v533 = vld [vmem:[%s303 + $0x710] sm:$0xff]
                %534 = vst [vmem:[%s304 + $0x390] sm:$0xff] %v533
                %v535 = vld [vmem:[%s303 + $0x718] sm:$0xff]
                %536 = vst [vmem:[%s304 + $0x398] sm:$0xff] %v535
                %v537 = vld [vmem:[%s303 + $0x720] sm:$0xff]
                %538 = vst [vmem:[%s304 + $0x3a0] sm:$0xff] %v537
                %v539 = vld [vmem:[%s303 + $0x728] sm:$0xff]
                %540 = vst [vmem:[%s304 + $0x3a8] sm:$0xff] %v539
                %v541 = vld [vmem:[%s303 + $0x730] sm:$0xff]
                %542 = vst [vmem:[%s304 + $0x3b0] sm:$0xff] %v541
                %v543 = vld [vmem:[%s303 + $0x738] sm:$0xff]
                %544 = vst [vmem:[%s304 + $0x3b8] sm:$0xff] %v543
                %v545 = vld [vmem:[%s303 + $0x740] sm:$0xff]
                %546 = vst [vmem:[%s304 + $0x3c0] sm:$0xff] %v545
                %v547 = vld [vmem:[%s303 + $0x748] sm:$0xff]
                %548 = vst [vmem:[%s304 + $0x3c8] sm:$0xff] %v547
                %v549 = vld [vmem:[%s303 + $0x750] sm:$0xff]
                %550 = vst [vmem:[%s304 + $0x3d0] sm:$0xff] %v549
                %v551 = vld [vmem:[%s303 + $0x758] sm:$0xff]
                %552 = vst [vmem:[%s304 + $0x3d8] sm:$0xff] %v551
                %v553 = vld [vmem:[%s303 + $0x760] sm:$0xff]
                %554 = vst [vmem:[%s304 + $0x3e0] sm:$0xff] %v553
                %v555 = vld [vmem:[%s303 + $0x768] sm:$0xff]
                %556 = vst [vmem:[%s304 + $0x3e8] sm:$0xff] %v555
                %v557 = vld [vmem:[%s303 + $0x770] sm:$0xff]
                %558 = vst [vmem:[%s304 + $0x3f0] sm:$0xff] %v557
                %v559 = vld [vmem:[%s303 + $0x778] sm:$0xff]
                %560 = vst [vmem:[%s304 + $0x3f8] sm:$0xff] %v559
              $region57: #{tpu_custom_call.1} parent=51 // loop_footer
                %s302 = sadd.s32 1, %s298
              $region58: #{tpu_custom_call.1} parent=51 // loop_footer_branch
                %297 = sbr.rel target = $region54
              $region59: #{tpu_custom_call.1} parent=51 // loop_exit
                _
            $region52: #{tpu_custom_call.1} parent=43 // pred_fallthru
              _
          $region44: #{tpu_custom_call.1} parent=39 // pred_fallthru
            _
          %829 = vnop
        $region40: #{tpu_custom_call.1} parent=35 // pred_fallthru
          _
      $region36: #{tpu_custom_call.1} parent=5 // pred_fallthru
        _
      %p830 = scmp.le.s32.totalorder 1, %s21
      %p831 = scmp.lt.s32.totalorder %s21, 3
      %p832 = pnand %p830, %p831
      %p833 = pneg %p832
      // Predicated region
      $region75: #{tpu_custom_call.1} parent=5 // pred_check
        _
      $region76: #{tpu_custom_call.1} parent=5 // pred_check_branch
        %835 = sbr.rel (%p832) target = $region78
      $region77: #{tpu_custom_call.1} parent=5 // pred_region
        %s836 = ssub.s32 %s21, 1
        %s837 = sand.u32 %s46, 1
        %s838 = sand.u32 %s46, 1
        %s839 = smul.addr %s838, 1024
        %s840 = scalar_lea.vmem [#allocation4], %s839
        // Predicated region
        $region79: #{tpu_custom_call.1} parent=77 // pred_check
          %p841 = pneg %p59
        $region80: #{tpu_custom_call.1} parent=77 // pred_check_branch
          %843 = sbr.rel (%p841) target = $region82
        $region81: #{tpu_custom_call.1} parent=77 // pred_region
          _
        $region82: #{tpu_custom_call.1} parent=77 // pred_fallthru
          _
        // Predicated region
        $region83: #{tpu_custom_call.1} parent=77 // pred_check
          %p844 = pneg %p174
        $region84: #{tpu_custom_call.1} parent=77 // pred_check_branch
          %846 = sbr.rel (%p844) target = $region86
        $region85: #{tpu_custom_call.1} parent=77 // pred_region
          %847 = dma.done [#allocation7], 16
        $region86: #{tpu_custom_call.1} parent=77 // pred_fallthru
          _
        %848 = sfence
        %s849 = sand.u32 %s46, 1
        %s850 = sand.u32 %s46, 1
        %s851 = smul.addr %s850, 1024
        %s852 = scalar_lea.vmem [#allocation4], %s851
        %p853 = pneg %p59
        %p854 = pneg %p56
        %s855 = smul.u32 2, %s31
        %p856 = scmp.lt.s32.totalorder %s855, 1
        %s857 = scalar_select %p856, %s855, 1
        %s858 = smul.addr %s857, 8
        %s859 = scalar_lea.vmem %s1, %s858
        %p860 = pneg %p85
        %p861 = pneg %p82
        %p862 = pneg %p106
        %p863 = pneg %p103
        %s864 = smul.u32 2, %s31
        %p865 = scmp.lt.s32.totalorder %s864, 1
        %s866 = scalar_select %p865, %s864, 1
        %s867 = smul.addr %s866, 8
        %s868 = scalar_lea.vmem %s3, %s867
        %p869 = pneg %p132
        %p870 = pneg %p129
        %p871 = pneg %p153
        %p872 = pneg %p150
        %p873 = pneg %p174
        %p874 = pneg %p171
        %p875 = pneg %p200
        %p876 = pneg %p197
        %s877 = sand.u32 %s187, 1
        %s878 = scalar_lea.sflag [#allocation6], %s877
        %s879 = sand.u32 %s187, 1
        %s880 = smul.addr %s879, 8
        %s881 = scalar_lea.vmem [#allocation8], %s880
        %p882 = pneg %p226
        %p883 = pneg %p223
        %s884 = sand.u32 %s213, 1
        %s885 = scalar_lea.sflag [#allocation10], %s884
        %s886 = sand.u32 %s213, 1
        %s887 = smul.addr %s886, 8
        %s888 = scalar_lea.vmem [#allocation9], %s887
        %s889 = smul.u32 16, %s30
        %s890 = smul.u32 2, %s31
        %p891 = scmp.lt.s32.totalorder %s890, 1
        %s892 = scalar_select %p891, %s890, 1
        %s893 = smul.addr %s892, 8
        %s894 = scalar_lea.vmem %s1, %s893
        %s895 = smul.u32 2, %s31
        %s896 = smul.u32 2, %s31
        %p897 = scmp.lt.s32.totalorder %s896, 1
        %s898 = scalar_select %p897, %s896, 1
        %s899 = smul.addr %s898, 8
        %s900 = scalar_lea.vmem %s3, %s899
        %s901 = smul.u32 2, %s31
        %v902 = vld [vmem:[%s840] sm:$0xff]
        %v903 = vld [vmem:[%s840 + $0x8] sm:$0xff]
        %v904 = vld [vmem:[%s840 + $0x10] sm:$0xff]
        %v905 = vld [vmem:[%s840 + $0x18] sm:$0xff]
        %v906 = vld [vmem:[%s840 + $0x20] sm:$0xff]
        %v907 = vld [vmem:[%s840 + $0x28] sm:$0xff]
        %v908 = vld [vmem:[%s840 + $0x30] sm:$0xff]
        %v909 = vld [vmem:[%s840 + $0x38] sm:$0xff]
        %v910 = vld [vmem:[%s840 + $0x40] sm:$0xff]
        %v911 = vld [vmem:[%s840 + $0x48] sm:$0xff]
        %v912 = vld [vmem:[%s840 + $0x50] sm:$0xff]
        %v913 = vld [vmem:[%s840 + $0x58] sm:$0xff]
        %v914 = vld [vmem:[%s840 + $0x60] sm:$0xff]
        %v915 = vld [vmem:[%s840 + $0x68] sm:$0xff]
        %v916 = vld [vmem:[%s840 + $0x70] sm:$0xff]
        %v917 = vld [vmem:[%s840 + $0x78] sm:$0xff]
        %v918 = vld [vmem:[%s840 + $0x80] sm:$0xff]
        %v919 = vld [vmem:[%s840 + $0x88] sm:$0xff]
        %v920 = vld [vmem:[%s840 + $0x90] sm:$0xff]
        %v921 = vld [vmem:[%s840 + $0x98] sm:$0xff]
        %v922 = vld [vmem:[%s840 + $0xa0] sm:$0xff]
        %v923 = vld [vmem:[%s840 + $0xa8] sm:$0xff]
        %v924 = vld [vmem:[%s840 + $0xb0] sm:$0xff]
        %v925 = vld [vmem:[%s840 + $0xb8] sm:$0xff]
        %v926 = vld [vmem:[%s840 + $0xc0] sm:$0xff]
        %v927 = vld [vmem:[%s840 + $0xc8] sm:$0xff]
        %v928 = vld [vmem:[%s840 + $0xd0] sm:$0xff]
        %v929 = vld [vmem:[%s840 + $0xd8] sm:$0xff]
        %v930 = vld [vmem:[%s840 + $0xe0] sm:$0xff]
        %v931 = vld [vmem:[%s840 + $0xe8] sm:$0xff]
        %v932 = vld [vmem:[%s840 + $0xf0] sm:$0xff]
        %v933 = vld [vmem:[%s840 + $0xf8] sm:$0xff]
        %v934 = vld [vmem:[%s840 + $0x100] sm:$0xff]
        %v935 = vld [vmem:[%s840 + $0x108] sm:$0xff]
        %v936 = vld [vmem:[%s840 + $0x110] sm:$0xff]
        %v937 = vld [vmem:[%s840 + $0x118] sm:$0xff]
        %v938 = vld [vmem:[%s840 + $0x120] sm:$0xff]
        %v939 = vld [vmem:[%s840 + $0x128] sm:$0xff]
        %v940 = vld [vmem:[%s840 + $0x130] sm:$0xff]
        %v941 = vld [vmem:[%s840 + $0x138] sm:$0xff]
        %v942 = vld [vmem:[%s840 + $0x140] sm:$0xff]
        %v943 = vld [vmem:[%s840 + $0x148] sm:$0xff]
        %v944 = vld [vmem:[%s840 + $0x150] sm:$0xff]
        %v945 = vld [vmem:[%s840 + $0x158] sm:$0xff]
        %v946 = vld [vmem:[%s840 + $0x160] sm:$0xff]
        %v947 = vld [vmem:[%s840 + $0x168] sm:$0xff]
        %v948 = vld [vmem:[%s840 + $0x170] sm:$0xff]
        %v949 = vld [vmem:[%s840 + $0x178] sm:$0xff]
        %v950 = vld [vmem:[%s840 + $0x180] sm:$0xff]
        %v951 = vld [vmem:[%s840 + $0x188] sm:$0xff]
        %v952 = vld [vmem:[%s840 + $0x190] sm:$0xff]
        %v953 = vld [vmem:[%s840 + $0x198] sm:$0xff]
        %v954 = vld [vmem:[%s840 + $0x1a0] sm:$0xff]
        %v955 = vld [vmem:[%s840 + $0x1a8] sm:$0xff]
        %v956 = vld [vmem:[%s840 + $0x1b0] sm:$0xff]
        %v957 = vld [vmem:[%s840 + $0x1b8] sm:$0xff]
        %v958 = vld [vmem:[%s840 + $0x1c0] sm:$0xff]
        %v959 = vld [vmem:[%s840 + $0x1c8] sm:$0xff]
        %v960 = vld [vmem:[%s840 + $0x1d0] sm:$0xff]
        %v961 = vld [vmem:[%s840 + $0x1d8] sm:$0xff]
        %v962 = vld [vmem:[%s840 + $0x1e0] sm:$0xff]
        %v963 = vld [vmem:[%s840 + $0x1e8] sm:$0xff]
        %v964 = vld [vmem:[%s840 + $0x1f0] sm:$0xff]
        %v965 = vld [vmem:[%s840 + $0x1f8] sm:$0xff]
        %v966 = vld [vmem:[%s840 + $0x200] sm:$0xff]
        %v967 = vld [vmem:[%s840 + $0x208] sm:$0xff]
        %v968 = vld [vmem:[%s840 + $0x210] sm:$0xff]
        %v969 = vld [vmem:[%s840 + $0x218] sm:$0xff]
        %v970 = vld [vmem:[%s840 + $0x220] sm:$0xff]
        %v971 = vld [vmem:[%s840 + $0x228] sm:$0xff]
        %v972 = vld [vmem:[%s840 + $0x230] sm:$0xff]
        %v973 = vld [vmem:[%s840 + $0x238] sm:$0xff]
        %v974 = vld [vmem:[%s840 + $0x240] sm:$0xff]
        %v975 = vld [vmem:[%s840 + $0x248] sm:$0xff]
        %v976 = vld [vmem:[%s840 + $0x250] sm:$0xff]
        %v977 = vld [vmem:[%s840 + $0x258] sm:$0xff]
        %v978 = vld [vmem:[%s840 + $0x260] sm:$0xff]
        %v979 = vld [vmem:[%s840 + $0x268] sm:$0xff]
        %v980 = vld [vmem:[%s840 + $0x270] sm:$0xff]
        %v981 = vld [vmem:[%s840 + $0x278] sm:$0xff]
        %v982 = vld [vmem:[%s840 + $0x280] sm:$0xff]
        %v983 = vld [vmem:[%s840 + $0x288] sm:$0xff]
        %v984 = vld [vmem:[%s840 + $0x290] sm:$0xff]
        %v985 = vld [vmem:[%s840 + $0x298] sm:$0xff]
        %v986 = vld [vmem:[%s840 + $0x2a0] sm:$0xff]
        %v987 = vld [vmem:[%s840 + $0x2a8] sm:$0xff]
        %v988 = vld [vmem:[%s840 + $0x2b0] sm:$0xff]
        %v989 = vld [vmem:[%s840 + $0x2b8] sm:$0xff]
        %v990 = vld [vmem:[%s840 + $0x2c0] sm:$0xff]
        %v991 = vld [vmem:[%s840 + $0x2c8] sm:$0xff]
        %v992 = vld [vmem:[%s840 + $0x2d0] sm:$0xff]
        %v993 = vld [vmem:[%s840 + $0x2d8] sm:$0xff]
        %v994 = vld [vmem:[%s840 + $0x2e0] sm:$0xff]
        %v995 = vld [vmem:[%s840 + $0x2e8] sm:$0xff]
        %v996 = vld [vmem:[%s840 + $0x2f0] sm:$0xff]
        %v997 = vld [vmem:[%s840 + $0x2f8] sm:$0xff]
        %v998 = vld [vmem:[%s840 + $0x300] sm:$0xff]
        %v999 = vld [vmem:[%s840 + $0x308] sm:$0xff]
        %v1000 = vld [vmem:[%s840 + $0x310] sm:$0xff]
        %v1001 = vld [vmem:[%s840 + $0x318] sm:$0xff]
        %v1002 = vld [vmem:[%s840 + $0x320] sm:$0xff]
        %v1003 = vld [vmem:[%s840 + $0x328] sm:$0xff]
        %v1004 = vld [vmem:[%s840 + $0x330] sm:$0xff]
        %v1005 = vld [vmem:[%s840 + $0x338] sm:$0xff]
        %v1006 = vld [vmem:[%s840 + $0x340] sm:$0xff]
        %v1007 = vld [vmem:[%s840 + $0x348] sm:$0xff]
        %v1008 = vld [vmem:[%s840 + $0x350] sm:$0xff]
        %v1009 = vld [vmem:[%s840 + $0x358] sm:$0xff]
        %v1010 = vld [vmem:[%s840 + $0x360] sm:$0xff]
        %v1011 = vld [vmem:[%s840 + $0x368] sm:$0xff]
        %v1012 = vld [vmem:[%s840 + $0x370] sm:$0xff]
        %v1013 = vld [vmem:[%s840 + $0x378] sm:$0xff]
        %v1014 = vld [vmem:[%s840 + $0x380] sm:$0xff]
        %v1015 = vld [vmem:[%s840 + $0x388] sm:$0xff]
        %v1016 = vld [vmem:[%s840 + $0x390] sm:$0xff]
        %v1017 = vld [vmem:[%s840 + $0x398] sm:$0xff]
        %v1018 = vld [vmem:[%s840 + $0x3a0] sm:$0xff]
        %v1019 = vld [vmem:[%s840 + $0x3a8] sm:$0xff]
        %v1020 = vld [vmem:[%s840 + $0x3b0] sm:$0xff]
        %v1021 = vld [vmem:[%s840 + $0x3b8] sm:$0xff]
        %v1022 = vld [vmem:[%s840 + $0x3c0] sm:$0xff]
        %v1023 = vld [vmem:[%s840 + $0x3c8] sm:$0xff]
        %v1024 = vld [vmem:[%s840 + $0x3d0] sm:$0xff]
        %v1025 = vld [vmem:[%s840 + $0x3d8] sm:$0xff]
        %v1026 = vld [vmem:[%s840 + $0x3e0] sm:$0xff]
        %v1027 = vld [vmem:[%s840 + $0x3e8] sm:$0xff]
        %v1028 = vld [vmem:[%s840 + $0x3f0] sm:$0xff]
        %v1029 = vld [vmem:[%s840 + $0x3f8] sm:$0xff]
        %v1030 = vld [vmem:[%s894] sm:$0xff]
        %v1031 = vld [vmem:[%s894 + $0x8] sm:$0xff]
        %vm1032 = vcmask 64512
        %v1034 = vsel %vm1032, %v902, 0
        %v1037 = vsel %vm1032, %v903, 0
        %v1040 = vsel %vm1032, %v904, 0
        %v1043 = vsel %vm1032, %v905, 0
        %v1046 = vsel %vm1032, %v906, 0
        %v1049 = vsel %vm1032, %v907, 0
        %v1052 = vsel %vm1032, %v908, 0
        %v1055 = vsel %vm1032, %v909, 0
        %v1058 = vsel %vm1032, %v910, 0
        %v1061 = vsel %vm1032, %v911, 0
        %v1064 = vsel %vm1032, %v912, 0
        %v1067 = vsel %vm1032, %v913, 0
        %v1070 = vsel %vm1032, %v914, 0
        %v1073 = vsel %vm1032, %v915, 0
        %v1076 = vsel %vm1032, %v916, 0
        %v1079 = vsel %vm1032, %v917, 0
        %v1082 = vsel %vm1032, %v918, 0
        %v1085 = vsel %vm1032, %v919, 0
        %v1088 = vsel %vm1032, %v920, 0
        %v1091 = vsel %vm1032, %v921, 0
        %v1094 = vsel %vm1032, %v922, 0
        %v1097 = vsel %vm1032, %v923, 0
        %v1100 = vsel %vm1032, %v924, 0
        %v1103 = vsel %vm1032, %v925, 0
        %v1106 = vsel %vm1032, %v926, 0
        %v1109 = vsel %vm1032, %v927, 0
        %v1112 = vsel %vm1032, %v928, 0
        %v1115 = vsel %vm1032, %v929, 0
        %v1118 = vsel %vm1032, %v930, 0
        %v1121 = vsel %vm1032, %v931, 0
        %v1124 = vsel %vm1032, %v932, 0
        %v1127 = vsel %vm1032, %v933, 0
        %v1130 = vsel %vm1032, %v934, 0
        %v1133 = vsel %vm1032, %v935, 0
        %v1136 = vsel %vm1032, %v936, 0
        %v1139 = vsel %vm1032, %v937, 0
        %v1142 = vsel %vm1032, %v938, 0
        %v1145 = vsel %vm1032, %v939, 0
        %v1148 = vsel %vm1032, %v940, 0
        %v1151 = vsel %vm1032, %v941, 0
        %v1154 = vsel %vm1032, %v942, 0
        %v1157 = vsel %vm1032, %v943, 0
        %v1160 = vsel %vm1032, %v944, 0
        %v1163 = vsel %vm1032, %v945, 0
        %v1166 = vsel %vm1032, %v946, 0
        %v1169 = vsel %vm1032, %v947, 0
        %v1172 = vsel %vm1032, %v948, 0
        %v1175 = vsel %vm1032, %v949, 0
        %v1178 = vsel %vm1032, %v950, 0
        %v1181 = vsel %vm1032, %v951, 0
        %v1184 = vsel %vm1032, %v952, 0
        %v1187 = vsel %vm1032, %v953, 0
        %v1190 = vsel %vm1032, %v954, 0
        %v1193 = vsel %vm1032, %v955, 0
        %v1196 = vsel %vm1032, %v956, 0
        %v1199 = vsel %vm1032, %v957, 0
        %v1202 = vsel %vm1032, %v958, 0
        %v1205 = vsel %vm1032, %v959, 0
        %v1208 = vsel %vm1032, %v960, 0
        %v1211 = vsel %vm1032, %v961, 0
        %v1214 = vsel %vm1032, %v962, 0
        %v1217 = vsel %vm1032, %v963, 0
        %v1220 = vsel %vm1032, %v964, 0
        %v1223 = vsel %vm1032, %v965, 0
        %v1226 = vsel %vm1032, %v966, 0
        %v1229 = vsel %vm1032, %v967, 0
        %v1232 = vsel %vm1032, %v968, 0
        %v1235 = vsel %vm1032, %v969, 0
        %v1238 = vsel %vm1032, %v970, 0
        %v1241 = vsel %vm1032, %v971, 0
        %v1244 = vsel %vm1032, %v972, 0
        %v1247 = vsel %vm1032, %v973, 0
        %v1250 = vsel %vm1032, %v974, 0
        %v1253 = vsel %vm1032, %v975, 0
        %v1256 = vsel %vm1032, %v976, 0
        %v1259 = vsel %vm1032, %v977, 0
        %v1262 = vsel %vm1032, %v978, 0
        %v1265 = vsel %vm1032, %v979, 0
        %v1268 = vsel %vm1032, %v980, 0
        %v1271 = vsel %vm1032, %v981, 0
        %v1274 = vsel %vm1032, %v982, 0
        %v1277 = vsel %vm1032, %v983, 0
        %v1280 = vsel %vm1032, %v984, 0
        %v1283 = vsel %vm1032, %v985, 0
        %v1286 = vsel %vm1032, %v986, 0
        %v1289 = vsel %vm1032, %v987, 0
        %v1292 = vsel %vm1032, %v988, 0
        %v1295 = vsel %vm1032, %v989, 0
        %v1298 = vsel %vm1032, %v990, 0
        %v1301 = vsel %vm1032, %v991, 0
        %v1304 = vsel %vm1032, %v992, 0
        %v1307 = vsel %vm1032, %v993, 0
        %v1310 = vsel %vm1032, %v994, 0
        %v1313 = vsel %vm1032, %v995, 0
        %v1316 = vsel %vm1032, %v996, 0
        %v1319 = vsel %vm1032, %v997, 0
        %v1322 = vsel %vm1032, %v998, 0
        %v1325 = vsel %vm1032, %v999, 0
        %v1328 = vsel %vm1032, %v1000, 0
        %v1331 = vsel %vm1032, %v1001, 0
        %v1334 = vsel %vm1032, %v1002, 0
        %v1337 = vsel %vm1032, %v1003, 0
        %v1340 = vsel %vm1032, %v1004, 0
        %v1343 = vsel %vm1032, %v1005, 0
        %v1346 = vsel %vm1032, %v1006, 0
        %v1349 = vsel %vm1032, %v1007, 0
        %v1352 = vsel %vm1032, %v1008, 0
        %v1355 = vsel %vm1032, %v1009, 0
        %v1358 = vsel %vm1032, %v1010, 0
        %v1361 = vsel %vm1032, %v1011, 0
        %v1364 = vsel %vm1032, %v1012, 0
        %v1367 = vsel %vm1032, %v1013, 0
        %v1370 = vsel %vm1032, %v1014, 0
        %v1373 = vsel %vm1032, %v1015, 0
        %v1376 = vsel %vm1032, %v1016, 0
        %v1379 = vsel %vm1032, %v1017, 0
        %v1382 = vsel %vm1032, %v1018, 0
        %v1385 = vsel %vm1032, %v1019, 0
        %v1388 = vsel %vm1032, %v1020, 0
        %v1391 = vsel %vm1032, %v1021, 0
        %v1394 = vsel %vm1032, %v1022, 0
        %v1397 = vsel %vm1032, %v1023, 0
        %v1400 = vsel %vm1032, %v1024, 0
        %v1403 = vsel %vm1032, %v1025, 0
        %v1406 = vsel %vm1032, %v1026, 0
        %v1409 = vsel %vm1032, %v1027, 0
        %v1412 = vsel %vm1032, %v1028, 0
        %v1415 = vsel %vm1032, %v1029, 0
        %1417 = vmatprep.subr.mxu0 %v1031
        %1418 = vmatpush1.msra.mxu0 %v1030
        %1419 = vmatprep.subr.mxu0 0.0
        %1420 = vmatpush1.msra.mxu0 0.0
        %1421 = vmatprep.subr.mxu0 0.0
        %1422 = vmatpush1.msra.mxu0 0.0
        %1423 = vmatprep.subr.mxu0 0.0
        %1424 = vmatpush1.msra.mxu0 0.0
        %1425 = vmatprep.subr.mxu0 0.0
        %1426 = vmatpush1.msra.mxu0 0.0
        %1427 = vmatprep.subr.mxu0 0.0
        %1428 = vmatpush1.msra.mxu0 0.0
        %1429 = vmatprep.subr.mxu0 0.0
        %1430 = vmatpush1.msra.mxu0 0.0
        %1431 = vmatprep.subr.mxu0 0.0
        %1432 = vmatpush1.msra.mxu0 0.0
        %1433 = vmatprep.subr.mxu0 0.0
        %1434 = vmatpush1.msra.mxu0 0.0
        %1435 = vmatprep.subr.mxu0 0.0
        %1436 = vmatpush1.msra.mxu0 0.0
        %1437 = vmatprep.subr.mxu0 0.0
        %1438 = vmatpush1.msra.mxu0 0.0
        %1439 = vmatprep.subr.mxu0 0.0
        %1440 = vmatpush1.msra.mxu0 0.0
        %1441 = vmatprep.subr.mxu0 0.0
        %1442 = vmatpush1.msra.mxu0 0.0
        %1443 = vmatprep.subr.mxu0 0.0
        %1444 = vmatpush1.msra.mxu0 0.0
        %1445 = vmatprep.subr.mxu0 0.0
        %1446 = vmatpush1.msra.mxu0 0.0
        %1447 = vmatprep.subr.mxu0 0.0
        %1448 = vmatpush1.msra.mxu0 0.0
        %1449 = vmatprep.subr.mxu0 0.0
        %1450 = vmatpush1.msra.mxu0 0.0
        %1451 = vmatprep.subr.mxu0 0.0
        %1452 = vmatpush1.msra.mxu0 0.0
        %1453 = vmatprep.subr.mxu0 0.0
        %1454 = vmatpush1.msra.mxu0 0.0
        %1455 = vmatprep.subr.mxu0 0.0
        %1456 = vmatpush1.msra.mxu0 0.0
        %1457 = vmatprep.subr.mxu0 0.0
        %1458 = vmatpush1.msra.mxu0 0.0
        %1459 = vmatprep.subr.mxu0 0.0
        %1460 = vmatpush1.msra.mxu0 0.0
        %1461 = vmatprep.subr.mxu0 0.0
        %1462 = vmatpush1.msra.mxu0 0.0
        %1463 = vmatprep.subr.mxu0 0.0
        %1464 = vmatpush1.msra.mxu0 0.0
        %1465 = vmatprep.subr.mxu0 0.0
        %1466 = vmatpush1.msra.mxu0 0.0
        %1467 = vmatprep.subr.mxu0 0.0
        %1468 = vmatpush1.msra.mxu0 0.0
        %1469 = vmatprep.subr.mxu0 0.0
        %1470 = vmatpush1.msra.mxu0 0.0
        %1471 = vmatprep.subr.mxu0 0.0
        %1472 = vmatpush1.msra.mxu0 0.0
        %1473 = vmatprep.subr.mxu0 0.0
        %1474 = vmatpush1.msra.mxu0 0.0
        %1475 = vmatprep.subr.mxu0 0.0
        %1476 = vmatpush1.msra.mxu0 0.0
        %1477 = vmatprep.subr.mxu0 0.0
        %1478 = vmatpush1.msra.mxu0 0.0
        %1479 = vmatprep.subr.mxu0 0.0
        %1480 = vmatpush1.msra.mxu0 0.0
        %1481 = vmatprep.mubr.f32.mxu0 0.0
        %1482 = vmatmul.mubr.f32.gmra.mrb[0].mxu0 %v1034
        %v1483 = vpop.f32.mrb[0].mxu0
        %v1484 = vadd.f32 0.0, %v1483
        %v1485 = vpop.f32.mrb[0].mxu0
        %v1486 = vadd.f32 0.0, %v1485
        %1487 = vmatprep.mubr.f32.mxu0 0.0
        %1488 = vmatmul.mubr.f32.gmra.mrb[0].mxu0 %v1037
        %v1489 = vpop.f32.mrb[0].mxu0
        %v1490 = vadd.f32 0.0, %v1489
        %v1491 = vpop.f32.mrb[0].mxu0
        %v1492 = vadd.f32 0.0, %v1491
        %1493 = vmatprep.mubr.f32.mxu0 0.0
        %1494 = vmatmul.mubr.f32.gmra.mrb[0].mxu0 %v1040
        %v1495 = vpop.f32.mrb[0].mxu0
        %v1496 = vadd.f32 0.0, %v1495
        %v1497 = vpop.f32.mrb[0].mxu0
        %v1498 = vadd.f32 0.0, %v1497
        %1499 = vmatprep.mubr.f32.mxu0 0.0
        %1500 = vmatmul.mubr.f32.gmra.mrb[0].mxu0 %v1043
        %v1501 = vpop.f32.mrb[0].mxu0
        %v1502 = vadd.f32 0.0, %v1501
        %v1503 = vpop.f32.mrb[0].mxu0
        %v1504 = vadd.f32 0.0, %v1503
        %1505 = vmatprep.mubr.f32.mxu0 0.0
        %1506 = vmatmul.mubr.f32.gmra.mrb[0].mxu0 %v1046
        %v1507 = vpop.f32.mrb[0].mxu0
        %v1508 = vadd.f32 0.0, %v1507
        %v1509 = vpop.f32.mrb[0].mxu0
        %v1510 = vadd.f32 0.0, %v1509
        %1511 = vmatprep.mubr.f32.mxu0 0.0
        %1512 = vmatmul.mubr.f32.gmra.mrb[0].mxu0 %v1049
        %v1513 = vpop.f32.mrb[0].mxu0
        %v1514 = vadd.f32 0.0, %v1513
        %v1515 = vpop.f32.mrb[0].mxu0
        %v1516 = vadd.f32 0.0, %v1515
        %1517 = vmatprep.mubr.f32.mxu0 0.0
        %1518 = vmatmul.mubr.f32.gmra.mrb[0].mxu0 %v1052
        %v1519 = vpop.f32.mrb[0].mxu0
        %v1520 = vadd.f32 0.0, %v1519
        %v1521 = vpop.f32.mrb[0].mxu0
        %v1522 = vadd.f32 0.0, %v1521
        %1523 = vmatprep.mubr.f32.mxu0 0.0
        %1524 = vmatmul.mubr.f32.gmra.mrb[0].mxu0 %v1055
        %v1525 = vpop.f32.mrb[0].mxu0
        %v1526 = vadd.f32 0.0, %v1525
        %v1527 = vpop.f32.mrb[0].mxu0
        %v1528 = vadd.f32 0.0, %v1527
        %1529 = vmatprep.mubr.f32.mxu0 0.0
        %1530 = vmatmul.mubr.f32.gmra.mrb[0].mxu0 %v1058
        %v1531 = vpop.f32.mrb[0].mxu0
        %v1532 = vadd.f32 0.0, %v1531
        %v1533 = vpop.f32.mrb[0].mxu0
        %v1534 = vadd.f32 0.0, %v1533
        %1535 = vmatprep.mubr.f32.mxu0 0.0
        %1536 = vmatmul.mubr.f32.gmra.mrb[0].mxu0 %v1061
        %v1537 = vpop.f32.mrb[0].mxu0
        %v1538 = vadd.f32 0.0, %v1537
        %v1539 = vpop.f32.mrb[0].mxu0
        %v1540 = vadd.f32 0.0, %v1539
        %1541 = vmatprep.mubr.f32.mxu0 0.0
        %1542 = vmatmul.mubr.f32.gmra.mrb[0].mxu0 %v1064
        %v1543 = vpop.f32.mrb[0].mxu0
        %v1544 = vadd.f32 0.0, %v1543
        %v1545 = vpop.f32.mrb[0].mxu0
        %v1546 = vadd.f32 0.0, %v1545
        %1547 = vmatprep.mubr.f32.mxu0 0.0
        %1548 = vmatmul.mubr.f32.gmra.mrb[0].mxu0 %v1067
        %v1549 = vpop.f32.mrb[0].mxu0
        %v1550 = vadd.f32 0.0, %v1549
        %v1551 = vpop.f32.mrb[0].mxu0
        %v1552 = vadd.f32 0.0, %v1551
        %1553 = vmatprep.mubr.f32.mxu0 0.0
        %1554 = vmatmul.mubr.f32.gmra.mrb[0].mxu0 %v1070
        %v1555 = vpop.f32.mrb[0].mxu0
        %v1556 = vadd.f32 0.0, %v1555
        %v1557 = vpop.f32.mrb[0].mxu0
        %v1558 = vadd.f32 0.0, %v1557
        %1559 = vmatprep.mubr.f32.mxu0 0.0
        %1560 = vmatmul.mubr.f32.gmra.mrb[0].mxu0 %v1073
        %v1561 = vpop.f32.mrb[0].mxu0
        %v1562 = vadd.f32 0.0, %v1561
        %v1563 = vpop.f32.mrb[0].mxu0
        %v1564 = vadd.f32 0.0, %v1563
        %1565 = vmatprep.mubr.f32.mxu0 0.0
        %1566 = vmatmul.mubr.f32.gmra.mrb[0].mxu0 %v1076
        %v1567 = vpop.f32.mrb[0].mxu0
        %v1568 = vadd.f32 0.0, %v1567
        %v1569 = vpop.f32.mrb[0].mxu0
        %v1570 = vadd.f32 0.0, %v1569
        %1571 = vmatprep.mubr.f32.mxu0 0.0
        %1572 = vmatmul.mubr.f32.gmra.mrb[0].mxu0 %v1079
        %v1573 = vpop.f32.mrb[0].mxu0
        %v1574 = vadd.f32 0.0, %v1573
        %v1575 = vpop.f32.mrb[0].mxu0
        %v1576 = vadd.f32 0.0, %v1575
        %1577 = vmatprep.mubr.f32.mxu0 0.0
        %1578 = vmatmul.mubr.f32.gmra.mrb[0].mxu0 %v1082
        %v1579 = vpop.f32.mrb[0].mxu0
        %v1580 = vadd.f32 0.0, %v1579
        %v1581 = vpop.f32.mrb[0].mxu0
        %v1582 = vadd.f32 0.0, %v1581
        %1583 = vmatprep.mubr.f32.mxu0 0.0
        %1584 = vmatmul.mubr.f32.gmra.mrb[0].mxu0 %v1085
        %v1585 = vpop.f32.mrb[0].mxu0
        %v1586 = vadd.f32 0.0, %v1585
        %v1587 = vpop.f32.mrb[0].mxu0
        %v1588 = vadd.f32 0.0, %v1587
        %1589 = vmatprep.mubr.f32.mxu0 0.0
        %1590 = vmatmul.mubr.f32.gmra.mrb[0].mxu0 %v1088
        %v1591 = vpop.f32.mrb[0].mxu0
        %v1592 = vadd.f32 0.0, %v1591
        %v1593 = vpop.f32.mrb[0].mxu0
        %v1594 = vadd.f32 0.0, %v1593
        %1595 = vmatprep.mubr.f32.mxu0 0.0
        %1596 = vmatmul.mubr.f32.gmra.mrb[0].mxu0 %v1091
        %v1597 = vpop.f32.mrb[0].mxu0
        %v1598 = vadd.f32 0.0, %v1597
        %v1599 = vpop.f32.mrb[0].mxu0
        %v1600 = vadd.f32 0.0, %v1599
        %1601 = vmatprep.mubr.f32.mxu0 0.0
        %1602 = vmatmul.mubr.f32.gmra.mrb[0].mxu0 %v1094
        %v1603 = vpop.f32.mrb[0].mxu0
        %v1604 = vadd.f32 0.0, %v1603
        %v1605 = vpop.f32.mrb[0].mxu0
        %v1606 = vadd.f32 0.0, %v1605
        %1607 = vmatprep.mubr.f32.mxu0 0.0
        %1608 = vmatmul.mubr.f32.gmra.mrb[0].mxu0 %v1097
        %v1609 = vpop.f32.mrb[0].mxu0
        %v1610 = vadd.f32 0.0, %v1609
        %v1611 = vpop.f32.mrb[0].mxu0
        %v1612 = vadd.f32 0.0, %v1611
        %1613 = vmatprep.mubr.f32.mxu0 0.0
        %1614 = vmatmul.mubr.f32.gmra.mrb[0].mxu0 %v1100
        %v1615 = vpop.f32.mrb[0].mxu0
        %v1616 = vadd.f32 0.0, %v1615
        %v1617 = vpop.f32.mrb[0].mxu0
        %v1618 = vadd.f32 0.0, %v1617
        %1619 = vmatprep.mubr.f32.mxu0 0.0
        %1620 = vmatmul.mubr.f32.gmra.mrb[0].mxu0 %v1103
        %v1621 = vpop.f32.mrb[0].mxu0
        %v1622 = vadd.f32 0.0, %v1621
        %v1623 = vpop.f32.mrb[0].mxu0
        %v1624 = vadd.f32 0.0, %v1623
        %1625 = vmatprep.mubr.f32.mxu0 0.0
        %1626 = vmatmul.mubr.f32.gmra.mrb[0].mxu0 %v1106
        %v1627 = vpop.f32.mrb[0].mxu0
        %v1628 = vadd.f32 0.0, %v1627
        %v1629 = vpop.f32.mrb[0].mxu0
        %v1630 = vadd.f32 0.0, %v1629
        %1631 = vmatprep.mubr.f32.mxu0 0.0
        %1632 = vmatmul.mubr.f32.gmra.mrb[0].mxu0 %v1109
        %v1633 = vpop.f32.mrb[0].mxu0
        %v1634 = vadd.f32 0.0, %v1633
        %v1635 = vpop.f32.mrb[0].mxu0
        %v1636 = vadd.f32 0.0, %v1635
        %1637 = vmatprep.mubr.f32.mxu0 0.0
        %1638 = vmatmul.mubr.f32.gmra.mrb[0].mxu0 %v1112
        %v1639 = vpop.f32.mrb[0].mxu0
        %v1640 = vadd.f32 0.0, %v1639
        %v1641 = vpop.f32.mrb[0].mxu0
        %v1642 = vadd.f32 0.0, %v1641
        %1643 = vmatprep.mubr.f32.mxu0 0.0
        %1644 = vmatmul.mubr.f32.gmra.mrb[0].mxu0 %v1115
        %v1645 = vpop.f32.mrb[0].mxu0
        %v1646 = vadd.f32 0.0, %v1645
        %v1647 = vpop.f32.mrb[0].mxu0
        %v1648 = vadd.f32 0.0, %v1647
        %1649 = vmatprep.mubr.f32.mxu0 0.0
        %1650 = vmatmul.mubr.f32.gmra.mrb[0].mxu0 %v1118
        %v1651 = vpop.f32.mrb[0].mxu0
        %v1652 = vadd.f32 0.0, %v1651
        %v1653 = vpop.f32.mrb[0].mxu0
        %v1654 = vadd.f32 0.0, %v1653
        %1655 = vmatprep.mubr.f32.mxu0 0.0
        %1656 = vmatmul.mubr.f32.gmra.mrb[0].mxu0 %v1121
        %v1657 = vpop.f32.mrb[0].mxu0
        %v1658 = vadd.f32 0.0, %v1657
        %v1659 = vpop.f32.mrb[0].mxu0
        %v1660 = vadd.f32 0.0, %v1659
        %1661 = vmatprep.mubr.f32.mxu0 0.0
        %1662 = vmatmul.mubr.f32.gmra.mrb[0].mxu0 %v1124
        %v1663 = vpop.f32.mrb[0].mxu0
        %v1664 = vadd.f32 0.0, %v1663
        %v1665 = vpop.f32.mrb[0].mxu0
        %v1666 = vadd.f32 0.0, %v1665
        %1667 = vmatprep.mubr.f32.mxu0 0.0
        %1668 = vmatmul.mubr.f32.gmra.mrb[0].mxu0 %v1127
        %v1669 = vpop.f32.mrb[0].mxu0
        %v1670 = vadd.f32 0.0, %v1669
        %v1671 = vpop.f32.mrb[0].mxu0
        %v1672 = vadd.f32 0.0, %v1671
        %1673 = vmatprep.mubr.f32.mxu0 0.0
        %1674 = vmatmul.mubr.f32.gmra.mrb[0].mxu0 %v1130
        %v1675 = vpop.f32.mrb[0].mxu0
        %v1676 = vadd.f32 0.0, %v1675
        %v1677 = vpop.f32.mrb[0].mxu0
        %v1678 = vadd.f32 0.0, %v1677
        %1679 = vmatprep.mubr.f32.mxu0 0.0
        %1680 = vmatmul.mubr.f32.gmra.mrb[0].mxu0 %v1133
        %v1681 = vpop.f32.mrb[0].mxu0
        %v1682 = vadd.f32 0.0, %v1681
        %v1683 = vpop.f32.mrb[0].mxu0
        %v1684 = vadd.f32 0.0, %v1683
        %1685 = vmatprep.mubr.f32.mxu0 0.0
        %1686 = vmatmul.mubr.f32.gmra.mrb[0].mxu0 %v1136
        %v1687 = vpop.f32.mrb[0].mxu0
        %v1688 = vadd.f32 0.0, %v1687
        %v1689 = vpop.f32.mrb[0].mxu0
        %v1690 = vadd.f32 0.0, %v1689
        %1691 = vmatprep.mubr.f32.mxu0 0.0
        %1692 = vmatmul.mubr.f32.gmra.mrb[0].mxu0 %v1139
        %v1693 = vpop.f32.mrb[0].mxu0
        %v1694 = vadd.f32 0.0, %v1693
        %v1695 = vpop.f32.mrb[0].mxu0
        %v1696 = vadd.f32 0.0, %v1695
        %1697 = vmatprep.mubr.f32.mxu0 0.0
        %1698 = vmatmul.mubr.f32.gmra.mrb[0].mxu0 %v1142
        %v1699 = vpop.f32.mrb[0].mxu0
        %v1700 = vadd.f32 0.0, %v1699
        %v1701 = vpop.f32.mrb[0].mxu0
        %v1702 = vadd.f32 0.0, %v1701
        %1703 = vmatprep.mubr.f32.mxu0 0.0
        %1704 = vmatmul.mubr.f32.gmra.mrb[0].mxu0 %v1145
        %v1705 = vpop.f32.mrb[0].mxu0
        %v1706 = vadd.f32 0.0, %v1705
        %v1707 = vpop.f32.mrb[0].mxu0
        %v1708 = vadd.f32 0.0, %v1707
        %1709 = vmatprep.mubr.f32.mxu0 0.0
        %1710 = vmatmul.mubr.f32.gmra.mrb[0].mxu0 %v1148
        %v1711 = vpop.f32.mrb[0].mxu0
        %v1712 = vadd.f32 0.0, %v1711
        %v1713 = vpop.f32.mrb[0].mxu0
        %v1714 = vadd.f32 0.0, %v1713
        %1715 = vmatprep.mubr.f32.mxu0 0.0
        %1716 = vmatmul.mubr.f32.gmra.mrb[0].mxu0 %v1151
        %v1717 = vpop.f32.mrb[0].mxu0
        %v1718 = vadd.f32 0.0, %v1717
        %v1719 = vpop.f32.mrb[0].mxu0
        %v1720 = vadd.f32 0.0, %v1719
        %1721 = vmatprep.mubr.f32.mxu0 0.0
        %1722 = vmatmul.mubr.f32.gmra.mrb[0].mxu0 %v1154
        %v1723 = vpop.f32.mrb[0].mxu0
        %v1724 = vadd.f32 0.0, %v1723
        %v1725 = vpop.f32.mrb[0].mxu0
        %v1726 = vadd.f32 0.0, %v1725
        %1727 = vmatprep.mubr.f32.mxu0 0.0
        %1728 = vmatmul.mubr.f32.gmra.mrb[0].mxu0 %v1157
        %v1729 = vpop.f32.mrb[0].mxu0
        %v1730 = vadd.f32 0.0, %v1729
        %v1731 = vpop.f32.mrb[0].mxu0
        %v1732 = vadd.f32 0.0, %v1731
        %1733 = vmatprep.mubr.f32.mxu0 0.0
        %1734 = vmatmul.mubr.f32.gmra.mrb[0].mxu0 %v1160
        %v1735 = vpop.f32.mrb[0].mxu0
        %v1736 = vadd.f32 0.0, %v1735
        %v1737 = vpop.f32.mrb[0].mxu0
        %v1738 = vadd.f32 0.0, %v1737
        %1739 = vmatprep.mubr.f32.mxu0 0.0
        %1740 = vmatmul.mubr.f32.gmra.mrb[0].mxu0 %v1163
        %v1741 = vpop.f32.mrb[0].mxu0
        %v1742 = vadd.f32 0.0, %v1741
        %v1743 = vpop.f32.mrb[0].mxu0
        %v1744 = vadd.f32 0.0, %v1743
        %1745 = vmatprep.mubr.f32.mxu0 0.0
        %1746 = vmatmul.mubr.f32.gmra.mrb[0].mxu0 %v1166
        %v1747 = vpop.f32.mrb[0].mxu0
        %v1748 = vadd.f32 0.0, %v1747
        %v1749 = vpop.f32.mrb[0].mxu0
        %v1750 = vadd.f32 0.0, %v1749
        %1751 = vmatprep.mubr.f32.mxu0 0.0
        %1752 = vmatmul.mubr.f32.gmra.mrb[0].mxu0 %v1169
        %v1753 = vpop.f32.mrb[0].mxu0
        %v1754 = vadd.f32 0.0, %v1753
        %v1755 = vpop.f32.mrb[0].mxu0
        %v1756 = vadd.f32 0.0, %v1755
        %1757 = vmatprep.mubr.f32.mxu0 0.0
        %1758 = vmatmul.mubr.f32.gmra.mrb[0].mxu0 %v1172
        %v1759 = vpop.f32.mrb[0].mxu0
        %v1760 = vadd.f32 0.0, %v1759
        %v1761 = vpop.f32.mrb[0].mxu0
        %v1762 = vadd.f32 0.0, %v1761
        %1763 = vmatprep.mubr.f32.mxu0 0.0
        %1764 = vmatmul.mubr.f32.gmra.mrb[0].mxu0 %v1175
        %v1765 = vpop.f32.mrb[0].mxu0
        %v1766 = vadd.f32 0.0, %v1765
        %v1767 = vpop.f32.mrb[0].mxu0
        %v1768 = vadd.f32 0.0, %v1767
        %1769 = vmatprep.mubr.f32.mxu0 0.0
        %1770 = vmatmul.mubr.f32.gmra.mrb[0].mxu0 %v1178
        %v1771 = vpop.f32.mrb[0].mxu0
        %v1772 = vadd.f32 0.0, %v1771
        %v1773 = vpop.f32.mrb[0].mxu0
        %v1774 = vadd.f32 0.0, %v1773
        %1775 = vmatprep.mubr.f32.mxu0 0.0
        %1776 = vmatmul.mubr.f32.gmra.mrb[0].mxu0 %v1181
        %v1777 = vpop.f32.mrb[0].mxu0
        %v1778 = vadd.f32 0.0, %v1777
        %v1779 = vpop.f32.mrb[0].mxu0
        %v1780 = vadd.f32 0.0, %v1779
        %1781 = vmatprep.mubr.f32.mxu0 0.0
        %1782 = vmatmul.mubr.f32.gmra.mrb[0].mxu0 %v1184
        %v1783 = vpop.f32.mrb[0].mxu0
        %v1784 = vadd.f32 0.0, %v1783
        %v1785 = vpop.f32.mrb[0].mxu0
        %v1786 = vadd.f32 0.0, %v1785
        %1787 = vmatprep.mubr.f32.mxu0 0.0
        %1788 = vmatmul.mubr.f32.gmra.mrb[0].mxu0 %v1187
        %v1789 = vpop.f32.mrb[0].mxu0
        %v1790 = vadd.f32 0.0, %v1789
        %v1791 = vpop.f32.mrb[0].mxu0
        %v1792 = vadd.f32 0.0, %v1791
        %1793 = vmatprep.mubr.f32.mxu0 0.0
        %1794 = vmatmul.mubr.f32.gmra.mrb[0].mxu0 %v1190
        %v1795 = vpop.f32.mrb[0].mxu0
        %v1796 = vadd.f32 0.0, %v1795
        %v1797 = vpop.f32.mrb[0].mxu0
        %v1798 = vadd.f32 0.0, %v1797
        %1799 = vmatprep.mubr.f32.mxu0 0.0
        %1800 = vmatmul.mubr.f32.gmra.mrb[0].mxu0 %v1193
        %v1801 = vpop.f32.mrb[0].mxu0
        %v1802 = vadd.f32 0.0, %v1801
        %v1803 = vpop.f32.mrb[0].mxu0
        %v1804 = vadd.f32 0.0, %v1803
        %1805 = vmatprep.mubr.f32.mxu0 0.0
        %1806 = vmatmul.mubr.f32.gmra.mrb[0].mxu0 %v1196
        %v1807 = vpop.f32.mrb[0].mxu0
        %v1808 = vadd.f32 0.0, %v1807
        %v1809 = vpop.f32.mrb[0].mxu0
        %v1810 = vadd.f32 0.0, %v1809
        %1811 = vmatprep.mubr.f32.mxu0 0.0
        %1812 = vmatmul.mubr.f32.gmra.mrb[0].mxu0 %v1199
        %v1813 = vpop.f32.mrb[0].mxu0
        %v1814 = vadd.f32 0.0, %v1813
        %v1815 = vpop.f32.mrb[0].mxu0
        %v1816 = vadd.f32 0.0, %v1815
        %1817 = vmatprep.mubr.f32.mxu0 0.0
        %1818 = vmatmul.mubr.f32.gmra.mrb[0].mxu0 %v1202
        %v1819 = vpop.f32.mrb[0].mxu0
        %v1820 = vadd.f32 0.0, %v1819
        %v1821 = vpop.f32.mrb[0].mxu0
        %v1822 = vadd.f32 0.0, %v1821
        %1823 = vmatprep.mubr.f32.mxu0 0.0
        %1824 = vmatmul.mubr.f32.gmra.mrb[0].mxu0 %v1205
        %v1825 = vpop.f32.mrb[0].mxu0
        %v1826 = vadd.f32 0.0, %v1825
        %v1827 = vpop.f32.mrb[0].mxu0
        %v1828 = vadd.f32 0.0, %v1827
        %1829 = vmatprep.mubr.f32.mxu0 0.0
        %1830 = vmatmul.mubr.f32.gmra.mrb[0].mxu0 %v1208
        %v1831 = vpop.f32.mrb[0].mxu0
        %v1832 = vadd.f32 0.0, %v1831
        %v1833 = vpop.f32.mrb[0].mxu0
        %v1834 = vadd.f32 0.0, %v1833
        %1835 = vmatprep.mubr.f32.mxu0 0.0
        %1836 = vmatmul.mubr.f32.gmra.mrb[0].mxu0 %v1211
        %v1837 = vpop.f32.mrb[0].mxu0
        %v1838 = vadd.f32 0.0, %v1837
        %v1839 = vpop.f32.mrb[0].mxu0
        %v1840 = vadd.f32 0.0, %v1839
        %1841 = vmatprep.mubr.f32.mxu0 0.0
        %1842 = vmatmul.mubr.f32.gmra.mrb[0].mxu0 %v1214
        %v1843 = vpop.f32.mrb[0].mxu0
        %v1844 = vadd.f32 0.0, %v1843
        %v1845 = vpop.f32.mrb[0].mxu0
        %v1846 = vadd.f32 0.0, %v1845
        %1847 = vmatprep.mubr.f32.mxu0 0.0
        %1848 = vmatmul.mubr.f32.gmra.mrb[0].mxu0 %v1217
        %v1849 = vpop.f32.mrb[0].mxu0
        %v1850 = vadd.f32 0.0, %v1849
        %v1851 = vpop.f32.mrb[0].mxu0
        %v1852 = vadd.f32 0.0, %v1851
        %1853 = vmatprep.mubr.f32.mxu0 0.0
        %1854 = vmatmul.mubr.f32.gmra.mrb[0].mxu0 %v1220
        %v1855 = vpop.f32.mrb[0].mxu0
        %v1856 = vadd.f32 0.0, %v1855
        %v1857 = vpop.f32.mrb[0].mxu0
        %v1858 = vadd.f32 0.0, %v1857
        %1859 = vmatprep.mubr.f32.mxu0 0.0
        %1860 = vmatmul.mubr.f32.gmra.mrb[0].mxu0 %v1223
        %v1861 = vpop.f32.mrb[0].mxu0
        %v1862 = vadd.f32 0.0, %v1861
        %v1863 = vpop.f32.mrb[0].mxu0
        %v1864 = vadd.f32 0.0, %v1863
        %1865 = vmatprep.mubr.f32.mxu0 0.0
        %1866 = vmatmul.mubr.f32.gmra.mrb[0].mxu0 %v1226
        %v1867 = vpop.f32.mrb[0].mxu0
        %v1868 = vadd.f32 0.0, %v1867
        %v1869 = vpop.f32.mrb[0].mxu0
        %v1870 = vadd.f32 0.0, %v1869
        %1871 = vmatprep.mubr.f32.mxu0 0.0
        %1872 = vmatmul.mubr.f32.gmra.mrb[0].mxu0 %v1229
        %v1873 = vpop.f32.mrb[0].mxu0
        %v1874 = vadd.f32 0.0, %v1873
        %v1875 = vpop.f32.mrb[0].mxu0
        %v1876 = vadd.f32 0.0, %v1875
        %1877 = vmatprep.mubr.f32.mxu0 0.0
        %1878 = vmatmul.mubr.f32.gmra.mrb[0].mxu0 %v1232
        %v1879 = vpop.f32.mrb[0].mxu0
        %v1880 = vadd.f32 0.0, %v1879
        %v1881 = vpop.f32.mrb[0].mxu0
        %v1882 = vadd.f32 0.0, %v1881
        %1883 = vmatprep.mubr.f32.mxu0 0.0
        %1884 = vmatmul.mubr.f32.gmra.mrb[0].mxu0 %v1235
        %v1885 = vpop.f32.mrb[0].mxu0
        %v1886 = vadd.f32 0.0, %v1885
        %v1887 = vpop.f32.mrb[0].mxu0
        %v1888 = vadd.f32 0.0, %v1887
        %1889 = vmatprep.mubr.f32.mxu0 0.0
        %1890 = vmatmul.mubr.f32.gmra.mrb[0].mxu0 %v1238
        %v1891 = vpop.f32.mrb[0].mxu0
        %v1892 = vadd.f32 0.0, %v1891
        %v1893 = vpop.f32.mrb[0].mxu0
        %v1894 = vadd.f32 0.0, %v1893
        %1895 = vmatprep.mubr.f32.mxu0 0.0
        %1896 = vmatmul.mubr.f32.gmra.mrb[0].mxu0 %v1241
        %v1897 = vpop.f32.mrb[0].mxu0
        %v1898 = vadd.f32 0.0, %v1897
        %v1899 = vpop.f32.mrb[0].mxu0
        %v1900 = vadd.f32 0.0, %v1899
        %1901 = vmatprep.mubr.f32.mxu0 0.0
        %1902 = vmatmul.mubr.f32.gmra.mrb[0].mxu0 %v1244
        %v1903 = vpop.f32.mrb[0].mxu0
        %v1904 = vadd.f32 0.0, %v1903
        %v1905 = vpop.f32.mrb[0].mxu0
        %v1906 = vadd.f32 0.0, %v1905
        %1907 = vmatprep.mubr.f32.mxu0 0.0
        %1908 = vmatmul.mubr.f32.gmra.mrb[0].mxu0 %v1247
        %v1909 = vpop.f32.mrb[0].mxu0
        %v1910 = vadd.f32 0.0, %v1909
        %v1911 = vpop.f32.mrb[0].mxu0
        %v1912 = vadd.f32 0.0, %v1911
        %1913 = vmatprep.mubr.f32.mxu0 0.0
        %1914 = vmatmul.mubr.f32.gmra.mrb[0].mxu0 %v1250
        %v1915 = vpop.f32.mrb[0].mxu0
        %v1916 = vadd.f32 0.0, %v1915
        %v1917 = vpop.f32.mrb[0].mxu0
        %v1918 = vadd.f32 0.0, %v1917
        %1919 = vmatprep.mubr.f32.mxu0 0.0
        %1920 = vmatmul.mubr.f32.gmra.mrb[0].mxu0 %v1253
        %v1921 = vpop.f32.mrb[0].mxu0
        %v1922 = vadd.f32 0.0, %v1921
        %v1923 = vpop.f32.mrb[0].mxu0
        %v1924 = vadd.f32 0.0, %v1923
        %1925 = vmatprep.mubr.f32.mxu0 0.0
        %1926 = vmatmul.mubr.f32.gmra.mrb[0].mxu0 %v1256
        %v1927 = vpop.f32.mrb[0].mxu0
        %v1928 = vadd.f32 0.0, %v1927
        %v1929 = vpop.f32.mrb[0].mxu0
        %v1930 = vadd.f32 0.0, %v1929
        %1931 = vmatprep.mubr.f32.mxu0 0.0
        %1932 = vmatmul.mubr.f32.gmra.mrb[0].mxu0 %v1259
        %v1933 = vpop.f32.mrb[0].mxu0
        %v1934 = vadd.f32 0.0, %v1933
        %v1935 = vpop.f32.mrb[0].mxu0
        %v1936 = vadd.f32 0.0, %v1935
        %1937 = vmatprep.mubr.f32.mxu0 0.0
        %1938 = vmatmul.mubr.f32.gmra.mrb[0].mxu0 %v1262
        %v1939 = vpop.f32.mrb[0].mxu0
        %v1940 = vadd.f32 0.0, %v1939
        %v1941 = vpop.f32.mrb[0].mxu0
        %v1942 = vadd.f32 0.0, %v1941
        %1943 = vmatprep.mubr.f32.mxu0 0.0
        %1944 = vmatmul.mubr.f32.gmra.mrb[0].mxu0 %v1265
        %v1945 = vpop.f32.mrb[0].mxu0
        %v1946 = vadd.f32 0.0, %v1945
        %v1947 = vpop.f32.mrb[0].mxu0
        %v1948 = vadd.f32 0.0, %v1947
        %1949 = vmatprep.mubr.f32.mxu0 0.0
        %1950 = vmatmul.mubr.f32.gmra.mrb[0].mxu0 %v1268
        %v1951 = vpop.f32.mrb[0].mxu0
        %v1952 = vadd.f32 0.0, %v1951
        %v1953 = vpop.f32.mrb[0].mxu0
        %v1954 = vadd.f32 0.0, %v1953
        %1955 = vmatprep.mubr.f32.mxu0 0.0
        %1956 = vmatmul.mubr.f32.gmra.mrb[0].mxu0 %v1271
        %v1957 = vpop.f32.mrb[0].mxu0
        %v1958 = vadd.f32 0.0, %v1957
        %v1959 = vpop.f32.mrb[0].mxu0
        %v1960 = vadd.f32 0.0, %v1959
        %1961 = vmatprep.mubr.f32.mxu0 0.0
        %1962 = vmatmul.mubr.f32.gmra.mrb[0].mxu0 %v1274
        %v1963 = vpop.f32.mrb[0].mxu0
        %v1964 = vadd.f32 0.0, %v1963
        %v1965 = vpop.f32.mrb[0].mxu0
        %v1966 = vadd.f32 0.0, %v1965
        %1967 = vmatprep.mubr.f32.mxu0 0.0
        %1968 = vmatmul.mubr.f32.gmra.mrb[0].mxu0 %v1277
        %v1969 = vpop.f32.mrb[0].mxu0
        %v1970 = vadd.f32 0.0, %v1969
        %v1971 = vpop.f32.mrb[0].mxu0
        %v1972 = vadd.f32 0.0, %v1971
        %1973 = vmatprep.mubr.f32.mxu0 0.0
        %1974 = vmatmul.mubr.f32.gmra.mrb[0].mxu0 %v1280
        %v1975 = vpop.f32.mrb[0].mxu0
        %v1976 = vadd.f32 0.0, %v1975
        %v1977 = vpop.f32.mrb[0].mxu0
        %v1978 = vadd.f32 0.0, %v1977
        %1979 = vmatprep.mubr.f32.mxu0 0.0
        %1980 = vmatmul.mubr.f32.gmra.mrb[0].mxu0 %v1283
        %v1981 = vpop.f32.mrb[0].mxu0
        %v1982 = vadd.f32 0.0, %v1981
        %v1983 = vpop.f32.mrb[0].mxu0
        %v1984 = vadd.f32 0.0, %v1983
        %1985 = vmatprep.mubr.f32.mxu0 0.0
        %1986 = vmatmul.mubr.f32.gmra.mrb[0].mxu0 %v1286
        %v1987 = vpop.f32.mrb[0].mxu0
        %v1988 = vadd.f32 0.0, %v1987
        %v1989 = vpop.f32.mrb[0].mxu0
        %v1990 = vadd.f32 0.0, %v1989
        %1991 = vmatprep.mubr.f32.mxu0 0.0
        %1992 = vmatmul.mubr.f32.gmra.mrb[0].mxu0 %v1289
        %v1993 = vpop.f32.mrb[0].mxu0
        %v1994 = vadd.f32 0.0, %v1993
        %v1995 = vpop.f32.mrb[0].mxu0
        %v1996 = vadd.f32 0.0, %v1995
        %1997 = vmatprep.mubr.f32.mxu0 0.0
        %1998 = vmatmul.mubr.f32.gmra.mrb[0].mxu0 %v1292
        %v1999 = vpop.f32.mrb[0].mxu0
        %v2000 = vadd.f32 0.0, %v1999
        %v2001 = vpop.f32.mrb[0].mxu0
        %v2002 = vadd.f32 0.0, %v2001
        %2003 = vmatprep.mubr.f32.mxu0 0.0
        %2004 = vmatmul.mubr.f32.gmra.mrb[0].mxu0 %v1295
        %v2005 = vpop.f32.mrb[0].mxu0
        %v2006 = vadd.f32 0.0, %v2005
        %v2007 = vpop.f32.mrb[0].mxu0
        %v2008 = vadd.f32 0.0, %v2007
        %2009 = vmatprep.mubr.f32.mxu0 0.0
        %2010 = vmatmul.mubr.f32.gmra.mrb[0].mxu0 %v1298
        %v2011 = vpop.f32.mrb[0].mxu0
        %v2012 = vadd.f32 0.0, %v2011
        %v2013 = vpop.f32.mrb[0].mxu0
        %v2014 = vadd.f32 0.0, %v2013
        %2015 = vmatprep.mubr.f32.mxu0 0.0
        %2016 = vmatmul.mubr.f32.gmra.mrb[0].mxu0 %v1301
        %v2017 = vpop.f32.mrb[0].mxu0
        %v2018 = vadd.f32 0.0, %v2017
        %v2019 = vpop.f32.mrb[0].mxu0
        %v2020 = vadd.f32 0.0, %v2019
        %2021 = vmatprep.mubr.f32.mxu0 0.0
        %2022 = vmatmul.mubr.f32.gmra.mrb[0].mxu0 %v1304
        %v2023 = vpop.f32.mrb[0].mxu0
        %v2024 = vadd.f32 0.0, %v2023
        %v2025 = vpop.f32.mrb[0].mxu0
        %v2026 = vadd.f32 0.0, %v2025
        %2027 = vmatprep.mubr.f32.mxu0 0.0
        %2028 = vmatmul.mubr.f32.gmra.mrb[0].mxu0 %v1307
        %v2029 = vpop.f32.mrb[0].mxu0
        %v2030 = vadd.f32 0.0, %v2029
        %v2031 = vpop.f32.mrb[0].mxu0
        %v2032 = vadd.f32 0.0, %v2031
        %2033 = vmatprep.mubr.f32.mxu0 0.0
        %2034 = vmatmul.mubr.f32.gmra.mrb[0].mxu0 %v1310
        %v2035 = vpop.f32.mrb[0].mxu0
        %v2036 = vadd.f32 0.0, %v2035
        %v2037 = vpop.f32.mrb[0].mxu0
        %v2038 = vadd.f32 0.0, %v2037
        %2039 = vmatprep.mubr.f32.mxu0 0.0
        %2040 = vmatmul.mubr.f32.gmra.mrb[0].mxu0 %v1313
        %v2041 = vpop.f32.mrb[0].mxu0
        %v2042 = vadd.f32 0.0, %v2041
        %v2043 = vpop.f32.mrb[0].mxu0
        %v2044 = vadd.f32 0.0, %v2043
        %2045 = vmatprep.mubr.f32.mxu0 0.0
        %2046 = vmatmul.mubr.f32.gmra.mrb[0].mxu0 %v1316
        %v2047 = vpop.f32.mrb[0].mxu0
        %v2048 = vadd.f32 0.0, %v2047
        %v2049 = vpop.f32.mrb[0].mxu0
        %v2050 = vadd.f32 0.0, %v2049
        %2051 = vmatprep.mubr.f32.mxu0 0.0
        %2052 = vmatmul.mubr.f32.gmra.mrb[0].mxu0 %v1319
        %v2053 = vpop.f32.mrb[0].mxu0
        %v2054 = vadd.f32 0.0, %v2053
        %v2055 = vpop.f32.mrb[0].mxu0
        %v2056 = vadd.f32 0.0, %v2055
        %2057 = vmatprep.mubr.f32.mxu0 0.0
        %2058 = vmatmul.mubr.f32.gmra.mrb[0].mxu0 %v1322
        %v2059 = vpop.f32.mrb[0].mxu0
        %v2060 = vadd.f32 0.0, %v2059
        %v2061 = vpop.f32.mrb[0].mxu0
        %v2062 = vadd.f32 0.0, %v2061
        %2063 = vmatprep.mubr.f32.mxu0 0.0
        %2064 = vmatmul.mubr.f32.gmra.mrb[0].mxu0 %v1325
        %v2065 = vpop.f32.mrb[0].mxu0
        %v2066 = vadd.f32 0.0, %v2065
        %v2067 = vpop.f32.mrb[0].mxu0
        %v2068 = vadd.f32 0.0, %v2067
        %2069 = vmatprep.mubr.f32.mxu0 0.0
        %2070 = vmatmul.mubr.f32.gmra.mrb[0].mxu0 %v1328
        %v2071 = vpop.f32.mrb[0].mxu0
        %v2072 = vadd.f32 0.0, %v2071
        %v2073 = vpop.f32.mrb[0].mxu0
        %v2074 = vadd.f32 0.0, %v2073
        %2075 = vmatprep.mubr.f32.mxu0 0.0
        %2076 = vmatmul.mubr.f32.gmra.mrb[0].mxu0 %v1331
        %v2077 = vpop.f32.mrb[0].mxu0
        %v2078 = vadd.f32 0.0, %v2077
        %v2079 = vpop.f32.mrb[0].mxu0
        %v2080 = vadd.f32 0.0, %v2079
        %2081 = vmatprep.mubr.f32.mxu0 0.0
        %2082 = vmatmul.mubr.f32.gmra.mrb[0].mxu0 %v1334
        %v2083 = vpop.f32.mrb[0].mxu0
        %v2084 = vadd.f32 0.0, %v2083
        %v2085 = vpop.f32.mrb[0].mxu0
        %v2086 = vadd.f32 0.0, %v2085
        %2087 = vmatprep.mubr.f32.mxu0 0.0
        %2088 = vmatmul.mubr.f32.gmra.mrb[0].mxu0 %v1337
        %v2089 = vpop.f32.mrb[0].mxu0
        %v2090 = vadd.f32 0.0, %v2089
        %v2091 = vpop.f32.mrb[0].mxu0
        %v2092 = vadd.f32 0.0, %v2091
        %2093 = vmatprep.mubr.f32.mxu0 0.0
        %2094 = vmatmul.mubr.f32.gmra.mrb[0].mxu0 %v1340
        %v2095 = vpop.f32.mrb[0].mxu0
        %v2096 = vadd.f32 0.0, %v2095
        %v2097 = vpop.f32.mrb[0].mxu0
        %v2098 = vadd.f32 0.0, %v2097
        %2099 = vmatprep.mubr.f32.mxu0 0.0
        %2100 = vmatmul.mubr.f32.gmra.mrb[0].mxu0 %v1343
        %v2101 = vpop.f32.mrb[0].mxu0
        %v2102 = vadd.f32 0.0, %v2101
        %v2103 = vpop.f32.mrb[0].mxu0
        %v2104 = vadd.f32 0.0, %v2103
        %2105 = vmatprep.mubr.f32.mxu0 0.0
        %2106 = vmatmul.mubr.f32.gmra.mrb[0].mxu0 %v1346
        %v2107 = vpop.f32.mrb[0].mxu0
        %v2108 = vadd.f32 0.0, %v2107
        %v2109 = vpop.f32.mrb[0].mxu0
        %v2110 = vadd.f32 0.0, %v2109
        %2111 = vmatprep.mubr.f32.mxu0 0.0
        %2112 = vmatmul.mubr.f32.gmra.mrb[0].mxu0 %v1349
        %v2113 = vpop.f32.mrb[0].mxu0
        %v2114 = vadd.f32 0.0, %v2113
        %v2115 = vpop.f32.mrb[0].mxu0
        %v2116 = vadd.f32 0.0, %v2115
        %2117 = vmatprep.mubr.f32.mxu0 0.0
        %2118 = vmatmul.mubr.f32.gmra.mrb[0].mxu0 %v1352
        %v2119 = vpop.f32.mrb[0].mxu0
        %v2120 = vadd.f32 0.0, %v2119
        %v2121 = vpop.f32.mrb[0].mxu0
        %v2122 = vadd.f32 0.0, %v2121
        %2123 = vmatprep.mubr.f32.mxu0 0.0
        %2124 = vmatmul.mubr.f32.gmra.mrb[0].mxu0 %v1355
        %v2125 = vpop.f32.mrb[0].mxu0
        %v2126 = vadd.f32 0.0, %v2125
        %v2127 = vpop.f32.mrb[0].mxu0
        %v2128 = vadd.f32 0.0, %v2127
        %2129 = vmatprep.mubr.f32.mxu0 0.0
        %2130 = vmatmul.mubr.f32.gmra.mrb[0].mxu0 %v1358
        %v2131 = vpop.f32.mrb[0].mxu0
        %v2132 = vadd.f32 0.0, %v2131
        %v2133 = vpop.f32.mrb[0].mxu0
        %v2134 = vadd.f32 0.0, %v2133
        %2135 = vmatprep.mubr.f32.mxu0 0.0
        %2136 = vmatmul.mubr.f32.gmra.mrb[0].mxu0 %v1361
        %v2137 = vpop.f32.mrb[0].mxu0
        %v2138 = vadd.f32 0.0, %v2137
        %v2139 = vpop.f32.mrb[0].mxu0
        %v2140 = vadd.f32 0.0, %v2139
        %2141 = vmatprep.mubr.f32.mxu0 0.0
        %2142 = vmatmul.mubr.f32.gmra.mrb[0].mxu0 %v1364
        %v2143 = vpop.f32.mrb[0].mxu0
        %v2144 = vadd.f32 0.0, %v2143
        %v2145 = vpop.f32.mrb[0].mxu0
        %v2146 = vadd.f32 0.0, %v2145
        %2147 = vmatprep.mubr.f32.mxu0 0.0
        %2148 = vmatmul.mubr.f32.gmra.mrb[0].mxu0 %v1367
        %v2149 = vpop.f32.mrb[0].mxu0
        %v2150 = vadd.f32 0.0, %v2149
        %v2151 = vpop.f32.mrb[0].mxu0
        %v2152 = vadd.f32 0.0, %v2151
        %2153 = vmatprep.mubr.f32.mxu0 0.0
        %2154 = vmatmul.mubr.f32.gmra.mrb[0].mxu0 %v1370
        %v2155 = vpop.f32.mrb[0].mxu0
        %v2156 = vadd.f32 0.0, %v2155
        %v2157 = vpop.f32.mrb[0].mxu0
        %v2158 = vadd.f32 0.0, %v2157
        %2159 = vmatprep.mubr.f32.mxu0 0.0
        %2160 = vmatmul.mubr.f32.gmra.mrb[0].mxu0 %v1373
        %v2161 = vpop.f32.mrb[0].mxu0
        %v2162 = vadd.f32 0.0, %v2161
        %v2163 = vpop.f32.mrb[0].mxu0
        %v2164 = vadd.f32 0.0, %v2163
        %2165 = vmatprep.mubr.f32.mxu0 0.0
        %2166 = vmatmul.mubr.f32.gmra.mrb[0].mxu0 %v1376
        %v2167 = vpop.f32.mrb[0].mxu0
        %v2168 = vadd.f32 0.0, %v2167
        %v2169 = vpop.f32.mrb[0].mxu0
        %v2170 = vadd.f32 0.0, %v2169
        %2171 = vmatprep.mubr.f32.mxu0 0.0
        %2172 = vmatmul.mubr.f32.gmra.mrb[0].mxu0 %v1379
        %v2173 = vpop.f32.mrb[0].mxu0
        %v2174 = vadd.f32 0.0, %v2173
        %v2175 = vpop.f32.mrb[0].mxu0
        %v2176 = vadd.f32 0.0, %v2175
        %2177 = vmatprep.mubr.f32.mxu0 0.0
        %2178 = vmatmul.mubr.f32.gmra.mrb[0].mxu0 %v1382
        %v2179 = vpop.f32.mrb[0].mxu0
        %v2180 = vadd.f32 0.0, %v2179
        %v2181 = vpop.f32.mrb[0].mxu0
        %v2182 = vadd.f32 0.0, %v2181
        %2183 = vmatprep.mubr.f32.mxu0 0.0
        %2184 = vmatmul.mubr.f32.gmra.mrb[0].mxu0 %v1385
        %v2185 = vpop.f32.mrb[0].mxu0
        %v2186 = vadd.f32 0.0, %v2185
        %v2187 = vpop.f32.mrb[0].mxu0
        %v2188 = vadd.f32 0.0, %v2187
        %2189 = vmatprep.mubr.f32.mxu0 0.0
        %2190 = vmatmul.mubr.f32.gmra.mrb[0].mxu0 %v1388
        %v2191 = vpop.f32.mrb[0].mxu0
        %v2192 = vadd.f32 0.0, %v2191
        %v2193 = vpop.f32.mrb[0].mxu0
        %v2194 = vadd.f32 0.0, %v2193
        %2195 = vmatprep.mubr.f32.mxu0 0.0
        %2196 = vmatmul.mubr.f32.gmra.mrb[0].mxu0 %v1391
        %v2197 = vpop.f32.mrb[0].mxu0
        %v2198 = vadd.f32 0.0, %v2197
        %v2199 = vpop.f32.mrb[0].mxu0
        %v2200 = vadd.f32 0.0, %v2199
        %2201 = vmatprep.mubr.f32.mxu0 0.0
        %2202 = vmatmul.mubr.f32.gmra.mrb[0].mxu0 %v1394
        %v2203 = vpop.f32.mrb[0].mxu0
        %v2204 = vadd.f32 0.0, %v2203
        %v2205 = vpop.f32.mrb[0].mxu0
        %v2206 = vadd.f32 0.0, %v2205
        %2207 = vmatprep.mubr.f32.mxu0 0.0
        %2208 = vmatmul.mubr.f32.gmra.mrb[0].mxu0 %v1397
        %v2209 = vpop.f32.mrb[0].mxu0
        %v2210 = vadd.f32 0.0, %v2209
        %v2211 = vpop.f32.mrb[0].mxu0
        %v2212 = vadd.f32 0.0, %v2211
        %2213 = vmatprep.mubr.f32.mxu0 0.0
        %2214 = vmatmul.mubr.f32.gmra.mrb[0].mxu0 %v1400
        %v2215 = vpop.f32.mrb[0].mxu0
        %v2216 = vadd.f32 0.0, %v2215
        %v2217 = vpop.f32.mrb[0].mxu0
        %v2218 = vadd.f32 0.0, %v2217
        %2219 = vmatprep.mubr.f32.mxu0 0.0
        %2220 = vmatmul.mubr.f32.gmra.mrb[0].mxu0 %v1403
        %v2221 = vpop.f32.mrb[0].mxu0
        %v2222 = vadd.f32 0.0, %v2221
        %v2223 = vpop.f32.mrb[0].mxu0
        %v2224 = vadd.f32 0.0, %v2223
        %2225 = vmatprep.mubr.f32.mxu0 0.0
        %2226 = vmatmul.mubr.f32.gmra.mrb[0].mxu0 %v1406
        %v2227 = vpop.f32.mrb[0].mxu0
        %v2228 = vadd.f32 0.0, %v2227
        %v2229 = vpop.f32.mrb[0].mxu0
        %v2230 = vadd.f32 0.0, %v2229
        %2231 = vmatprep.mubr.f32.mxu0 0.0
        %2232 = vmatmul.mubr.f32.gmra.mrb[0].mxu0 %v1409
        %v2233 = vpop.f32.mrb[0].mxu0
        %v2234 = vadd.f32 0.0, %v2233
        %v2235 = vpop.f32.mrb[0].mxu0
        %v2236 = vadd.f32 0.0, %v2235
        %2237 = vmatprep.mubr.f32.mxu0 0.0
        %2238 = vmatmul.mubr.f32.gmra.mrb[0].mxu0 %v1412
        %v2239 = vpop.f32.mrb[0].mxu0
        %v2240 = vadd.f32 0.0, %v2239
        %v2241 = vpop.f32.mrb[0].mxu0
        %v2242 = vadd.f32 0.0, %v2241
        %2243 = vmatprep.mubr.f32.mxu0 0.0
        %2244 = vmatmul.mubr.f32.gmra.mrb[0].mxu0 %v1415
        %v2245 = vpop.f32.mrb[0].mxu0
        %v2246 = vadd.f32 0.0, %v2245
        %v2247 = vpop.f32.mrb[0].mxu0
        %v2248 = vadd.f32 0.0, %v2247
        %2249 = vdwg.mxu0
        %v2250 = vld [vmem:[%s900] sm:$0xff]
        %v2251 = vld [vmem:[%s900 + $0x8] sm:$0xff]
        %v2254 = vcombine.low %v2250, %v2251
        %v2255 = vcombine.high %v2250, %v2251
        %v2257 = vunpack.c.l.s4 1966171168
        %v2258 = vunpack.c.0.s8 %v2257
        %v2259 = vlaneseq
        %v2260 = vshrl.u32 %v2259, 7
        %v2261 = vsub.s32 %v2258, %v2260
        %v2262 = vrot.slane %v2254, %v2261
        %v2264 = vunpack.c.l.s4 1966171168
        %v2265 = vunpack.c.0.s8 %v2264
        %v2266 = vlaneseq
        %v2267 = vshrl.u32 %v2266, 7
        %v2268 = vsub.s32 %v2265, %v2267
        %v2269 = vrot.slane %v2255, %v2268
        %v2270 = vcombine.high %v2262, %v2262
        %v2271 = vcombine.high %v2269, %v2269
        %v2273 = vunpack.c.l.s4 1966171168
        %v2274 = vunpack.c.0.s8 %v2273
        %v2275 = vlaneseq
        %v2276 = vshrl.u32 %v2275, 7
        %v2277 = vsub.s32 %v2274, %v2276
        %v2278 = vrot.slane %v2262, %v2277
        %v2280 = vunpack.c.l.s4 1966171168
        %v2281 = vunpack.c.0.s8 %v2280
        %v2282 = vlaneseq
        %v2283 = vshrl.u32 %v2282, 7
        %v2284 = vsub.s32 %v2281, %v2283
        %v2285 = vrot.slane %v2269, %v2284
        %v2287 = vunpack.c.l.s4 1966171168
        %v2288 = vunpack.c.0.s8 %v2287
        %v2289 = vlaneseq
        %v2290 = vshrl.u32 %v2289, 7
        %v2291 = vsub.s32 %v2288, %v2290
        %v2292 = vrot.slane %v2270, %v2291
        %v2294 = vunpack.c.l.s4 1966171168
        %v2295 = vunpack.c.0.s8 %v2294
        %v2296 = vlaneseq
        %v2297 = vshrl.u32 %v2296, 7
        %v2298 = vsub.s32 %v2295, %v2297
        %v2299 = vrot.slane %v2271, %v2298
        %v2300 = vcombine.high %v2278, %v2278
        %v2301 = vcombine.high %v2285, %v2285
        %v2302 = vcombine.high %v2292, %v2292
        %v2303 = vcombine.high %v2299, %v2299
        %v2304 = vlaneseq
        %v2305 = vshrl.u32 %v2304, 7
        %v2306 = vsub.s32 0, %v2305
        %v2307 = vrot.slane %v2278, %v2306
        %v2308 = vlaneseq
        %v2309 = vshrl.u32 %v2308, 7
        %v2310 = vsub.s32 1, %v2309
        %v2311 = vrot.slane %v2278, %v2310
        %v2312 = vlaneseq
        %v2313 = vshrl.u32 %v2312, 7
        %v2314 = vsub.s32 0, %v2313
        %v2315 = vrot.slane %v2292, %v2314
        %v2316 = vlaneseq
        %v2317 = vshrl.u32 %v2316, 7
        %v2318 = vsub.s32 1, %v2317
        %v2319 = vrot.slane %v2292, %v2318
        %v2320 = vlaneseq
        %v2321 = vshrl.u32 %v2320, 7
        %v2322 = vsub.s32 0, %v2321
        %v2323 = vrot.slane %v2300, %v2322
        %v2324 = vlaneseq
        %v2325 = vshrl.u32 %v2324, 7
        %v2326 = vsub.s32 1, %v2325
        %v2327 = vrot.slane %v2300, %v2326
        %v2328 = vlaneseq
        %v2329 = vshrl.u32 %v2328, 7
        %v2330 = vsub.s32 0, %v2329
        %v2331 = vrot.slane %v2302, %v2330
        %v2332 = vlaneseq
        %v2333 = vshrl.u32 %v2332, 7
        %v2334 = vsub.s32 1, %v2333
        %v2335 = vrot.slane %v2302, %v2334
        %v2336 = vlaneseq
        %v2337 = vshrl.u32 %v2336, 7
        %v2338 = vsub.s32 0, %v2337
        %v2339 = vrot.slane %v2285, %v2338
        %v2340 = vlaneseq
        %v2341 = vshrl.u32 %v2340, 7
        %v2342 = vsub.s32 1, %v2341
        %v2343 = vrot.slane %v2285, %v2342
        %v2344 = vlaneseq
        %v2345 = vshrl.u32 %v2344, 7
        %v2346 = vsub.s32 0, %v2345
        %v2347 = vrot.slane %v2299, %v2346
        %v2348 = vlaneseq
        %v2349 = vshrl.u32 %v2348, 7
        %v2350 = vsub.s32 1, %v2349
        %v2351 = vrot.slane %v2299, %v2350
        %v2352 = vlaneseq
        %v2353 = vshrl.u32 %v2352, 7
        %v2354 = vsub.s32 0, %v2353
        %v2355 = vrot.slane %v2301, %v2354
        %v2356 = vlaneseq
        %v2357 = vshrl.u32 %v2356, 7
        %v2358 = vsub.s32 1, %v2357
        %v2359 = vrot.slane %v2301, %v2358
        %v2360 = vlaneseq
        %v2361 = vshrl.u32 %v2360, 7
        %v2362 = vsub.s32 0, %v2361
        %v2363 = vrot.slane %v2303, %v2362
        %v2364 = vlaneseq
        %v2365 = vshrl.u32 %v2364, 7
        %v2366 = vsub.s32 1, %v2365
        %v2367 = vrot.slane %v2303, %v2366
        %v2384 = vadd.f32 %v2307, %v1484
        %v2385 = vadd.f32 %v2311, %v1486
        %v2386 = vadd.f32 %v2307, %v1490
        %v2387 = vadd.f32 %v2311, %v1492
        %v2388 = vadd.f32 %v2307, %v1496
        %v2389 = vadd.f32 %v2311, %v1498
        %v2390 = vadd.f32 %v2307, %v1502
        %v2391 = vadd.f32 %v2311, %v1504
        %v2392 = vadd.f32 %v2307, %v1508
        %v2393 = vadd.f32 %v2311, %v1510
        %v2394 = vadd.f32 %v2307, %v1514
        %v2395 = vadd.f32 %v2311, %v1516
        %v2396 = vadd.f32 %v2307, %v1520
        %v2397 = vadd.f32 %v2311, %v1522
        %v2398 = vadd.f32 %v2307, %v1526
        %v2399 = vadd.f32 %v2311, %v1528
        %v2400 = vadd.f32 %v2307, %v1532
        %v2401 = vadd.f32 %v2311, %v1534
        %v2402 = vadd.f32 %v2307, %v1538
        %v2403 = vadd.f32 %v2311, %v1540
        %v2404 = vadd.f32 %v2307, %v1544
        %v2405 = vadd.f32 %v2311, %v1546
        %v2406 = vadd.f32 %v2307, %v1550
        %v2407 = vadd.f32 %v2311, %v1552
        %v2408 = vadd.f32 %v2307, %v1556
        %v2409 = vadd.f32 %v2311, %v1558
        %v2410 = vadd.f32 %v2307, %v1562
        %v2411 = vadd.f32 %v2311, %v1564
        %v2412 = vadd.f32 %v2307, %v1568
        %v2413 = vadd.f32 %v2311, %v1570
        %v2414 = vadd.f32 %v2307, %v1574
        %v2415 = vadd.f32 %v2311, %v1576
        %v2416 = vadd.f32 %v2315, %v1580
        %v2417 = vadd.f32 %v2319, %v1582
        %v2418 = vadd.f32 %v2315, %v1586
        %v2419 = vadd.f32 %v2319, %v1588
        %v2420 = vadd.f32 %v2315, %v1592
        %v2421 = vadd.f32 %v2319, %v1594
        %v2422 = vadd.f32 %v2315, %v1598
        %v2423 = vadd.f32 %v2319, %v1600
        %v2424 = vadd.f32 %v2315, %v1604
        %v2425 = vadd.f32 %v2319, %v1606
        %v2426 = vadd.f32 %v2315, %v1610
        %v2427 = vadd.f32 %v2319, %v1612
        %v2428 = vadd.f32 %v2315, %v1616
        %v2429 = vadd.f32 %v2319, %v1618
        %v2430 = vadd.f32 %v2315, %v1622
        %v2431 = vadd.f32 %v2319, %v1624
        %v2432 = vadd.f32 %v2315, %v1628
        %v2433 = vadd.f32 %v2319, %v1630
        %v2434 = vadd.f32 %v2315, %v1634
        %v2435 = vadd.f32 %v2319, %v1636
        %v2436 = vadd.f32 %v2315, %v1640
        %v2437 = vadd.f32 %v2319, %v1642
        %v2438 = vadd.f32 %v2315, %v1646
        %v2439 = vadd.f32 %v2319, %v1648
        %v2440 = vadd.f32 %v2315, %v1652
        %v2441 = vadd.f32 %v2319, %v1654
        %v2442 = vadd.f32 %v2315, %v1658
        %v2443 = vadd.f32 %v2319, %v1660
        %v2444 = vadd.f32 %v2315, %v1664
        %v2445 = vadd.f32 %v2319, %v1666
        %v2446 = vadd.f32 %v2315, %v1670
        %v2447 = vadd.f32 %v2319, %v1672
        %v2448 = vadd.f32 %v2323, %v1676
        %v2449 = vadd.f32 %v2327, %v1678
        %v2450 = vadd.f32 %v2323, %v1682
        %v2451 = vadd.f32 %v2327, %v1684
        %v2452 = vadd.f32 %v2323, %v1688
        %v2453 = vadd.f32 %v2327, %v1690
        %v2454 = vadd.f32 %v2323, %v1694
        %v2455 = vadd.f32 %v2327, %v1696
        %v2456 = vadd.f32 %v2323, %v1700
        %v2457 = vadd.f32 %v2327, %v1702
        %v2458 = vadd.f32 %v2323, %v1706
        %v2459 = vadd.f32 %v2327, %v1708
        %v2460 = vadd.f32 %v2323, %v1712
        %v2461 = vadd.f32 %v2327, %v1714
        %v2462 = vadd.f32 %v2323, %v1718
        %v2463 = vadd.f32 %v2327, %v1720
        %v2464 = vadd.f32 %v2323, %v1724
        %v2465 = vadd.f32 %v2327, %v1726
        %v2466 = vadd.f32 %v2323, %v1730
        %v2467 = vadd.f32 %v2327, %v1732
        %v2468 = vadd.f32 %v2323, %v1736
        %v2469 = vadd.f32 %v2327, %v1738
        %v2470 = vadd.f32 %v2323, %v1742
        %v2471 = vadd.f32 %v2327, %v1744
        %v2472 = vadd.f32 %v2323, %v1748
        %v2473 = vadd.f32 %v2327, %v1750
        %v2474 = vadd.f32 %v2323, %v1754
        %v2475 = vadd.f32 %v2327, %v1756
        %v2476 = vadd.f32 %v2323, %v1760
        %v2477 = vadd.f32 %v2327, %v1762
        %v2478 = vadd.f32 %v2323, %v1766
        %v2479 = vadd.f32 %v2327, %v1768
        %v2480 = vadd.f32 %v2331, %v1772
        %v2481 = vadd.f32 %v2335, %v1774
        %v2482 = vadd.f32 %v2331, %v1778
        %v2483 = vadd.f32 %v2335, %v1780
        %v2484 = vadd.f32 %v2331, %v1784
        %v2485 = vadd.f32 %v2335, %v1786
        %v2486 = vadd.f32 %v2331, %v1790
        %v2487 = vadd.f32 %v2335, %v1792
        %v2488 = vadd.f32 %v2331, %v1796
        %v2489 = vadd.f32 %v2335, %v1798
        %v2490 = vadd.f32 %v2331, %v1802
        %v2491 = vadd.f32 %v2335, %v1804
        %v2492 = vadd.f32 %v2331, %v1808
        %v2493 = vadd.f32 %v2335, %v1810
        %v2494 = vadd.f32 %v2331, %v1814
        %v2495 = vadd.f32 %v2335, %v1816
        %v2496 = vadd.f32 %v2331, %v1820
        %v2497 = vadd.f32 %v2335, %v1822
        %v2498 = vadd.f32 %v2331, %v1826
        %v2499 = vadd.f32 %v2335, %v1828
        %v2500 = vadd.f32 %v2331, %v1832
        %v2501 = vadd.f32 %v2335, %v1834
        %v2502 = vadd.f32 %v2331, %v1838
        %v2503 = vadd.f32 %v2335, %v1840
        %v2504 = vadd.f32 %v2331, %v1844
        %v2505 = vadd.f32 %v2335, %v1846
        %v2506 = vadd.f32 %v2331, %v1850
        %v2507 = vadd.f32 %v2335, %v1852
        %v2508 = vadd.f32 %v2331, %v1856
        %v2509 = vadd.f32 %v2335, %v1858
        %v2510 = vadd.f32 %v2331, %v1862
        %v2511 = vadd.f32 %v2335, %v1864
        %v2512 = vadd.f32 %v2339, %v1868
        %v2513 = vadd.f32 %v2343, %v1870
        %v2514 = vadd.f32 %v2339, %v1874
        %v2515 = vadd.f32 %v2343, %v1876
        %v2516 = vadd.f32 %v2339, %v1880
        %v2517 = vadd.f32 %v2343, %v1882
        %v2518 = vadd.f32 %v2339, %v1886
        %v2519 = vadd.f32 %v2343, %v1888
        %v2520 = vadd.f32 %v2339, %v1892
        %v2521 = vadd.f32 %v2343, %v1894
        %v2522 = vadd.f32 %v2339, %v1898
        %v2523 = vadd.f32 %v2343, %v1900
        %v2524 = vadd.f32 %v2339, %v1904
        %v2525 = vadd.f32 %v2343, %v1906
        %v2526 = vadd.f32 %v2339, %v1910
        %v2527 = vadd.f32 %v2343, %v1912
        %v2528 = vadd.f32 %v2339, %v1916
        %v2529 = vadd.f32 %v2343, %v1918
        %v2530 = vadd.f32 %v2339, %v1922
        %v2531 = vadd.f32 %v2343, %v1924
        %v2532 = vadd.f32 %v2339, %v1928
        %v2533 = vadd.f32 %v2343, %v1930
        %v2534 = vadd.f32 %v2339, %v1934
        %v2535 = vadd.f32 %v2343, %v1936
        %v2536 = vadd.f32 %v2339, %v1940
        %v2537 = vadd.f32 %v2343, %v1942
        %v2538 = vadd.f32 %v2339, %v1946
        %v2539 = vadd.f32 %v2343, %v1948
        %v2540 = vadd.f32 %v2339, %v1952
        %v2541 = vadd.f32 %v2343, %v1954
        %v2542 = vadd.f32 %v2339, %v1958
        %v2543 = vadd.f32 %v2343, %v1960
        %v2544 = vadd.f32 %v2347, %v1964
        %v2545 = vadd.f32 %v2351, %v1966
        %v2546 = vadd.f32 %v2347, %v1970
        %v2547 = vadd.f32 %v2351, %v1972
        %v2548 = vadd.f32 %v2347, %v1976
        %v2549 = vadd.f32 %v2351, %v1978
        %v2550 = vadd.f32 %v2347, %v1982
        %v2551 = vadd.f32 %v2351, %v1984
        %v2552 = vadd.f32 %v2347, %v1988
        %v2553 = vadd.f32 %v2351, %v1990
        %v2554 = vadd.f32 %v2347, %v1994
        %v2555 = vadd.f32 %v2351, %v1996
        %v2556 = vadd.f32 %v2347, %v2000
        %v2557 = vadd.f32 %v2351, %v2002
        %v2558 = vadd.f32 %v2347, %v2006
        %v2559 = vadd.f32 %v2351, %v2008
        %v2560 = vadd.f32 %v2347, %v2012
        %v2561 = vadd.f32 %v2351, %v2014
        %v2562 = vadd.f32 %v2347, %v2018
        %v2563 = vadd.f32 %v2351, %v2020
        %v2564 = vadd.f32 %v2347, %v2024
        %v2565 = vadd.f32 %v2351, %v2026
        %v2566 = vadd.f32 %v2347, %v2030
        %v2567 = vadd.f32 %v2351, %v2032
        %v2568 = vadd.f32 %v2347, %v2036
        %v2569 = vadd.f32 %v2351, %v2038
        %v2570 = vadd.f32 %v2347, %v2042
        %v2571 = vadd.f32 %v2351, %v2044
        %v2572 = vadd.f32 %v2347, %v2048
        %v2573 = vadd.f32 %v2351, %v2050
        %v2574 = vadd.f32 %v2347, %v2054
        %v2575 = vadd.f32 %v2351, %v2056
        %v2576 = vadd.f32 %v2355, %v2060
        %v2577 = vadd.f32 %v2359, %v2062
        %v2578 = vadd.f32 %v2355, %v2066
        %v2579 = vadd.f32 %v2359, %v2068
        %v2580 = vadd.f32 %v2355, %v2072
        %v2581 = vadd.f32 %v2359, %v2074
        %v2582 = vadd.f32 %v2355, %v2078
        %v2583 = vadd.f32 %v2359, %v2080
        %v2584 = vadd.f32 %v2355, %v2084
        %v2585 = vadd.f32 %v2359, %v2086
        %v2586 = vadd.f32 %v2355, %v2090
        %v2587 = vadd.f32 %v2359, %v2092
        %v2588 = vadd.f32 %v2355, %v2096
        %v2589 = vadd.f32 %v2359, %v2098
        %v2590 = vadd.f32 %v2355, %v2102
        %v2591 = vadd.f32 %v2359, %v2104
        %v2592 = vadd.f32 %v2355, %v2108
        %v2593 = vadd.f32 %v2359, %v2110
        %v2594 = vadd.f32 %v2355, %v2114
        %v2595 = vadd.f32 %v2359, %v2116
        %v2596 = vadd.f32 %v2355, %v2120
        %v2597 = vadd.f32 %v2359, %v2122
        %v2598 = vadd.f32 %v2355, %v2126
        %v2599 = vadd.f32 %v2359, %v2128
        %v2600 = vadd.f32 %v2355, %v2132
        %v2601 = vadd.f32 %v2359, %v2134
        %v2602 = vadd.f32 %v2355, %v2138
        %v2603 = vadd.f32 %v2359, %v2140
        %v2604 = vadd.f32 %v2355, %v2144
        %v2605 = vadd.f32 %v2359, %v2146
        %v2606 = vadd.f32 %v2355, %v2150
        %v2607 = vadd.f32 %v2359, %v2152
        %v2608 = vadd.f32 %v2363, %v2156
        %v2609 = vadd.f32 %v2367, %v2158
        %v2610 = vadd.f32 %v2363, %v2162
        %v2611 = vadd.f32 %v2367, %v2164
        %v2612 = vadd.f32 %v2363, %v2168
        %v2613 = vadd.f32 %v2367, %v2170
        %v2614 = vadd.f32 %v2363, %v2174
        %v2615 = vadd.f32 %v2367, %v2176
        %v2616 = vadd.f32 %v2363, %v2180
        %v2617 = vadd.f32 %v2367, %v2182
        %v2618 = vadd.f32 %v2363, %v2186
        %v2619 = vadd.f32 %v2367, %v2188
        %v2620 = vadd.f32 %v2363, %v2192
        %v2621 = vadd.f32 %v2367, %v2194
        %v2622 = vadd.f32 %v2363, %v2198
        %v2623 = vadd.f32 %v2367, %v2200
        %v2624 = vadd.f32 %v2363, %v2204
        %v2625 = vadd.f32 %v2367, %v2206
        %v2626 = vadd.f32 %v2363, %v2210
        %v2627 = vadd.f32 %v2367, %v2212
        %v2628 = vadd.f32 %v2363, %v2216
        %v2629 = vadd.f32 %v2367, %v2218
        %v2630 = vadd.f32 %v2363, %v2222
        %v2631 = vadd.f32 %v2367, %v2224
        %v2632 = vadd.f32 %v2363, %v2228
        %v2633 = vadd.f32 %v2367, %v2230
        %v2634 = vadd.f32 %v2363, %v2234
        %v2635 = vadd.f32 %v2367, %v2236
        %v2636 = vadd.f32 %v2363, %v2240
        %v2637 = vadd.f32 %v2367, %v2242
        %v2638 = vadd.f32 %v2363, %v2246
        %v2639 = vadd.f32 %v2367, %v2248
        %p2640 = scmp.eq.s32.totalorder %s31, 0
        // Predicated region
        $region87: #{tpu_custom_call.1} parent=77 // pred_check
          %p2641 = pneg %p2640
        $region88: #{tpu_custom_call.1} parent=77 // pred_check_branch
          %2643 = sbr.rel (%p2641) target = $region90
        $region89: #{tpu_custom_call.1} parent=77 // pred_region
          %2644 = vst [vmem:[#allocation2] sm:$0xff] -inf
          %2645 = vst [vmem:[#allocation3] sm:$0xff] 0.0
        $region90: #{tpu_custom_call.1} parent=77 // pred_fallthru
          _
        %v2646 = vmax.f32 %v2384, %v2385
        %2647 = vmax.xlane.f32.xlu0 %v2646
        %v2648 = vpop.xlane.xlu0 %2647
        %v2649 = vmax.f32 %v2386, %v2387
        %2650 = vmax.xlane.f32.xlu0 %v2649
        %v2651 = vpop.xlane.xlu0 %2650
        %v2652 = vmax.f32 %v2388, %v2389
        %2653 = vmax.xlane.f32.xlu0 %v2652
        %v2654 = vpop.xlane.xlu0 %2653
        %v2655 = vmax.f32 %v2390, %v2391
        %2656 = vmax.xlane.f32.xlu0 %v2655
        %v2657 = vpop.xlane.xlu0 %2656
        %v2658 = vmax.f32 %v2392, %v2393
        %2659 = vmax.xlane.f32.xlu0 %v2658
        %v2660 = vpop.xlane.xlu0 %2659
        %v2661 = vmax.f32 %v2394, %v2395
        %2662 = vmax.xlane.f32.xlu0 %v2661
        %v2663 = vpop.xlane.xlu0 %2662
        %v2664 = vmax.f32 %v2396, %v2397
        %2665 = vmax.xlane.f32.xlu0 %v2664
        %v2666 = vpop.xlane.xlu0 %2665
        %v2667 = vmax.f32 %v2398, %v2399
        %2668 = vmax.xlane.f32.xlu0 %v2667
        %v2669 = vpop.xlane.xlu0 %2668
        %v2670 = vmax.f32 %v2400, %v2401
        %2671 = vmax.xlane.f32.xlu0 %v2670
        %v2672 = vpop.xlane.xlu0 %2671
        %v2673 = vmax.f32 %v2402, %v2403
        %2674 = vmax.xlane.f32.xlu0 %v2673
        %v2675 = vpop.xlane.xlu0 %2674
        %v2676 = vmax.f32 %v2404, %v2405
        %2677 = vmax.xlane.f32.xlu0 %v2676
        %v2678 = vpop.xlane.xlu0 %2677
        %v2679 = vmax.f32 %v2406, %v2407
        %2680 = vmax.xlane.f32.xlu0 %v2679
        %v2681 = vpop.xlane.xlu0 %2680
        %v2682 = vmax.f32 %v2408, %v2409
        %2683 = vmax.xlane.f32.xlu0 %v2682
        %v2684 = vpop.xlane.xlu0 %2683
        %v2685 = vmax.f32 %v2410, %v2411
        %2686 = vmax.xlane.f32.xlu0 %v2685
        %v2687 = vpop.xlane.xlu0 %2686
        %v2688 = vmax.f32 %v2412, %v2413
        %2689 = vmax.xlane.f32.xlu0 %v2688
        %v2690 = vpop.xlane.xlu0 %2689
        %v2691 = vmax.f32 %v2414, %v2415
        %2692 = vmax.xlane.f32.xlu0 %v2691
        %v2693 = vpop.xlane.xlu0 %2692
        %v2694 = vmax.f32 %v2416, %v2417
        %2695 = vmax.xlane.f32.xlu0 %v2694
        %v2696 = vpop.xlane.xlu0 %2695
        %v2697 = vmax.f32 %v2418, %v2419
        %2698 = vmax.xlane.f32.xlu0 %v2697
        %v2699 = vpop.xlane.xlu0 %2698
        %v2700 = vmax.f32 %v2420, %v2421
        %2701 = vmax.xlane.f32.xlu0 %v2700
        %v2702 = vpop.xlane.xlu0 %2701
        %v2703 = vmax.f32 %v2422, %v2423
        %2704 = vmax.xlane.f32.xlu0 %v2703
        %v2705 = vpop.xlane.xlu0 %2704
        %v2706 = vmax.f32 %v2424, %v2425
        %2707 = vmax.xlane.f32.xlu0 %v2706
        %v2708 = vpop.xlane.xlu0 %2707
        %v2709 = vmax.f32 %v2426, %v2427
        %2710 = vmax.xlane.f32.xlu0 %v2709
        %v2711 = vpop.xlane.xlu0 %2710
        %v2712 = vmax.f32 %v2428, %v2429
        %2713 = vmax.xlane.f32.xlu0 %v2712
        %v2714 = vpop.xlane.xlu0 %2713
        %v2715 = vmax.f32 %v2430, %v2431
        %2716 = vmax.xlane.f32.xlu0 %v2715
        %v2717 = vpop.xlane.xlu0 %2716
        %v2718 = vmax.f32 %v2432, %v2433
        %2719 = vmax.xlane.f32.xlu0 %v2718
        %v2720 = vpop.xlane.xlu0 %2719
        %v2721 = vmax.f32 %v2434, %v2435
        %2722 = vmax.xlane.f32.xlu0 %v2721
        %v2723 = vpop.xlane.xlu0 %2722
        %v2724 = vmax.f32 %v2436, %v2437
        %2725 = vmax.xlane.f32.xlu0 %v2724
        %v2726 = vpop.xlane.xlu0 %2725
        %v2727 = vmax.f32 %v2438, %v2439
        %2728 = vmax.xlane.f32.xlu0 %v2727
        %v2729 = vpop.xlane.xlu0 %2728
        %v2730 = vmax.f32 %v2440, %v2441
        %2731 = vmax.xlane.f32.xlu0 %v2730
        %v2732 = vpop.xlane.xlu0 %2731
        %v2733 = vmax.f32 %v2442, %v2443
        %2734 = vmax.xlane.f32.xlu0 %v2733
        %v2735 = vpop.xlane.xlu0 %2734
        %v2736 = vmax.f32 %v2444, %v2445
        %2737 = vmax.xlane.f32.xlu0 %v2736
        %v2738 = vpop.xlane.xlu0 %2737
        %v2739 = vmax.f32 %v2446, %v2447
        %2740 = vmax.xlane.f32.xlu0 %v2739
        %v2741 = vpop.xlane.xlu0 %2740
        %v2742 = vmax.f32 %v2448, %v2449
        %2743 = vmax.xlane.f32.xlu0 %v2742
        %v2744 = vpop.xlane.xlu0 %2743
        %v2745 = vmax.f32 %v2450, %v2451
        %2746 = vmax.xlane.f32.xlu0 %v2745
        %v2747 = vpop.xlane.xlu0 %2746
        %v2748 = vmax.f32 %v2452, %v2453
        %2749 = vmax.xlane.f32.xlu0 %v2748
        %v2750 = vpop.xlane.xlu0 %2749
        %v2751 = vmax.f32 %v2454, %v2455
        %2752 = vmax.xlane.f32.xlu0 %v2751
        %v2753 = vpop.xlane.xlu0 %2752
        %v2754 = vmax.f32 %v2456, %v2457
        %2755 = vmax.xlane.f32.xlu0 %v2754
        %v2756 = vpop.xlane.xlu0 %2755
        %v2757 = vmax.f32 %v2458, %v2459
        %2758 = vmax.xlane.f32.xlu0 %v2757
        %v2759 = vpop.xlane.xlu0 %2758
        %v2760 = vmax.f32 %v2460, %v2461
        %2761 = vmax.xlane.f32.xlu0 %v2760
        %v2762 = vpop.xlane.xlu0 %2761
        %v2763 = vmax.f32 %v2462, %v2463
        %2764 = vmax.xlane.f32.xlu0 %v2763
        %v2765 = vpop.xlane.xlu0 %2764
        %v2766 = vmax.f32 %v2464, %v2465
        %2767 = vmax.xlane.f32.xlu0 %v2766
        %v2768 = vpop.xlane.xlu0 %2767
        %v2769 = vmax.f32 %v2466, %v2467
        %2770 = vmax.xlane.f32.xlu0 %v2769
        %v2771 = vpop.xlane.xlu0 %2770
        %v2772 = vmax.f32 %v2468, %v2469
        %2773 = vmax.xlane.f32.xlu0 %v2772
        %v2774 = vpop.xlane.xlu0 %2773
        %v2775 = vmax.f32 %v2470, %v2471
        %2776 = vmax.xlane.f32.xlu0 %v2775
        %v2777 = vpop.xlane.xlu0 %2776
        %v2778 = vmax.f32 %v2472, %v2473
        %2779 = vmax.xlane.f32.xlu0 %v2778
        %v2780 = vpop.xlane.xlu0 %2779
        %v2781 = vmax.f32 %v2474, %v2475
        %2782 = vmax.xlane.f32.xlu0 %v2781
        %v2783 = vpop.xlane.xlu0 %2782
        %v2784 = vmax.f32 %v2476, %v2477
        %2785 = vmax.xlane.f32.xlu0 %v2784
        %v2786 = vpop.xlane.xlu0 %2785
        %v2787 = vmax.f32 %v2478, %v2479
        %2788 = vmax.xlane.f32.xlu0 %v2787
        %v2789 = vpop.xlane.xlu0 %2788
        %v2790 = vmax.f32 %v2480, %v2481
        %2791 = vmax.xlane.f32.xlu0 %v2790
        %v2792 = vpop.xlane.xlu0 %2791
        %v2793 = vmax.f32 %v2482, %v2483
        %2794 = vmax.xlane.f32.xlu0 %v2793
        %v2795 = vpop.xlane.xlu0 %2794
        %v2796 = vmax.f32 %v2484, %v2485
        %2797 = vmax.xlane.f32.xlu0 %v2796
        %v2798 = vpop.xlane.xlu0 %2797
        %v2799 = vmax.f32 %v2486, %v2487
        %2800 = vmax.xlane.f32.xlu0 %v2799
        %v2801 = vpop.xlane.xlu0 %2800
        %v2802 = vmax.f32 %v2488, %v2489
        %2803 = vmax.xlane.f32.xlu0 %v2802
        %v2804 = vpop.xlane.xlu0 %2803
        %v2805 = vmax.f32 %v2490, %v2491
        %2806 = vmax.xlane.f32.xlu0 %v2805
        %v2807 = vpop.xlane.xlu0 %2806
        %v2808 = vmax.f32 %v2492, %v2493
        %2809 = vmax.xlane.f32.xlu0 %v2808
        %v2810 = vpop.xlane.xlu0 %2809
        %v2811 = vmax.f32 %v2494, %v2495
        %2812 = vmax.xlane.f32.xlu0 %v2811
        %v2813 = vpop.xlane.xlu0 %2812
        %v2814 = vmax.f32 %v2496, %v2497
        %2815 = vmax.xlane.f32.xlu0 %v2814
        %v2816 = vpop.xlane.xlu0 %2815
        %v2817 = vmax.f32 %v2498, %v2499
        %2818 = vmax.xlane.f32.xlu0 %v2817
        %v2819 = vpop.xlane.xlu0 %2818
        %v2820 = vmax.f32 %v2500, %v2501
        %2821 = vmax.xlane.f32.xlu0 %v2820
        %v2822 = vpop.xlane.xlu0 %2821
        %v2823 = vmax.f32 %v2502, %v2503
        %2824 = vmax.xlane.f32.xlu0 %v2823
        %v2825 = vpop.xlane.xlu0 %2824
        %v2826 = vmax.f32 %v2504, %v2505
        %2827 = vmax.xlane.f32.xlu0 %v2826
        %v2828 = vpop.xlane.xlu0 %2827
        %v2829 = vmax.f32 %v2506, %v2507
        %2830 = vmax.xlane.f32.xlu0 %v2829
        %v2831 = vpop.xlane.xlu0 %2830
        %v2832 = vmax.f32 %v2508, %v2509
        %2833 = vmax.xlane.f32.xlu0 %v2832
        %v2834 = vpop.xlane.xlu0 %2833
        %v2835 = vmax.f32 %v2510, %v2511
        %2836 = vmax.xlane.f32.xlu0 %v2835
        %v2837 = vpop.xlane.xlu0 %2836
        %v2838 = vmax.f32 %v2512, %v2513
        %2839 = vmax.xlane.f32.xlu0 %v2838
        %v2840 = vpop.xlane.xlu0 %2839
        %v2841 = vmax.f32 %v2514, %v2515
        %2842 = vmax.xlane.f32.xlu0 %v2841
        %v2843 = vpop.xlane.xlu0 %2842
        %v2844 = vmax.f32 %v2516, %v2517
        %2845 = vmax.xlane.f32.xlu0 %v2844
        %v2846 = vpop.xlane.xlu0 %2845
        %v2847 = vmax.f32 %v2518, %v2519
        %2848 = vmax.xlane.f32.xlu0 %v2847
        %v2849 = vpop.xlane.xlu0 %2848
        %v2850 = vmax.f32 %v2520, %v2521
        %2851 = vmax.xlane.f32.xlu0 %v2850
        %v2852 = vpop.xlane.xlu0 %2851
        %v2853 = vmax.f32 %v2522, %v2523
        %2854 = vmax.xlane.f32.xlu0 %v2853
        %v2855 = vpop.xlane.xlu0 %2854
        %v2856 = vmax.f32 %v2524, %v2525
        %2857 = vmax.xlane.f32.xlu0 %v2856
        %v2858 = vpop.xlane.xlu0 %2857
        %v2859 = vmax.f32 %v2526, %v2527
        %2860 = vmax.xlane.f32.xlu0 %v2859
        %v2861 = vpop.xlane.xlu0 %2860
        %v2862 = vmax.f32 %v2528, %v2529
        %2863 = vmax.xlane.f32.xlu0 %v2862
        %v2864 = vpop.xlane.xlu0 %2863
        %v2865 = vmax.f32 %v2530, %v2531
        %2866 = vmax.xlane.f32.xlu0 %v2865
        %v2867 = vpop.xlane.xlu0 %2866
        %v2868 = vmax.f32 %v2532, %v2533
        %2869 = vmax.xlane.f32.xlu0 %v2868
        %v2870 = vpop.xlane.xlu0 %2869
        %v2871 = vmax.f32 %v2534, %v2535
        %2872 = vmax.xlane.f32.xlu0 %v2871
        %v2873 = vpop.xlane.xlu0 %2872
        %v2874 = vmax.f32 %v2536, %v2537
        %2875 = vmax.xlane.f32.xlu0 %v2874
        %v2876 = vpop.xlane.xlu0 %2875
        %v2877 = vmax.f32 %v2538, %v2539
        %2878 = vmax.xlane.f32.xlu0 %v2877
        %v2879 = vpop.xlane.xlu0 %2878
        %v2880 = vmax.f32 %v2540, %v2541
        %2881 = vmax.xlane.f32.xlu0 %v2880
        %v2882 = vpop.xlane.xlu0 %2881
        %v2883 = vmax.f32 %v2542, %v2543
        %2884 = vmax.xlane.f32.xlu0 %v2883
        %v2885 = vpop.xlane.xlu0 %2884
        %v2886 = vmax.f32 %v2544, %v2545
        %2887 = vmax.xlane.f32.xlu0 %v2886
        %v2888 = vpop.xlane.xlu0 %2887
        %v2889 = vmax.f32 %v2546, %v2547
        %2890 = vmax.xlane.f32.xlu0 %v2889
        %v2891 = vpop.xlane.xlu0 %2890
        %v2892 = vmax.f32 %v2548, %v2549
        %2893 = vmax.xlane.f32.xlu0 %v2892
        %v2894 = vpop.xlane.xlu0 %2893
        %v2895 = vmax.f32 %v2550, %v2551
        %2896 = vmax.xlane.f32.xlu0 %v2895
        %v2897 = vpop.xlane.xlu0 %2896
        %v2898 = vmax.f32 %v2552, %v2553
        %2899 = vmax.xlane.f32.xlu0 %v2898
        %v2900 = vpop.xlane.xlu0 %2899
        %v2901 = vmax.f32 %v2554, %v2555
        %2902 = vmax.xlane.f32.xlu0 %v2901
        %v2903 = vpop.xlane.xlu0 %2902
        %v2904 = vmax.f32 %v2556, %v2557
        %2905 = vmax.xlane.f32.xlu0 %v2904
        %v2906 = vpop.xlane.xlu0 %2905
        %v2907 = vmax.f32 %v2558, %v2559
        %2908 = vmax.xlane.f32.xlu0 %v2907
        %v2909 = vpop.xlane.xlu0 %2908
        %v2910 = vmax.f32 %v2560, %v2561
        %2911 = vmax.xlane.f32.xlu0 %v2910
        %v2912 = vpop.xlane.xlu0 %2911
        %v2913 = vmax.f32 %v2562, %v2563
        %2914 = vmax.xlane.f32.xlu0 %v2913
        %v2915 = vpop.xlane.xlu0 %2914
        %v2916 = vmax.f32 %v2564, %v2565
        %2917 = vmax.xlane.f32.xlu0 %v2916
        %v2918 = vpop.xlane.xlu0 %2917
        %v2919 = vmax.f32 %v2566, %v2567
        %2920 = vmax.xlane.f32.xlu0 %v2919
        %v2921 = vpop.xlane.xlu0 %2920
        %v2922 = vmax.f32 %v2568, %v2569
        %2923 = vmax.xlane.f32.xlu0 %v2922
        %v2924 = vpop.xlane.xlu0 %2923
        %v2925 = vmax.f32 %v2570, %v2571
        %2926 = vmax.xlane.f32.xlu0 %v2925
        %v2927 = vpop.xlane.xlu0 %2926
        %v2928 = vmax.f32 %v2572, %v2573
        %2929 = vmax.xlane.f32.xlu0 %v2928
        %v2930 = vpop.xlane.xlu0 %2929
        %v2931 = vmax.f32 %v2574, %v2575
        %2932 = vmax.xlane.f32.xlu0 %v2931
        %v2933 = vpop.xlane.xlu0 %2932
        %v2934 = vmax.f32 %v2576, %v2577
        %2935 = vmax.xlane.f32.xlu0 %v2934
        %v2936 = vpop.xlane.xlu0 %2935
        %v2937 = vmax.f32 %v2578, %v2579
        %2938 = vmax.xlane.f32.xlu0 %v2937
        %v2939 = vpop.xlane.xlu0 %2938
        %v2940 = vmax.f32 %v2580, %v2581
        %2941 = vmax.xlane.f32.xlu0 %v2940
        %v2942 = vpop.xlane.xlu0 %2941
        %v2943 = vmax.f32 %v2582, %v2583
        %2944 = vmax.xlane.f32.xlu0 %v2943
        %v2945 = vpop.xlane.xlu0 %2944
        %v2946 = vmax.f32 %v2584, %v2585
        %2947 = vmax.xlane.f32.xlu0 %v2946
        %v2948 = vpop.xlane.xlu0 %2947
        %v2949 = vmax.f32 %v2586, %v2587
        %2950 = vmax.xlane.f32.xlu0 %v2949
        %v2951 = vpop.xlane.xlu0 %2950
        %v2952 = vmax.f32 %v2588, %v2589
        %2953 = vmax.xlane.f32.xlu0 %v2952
        %v2954 = vpop.xlane.xlu0 %2953
        %v2955 = vmax.f32 %v2590, %v2591
        %2956 = vmax.xlane.f32.xlu0 %v2955
        %v2957 = vpop.xlane.xlu0 %2956
        %v2958 = vmax.f32 %v2592, %v2593
        %2959 = vmax.xlane.f32.xlu0 %v2958
        %v2960 = vpop.xlane.xlu0 %2959
        %v2961 = vmax.f32 %v2594, %v2595
        %2962 = vmax.xlane.f32.xlu0 %v2961
        %v2963 = vpop.xlane.xlu0 %2962
        %v2964 = vmax.f32 %v2596, %v2597
        %2965 = vmax.xlane.f32.xlu0 %v2964
        %v2966 = vpop.xlane.xlu0 %2965
        %v2967 = vmax.f32 %v2598, %v2599
        %2968 = vmax.xlane.f32.xlu0 %v2967
        %v2969 = vpop.xlane.xlu0 %2968
        %v2970 = vmax.f32 %v2600, %v2601
        %2971 = vmax.xlane.f32.xlu0 %v2970
        %v2972 = vpop.xlane.xlu0 %2971
        %v2973 = vmax.f32 %v2602, %v2603
        %2974 = vmax.xlane.f32.xlu0 %v2973
        %v2975 = vpop.xlane.xlu0 %2974
        %v2976 = vmax.f32 %v2604, %v2605
        %2977 = vmax.xlane.f32.xlu0 %v2976
        %v2978 = vpop.xlane.xlu0 %2977
        %v2979 = vmax.f32 %v2606, %v2607
        %2980 = vmax.xlane.f32.xlu0 %v2979
        %v2981 = vpop.xlane.xlu0 %2980
        %v2982 = vmax.f32 %v2608, %v2609
        %2983 = vmax.xlane.f32.xlu0 %v2982
        %v2984 = vpop.xlane.xlu0 %2983
        %v2985 = vmax.f32 %v2610, %v2611
        %2986 = vmax.xlane.f32.xlu0 %v2985
        %v2987 = vpop.xlane.xlu0 %2986
        %v2988 = vmax.f32 %v2612, %v2613
        %2989 = vmax.xlane.f32.xlu0 %v2988
        %v2990 = vpop.xlane.xlu0 %2989
        %v2991 = vmax.f32 %v2614, %v2615
        %2992 = vmax.xlane.f32.xlu0 %v2991
        %v2993 = vpop.xlane.xlu0 %2992
        %v2994 = vmax.f32 %v2616, %v2617
        %2995 = vmax.xlane.f32.xlu0 %v2994
        %v2996 = vpop.xlane.xlu0 %2995
        %v2997 = vmax.f32 %v2618, %v2619
        %2998 = vmax.xlane.f32.xlu0 %v2997
        %v2999 = vpop.xlane.xlu0 %2998
        %v3000 = vmax.f32 %v2620, %v2621
        %3001 = vmax.xlane.f32.xlu0 %v3000
        %v3002 = vpop.xlane.xlu0 %3001
        %v3003 = vmax.f32 %v2622, %v2623
        %3004 = vmax.xlane.f32.xlu0 %v3003
        %v3005 = vpop.xlane.xlu0 %3004
        %v3006 = vmax.f32 %v2624, %v2625
        %3007 = vmax.xlane.f32.xlu0 %v3006
        %v3008 = vpop.xlane.xlu0 %3007
        %v3009 = vmax.f32 %v2626, %v2627
        %3010 = vmax.xlane.f32.xlu0 %v3009
        %v3011 = vpop.xlane.xlu0 %3010
        %v3012 = vmax.f32 %v2628, %v2629
        %3013 = vmax.xlane.f32.xlu0 %v3012
        %v3014 = vpop.xlane.xlu0 %3013
        %v3015 = vmax.f32 %v2630, %v2631
        %3016 = vmax.xlane.f32.xlu0 %v3015
        %v3017 = vpop.xlane.xlu0 %3016
        %v3018 = vmax.f32 %v2632, %v2633
        %3019 = vmax.xlane.f32.xlu0 %v3018
        %v3020 = vpop.xlane.xlu0 %3019
        %v3021 = vmax.f32 %v2634, %v2635
        %3022 = vmax.xlane.f32.xlu0 %v3021
        %v3023 = vpop.xlane.xlu0 %3022
        %v3024 = vmax.f32 %v2636, %v2637
        %3025 = vmax.xlane.f32.xlu0 %v3024
        %v3026 = vpop.xlane.xlu0 %3025
        %v3027 = vmax.f32 %v2638, %v2639
        %3028 = vmax.xlane.f32.xlu0 %v3027
        %v3029 = vpop.xlane.xlu0 %3028
        %v3030 = vld [vmem:[#allocation2] sm:$0xff]
        %v3159 = vlaneseq
        %v3160 = vand.u32 %v3159, 127
        %v3161 = vlaneseq
        %v3162 = vshrl.u32 %v3161, 7
        %v3163 = vsub.s32 %v3160, %v3162
        %v3164 = vrot.slane %v2648, %v3163
        %v3165 = vadd.s32 %v3160, 4294967288
        %v3166 = vlaneseq
        %v3167 = vshrl.u32 %v3166, 7
        %v3168 = vsub.s32 %v3165, %v3167
        %v3169 = vrot.slane %v2651, %v3168
        %vm3170 = vcmask 130112
        %v3171 = vsel %vm3170, %v3169, %v3164
        %v3172 = vadd.s32 %v3160, 4294967280
        %v3173 = vlaneseq
        %v3174 = vshrl.u32 %v3173, 7
        %v3175 = vsub.s32 %v3172, %v3174
        %v3176 = vrot.slane %v2654, %v3175
        %vm3177 = vcmask 195712
        %v3178 = vsel %vm3177, %v3176, %v3171
        %v3179 = vadd.s32 %v3160, 4294967272
        %v3180 = vlaneseq
        %v3181 = vshrl.u32 %v3180, 7
        %v3182 = vsub.s32 %v3179, %v3181
        %v3183 = vrot.slane %v2657, %v3182
        %vm3184 = vcmask 261312
        %v3185 = vsel %vm3184, %v3183, %v3178
        %v3186 = vadd.s32 %v3160, 4294967264
        %v3187 = vlaneseq
        %v3188 = vshrl.u32 %v3187, 7
        %v3189 = vsub.s32 %v3186, %v3188
        %v3190 = vrot.slane %v2660, %v3189
        %vm3191 = vcmask 326912
        %v3192 = vsel %vm3191, %v3190, %v3185
        %v3193 = vadd.s32 %v3160, 4294967256
        %v3194 = vlaneseq
        %v3195 = vshrl.u32 %v3194, 7
        %v3196 = vsub.s32 %v3193, %v3195
        %v3197 = vrot.slane %v2663, %v3196
        %vm3198 = vcmask 392512
        %v3199 = vsel %vm3198, %v3197, %v3192
        %v3200 = vadd.s32 %v3160, 4294967248
        %v3201 = vlaneseq
        %v3202 = vshrl.u32 %v3201, 7
        %v3203 = vsub.s32 %v3200, %v3202
        %v3204 = vrot.slane %v2666, %v3203
        %vm3205 = vcmask 458112
        %v3206 = vsel %vm3205, %v3204, %v3199
        %v3207 = vadd.s32 %v3160, 4294967240
        %v3208 = vlaneseq
        %v3209 = vshrl.u32 %v3208, 7
        %v3210 = vsub.s32 %v3207, %v3209
        %v3211 = vrot.slane %v2669, %v3210
        %vm3212 = vcmask 523712
        %v3213 = vsel %vm3212, %v3211, %v3206
        %v3214 = vadd.s32 %v3160, 4294967232
        %v3215 = vlaneseq
        %v3216 = vshrl.u32 %v3215, 7
        %v3217 = vsub.s32 %v3214, %v3216
        %v3218 = vrot.slane %v2672, %v3217
        %vm3219 = vcmask 589312
        %v3220 = vsel %vm3219, %v3218, %v3213
        %v3221 = vadd.s32 %v3160, 4294967224
        %v3222 = vlaneseq
        %v3223 = vshrl.u32 %v3222, 7
        %v3224 = vsub.s32 %v3221, %v3223
        %v3225 = vrot.slane %v2675, %v3224
        %vm3226 = vcmask 654912
        %v3227 = vsel %vm3226, %v3225, %v3220
        %v3228 = vadd.s32 %v3160, 4294967216
        %v3229 = vlaneseq
        %v3230 = vshrl.u32 %v3229, 7
        %v3231 = vsub.s32 %v3228, %v3230
        %v3232 = vrot.slane %v2678, %v3231
        %vm3233 = vcmask 720512
        %v3234 = vsel %vm3233, %v3232, %v3227
        %v3235 = vadd.s32 %v3160, 4294967208
        %v3236 = vlaneseq
        %v3237 = vshrl.u32 %v3236, 7
        %v3238 = vsub.s32 %v3235, %v3237
        %v3239 = vrot.slane %v2681, %v3238
        %vm3240 = vcmask 786112
        %v3241 = vsel %vm3240, %v3239, %v3234
        %v3242 = vadd.s32 %v3160, 4294967200
        %v3243 = vlaneseq
        %v3244 = vshrl.u32 %v3243, 7
        %v3245 = vsub.s32 %v3242, %v3244
        %v3246 = vrot.slane %v2684, %v3245
        %vm3247 = vcmask 851712
        %v3248 = vsel %vm3247, %v3246, %v3241
        %v3249 = vadd.s32 %v3160, 4294967192
        %v3250 = vlaneseq
        %v3251 = vshrl.u32 %v3250, 7
        %v3252 = vsub.s32 %v3249, %v3251
        %v3253 = vrot.slane %v2687, %v3252
        %vm3254 = vcmask 917312
        %v3255 = vsel %vm3254, %v3253, %v3248
        %v3256 = vadd.s32 %v3160, 4294967184
        %v3257 = vlaneseq
        %v3258 = vshrl.u32 %v3257, 7
        %v3259 = vsub.s32 %v3256, %v3258
        %v3260 = vrot.slane %v2690, %v3259
        %vm3261 = vcmask 982912
        %v3262 = vsel %vm3261, %v3260, %v3255
        %v3263 = vadd.s32 %v3160, 4294967176
        %v3264 = vlaneseq
        %v3265 = vshrl.u32 %v3264, 7
        %v3266 = vsub.s32 %v3263, %v3265
        %v3267 = vrot.slane %v2693, %v3266
        %vm3268 = vcmask 1048512
        %v3269 = vsel %vm3268, %v3267, %v3262
        %v3270 = vlaneseq
        %v3271 = vshrl.u32 %v3270, 7
        %v3272 = vsub.s32 %v3160, %v3271
        %v3273 = vrot.slane %v2696, %v3272
        %v3274 = vlaneseq
        %v3275 = vshrl.u32 %v3274, 7
        %v3276 = vsub.s32 %v3165, %v3275
        %v3277 = vrot.slane %v2699, %v3276
        %v3278 = vsel %vm3170, %v3277, %v3273
        %v3279 = vlaneseq
        %v3280 = vshrl.u32 %v3279, 7
        %v3281 = vsub.s32 %v3172, %v3280
        %v3282 = vrot.slane %v2702, %v3281
        %v3283 = vsel %vm3177, %v3282, %v3278
        %v3284 = vlaneseq
        %v3285 = vshrl.u32 %v3284, 7
        %v3286 = vsub.s32 %v3179, %v3285
        %v3287 = vrot.slane %v2705, %v3286
        %v3288 = vsel %vm3184, %v3287, %v3283
        %v3289 = vlaneseq
        %v3290 = vshrl.u32 %v3289, 7
        %v3291 = vsub.s32 %v3186, %v3290
        %v3292 = vrot.slane %v2708, %v3291
        %v3293 = vsel %vm3191, %v3292, %v3288
        %v3294 = vlaneseq
        %v3295 = vshrl.u32 %v3294, 7
        %v3296 = vsub.s32 %v3193, %v3295
        %v3297 = vrot.slane %v2711, %v3296
        %v3298 = vsel %vm3198, %v3297, %v3293
        %v3299 = vlaneseq
        %v3300 = vshrl.u32 %v3299, 7
        %v3301 = vsub.s32 %v3200, %v3300
        %v3302 = vrot.slane %v2714, %v3301
        %v3303 = vsel %vm3205, %v3302, %v3298
        %v3304 = vlaneseq
        %v3305 = vshrl.u32 %v3304, 7
        %v3306 = vsub.s32 %v3207, %v3305
        %v3307 = vrot.slane %v2717, %v3306
        %v3308 = vsel %vm3212, %v3307, %v3303
        %v3309 = vlaneseq
        %v3310 = vshrl.u32 %v3309, 7
        %v3311 = vsub.s32 %v3214, %v3310
        %v3312 = vrot.slane %v2720, %v3311
        %v3313 = vsel %vm3219, %v3312, %v3308
        %v3314 = vlaneseq
        %v3315 = vshrl.u32 %v3314, 7
        %v3316 = vsub.s32 %v3221, %v3315
        %v3317 = vrot.slane %v2723, %v3316
        %v3318 = vsel %vm3226, %v3317, %v3313
        %v3319 = vlaneseq
        %v3320 = vshrl.u32 %v3319, 7
        %v3321 = vsub.s32 %v3228, %v3320
        %v3322 = vrot.slane %v2726, %v3321
        %v3323 = vsel %vm3233, %v3322, %v3318
        %v3324 = vlaneseq
        %v3325 = vshrl.u32 %v3324, 7
        %v3326 = vsub.s32 %v3235, %v3325
        %v3327 = vrot.slane %v2729, %v3326
        %v3328 = vsel %vm3240, %v3327, %v3323
        %v3329 = vlaneseq
        %v3330 = vshrl.u32 %v3329, 7
        %v3331 = vsub.s32 %v3242, %v3330
        %v3332 = vrot.slane %v2732, %v3331
        %v3333 = vsel %vm3247, %v3332, %v3328
        %v3334 = vlaneseq
        %v3335 = vshrl.u32 %v3334, 7
        %v3336 = vsub.s32 %v3249, %v3335
        %v3337 = vrot.slane %v2735, %v3336
        %v3338 = vsel %vm3254, %v3337, %v3333
        %v3339 = vlaneseq
        %v3340 = vshrl.u32 %v3339, 7
        %v3341 = vsub.s32 %v3256, %v3340
        %v3342 = vrot.slane %v2738, %v3341
        %v3343 = vsel %vm3261, %v3342, %v3338
        %v3344 = vlaneseq
        %v3345 = vshrl.u32 %v3344, 7
        %v3346 = vsub.s32 %v3263, %v3345
        %v3347 = vrot.slane %v2741, %v3346
        %v3348 = vsel %vm3268, %v3347, %v3343
        %v3349 = vlaneseq
        %v3350 = vshrl.u32 %v3349, 7
        %v3351 = vsub.s32 %v3160, %v3350
        %v3352 = vrot.slane %v2744, %v3351
        %v3353 = vlaneseq
        %v3354 = vshrl.u32 %v3353, 7
        %v3355 = vsub.s32 %v3165, %v3354
        %v3356 = vrot.slane %v2747, %v3355
        %v3357 = vsel %vm3170, %v3356, %v3352
        %v3358 = vlaneseq
        %v3359 = vshrl.u32 %v3358, 7
        %v3360 = vsub.s32 %v3172, %v3359
        %v3361 = vrot.slane %v2750, %v3360
        %v3362 = vsel %vm3177, %v3361, %v3357
        %v3363 = vlaneseq
        %v3364 = vshrl.u32 %v3363, 7
        %v3365 = vsub.s32 %v3179, %v3364
        %v3366 = vrot.slane %v2753, %v3365
        %v3367 = vsel %vm3184, %v3366, %v3362
        %v3368 = vlaneseq
        %v3369 = vshrl.u32 %v3368, 7
        %v3370 = vsub.s32 %v3186, %v3369
        %v3371 = vrot.slane %v2756, %v3370
        %v3372 = vsel %vm3191, %v3371, %v3367
        %v3373 = vlaneseq
        %v3374 = vshrl.u32 %v3373, 7
        %v3375 = vsub.s32 %v3193, %v3374
        %v3376 = vrot.slane %v2759, %v3375
        %v3377 = vsel %vm3198, %v3376, %v3372
        %v3378 = vlaneseq
        %v3379 = vshrl.u32 %v3378, 7
        %v3380 = vsub.s32 %v3200, %v3379
        %v3381 = vrot.slane %v2762, %v3380
        %v3382 = vsel %vm3205, %v3381, %v3377
        %v3383 = vlaneseq
        %v3384 = vshrl.u32 %v3383, 7
        %v3385 = vsub.s32 %v3207, %v3384
        %v3386 = vrot.slane %v2765, %v3385
        %v3387 = vsel %vm3212, %v3386, %v3382
        %v3388 = vlaneseq
        %v3389 = vshrl.u32 %v3388, 7
        %v3390 = vsub.s32 %v3214, %v3389
        %v3391 = vrot.slane %v2768, %v3390
        %v3392 = vsel %vm3219, %v3391, %v3387
        %v3393 = vlaneseq
        %v3394 = vshrl.u32 %v3393, 7
        %v3395 = vsub.s32 %v3221, %v3394
        %v3396 = vrot.slane %v2771, %v3395
        %v3397 = vsel %vm3226, %v3396, %v3392
        %v3398 = vlaneseq
        %v3399 = vshrl.u32 %v3398, 7
        %v3400 = vsub.s32 %v3228, %v3399
        %v3401 = vrot.slane %v2774, %v3400
        %v3402 = vsel %vm3233, %v3401, %v3397
        %v3403 = vlaneseq
        %v3404 = vshrl.u32 %v3403, 7
        %v3405 = vsub.s32 %v3235, %v3404
        %v3406 = vrot.slane %v2777, %v3405
        %v3407 = vsel %vm3240, %v3406, %v3402
        %v3408 = vlaneseq
        %v3409 = vshrl.u32 %v3408, 7
        %v3410 = vsub.s32 %v3242, %v3409
        %v3411 = vrot.slane %v2780, %v3410
        %v3412 = vsel %vm3247, %v3411, %v3407
        %v3413 = vlaneseq
        %v3414 = vshrl.u32 %v3413, 7
        %v3415 = vsub.s32 %v3249, %v3414
        %v3416 = vrot.slane %v2783, %v3415
        %v3417 = vsel %vm3254, %v3416, %v3412
        %v3418 = vlaneseq
        %v3419 = vshrl.u32 %v3418, 7
        %v3420 = vsub.s32 %v3256, %v3419
        %v3421 = vrot.slane %v2786, %v3420
        %v3422 = vsel %vm3261, %v3421, %v3417
        %v3423 = vlaneseq
        %v3424 = vshrl.u32 %v3423, 7
        %v3425 = vsub.s32 %v3263, %v3424
        %v3426 = vrot.slane %v2789, %v3425
        %v3427 = vsel %vm3268, %v3426, %v3422
        %v3428 = vlaneseq
        %v3429 = vshrl.u32 %v3428, 7
        %v3430 = vsub.s32 %v3160, %v3429
        %v3431 = vrot.slane %v2792, %v3430
        %v3432 = vlaneseq
        %v3433 = vshrl.u32 %v3432, 7
        %v3434 = vsub.s32 %v3165, %v3433
        %v3435 = vrot.slane %v2795, %v3434
        %v3436 = vsel %vm3170, %v3435, %v3431
        %v3437 = vlaneseq
        %v3438 = vshrl.u32 %v3437, 7
        %v3439 = vsub.s32 %v3172, %v3438
        %v3440 = vrot.slane %v2798, %v3439
        %v3441 = vsel %vm3177, %v3440, %v3436
        %v3442 = vlaneseq
        %v3443 = vshrl.u32 %v3442, 7
        %v3444 = vsub.s32 %v3179, %v3443
        %v3445 = vrot.slane %v2801, %v3444
        %v3446 = vsel %vm3184, %v3445, %v3441
        %v3447 = vlaneseq
        %v3448 = vshrl.u32 %v3447, 7
        %v3449 = vsub.s32 %v3186, %v3448
        %v3450 = vrot.slane %v2804, %v3449
        %v3451 = vsel %vm3191, %v3450, %v3446
        %v3452 = vlaneseq
        %v3453 = vshrl.u32 %v3452, 7
        %v3454 = vsub.s32 %v3193, %v3453
        %v3455 = vrot.slane %v2807, %v3454
        %v3456 = vsel %vm3198, %v3455, %v3451
        %v3457 = vlaneseq
        %v3458 = vshrl.u32 %v3457, 7
        %v3459 = vsub.s32 %v3200, %v3458
        %v3460 = vrot.slane %v2810, %v3459
        %v3461 = vsel %vm3205, %v3460, %v3456
        %v3462 = vlaneseq
        %v3463 = vshrl.u32 %v3462, 7
        %v3464 = vsub.s32 %v3207, %v3463
        %v3465 = vrot.slane %v2813, %v3464
        %v3466 = vsel %vm3212, %v3465, %v3461
        %v3467 = vlaneseq
        %v3468 = vshrl.u32 %v3467, 7
        %v3469 = vsub.s32 %v3214, %v3468
        %v3470 = vrot.slane %v2816, %v3469
        %v3471 = vsel %vm3219, %v3470, %v3466
        %v3472 = vlaneseq
        %v3473 = vshrl.u32 %v3472, 7
        %v3474 = vsub.s32 %v3221, %v3473
        %v3475 = vrot.slane %v2819, %v3474
        %v3476 = vsel %vm3226, %v3475, %v3471
        %v3477 = vlaneseq
        %v3478 = vshrl.u32 %v3477, 7
        %v3479 = vsub.s32 %v3228, %v3478
        %v3480 = vrot.slane %v2822, %v3479
        %v3481 = vsel %vm3233, %v3480, %v3476
        %v3482 = vlaneseq
        %v3483 = vshrl.u32 %v3482, 7
        %v3484 = vsub.s32 %v3235, %v3483
        %v3485 = vrot.slane %v2825, %v3484
        %v3486 = vsel %vm3240, %v3485, %v3481
        %v3487 = vlaneseq
        %v3488 = vshrl.u32 %v3487, 7
        %v3489 = vsub.s32 %v3242, %v3488
        %v3490 = vrot.slane %v2828, %v3489
        %v3491 = vsel %vm3247, %v3490, %v3486
        %v3492 = vlaneseq
        %v3493 = vshrl.u32 %v3492, 7
        %v3494 = vsub.s32 %v3249, %v3493
        %v3495 = vrot.slane %v2831, %v3494
        %v3496 = vsel %vm3254, %v3495, %v3491
        %v3497 = vlaneseq
        %v3498 = vshrl.u32 %v3497, 7
        %v3499 = vsub.s32 %v3256, %v3498
        %v3500 = vrot.slane %v2834, %v3499
        %v3501 = vsel %vm3261, %v3500, %v3496
        %v3502 = vlaneseq
        %v3503 = vshrl.u32 %v3502, 7
        %v3504 = vsub.s32 %v3263, %v3503
        %v3505 = vrot.slane %v2837, %v3504
        %v3506 = vsel %vm3268, %v3505, %v3501
        %v3507 = vlaneseq
        %v3508 = vshrl.u32 %v3507, 7
        %v3509 = vsub.s32 %v3160, %v3508
        %v3510 = vrot.slane %v2840, %v3509
        %v3511 = vlaneseq
        %v3512 = vshrl.u32 %v3511, 7
        %v3513 = vsub.s32 %v3165, %v3512
        %v3514 = vrot.slane %v2843, %v3513
        %v3515 = vsel %vm3170, %v3514, %v3510
        %v3516 = vlaneseq
        %v3517 = vshrl.u32 %v3516, 7
        %v3518 = vsub.s32 %v3172, %v3517
        %v3519 = vrot.slane %v2846, %v3518
        %v3520 = vsel %vm3177, %v3519, %v3515
        %v3521 = vlaneseq
        %v3522 = vshrl.u32 %v3521, 7
        %v3523 = vsub.s32 %v3179, %v3522
        %v3524 = vrot.slane %v2849, %v3523
        %v3525 = vsel %vm3184, %v3524, %v3520
        %v3526 = vlaneseq
        %v3527 = vshrl.u32 %v3526, 7
        %v3528 = vsub.s32 %v3186, %v3527
        %v3529 = vrot.slane %v2852, %v3528
        %v3530 = vsel %vm3191, %v3529, %v3525
        %v3531 = vlaneseq
        %v3532 = vshrl.u32 %v3531, 7
        %v3533 = vsub.s32 %v3193, %v3532
        %v3534 = vrot.slane %v2855, %v3533
        %v3535 = vsel %vm3198, %v3534, %v3530
        %v3536 = vlaneseq
        %v3537 = vshrl.u32 %v3536, 7
        %v3538 = vsub.s32 %v3200, %v3537
        %v3539 = vrot.slane %v2858, %v3538
        %v3540 = vsel %vm3205, %v3539, %v3535
        %v3541 = vlaneseq
        %v3542 = vshrl.u32 %v3541, 7
        %v3543 = vsub.s32 %v3207, %v3542
        %v3544 = vrot.slane %v2861, %v3543
        %v3545 = vsel %vm3212, %v3544, %v3540
        %v3546 = vlaneseq
        %v3547 = vshrl.u32 %v3546, 7
        %v3548 = vsub.s32 %v3214, %v3547
        %v3549 = vrot.slane %v2864, %v3548
        %v3550 = vsel %vm3219, %v3549, %v3545
        %v3551 = vlaneseq
        %v3552 = vshrl.u32 %v3551, 7
        %v3553 = vsub.s32 %v3221, %v3552
        %v3554 = vrot.slane %v2867, %v3553
        %v3555 = vsel %vm3226, %v3554, %v3550
        %v3556 = vlaneseq
        %v3557 = vshrl.u32 %v3556, 7
        %v3558 = vsub.s32 %v3228, %v3557
        %v3559 = vrot.slane %v2870, %v3558
        %v3560 = vsel %vm3233, %v3559, %v3555
        %v3561 = vlaneseq
        %v3562 = vshrl.u32 %v3561, 7
        %v3563 = vsub.s32 %v3235, %v3562
        %v3564 = vrot.slane %v2873, %v3563
        %v3565 = vsel %vm3240, %v3564, %v3560
        %v3566 = vlaneseq
        %v3567 = vshrl.u32 %v3566, 7
        %v3568 = vsub.s32 %v3242, %v3567
        %v3569 = vrot.slane %v2876, %v3568
        %v3570 = vsel %vm3247, %v3569, %v3565
        %v3571 = vlaneseq
        %v3572 = vshrl.u32 %v3571, 7
        %v3573 = vsub.s32 %v3249, %v3572
        %v3574 = vrot.slane %v2879, %v3573
        %v3575 = vsel %vm3254, %v3574, %v3570
        %v3576 = vlaneseq
        %v3577 = vshrl.u32 %v3576, 7
        %v3578 = vsub.s32 %v3256, %v3577
        %v3579 = vrot.slane %v2882, %v3578
        %v3580 = vsel %vm3261, %v3579, %v3575
        %v3581 = vlaneseq
        %v3582 = vshrl.u32 %v3581, 7
        %v3583 = vsub.s32 %v3263, %v3582
        %v3584 = vrot.slane %v2885, %v3583
        %v3585 = vsel %vm3268, %v3584, %v3580
        %v3586 = vlaneseq
        %v3587 = vshrl.u32 %v3586, 7
        %v3588 = vsub.s32 %v3160, %v3587
        %v3589 = vrot.slane %v2888, %v3588
        %v3590 = vlaneseq
        %v3591 = vshrl.u32 %v3590, 7
        %v3592 = vsub.s32 %v3165, %v3591
        %v3593 = vrot.slane %v2891, %v3592
        %v3594 = vsel %vm3170, %v3593, %v3589
        %v3595 = vlaneseq
        %v3596 = vshrl.u32 %v3595, 7
        %v3597 = vsub.s32 %v3172, %v3596
        %v3598 = vrot.slane %v2894, %v3597
        %v3599 = vsel %vm3177, %v3598, %v3594
        %v3600 = vlaneseq
        %v3601 = vshrl.u32 %v3600, 7
        %v3602 = vsub.s32 %v3179, %v3601
        %v3603 = vrot.slane %v2897, %v3602
        %v3604 = vsel %vm3184, %v3603, %v3599
        %v3605 = vlaneseq
        %v3606 = vshrl.u32 %v3605, 7
        %v3607 = vsub.s32 %v3186, %v3606
        %v3608 = vrot.slane %v2900, %v3607
        %v3609 = vsel %vm3191, %v3608, %v3604
        %v3610 = vlaneseq
        %v3611 = vshrl.u32 %v3610, 7
        %v3612 = vsub.s32 %v3193, %v3611
        %v3613 = vrot.slane %v2903, %v3612
        %v3614 = vsel %vm3198, %v3613, %v3609
        %v3615 = vlaneseq
        %v3616 = vshrl.u32 %v3615, 7
        %v3617 = vsub.s32 %v3200, %v3616
        %v3618 = vrot.slane %v2906, %v3617
        %v3619 = vsel %vm3205, %v3618, %v3614
        %v3620 = vlaneseq
        %v3621 = vshrl.u32 %v3620, 7
        %v3622 = vsub.s32 %v3207, %v3621
        %v3623 = vrot.slane %v2909, %v3622
        %v3624 = vsel %vm3212, %v3623, %v3619
        %v3625 = vlaneseq
        %v3626 = vshrl.u32 %v3625, 7
        %v3627 = vsub.s32 %v3214, %v3626
        %v3628 = vrot.slane %v2912, %v3627
        %v3629 = vsel %vm3219, %v3628, %v3624
        %v3630 = vlaneseq
        %v3631 = vshrl.u32 %v3630, 7
        %v3632 = vsub.s32 %v3221, %v3631
        %v3633 = vrot.slane %v2915, %v3632
        %v3634 = vsel %vm3226, %v3633, %v3629
        %v3635 = vlaneseq
        %v3636 = vshrl.u32 %v3635, 7
        %v3637 = vsub.s32 %v3228, %v3636
        %v3638 = vrot.slane %v2918, %v3637
        %v3639 = vsel %vm3233, %v3638, %v3634
        %v3640 = vlaneseq
        %v3641 = vshrl.u32 %v3640, 7
        %v3642 = vsub.s32 %v3235, %v3641
        %v3643 = vrot.slane %v2921, %v3642
        %v3644 = vsel %vm3240, %v3643, %v3639
        %v3645 = vlaneseq
        %v3646 = vshrl.u32 %v3645, 7
        %v3647 = vsub.s32 %v3242, %v3646
        %v3648 = vrot.slane %v2924, %v3647
        %v3649 = vsel %vm3247, %v3648, %v3644
        %v3650 = vlaneseq
        %v3651 = vshrl.u32 %v3650, 7
        %v3652 = vsub.s32 %v3249, %v3651
        %v3653 = vrot.slane %v2927, %v3652
        %v3654 = vsel %vm3254, %v3653, %v3649
        %v3655 = vlaneseq
        %v3656 = vshrl.u32 %v3655, 7
        %v3657 = vsub.s32 %v3256, %v3656
        %v3658 = vrot.slane %v2930, %v3657
        %v3659 = vsel %vm3261, %v3658, %v3654
        %v3660 = vlaneseq
        %v3661 = vshrl.u32 %v3660, 7
        %v3662 = vsub.s32 %v3263, %v3661
        %v3663 = vrot.slane %v2933, %v3662
        %v3664 = vsel %vm3268, %v3663, %v3659
        %v3665 = vlaneseq
        %v3666 = vshrl.u32 %v3665, 7
        %v3667 = vsub.s32 %v3160, %v3666
        %v3668 = vrot.slane %v2936, %v3667
        %v3669 = vlaneseq
        %v3670 = vshrl.u32 %v3669, 7
        %v3671 = vsub.s32 %v3165, %v3670
        %v3672 = vrot.slane %v2939, %v3671
        %v3673 = vsel %vm3170, %v3672, %v3668
        %v3674 = vlaneseq
        %v3675 = vshrl.u32 %v3674, 7
        %v3676 = vsub.s32 %v3172, %v3675
        %v3677 = vrot.slane %v2942, %v3676
        %v3678 = vsel %vm3177, %v3677, %v3673
        %v3679 = vlaneseq
        %v3680 = vshrl.u32 %v3679, 7
        %v3681 = vsub.s32 %v3179, %v3680
        %v3682 = vrot.slane %v2945, %v3681
        %v3683 = vsel %vm3184, %v3682, %v3678
        %v3684 = vlaneseq
        %v3685 = vshrl.u32 %v3684, 7
        %v3686 = vsub.s32 %v3186, %v3685
        %v3687 = vrot.slane %v2948, %v3686
        %v3688 = vsel %vm3191, %v3687, %v3683
        %v3689 = vlaneseq
        %v3690 = vshrl.u32 %v3689, 7
        %v3691 = vsub.s32 %v3193, %v3690
        %v3692 = vrot.slane %v2951, %v3691
        %v3693 = vsel %vm3198, %v3692, %v3688
        %v3694 = vlaneseq
        %v3695 = vshrl.u32 %v3694, 7
        %v3696 = vsub.s32 %v3200, %v3695
        %v3697 = vrot.slane %v2954, %v3696
        %v3698 = vsel %vm3205, %v3697, %v3693
        %v3699 = vlaneseq
        %v3700 = vshrl.u32 %v3699, 7
        %v3701 = vsub.s32 %v3207, %v3700
        %v3702 = vrot.slane %v2957, %v3701
        %v3703 = vsel %vm3212, %v3702, %v3698
        %v3704 = vlaneseq
        %v3705 = vshrl.u32 %v3704, 7
        %v3706 = vsub.s32 %v3214, %v3705
        %v3707 = vrot.slane %v2960, %v3706
        %v3708 = vsel %vm3219, %v3707, %v3703
        %v3709 = vlaneseq
        %v3710 = vshrl.u32 %v3709, 7
        %v3711 = vsub.s32 %v3221, %v3710
        %v3712 = vrot.slane %v2963, %v3711
        %v3713 = vsel %vm3226, %v3712, %v3708
        %v3714 = vlaneseq
        %v3715 = vshrl.u32 %v3714, 7
        %v3716 = vsub.s32 %v3228, %v3715
        %v3717 = vrot.slane %v2966, %v3716
        %v3718 = vsel %vm3233, %v3717, %v3713
        %v3719 = vlaneseq
        %v3720 = vshrl.u32 %v3719, 7
        %v3721 = vsub.s32 %v3235, %v3720
        %v3722 = vrot.slane %v2969, %v3721
        %v3723 = vsel %vm3240, %v3722, %v3718
        %v3724 = vlaneseq
        %v3725 = vshrl.u32 %v3724, 7
        %v3726 = vsub.s32 %v3242, %v3725
        %v3727 = vrot.slane %v2972, %v3726
        %v3728 = vsel %vm3247, %v3727, %v3723
        %v3729 = vlaneseq
        %v3730 = vshrl.u32 %v3729, 7
        %v3731 = vsub.s32 %v3249, %v3730
        %v3732 = vrot.slane %v2975, %v3731
        %v3733 = vsel %vm3254, %v3732, %v3728
        %v3734 = vlaneseq
        %v3735 = vshrl.u32 %v3734, 7
        %v3736 = vsub.s32 %v3256, %v3735
        %v3737 = vrot.slane %v2978, %v3736
        %v3738 = vsel %vm3261, %v3737, %v3733
        %v3739 = vlaneseq
        %v3740 = vshrl.u32 %v3739, 7
        %v3741 = vsub.s32 %v3263, %v3740
        %v3742 = vrot.slane %v2981, %v3741
        %v3743 = vsel %vm3268, %v3742, %v3738
        %v3744 = vlaneseq
        %v3745 = vshrl.u32 %v3744, 7
        %v3746 = vsub.s32 %v3160, %v3745
        %v3747 = vrot.slane %v2984, %v3746
        %v3748 = vlaneseq
        %v3749 = vshrl.u32 %v3748, 7
        %v3750 = vsub.s32 %v3165, %v3749
        %v3751 = vrot.slane %v2987, %v3750
        %v3752 = vsel %vm3170, %v3751, %v3747
        %v3753 = vlaneseq
        %v3754 = vshrl.u32 %v3753, 7
        %v3755 = vsub.s32 %v3172, %v3754
        %v3756 = vrot.slane %v2990, %v3755
        %v3757 = vsel %vm3177, %v3756, %v3752
        %v3758 = vlaneseq
        %v3759 = vshrl.u32 %v3758, 7
        %v3760 = vsub.s32 %v3179, %v3759
        %v3761 = vrot.slane %v2993, %v3760
        %v3762 = vsel %vm3184, %v3761, %v3757
        %v3763 = vlaneseq
        %v3764 = vshrl.u32 %v3763, 7
        %v3765 = vsub.s32 %v3186, %v3764
        %v3766 = vrot.slane %v2996, %v3765
        %v3767 = vsel %vm3191, %v3766, %v3762
        %v3768 = vlaneseq
        %v3769 = vshrl.u32 %v3768, 7
        %v3770 = vsub.s32 %v3193, %v3769
        %v3771 = vrot.slane %v2999, %v3770
        %v3772 = vsel %vm3198, %v3771, %v3767
        %v3773 = vlaneseq
        %v3774 = vshrl.u32 %v3773, 7
        %v3775 = vsub.s32 %v3200, %v3774
        %v3776 = vrot.slane %v3002, %v3775
        %v3777 = vsel %vm3205, %v3776, %v3772
        %v3778 = vlaneseq
        %v3779 = vshrl.u32 %v3778, 7
        %v3780 = vsub.s32 %v3207, %v3779
        %v3781 = vrot.slane %v3005, %v3780
        %v3782 = vsel %vm3212, %v3781, %v3777
        %v3783 = vlaneseq
        %v3784 = vshrl.u32 %v3783, 7
        %v3785 = vsub.s32 %v3214, %v3784
        %v3786 = vrot.slane %v3008, %v3785
        %v3787 = vsel %vm3219, %v3786, %v3782
        %v3788 = vlaneseq
        %v3789 = vshrl.u32 %v3788, 7
        %v3790 = vsub.s32 %v3221, %v3789
        %v3791 = vrot.slane %v3011, %v3790
        %v3792 = vsel %vm3226, %v3791, %v3787
        %v3793 = vlaneseq
        %v3794 = vshrl.u32 %v3793, 7
        %v3795 = vsub.s32 %v3228, %v3794
        %v3796 = vrot.slane %v3014, %v3795
        %v3797 = vsel %vm3233, %v3796, %v3792
        %v3798 = vlaneseq
        %v3799 = vshrl.u32 %v3798, 7
        %v3800 = vsub.s32 %v3235, %v3799
        %v3801 = vrot.slane %v3017, %v3800
        %v3802 = vsel %vm3240, %v3801, %v3797
        %v3803 = vlaneseq
        %v3804 = vshrl.u32 %v3803, 7
        %v3805 = vsub.s32 %v3242, %v3804
        %v3806 = vrot.slane %v3020, %v3805
        %v3807 = vsel %vm3247, %v3806, %v3802
        %v3808 = vlaneseq
        %v3809 = vshrl.u32 %v3808, 7
        %v3810 = vsub.s32 %v3249, %v3809
        %v3811 = vrot.slane %v3023, %v3810
        %v3812 = vsel %vm3254, %v3811, %v3807
        %v3813 = vlaneseq
        %v3814 = vshrl.u32 %v3813, 7
        %v3815 = vsub.s32 %v3256, %v3814
        %v3816 = vrot.slane %v3026, %v3815
        %v3817 = vsel %vm3261, %v3816, %v3812
        %v3818 = vlaneseq
        %v3819 = vshrl.u32 %v3818, 7
        %v3820 = vsub.s32 %v3263, %v3819
        %v3821 = vrot.slane %v3029, %v3820
        %v3822 = vsel %vm3268, %v3821, %v3817
        %vm3823 = vcmask 1041409
        %v3824 = vsel %vm3823, %v3348, %v3269
        %vm3825 = vcmask 1042434
        %v3826 = vsel %vm3825, %v3427, %v3824
        %vm3827 = vcmask 1043459
        %v3828 = vsel %vm3827, %v3506, %v3826
        %vm3829 = vcmask 1044484
        %v3830 = vsel %vm3829, %v3585, %v3828
        %vm3831 = vcmask 1045509
        %v3832 = vsel %vm3831, %v3664, %v3830
        %vm3833 = vcmask 1046534
        %v3834 = vsel %vm3833, %v3743, %v3832
        %vm3835 = vcmask 1047559
        %v3836 = vsel %vm3835, %v3822, %v3834
        %v3838 = vmax.f32 %v3030, %v3836
        %v3839 = vsub.f32 %v3030, %v3838
        %v3840 = vmul.f32 %v3839, 1.442695
        %v3841 = vpow.pop %v3840
        %v3842 = vlaneseq
        %v3843 = vshrl.u32 %v3842, 7
        %v3844 = vsub.s32 0, %v3843
        %v3845 = vrot.slane %v3838, %v3844
        %3847 = vbcast.lane.b32.xlu0 %v3845, 256
        %v3848 = vpop.permute.xlu0 %3847
        %s3850 = sor.u32 256, 8
        %3851 = vbcast.lane.b32.xlu0 %v3845, %s3850
        %v3852 = vpop.permute.xlu0 %3851
        %s3854 = sor.u32 256, 16
        %3855 = vbcast.lane.b32.xlu0 %v3845, %s3854
        %v3856 = vpop.permute.xlu0 %3855
        %s3858 = sor.u32 256, 24
        %3859 = vbcast.lane.b32.xlu0 %v3845, %s3858
        %v3860 = vpop.permute.xlu0 %3859
        %s3862 = sor.u32 256, 32
        %3863 = vbcast.lane.b32.xlu0 %v3845, %s3862
        %v3864 = vpop.permute.xlu0 %3863
        %s3866 = sor.u32 256, 40
        %3867 = vbcast.lane.b32.xlu0 %v3845, %s3866
        %v3868 = vpop.permute.xlu0 %3867
        %s3870 = sor.u32 256, 48
        %3871 = vbcast.lane.b32.xlu0 %v3845, %s3870
        %v3872 = vpop.permute.xlu0 %3871
        %s3874 = sor.u32 256, 56
        %3875 = vbcast.lane.b32.xlu0 %v3845, %s3874
        %v3876 = vpop.permute.xlu0 %3875
        %s3878 = sor.u32 256, 64
        %3879 = vbcast.lane.b32.xlu0 %v3845, %s3878
        %v3880 = vpop.permute.xlu0 %3879
        %s3882 = sor.u32 256, 72
        %3883 = vbcast.lane.b32.xlu0 %v3845, %s3882
        %v3884 = vpop.permute.xlu0 %3883
        %s3886 = sor.u32 256, 80
        %3887 = vbcast.lane.b32.xlu0 %v3845, %s3886
        %v3888 = vpop.permute.xlu0 %3887
        %s3890 = sor.u32 256, 88
        %3891 = vbcast.lane.b32.xlu0 %v3845, %s3890
        %v3892 = vpop.permute.xlu0 %3891
        %s3894 = sor.u32 256, 96
        %3895 = vbcast.lane.b32.xlu0 %v3845, %s3894
        %v3896 = vpop.permute.xlu0 %3895
        %s3898 = sor.u32 256, 104
        %3899 = vbcast.lane.b32.xlu0 %v3845, %s3898
        %v3900 = vpop.permute.xlu0 %3899
        %s3902 = sor.u32 256, 112
        %3903 = vbcast.lane.b32.xlu0 %v3845, %s3902
        %v3904 = vpop.permute.xlu0 %3903
        %s3906 = sor.u32 256, 120
        %3907 = vbcast.lane.b32.xlu0 %v3845, %s3906
        %v3908 = vpop.permute.xlu0 %3907
        %v3909 = vlaneseq
        %v3910 = vshrl.u32 %v3909, 7
        %v3911 = vsub.s32 1, %v3910
        %v3912 = vrot.slane %v3838, %v3911
        %3914 = vbcast.lane.b32.xlu0 %v3912, 256
        %v3915 = vpop.permute.xlu0 %3914
        %s3917 = sor.u32 256, 8
        %3918 = vbcast.lane.b32.xlu0 %v3912, %s3917
        %v3919 = vpop.permute.xlu0 %3918
        %s3921 = sor.u32 256, 16
        %3922 = vbcast.lane.b32.xlu0 %v3912, %s3921
        %v3923 = vpop.permute.xlu0 %3922
        %s3925 = sor.u32 256, 24
        %3926 = vbcast.lane.b32.xlu0 %v3912, %s3925
        %v3927 = vpop.permute.xlu0 %3926
        %s3929 = sor.u32 256, 32
        %3930 = vbcast.lane.b32.xlu0 %v3912, %s3929
        %v3931 = vpop.permute.xlu0 %3930
        %s3933 = sor.u32 256, 40
        %3934 = vbcast.lane.b32.xlu0 %v3912, %s3933
        %v3935 = vpop.permute.xlu0 %3934
        %s3937 = sor.u32 256, 48
        %3938 = vbcast.lane.b32.xlu0 %v3912, %s3937
        %v3939 = vpop.permute.xlu0 %3938
        %s3941 = sor.u32 256, 56
        %3942 = vbcast.lane.b32.xlu0 %v3912, %s3941
        %v3943 = vpop.permute.xlu0 %3942
        %s3945 = sor.u32 256, 64
        %3946 = vbcast.lane.b32.xlu0 %v3912, %s3945
        %v3947 = vpop.permute.xlu0 %3946
        %s3949 = sor.u32 256, 72
        %3950 = vbcast.lane.b32.xlu0 %v3912, %s3949
        %v3951 = vpop.permute.xlu0 %3950
        %s3953 = sor.u32 256, 80
        %3954 = vbcast.lane.b32.xlu0 %v3912, %s3953
        %v3955 = vpop.permute.xlu0 %3954
        %s3957 = sor.u32 256, 88
        %3958 = vbcast.lane.b32.xlu0 %v3912, %s3957
        %v3959 = vpop.permute.xlu0 %3958
        %s3961 = sor.u32 256, 96
        %3962 = vbcast.lane.b32.xlu0 %v3912, %s3961
        %v3963 = vpop.permute.xlu0 %3962
        %s3965 = sor.u32 256, 104
        %3966 = vbcast.lane.b32.xlu0 %v3912, %s3965
        %v3967 = vpop.permute.xlu0 %3966
        %s3969 = sor.u32 256, 112
        %3970 = vbcast.lane.b32.xlu0 %v3912, %s3969
        %v3971 = vpop.permute.xlu0 %3970
        %s3973 = sor.u32 256, 120
        %3974 = vbcast.lane.b32.xlu0 %v3912, %s3973
        %v3975 = vpop.permute.xlu0 %3974
        %v3976 = vlaneseq
        %v3977 = vshrl.u32 %v3976, 7
        %v3978 = vsub.s32 2, %v3977
        %v3979 = vrot.slane %v3838, %v3978
        %3981 = vbcast.lane.b32.xlu0 %v3979, 256
        %v3982 = vpop.permute.xlu0 %3981
        %s3984 = sor.u32 256, 8
        %3985 = vbcast.lane.b32.xlu0 %v3979, %s3984
        %v3986 = vpop.permute.xlu0 %3985
        %s3988 = sor.u32 256, 16
        %3989 = vbcast.lane.b32.xlu0 %v3979, %s3988
        %v3990 = vpop.permute.xlu0 %3989
        %s3992 = sor.u32 256, 24
        %3993 = vbcast.lane.b32.xlu0 %v3979, %s3992
        %v3994 = vpop.permute.xlu0 %3993
        %s3996 = sor.u32 256, 32
        %3997 = vbcast.lane.b32.xlu0 %v3979, %s3996
        %v3998 = vpop.permute.xlu0 %3997
        %s4000 = sor.u32 256, 40
        %4001 = vbcast.lane.b32.xlu0 %v3979, %s4000
        %v4002 = vpop.permute.xlu0 %4001
        %s4004 = sor.u32 256, 48
        %4005 = vbcast.lane.b32.xlu0 %v3979, %s4004
        %v4006 = vpop.permute.xlu0 %4005
        %s4008 = sor.u32 256, 56
        %4009 = vbcast.lane.b32.xlu0 %v3979, %s4008
        %v4010 = vpop.permute.xlu0 %4009
        %s4012 = sor.u32 256, 64
        %4013 = vbcast.lane.b32.xlu0 %v3979, %s4012
        %v4014 = vpop.permute.xlu0 %4013
        %s4016 = sor.u32 256, 72
        %4017 = vbcast.lane.b32.xlu0 %v3979, %s4016
        %v4018 = vpop.permute.xlu0 %4017
        %s4020 = sor.u32 256, 80
        %4021 = vbcast.lane.b32.xlu0 %v3979, %s4020
        %v4022 = vpop.permute.xlu0 %4021
        %s4024 = sor.u32 256, 88
        %4025 = vbcast.lane.b32.xlu0 %v3979, %s4024
        %v4026 = vpop.permute.xlu0 %4025
        %s4028 = sor.u32 256, 96
        %4029 = vbcast.lane.b32.xlu0 %v3979, %s4028
        %v4030 = vpop.permute.xlu0 %4029
        %s4032 = sor.u32 256, 104
        %4033 = vbcast.lane.b32.xlu0 %v3979, %s4032
        %v4034 = vpop.permute.xlu0 %4033
        %s4036 = sor.u32 256, 112
        %4037 = vbcast.lane.b32.xlu0 %v3979, %s4036
        %v4038 = vpop.permute.xlu0 %4037
        %s4040 = sor.u32 256, 120
        %4041 = vbcast.lane.b32.xlu0 %v3979, %s4040
        %v4042 = vpop.permute.xlu0 %4041
        %v4043 = vlaneseq
        %v4044 = vshrl.u32 %v4043, 7
        %v4045 = vsub.s32 3, %v4044
        %v4046 = vrot.slane %v3838, %v4045
        %4048 = vbcast.lane.b32.xlu0 %v4046, 256
        %v4049 = vpop.permute.xlu0 %4048
        %s4051 = sor.u32 256, 8
        %4052 = vbcast.lane.b32.xlu0 %v4046, %s4051
        %v4053 = vpop.permute.xlu0 %4052
        %s4055 = sor.u32 256, 16
        %4056 = vbcast.lane.b32.xlu0 %v4046, %s4055
        %v4057 = vpop.permute.xlu0 %4056
        %s4059 = sor.u32 256, 24
        %4060 = vbcast.lane.b32.xlu0 %v4046, %s4059
        %v4061 = vpop.permute.xlu0 %4060
        %s4063 = sor.u32 256, 32
        %4064 = vbcast.lane.b32.xlu0 %v4046, %s4063
        %v4065 = vpop.permute.xlu0 %4064
        %s4067 = sor.u32 256, 40
        %4068 = vbcast.lane.b32.xlu0 %v4046, %s4067
        %v4069 = vpop.permute.xlu0 %4068
        %s4071 = sor.u32 256, 48
        %4072 = vbcast.lane.b32.xlu0 %v4046, %s4071
        %v4073 = vpop.permute.xlu0 %4072
        %s4075 = sor.u32 256, 56
        %4076 = vbcast.lane.b32.xlu0 %v4046, %s4075
        %v4077 = vpop.permute.xlu0 %4076
        %s4079 = sor.u32 256, 64
        %4080 = vbcast.lane.b32.xlu0 %v4046, %s4079
        %v4081 = vpop.permute.xlu0 %4080
        %s4083 = sor.u32 256, 72
        %4084 = vbcast.lane.b32.xlu0 %v4046, %s4083
        %v4085 = vpop.permute.xlu0 %4084
        %s4087 = sor.u32 256, 80
        %4088 = vbcast.lane.b32.xlu0 %v4046, %s4087
        %v4089 = vpop.permute.xlu0 %4088
        %s4091 = sor.u32 256, 88
        %4092 = vbcast.lane.b32.xlu0 %v4046, %s4091
        %v4093 = vpop.permute.xlu0 %4092
        %s4095 = sor.u32 256, 96
        %4096 = vbcast.lane.b32.xlu0 %v4046, %s4095
        %v4097 = vpop.permute.xlu0 %4096
        %s4099 = sor.u32 256, 104
        %4100 = vbcast.lane.b32.xlu0 %v4046, %s4099
        %v4101 = vpop.permute.xlu0 %4100
        %s4103 = sor.u32 256, 112
        %4104 = vbcast.lane.b32.xlu0 %v4046, %s4103
        %v4105 = vpop.permute.xlu0 %4104
        %s4107 = sor.u32 256, 120
        %4108 = vbcast.lane.b32.xlu0 %v4046, %s4107
        %v4109 = vpop.permute.xlu0 %4108
        %v4110 = vlaneseq
        %v4111 = vshrl.u32 %v4110, 7
        %v4112 = vsub.s32 4, %v4111
        %v4113 = vrot.slane %v3838, %v4112
        %4115 = vbcast.lane.b32.xlu0 %v4113, 256
        %v4116 = vpop.permute.xlu0 %4115
        %s4118 = sor.u32 256, 8
        %4119 = vbcast.lane.b32.xlu0 %v4113, %s4118
        %v4120 = vpop.permute.xlu0 %4119
        %s4122 = sor.u32 256, 16
        %4123 = vbcast.lane.b32.xlu0 %v4113, %s4122
        %v4124 = vpop.permute.xlu0 %4123
        %s4126 = sor.u32 256, 24
        %4127 = vbcast.lane.b32.xlu0 %v4113, %s4126
        %v4128 = vpop.permute.xlu0 %4127
        %s4130 = sor.u32 256, 32
        %4131 = vbcast.lane.b32.xlu0 %v4113, %s4130
        %v4132 = vpop.permute.xlu0 %4131
        %s4134 = sor.u32 256, 40
        %4135 = vbcast.lane.b32.xlu0 %v4113, %s4134
        %v4136 = vpop.permute.xlu0 %4135
        %s4138 = sor.u32 256, 48
        %4139 = vbcast.lane.b32.xlu0 %v4113, %s4138
        %v4140 = vpop.permute.xlu0 %4139
        %s4142 = sor.u32 256, 56
        %4143 = vbcast.lane.b32.xlu0 %v4113, %s4142
        %v4144 = vpop.permute.xlu0 %4143
        %s4146 = sor.u32 256, 64
        %4147 = vbcast.lane.b32.xlu0 %v4113, %s4146
        %v4148 = vpop.permute.xlu0 %4147
        %s4150 = sor.u32 256, 72
        %4151 = vbcast.lane.b32.xlu0 %v4113, %s4150
        %v4152 = vpop.permute.xlu0 %4151
        %s4154 = sor.u32 256, 80
        %4155 = vbcast.lane.b32.xlu0 %v4113, %s4154
        %v4156 = vpop.permute.xlu0 %4155
        %s4158 = sor.u32 256, 88
        %4159 = vbcast.lane.b32.xlu0 %v4113, %s4158
        %v4160 = vpop.permute.xlu0 %4159
        %s4162 = sor.u32 256, 96
        %4163 = vbcast.lane.b32.xlu0 %v4113, %s4162
        %v4164 = vpop.permute.xlu0 %4163
        %s4166 = sor.u32 256, 104
        %4167 = vbcast.lane.b32.xlu0 %v4113, %s4166
        %v4168 = vpop.permute.xlu0 %4167
        %s4170 = sor.u32 256, 112
        %4171 = vbcast.lane.b32.xlu0 %v4113, %s4170
        %v4172 = vpop.permute.xlu0 %4171
        %s4174 = sor.u32 256, 120
        %4175 = vbcast.lane.b32.xlu0 %v4113, %s4174
        %v4176 = vpop.permute.xlu0 %4175
        %v4177 = vlaneseq
        %v4178 = vshrl.u32 %v4177, 7
        %v4179 = vsub.s32 5, %v4178
        %v4180 = vrot.slane %v3838, %v4179
        %4182 = vbcast.lane.b32.xlu0 %v4180, 256
        %v4183 = vpop.permute.xlu0 %4182
        %s4185 = sor.u32 256, 8
        %4186 = vbcast.lane.b32.xlu0 %v4180, %s4185
        %v4187 = vpop.permute.xlu0 %4186
        %s4189 = sor.u32 256, 16
        %4190 = vbcast.lane.b32.xlu0 %v4180, %s4189
        %v4191 = vpop.permute.xlu0 %4190
        %s4193 = sor.u32 256, 24
        %4194 = vbcast.lane.b32.xlu0 %v4180, %s4193
        %v4195 = vpop.permute.xlu0 %4194
        %s4197 = sor.u32 256, 32
        %4198 = vbcast.lane.b32.xlu0 %v4180, %s4197
        %v4199 = vpop.permute.xlu0 %4198
        %s4201 = sor.u32 256, 40
        %4202 = vbcast.lane.b32.xlu0 %v4180, %s4201
        %v4203 = vpop.permute.xlu0 %4202
        %s4205 = sor.u32 256, 48
        %4206 = vbcast.lane.b32.xlu0 %v4180, %s4205
        %v4207 = vpop.permute.xlu0 %4206
        %s4209 = sor.u32 256, 56
        %4210 = vbcast.lane.b32.xlu0 %v4180, %s4209
        %v4211 = vpop.permute.xlu0 %4210
        %s4213 = sor.u32 256, 64
        %4214 = vbcast.lane.b32.xlu0 %v4180, %s4213
        %v4215 = vpop.permute.xlu0 %4214
        %s4217 = sor.u32 256, 72
        %4218 = vbcast.lane.b32.xlu0 %v4180, %s4217
        %v4219 = vpop.permute.xlu0 %4218
        %s4221 = sor.u32 256, 80
        %4222 = vbcast.lane.b32.xlu0 %v4180, %s4221
        %v4223 = vpop.permute.xlu0 %4222
        %s4225 = sor.u32 256, 88
        %4226 = vbcast.lane.b32.xlu0 %v4180, %s4225
        %v4227 = vpop.permute.xlu0 %4226
        %s4229 = sor.u32 256, 96
        %4230 = vbcast.lane.b32.xlu0 %v4180, %s4229
        %v4231 = vpop.permute.xlu0 %4230
        %s4233 = sor.u32 256, 104
        %4234 = vbcast.lane.b32.xlu0 %v4180, %s4233
        %v4235 = vpop.permute.xlu0 %4234
        %s4237 = sor.u32 256, 112
        %4238 = vbcast.lane.b32.xlu0 %v4180, %s4237
        %v4239 = vpop.permute.xlu0 %4238
        %s4241 = sor.u32 256, 120
        %4242 = vbcast.lane.b32.xlu0 %v4180, %s4241
        %v4243 = vpop.permute.xlu0 %4242
        %v4244 = vlaneseq
        %v4245 = vshrl.u32 %v4244, 7
        %v4246 = vsub.s32 6, %v4245
        %v4247 = vrot.slane %v3838, %v4246
        %4249 = vbcast.lane.b32.xlu0 %v4247, 256
        %v4250 = vpop.permute.xlu0 %4249
        %s4252 = sor.u32 256, 8
        %4253 = vbcast.lane.b32.xlu0 %v4247, %s4252
        %v4254 = vpop.permute.xlu0 %4253
        %s4256 = sor.u32 256, 16
        %4257 = vbcast.lane.b32.xlu0 %v4247, %s4256
        %v4258 = vpop.permute.xlu0 %4257
        %s4260 = sor.u32 256, 24
        %4261 = vbcast.lane.b32.xlu0 %v4247, %s4260
        %v4262 = vpop.permute.xlu0 %4261
        %s4264 = sor.u32 256, 32
        %4265 = vbcast.lane.b32.xlu0 %v4247, %s4264
        %v4266 = vpop.permute.xlu0 %4265
        %s4268 = sor.u32 256, 40
        %4269 = vbcast.lane.b32.xlu0 %v4247, %s4268
        %v4270 = vpop.permute.xlu0 %4269
        %s4272 = sor.u32 256, 48
        %4273 = vbcast.lane.b32.xlu0 %v4247, %s4272
        %v4274 = vpop.permute.xlu0 %4273
        %s4276 = sor.u32 256, 56
        %4277 = vbcast.lane.b32.xlu0 %v4247, %s4276
        %v4278 = vpop.permute.xlu0 %4277
        %s4280 = sor.u32 256, 64
        %4281 = vbcast.lane.b32.xlu0 %v4247, %s4280
        %v4282 = vpop.permute.xlu0 %4281
        %s4284 = sor.u32 256, 72
        %4285 = vbcast.lane.b32.xlu0 %v4247, %s4284
        %v4286 = vpop.permute.xlu0 %4285
        %s4288 = sor.u32 256, 80
        %4289 = vbcast.lane.b32.xlu0 %v4247, %s4288
        %v4290 = vpop.permute.xlu0 %4289
        %s4292 = sor.u32 256, 88
        %4293 = vbcast.lane.b32.xlu0 %v4247, %s4292
        %v4294 = vpop.permute.xlu0 %4293
        %s4296 = sor.u32 256, 96
        %4297 = vbcast.lane.b32.xlu0 %v4247, %s4296
        %v4298 = vpop.permute.xlu0 %4297
        %s4300 = sor.u32 256, 104
        %4301 = vbcast.lane.b32.xlu0 %v4247, %s4300
        %v4302 = vpop.permute.xlu0 %4301
        %s4304 = sor.u32 256, 112
        %4305 = vbcast.lane.b32.xlu0 %v4247, %s4304
        %v4306 = vpop.permute.xlu0 %4305
        %s4308 = sor.u32 256, 120
        %4309 = vbcast.lane.b32.xlu0 %v4247, %s4308
        %v4310 = vpop.permute.xlu0 %4309
        %v4311 = vlaneseq
        %v4312 = vshrl.u32 %v4311, 7
        %v4313 = vsub.s32 7, %v4312
        %v4314 = vrot.slane %v3838, %v4313
        %4316 = vbcast.lane.b32.xlu0 %v4314, 256
        %v4317 = vpop.permute.xlu0 %4316
        %s4319 = sor.u32 256, 8
        %4320 = vbcast.lane.b32.xlu0 %v4314, %s4319
        %v4321 = vpop.permute.xlu0 %4320
        %s4323 = sor.u32 256, 16
        %4324 = vbcast.lane.b32.xlu0 %v4314, %s4323
        %v4325 = vpop.permute.xlu0 %4324
        %s4327 = sor.u32 256, 24
        %4328 = vbcast.lane.b32.xlu0 %v4314, %s4327
        %v4329 = vpop.permute.xlu0 %4328
        %s4331 = sor.u32 256, 32
        %4332 = vbcast.lane.b32.xlu0 %v4314, %s4331
        %v4333 = vpop.permute.xlu0 %4332
        %s4335 = sor.u32 256, 40
        %4336 = vbcast.lane.b32.xlu0 %v4314, %s4335
        %v4337 = vpop.permute.xlu0 %4336
        %s4339 = sor.u32 256, 48
        %4340 = vbcast.lane.b32.xlu0 %v4314, %s4339
        %v4341 = vpop.permute.xlu0 %4340
        %s4343 = sor.u32 256, 56
        %4344 = vbcast.lane.b32.xlu0 %v4314, %s4343
        %v4345 = vpop.permute.xlu0 %4344
        %s4347 = sor.u32 256, 64
        %4348 = vbcast.lane.b32.xlu0 %v4314, %s4347
        %v4349 = vpop.permute.xlu0 %4348
        %s4351 = sor.u32 256, 72
        %4352 = vbcast.lane.b32.xlu0 %v4314, %s4351
        %v4353 = vpop.permute.xlu0 %4352
        %s4355 = sor.u32 256, 80
        %4356 = vbcast.lane.b32.xlu0 %v4314, %s4355
        %v4357 = vpop.permute.xlu0 %4356
        %s4359 = sor.u32 256, 88
        %4360 = vbcast.lane.b32.xlu0 %v4314, %s4359
        %v4361 = vpop.permute.xlu0 %4360
        %s4363 = sor.u32 256, 96
        %4364 = vbcast.lane.b32.xlu0 %v4314, %s4363
        %v4365 = vpop.permute.xlu0 %4364
        %s4367 = sor.u32 256, 104
        %4368 = vbcast.lane.b32.xlu0 %v4314, %s4367
        %v4369 = vpop.permute.xlu0 %4368
        %s4371 = sor.u32 256, 112
        %4372 = vbcast.lane.b32.xlu0 %v4314, %s4371
        %v4373 = vpop.permute.xlu0 %4372
        %s4375 = sor.u32 256, 120
        %4376 = vbcast.lane.b32.xlu0 %v4314, %s4375
        %v4377 = vpop.permute.xlu0 %4376
        %v4378 = vsub.f32 %v2384, %v3848
        %v4379 = vsub.f32 %v2385, %v3848
        %v4380 = vsub.f32 %v2386, %v3852
        %v4381 = vsub.f32 %v2387, %v3852
        %v4382 = vsub.f32 %v2388, %v3856
        %v4383 = vsub.f32 %v2389, %v3856
        %v4384 = vsub.f32 %v2390, %v3860
        %v4385 = vsub.f32 %v2391, %v3860
        %v4386 = vsub.f32 %v2392, %v3864
        %v4387 = vsub.f32 %v2393, %v3864
        %v4388 = vsub.f32 %v2394, %v3868
        %v4389 = vsub.f32 %v2395, %v3868
        %v4390 = vsub.f32 %v2396, %v3872
        %v4391 = vsub.f32 %v2397, %v3872
        %v4392 = vsub.f32 %v2398, %v3876
        %v4393 = vsub.f32 %v2399, %v3876
        %v4394 = vsub.f32 %v2400, %v3880
        %v4395 = vsub.f32 %v2401, %v3880
        %v4396 = vsub.f32 %v2402, %v3884
        %v4397 = vsub.f32 %v2403, %v3884
        %v4398 = vsub.f32 %v2404, %v3888
        %v4399 = vsub.f32 %v2405, %v3888
        %v4400 = vsub.f32 %v2406, %v3892
        %v4401 = vsub.f32 %v2407, %v3892
        %v4402 = vsub.f32 %v2408, %v3896
        %v4403 = vsub.f32 %v2409, %v3896
        %v4404 = vsub.f32 %v2410, %v3900
        %v4405 = vsub.f32 %v2411, %v3900
        %v4406 = vsub.f32 %v2412, %v3904
        %v4407 = vsub.f32 %v2413, %v3904
        %v4408 = vsub.f32 %v2414, %v3908
        %v4409 = vsub.f32 %v2415, %v3908
        %v4410 = vsub.f32 %v2416, %v3915
        %v4411 = vsub.f32 %v2417, %v3915
        %v4412 = vsub.f32 %v2418, %v3919
        %v4413 = vsub.f32 %v2419, %v3919
        %v4414 = vsub.f32 %v2420, %v3923
        %v4415 = vsub.f32 %v2421, %v3923
        %v4416 = vsub.f32 %v2422, %v3927
        %v4417 = vsub.f32 %v2423, %v3927
        %v4418 = vsub.f32 %v2424, %v3931
        %v4419 = vsub.f32 %v2425, %v3931
        %v4420 = vsub.f32 %v2426, %v3935
        %v4421 = vsub.f32 %v2427, %v3935
        %v4422 = vsub.f32 %v2428, %v3939
        %v4423 = vsub.f32 %v2429, %v3939
        %v4424 = vsub.f32 %v2430, %v3943
        %v4425 = vsub.f32 %v2431, %v3943
        %v4426 = vsub.f32 %v2432, %v3947
        %v4427 = vsub.f32 %v2433, %v3947
        %v4428 = vsub.f32 %v2434, %v3951
        %v4429 = vsub.f32 %v2435, %v3951
        %v4430 = vsub.f32 %v2436, %v3955
        %v4431 = vsub.f32 %v2437, %v3955
        %v4432 = vsub.f32 %v2438, %v3959
        %v4433 = vsub.f32 %v2439, %v3959
        %v4434 = vsub.f32 %v2440, %v3963
        %v4435 = vsub.f32 %v2441, %v3963
        %v4436 = vsub.f32 %v2442, %v3967
        %v4437 = vsub.f32 %v2443, %v3967
        %v4438 = vsub.f32 %v2444, %v3971
        %v4439 = vsub.f32 %v2445, %v3971
        %v4440 = vsub.f32 %v2446, %v3975
        %v4441 = vsub.f32 %v2447, %v3975
        %v4442 = vsub.f32 %v2448, %v3982
        %v4443 = vsub.f32 %v2449, %v3982
        %v4444 = vsub.f32 %v2450, %v3986
        %v4445 = vsub.f32 %v2451, %v3986
        %v4446 = vsub.f32 %v2452, %v3990
        %v4447 = vsub.f32 %v2453, %v3990
        %v4448 = vsub.f32 %v2454, %v3994
        %v4449 = vsub.f32 %v2455, %v3994
        %v4450 = vsub.f32 %v2456, %v3998
        %v4451 = vsub.f32 %v2457, %v3998
        %v4452 = vsub.f32 %v2458, %v4002
        %v4453 = vsub.f32 %v2459, %v4002
        %v4454 = vsub.f32 %v2460, %v4006
        %v4455 = vsub.f32 %v2461, %v4006
        %v4456 = vsub.f32 %v2462, %v4010
        %v4457 = vsub.f32 %v2463, %v4010
        %v4458 = vsub.f32 %v2464, %v4014
        %v4459 = vsub.f32 %v2465, %v4014
        %v4460 = vsub.f32 %v2466, %v4018
        %v4461 = vsub.f32 %v2467, %v4018
        %v4462 = vsub.f32 %v2468, %v4022
        %v4463 = vsub.f32 %v2469, %v4022
        %v4464 = vsub.f32 %v2470, %v4026
        %v4465 = vsub.f32 %v2471, %v4026
        %v4466 = vsub.f32 %v2472, %v4030
        %v4467 = vsub.f32 %v2473, %v4030
        %v4468 = vsub.f32 %v2474, %v4034
        %v4469 = vsub.f32 %v2475, %v4034
        %v4470 = vsub.f32 %v2476, %v4038
        %v4471 = vsub.f32 %v2477, %v4038
        %v4472 = vsub.f32 %v2478, %v4042
        %v4473 = vsub.f32 %v2479, %v4042
        %v4474 = vsub.f32 %v2480, %v4049
        %v4475 = vsub.f32 %v2481, %v4049
        %v4476 = vsub.f32 %v2482, %v4053
        %v4477 = vsub.f32 %v2483, %v4053
        %v4478 = vsub.f32 %v2484, %v4057
        %v4479 = vsub.f32 %v2485, %v4057
        %v4480 = vsub.f32 %v2486, %v4061
        %v4481 = vsub.f32 %v2487, %v4061
        %v4482 = vsub.f32 %v2488, %v4065
        %v4483 = vsub.f32 %v2489, %v4065
        %v4484 = vsub.f32 %v2490, %v4069
        %v4485 = vsub.f32 %v2491, %v4069
        %v4486 = vsub.f32 %v2492, %v4073
        %v4487 = vsub.f32 %v2493, %v4073
        %v4488 = vsub.f32 %v2494, %v4077
        %v4489 = vsub.f32 %v2495, %v4077
        %v4490 = vsub.f32 %v2496, %v4081
        %v4491 = vsub.f32 %v2497, %v4081
        %v4492 = vsub.f32 %v2498, %v4085
        %v4493 = vsub.f32 %v2499, %v4085
        %v4494 = vsub.f32 %v2500, %v4089
        %v4495 = vsub.f32 %v2501, %v4089
        %v4496 = vsub.f32 %v2502, %v4093
        %v4497 = vsub.f32 %v2503, %v4093
        %v4498 = vsub.f32 %v2504, %v4097
        %v4499 = vsub.f32 %v2505, %v4097
        %v4500 = vsub.f32 %v2506, %v4101
        %v4501 = vsub.f32 %v2507, %v4101
        %v4502 = vsub.f32 %v2508, %v4105
        %v4503 = vsub.f32 %v2509, %v4105
        %v4504 = vsub.f32 %v2510, %v4109
        %v4505 = vsub.f32 %v2511, %v4109
        %v4506 = vsub.f32 %v2512, %v4116
        %v4507 = vsub.f32 %v2513, %v4116
        %v4508 = vsub.f32 %v2514, %v4120
        %v4509 = vsub.f32 %v2515, %v4120
        %v4510 = vsub.f32 %v2516, %v4124
        %v4511 = vsub.f32 %v2517, %v4124
        %v4512 = vsub.f32 %v2518, %v4128
        %v4513 = vsub.f32 %v2519, %v4128
        %v4514 = vsub.f32 %v2520, %v4132
        %v4515 = vsub.f32 %v2521, %v4132
        %v4516 = vsub.f32 %v2522, %v4136
        %v4517 = vsub.f32 %v2523, %v4136
        %v4518 = vsub.f32 %v2524, %v4140
        %v4519 = vsub.f32 %v2525, %v4140
        %v4520 = vsub.f32 %v2526, %v4144
        %v4521 = vsub.f32 %v2527, %v4144
        %v4522 = vsub.f32 %v2528, %v4148
        %v4523 = vsub.f32 %v2529, %v4148
        %v4524 = vsub.f32 %v2530, %v4152
        %v4525 = vsub.f32 %v2531, %v4152
        %v4526 = vsub.f32 %v2532, %v4156
        %v4527 = vsub.f32 %v2533, %v4156
        %v4528 = vsub.f32 %v2534, %v4160
        %v4529 = vsub.f32 %v2535, %v4160
        %v4530 = vsub.f32 %v2536, %v4164
        %v4531 = vsub.f32 %v2537, %v4164
        %v4532 = vsub.f32 %v2538, %v4168
        %v4533 = vsub.f32 %v2539, %v4168
        %v4534 = vsub.f32 %v2540, %v4172
        %v4535 = vsub.f32 %v2541, %v4172
        %v4536 = vsub.f32 %v2542, %v4176
        %v4537 = vsub.f32 %v2543, %v4176
        %v4538 = vsub.f32 %v2544, %v4183
        %v4539 = vsub.f32 %v2545, %v4183
        %v4540 = vsub.f32 %v2546, %v4187
        %v4541 = vsub.f32 %v2547, %v4187
        %v4542 = vsub.f32 %v2548, %v4191
        %v4543 = vsub.f32 %v2549, %v4191
        %v4544 = vsub.f32 %v2550, %v4195
        %v4545 = vsub.f32 %v2551, %v4195
        %v4546 = vsub.f32 %v2552, %v4199
        %v4547 = vsub.f32 %v2553, %v4199
        %v4548 = vsub.f32 %v2554, %v4203
        %v4549 = vsub.f32 %v2555, %v4203
        %v4550 = vsub.f32 %v2556, %v4207
        %v4551 = vsub.f32 %v2557, %v4207
        %v4552 = vsub.f32 %v2558, %v4211
        %v4553 = vsub.f32 %v2559, %v4211
        %v4554 = vsub.f32 %v2560, %v4215
        %v4555 = vsub.f32 %v2561, %v4215
        %v4556 = vsub.f32 %v2562, %v4219
        %v4557 = vsub.f32 %v2563, %v4219
        %v4558 = vsub.f32 %v2564, %v4223
        %v4559 = vsub.f32 %v2565, %v4223
        %v4560 = vsub.f32 %v2566, %v4227
        %v4561 = vsub.f32 %v2567, %v4227
        %v4562 = vsub.f32 %v2568, %v4231
        %v4563 = vsub.f32 %v2569, %v4231
        %v4564 = vsub.f32 %v2570, %v4235
        %v4565 = vsub.f32 %v2571, %v4235
        %v4566 = vsub.f32 %v2572, %v4239
        %v4567 = vsub.f32 %v2573, %v4239
        %v4568 = vsub.f32 %v2574, %v4243
        %v4569 = vsub.f32 %v2575, %v4243
        %v4570 = vsub.f32 %v2576, %v4250
        %v4571 = vsub.f32 %v2577, %v4250
        %v4572 = vsub.f32 %v2578, %v4254
        %v4573 = vsub.f32 %v2579, %v4254
        %v4574 = vsub.f32 %v2580, %v4258
        %v4575 = vsub.f32 %v2581, %v4258
        %v4576 = vsub.f32 %v2582, %v4262
        %v4577 = vsub.f32 %v2583, %v4262
        %v4578 = vsub.f32 %v2584, %v4266
        %v4579 = vsub.f32 %v2585, %v4266
        %v4580 = vsub.f32 %v2586, %v4270
        %v4581 = vsub.f32 %v2587, %v4270
        %v4582 = vsub.f32 %v2588, %v4274
        %v4583 = vsub.f32 %v2589, %v4274
        %v4584 = vsub.f32 %v2590, %v4278
        %v4585 = vsub.f32 %v2591, %v4278
        %v4586 = vsub.f32 %v2592, %v4282
        %v4587 = vsub.f32 %v2593, %v4282
        %v4588 = vsub.f32 %v2594, %v4286
        %v4589 = vsub.f32 %v2595, %v4286
        %v4590 = vsub.f32 %v2596, %v4290
        %v4591 = vsub.f32 %v2597, %v4290
        %v4592 = vsub.f32 %v2598, %v4294
        %v4593 = vsub.f32 %v2599, %v4294
        %v4594 = vsub.f32 %v2600, %v4298
        %v4595 = vsub.f32 %v2601, %v4298
        %v4596 = vsub.f32 %v2602, %v4302
        %v4597 = vsub.f32 %v2603, %v4302
        %v4598 = vsub.f32 %v2604, %v4306
        %v4599 = vsub.f32 %v2605, %v4306
        %v4600 = vsub.f32 %v2606, %v4310
        %v4601 = vsub.f32 %v2607, %v4310
        %v4602 = vsub.f32 %v2608, %v4317
        %v4603 = vsub.f32 %v2609, %v4317
        %v4604 = vsub.f32 %v2610, %v4321
        %v4605 = vsub.f32 %v2611, %v4321
        %v4606 = vsub.f32 %v2612, %v4325
        %v4607 = vsub.f32 %v2613, %v4325
        %v4608 = vsub.f32 %v2614, %v4329
        %v4609 = vsub.f32 %v2615, %v4329
        %v4610 = vsub.f32 %v2616, %v4333
        %v4611 = vsub.f32 %v2617, %v4333
        %v4612 = vsub.f32 %v2618, %v4337
        %v4613 = vsub.f32 %v2619, %v4337
        %v4614 = vsub.f32 %v2620, %v4341
        %v4615 = vsub.f32 %v2621, %v4341
        %v4616 = vsub.f32 %v2622, %v4345
        %v4617 = vsub.f32 %v2623, %v4345
        %v4618 = vsub.f32 %v2624, %v4349
        %v4619 = vsub.f32 %v2625, %v4349
        %v4620 = vsub.f32 %v2626, %v4353
        %v4621 = vsub.f32 %v2627, %v4353
        %v4622 = vsub.f32 %v2628, %v4357
        %v4623 = vsub.f32 %v2629, %v4357
        %v4624 = vsub.f32 %v2630, %v4361
        %v4625 = vsub.f32 %v2631, %v4361
        %v4626 = vsub.f32 %v2632, %v4365
        %v4627 = vsub.f32 %v2633, %v4365
        %v4628 = vsub.f32 %v2634, %v4369
        %v4629 = vsub.f32 %v2635, %v4369
        %v4630 = vsub.f32 %v2636, %v4373
        %v4631 = vsub.f32 %v2637, %v4373
        %v4632 = vsub.f32 %v2638, %v4377
        %v4633 = vsub.f32 %v2639, %v4377
        %v4634 = vmul.f32 %v4378, 1.442695
        %v4635 = vpow.pop %v4634
        %v4636 = vmul.f32 %v4379, 1.442695
        %v4637 = vpow.pop %v4636
        %v4638 = vmul.f32 %v4380, 1.442695
        %v4639 = vpow.pop %v4638
        %v4640 = vmul.f32 %v4381, 1.442695
        %v4641 = vpow.pop %v4640
        %v4642 = vmul.f32 %v4382, 1.442695
        %v4643 = vpow.pop %v4642
        %v4644 = vmul.f32 %v4383, 1.442695
        %v4645 = vpow.pop %v4644
        %v4646 = vmul.f32 %v4384, 1.442695
        %v4647 = vpow.pop %v4646
        %v4648 = vmul.f32 %v4385, 1.442695
        %v4649 = vpow.pop %v4648
        %v4650 = vmul.f32 %v4386, 1.442695
        %v4651 = vpow.pop %v4650
        %v4652 = vmul.f32 %v4387, 1.442695
        %v4653 = vpow.pop %v4652
        %v4654 = vmul.f32 %v4388, 1.442695
        %v4655 = vpow.pop %v4654
        %v4656 = vmul.f32 %v4389, 1.442695
        %v4657 = vpow.pop %v4656
        %v4658 = vmul.f32 %v4390, 1.442695
        %v4659 = vpow.pop %v4658
        %v4660 = vmul.f32 %v4391, 1.442695
        %v4661 = vpow.pop %v4660
        %v4662 = vmul.f32 %v4392, 1.442695
        %v4663 = vpow.pop %v4662
        %v4664 = vmul.f32 %v4393, 1.442695
        %v4665 = vpow.pop %v4664
        %v4666 = vmul.f32 %v4394, 1.442695
        %v4667 = vpow.pop %v4666
        %v4668 = vmul.f32 %v4395, 1.442695
        %v4669 = vpow.pop %v4668
        %v4670 = vmul.f32 %v4396, 1.442695
        %v4671 = vpow.pop %v4670
        %v4672 = vmul.f32 %v4397, 1.442695
        %v4673 = vpow.pop %v4672
        %v4674 = vmul.f32 %v4398, 1.442695
        %v4675 = vpow.pop %v4674
        %v4676 = vmul.f32 %v4399, 1.442695
        %v4677 = vpow.pop %v4676
        %v4678 = vmul.f32 %v4400, 1.442695
        %v4679 = vpow.pop %v4678
        %v4680 = vmul.f32 %v4401, 1.442695
        %v4681 = vpow.pop %v4680
        %v4682 = vmul.f32 %v4402, 1.442695
        %v4683 = vpow.pop %v4682
        %v4684 = vmul.f32 %v4403, 1.442695
        %v4685 = vpow.pop %v4684
        %v4686 = vmul.f32 %v4404, 1.442695
        %v4687 = vpow.pop %v4686
        %v4688 = vmul.f32 %v4405, 1.442695
        %v4689 = vpow.pop %v4688
        %v4690 = vmul.f32 %v4406, 1.442695
        %v4691 = vpow.pop %v4690
        %v4692 = vmul.f32 %v4407, 1.442695
        %v4693 = vpow.pop %v4692
        %v4694 = vmul.f32 %v4408, 1.442695
        %v4695 = vpow.pop %v4694
        %v4696 = vmul.f32 %v4409, 1.442695
        %v4697 = vpow.pop %v4696
        %v4698 = vmul.f32 %v4410, 1.442695
        %v4699 = vpow.pop %v4698
        %v4700 = vmul.f32 %v4411, 1.442695
        %v4701 = vpow.pop %v4700
        %v4702 = vmul.f32 %v4412, 1.442695
        %v4703 = vpow.pop %v4702
        %v4704 = vmul.f32 %v4413, 1.442695
        %v4705 = vpow.pop %v4704
        %v4706 = vmul.f32 %v4414, 1.442695
        %v4707 = vpow.pop %v4706
        %v4708 = vmul.f32 %v4415, 1.442695
        %v4709 = vpow.pop %v4708
        %v4710 = vmul.f32 %v4416, 1.442695
        %v4711 = vpow.pop %v4710
        %v4712 = vmul.f32 %v4417, 1.442695
        %v4713 = vpow.pop %v4712
        %v4714 = vmul.f32 %v4418, 1.442695
        %v4715 = vpow.pop %v4714
        %v4716 = vmul.f32 %v4419, 1.442695
        %v4717 = vpow.pop %v4716
        %v4718 = vmul.f32 %v4420, 1.442695
        %v4719 = vpow.pop %v4718
        %v4720 = vmul.f32 %v4421, 1.442695
        %v4721 = vpow.pop %v4720
        %v4722 = vmul.f32 %v4422, 1.442695
        %v4723 = vpow.pop %v4722
        %v4724 = vmul.f32 %v4423, 1.442695
        %v4725 = vpow.pop %v4724
        %v4726 = vmul.f32 %v4424, 1.442695
        %v4727 = vpow.pop %v4726
        %v4728 = vmul.f32 %v4425, 1.442695
        %v4729 = vpow.pop %v4728
        %v4730 = vmul.f32 %v4426, 1.442695
        %v4731 = vpow.pop %v4730
        %v4732 = vmul.f32 %v4427, 1.442695
        %v4733 = vpow.pop %v4732
        %v4734 = vmul.f32 %v4428, 1.442695
        %v4735 = vpow.pop %v4734
        %v4736 = vmul.f32 %v4429, 1.442695
        %v4737 = vpow.pop %v4736
        %v4738 = vmul.f32 %v4430, 1.442695
        %v4739 = vpow.pop %v4738
        %v4740 = vmul.f32 %v4431, 1.442695
        %v4741 = vpow.pop %v4740
        %v4742 = vmul.f32 %v4432, 1.442695
        %v4743 = vpow.pop %v4742
        %v4744 = vmul.f32 %v4433, 1.442695
        %v4745 = vpow.pop %v4744
        %v4746 = vmul.f32 %v4434, 1.442695
        %v4747 = vpow.pop %v4746
        %v4748 = vmul.f32 %v4435, 1.442695
        %v4749 = vpow.pop %v4748
        %v4750 = vmul.f32 %v4436, 1.442695
        %v4751 = vpow.pop %v4750
        %v4752 = vmul.f32 %v4437, 1.442695
        %v4753 = vpow.pop %v4752
        %v4754 = vmul.f32 %v4438, 1.442695
        %v4755 = vpow.pop %v4754
        %v4756 = vmul.f32 %v4439, 1.442695
        %v4757 = vpow.pop %v4756
        %v4758 = vmul.f32 %v4440, 1.442695
        %v4759 = vpow.pop %v4758
        %v4760 = vmul.f32 %v4441, 1.442695
        %v4761 = vpow.pop %v4760
        %v4762 = vmul.f32 %v4442, 1.442695
        %v4763 = vpow.pop %v4762
        %v4764 = vmul.f32 %v4443, 1.442695
        %v4765 = vpow.pop %v4764
        %v4766 = vmul.f32 %v4444, 1.442695
        %v4767 = vpow.pop %v4766
        %v4768 = vmul.f32 %v4445, 1.442695
        %v4769 = vpow.pop %v4768
        %v4770 = vmul.f32 %v4446, 1.442695
        %v4771 = vpow.pop %v4770
        %v4772 = vmul.f32 %v4447, 1.442695
        %v4773 = vpow.pop %v4772
        %v4774 = vmul.f32 %v4448, 1.442695
        %v4775 = vpow.pop %v4774
        %v4776 = vmul.f32 %v4449, 1.442695
        %v4777 = vpow.pop %v4776
        %v4778 = vmul.f32 %v4450, 1.442695
        %v4779 = vpow.pop %v4778
        %v4780 = vmul.f32 %v4451, 1.442695
        %v4781 = vpow.pop %v4780
        %v4782 = vmul.f32 %v4452, 1.442695
        %v4783 = vpow.pop %v4782
        %v4784 = vmul.f32 %v4453, 1.442695
        %v4785 = vpow.pop %v4784
        %v4786 = vmul.f32 %v4454, 1.442695
        %v4787 = vpow.pop %v4786
        %v4788 = vmul.f32 %v4455, 1.442695
        %v4789 = vpow.pop %v4788
        %v4790 = vmul.f32 %v4456, 1.442695
        %v4791 = vpow.pop %v4790
        %v4792 = vmul.f32 %v4457, 1.442695
        %v4793 = vpow.pop %v4792
        %v4794 = vmul.f32 %v4458, 1.442695
        %v4795 = vpow.pop %v4794
        %v4796 = vmul.f32 %v4459, 1.442695
        %v4797 = vpow.pop %v4796
        %v4798 = vmul.f32 %v4460, 1.442695
        %v4799 = vpow.pop %v4798
        %v4800 = vmul.f32 %v4461, 1.442695
        %v4801 = vpow.pop %v4800
        %v4802 = vmul.f32 %v4462, 1.442695
        %v4803 = vpow.pop %v4802
        %v4804 = vmul.f32 %v4463, 1.442695
        %v4805 = vpow.pop %v4804
        %v4806 = vmul.f32 %v4464, 1.442695
        %v4807 = vpow.pop %v4806
        %v4808 = vmul.f32 %v4465, 1.442695
        %v4809 = vpow.pop %v4808
        %v4810 = vmul.f32 %v4466, 1.442695
        %v4811 = vpow.pop %v4810
        %v4812 = vmul.f32 %v4467, 1.442695
        %v4813 = vpow.pop %v4812
        %v4814 = vmul.f32 %v4468, 1.442695
        %v4815 = vpow.pop %v4814
        %v4816 = vmul.f32 %v4469, 1.442695
        %v4817 = vpow.pop %v4816
        %v4818 = vmul.f32 %v4470, 1.442695
        %v4819 = vpow.pop %v4818
        %v4820 = vmul.f32 %v4471, 1.442695
        %v4821 = vpow.pop %v4820
        %v4822 = vmul.f32 %v4472, 1.442695
        %v4823 = vpow.pop %v4822
        %v4824 = vmul.f32 %v4473, 1.442695
        %v4825 = vpow.pop %v4824
        %v4826 = vmul.f32 %v4474, 1.442695
        %v4827 = vpow.pop %v4826
        %v4828 = vmul.f32 %v4475, 1.442695
        %v4829 = vpow.pop %v4828
        %v4830 = vmul.f32 %v4476, 1.442695
        %v4831 = vpow.pop %v4830
        %v4832 = vmul.f32 %v4477, 1.442695
        %v4833 = vpow.pop %v4832
        %v4834 = vmul.f32 %v4478, 1.442695
        %v4835 = vpow.pop %v4834
        %v4836 = vmul.f32 %v4479, 1.442695
        %v4837 = vpow.pop %v4836
        %v4838 = vmul.f32 %v4480, 1.442695
        %v4839 = vpow.pop %v4838
        %v4840 = vmul.f32 %v4481, 1.442695
        %v4841 = vpow.pop %v4840
        %v4842 = vmul.f32 %v4482, 1.442695
        %v4843 = vpow.pop %v4842
        %v4844 = vmul.f32 %v4483, 1.442695
        %v4845 = vpow.pop %v4844
        %v4846 = vmul.f32 %v4484, 1.442695
        %v4847 = vpow.pop %v4846
        %v4848 = vmul.f32 %v4485, 1.442695
        %v4849 = vpow.pop %v4848
        %v4850 = vmul.f32 %v4486, 1.442695
        %v4851 = vpow.pop %v4850
        %v4852 = vmul.f32 %v4487, 1.442695
        %v4853 = vpow.pop %v4852
        %v4854 = vmul.f32 %v4488, 1.442695
        %v4855 = vpow.pop %v4854
        %v4856 = vmul.f32 %v4489, 1.442695
        %v4857 = vpow.pop %v4856
        %v4858 = vmul.f32 %v4490, 1.442695
        %v4859 = vpow.pop %v4858
        %v4860 = vmul.f32 %v4491, 1.442695
        %v4861 = vpow.pop %v4860
        %v4862 = vmul.f32 %v4492, 1.442695
        %v4863 = vpow.pop %v4862
        %v4864 = vmul.f32 %v4493, 1.442695
        %v4865 = vpow.pop %v4864
        %v4866 = vmul.f32 %v4494, 1.442695
        %v4867 = vpow.pop %v4866
        %v4868 = vmul.f32 %v4495, 1.442695
        %v4869 = vpow.pop %v4868
        %v4870 = vmul.f32 %v4496, 1.442695
        %v4871 = vpow.pop %v4870
        %v4872 = vmul.f32 %v4497, 1.442695
        %v4873 = vpow.pop %v4872
        %v4874 = vmul.f32 %v4498, 1.442695
        %v4875 = vpow.pop %v4874
        %v4876 = vmul.f32 %v4499, 1.442695
        %v4877 = vpow.pop %v4876
        %v4878 = vmul.f32 %v4500, 1.442695
        %v4879 = vpow.pop %v4878
        %v4880 = vmul.f32 %v4501, 1.442695
        %v4881 = vpow.pop %v4880
        %v4882 = vmul.f32 %v4502, 1.442695
        %v4883 = vpow.pop %v4882
        %v4884 = vmul.f32 %v4503, 1.442695
        %v4885 = vpow.pop %v4884
        %v4886 = vmul.f32 %v4504, 1.442695
        %v4887 = vpow.pop %v4886
        %v4888 = vmul.f32 %v4505, 1.442695
        %v4889 = vpow.pop %v4888
        %v4890 = vmul.f32 %v4506, 1.442695
        %v4891 = vpow.pop %v4890
        %v4892 = vmul.f32 %v4507, 1.442695
        %v4893 = vpow.pop %v4892
        %v4894 = vmul.f32 %v4508, 1.442695
        %v4895 = vpow.pop %v4894
        %v4896 = vmul.f32 %v4509, 1.442695
        %v4897 = vpow.pop %v4896
        %v4898 = vmul.f32 %v4510, 1.442695
        %v4899 = vpow.pop %v4898
        %v4900 = vmul.f32 %v4511, 1.442695
        %v4901 = vpow.pop %v4900
        %v4902 = vmul.f32 %v4512, 1.442695
        %v4903 = vpow.pop %v4902
        %v4904 = vmul.f32 %v4513, 1.442695
        %v4905 = vpow.pop %v4904
        %v4906 = vmul.f32 %v4514, 1.442695
        %v4907 = vpow.pop %v4906
        %v4908 = vmul.f32 %v4515, 1.442695
        %v4909 = vpow.pop %v4908
        %v4910 = vmul.f32 %v4516, 1.442695
        %v4911 = vpow.pop %v4910
        %v4912 = vmul.f32 %v4517, 1.442695
        %v4913 = vpow.pop %v4912
        %v4914 = vmul.f32 %v4518, 1.442695
        %v4915 = vpow.pop %v4914
        %v4916 = vmul.f32 %v4519, 1.442695
        %v4917 = vpow.pop %v4916
        %v4918 = vmul.f32 %v4520, 1.442695
        %v4919 = vpow.pop %v4918
        %v4920 = vmul.f32 %v4521, 1.442695
        %v4921 = vpow.pop %v4920
        %v4922 = vmul.f32 %v4522, 1.442695
        %v4923 = vpow.pop %v4922
        %v4924 = vmul.f32 %v4523, 1.442695
        %v4925 = vpow.pop %v4924
        %v4926 = vmul.f32 %v4524, 1.442695
        %v4927 = vpow.pop %v4926
        %v4928 = vmul.f32 %v4525, 1.442695
        %v4929 = vpow.pop %v4928
        %v4930 = vmul.f32 %v4526, 1.442695
        %v4931 = vpow.pop %v4930
        %v4932 = vmul.f32 %v4527, 1.442695
        %v4933 = vpow.pop %v4932
        %v4934 = vmul.f32 %v4528, 1.442695
        %v4935 = vpow.pop %v4934
        %v4936 = vmul.f32 %v4529, 1.442695
        %v4937 = vpow.pop %v4936
        %v4938 = vmul.f32 %v4530, 1.442695
        %v4939 = vpow.pop %v4938
        %v4940 = vmul.f32 %v4531, 1.442695
        %v4941 = vpow.pop %v4940
        %v4942 = vmul.f32 %v4532, 1.442695
        %v4943 = vpow.pop %v4942
        %v4944 = vmul.f32 %v4533, 1.442695
        %v4945 = vpow.pop %v4944
        %v4946 = vmul.f32 %v4534, 1.442695
        %v4947 = vpow.pop %v4946
        %v4948 = vmul.f32 %v4535, 1.442695
        %v4949 = vpow.pop %v4948
        %v4950 = vmul.f32 %v4536, 1.442695
        %v4951 = vpow.pop %v4950
        %v4952 = vmul.f32 %v4537, 1.442695
        %v4953 = vpow.pop %v4952
        %v4954 = vmul.f32 %v4538, 1.442695
        %v4955 = vpow.pop %v4954
        %v4956 = vmul.f32 %v4539, 1.442695
        %v4957 = vpow.pop %v4956
        %v4958 = vmul.f32 %v4540, 1.442695
        %v4959 = vpow.pop %v4958
        %v4960 = vmul.f32 %v4541, 1.442695
        %v4961 = vpow.pop %v4960
        %v4962 = vmul.f32 %v4542, 1.442695
        %v4963 = vpow.pop %v4962
        %v4964 = vmul.f32 %v4543, 1.442695
        %v4965 = vpow.pop %v4964
        %v4966 = vmul.f32 %v4544, 1.442695
        %v4967 = vpow.pop %v4966
        %v4968 = vmul.f32 %v4545, 1.442695
        %v4969 = vpow.pop %v4968
        %v4970 = vmul.f32 %v4546, 1.442695
        %v4971 = vpow.pop %v4970
        %v4972 = vmul.f32 %v4547, 1.442695
        %v4973 = vpow.pop %v4972
        %v4974 = vmul.f32 %v4548, 1.442695
        %v4975 = vpow.pop %v4974
        %v4976 = vmul.f32 %v4549, 1.442695
        %v4977 = vpow.pop %v4976
        %v4978 = vmul.f32 %v4550, 1.442695
        %v4979 = vpow.pop %v4978
        %v4980 = vmul.f32 %v4551, 1.442695
        %v4981 = vpow.pop %v4980
        %v4982 = vmul.f32 %v4552, 1.442695
        %v4983 = vpow.pop %v4982
        %v4984 = vmul.f32 %v4553, 1.442695
        %v4985 = vpow.pop %v4984
        %v4986 = vmul.f32 %v4554, 1.442695
        %v4987 = vpow.pop %v4986
        %v4988 = vmul.f32 %v4555, 1.442695
        %v4989 = vpow.pop %v4988
        %v4990 = vmul.f32 %v4556, 1.442695
        %v4991 = vpow.pop %v4990
        %v4992 = vmul.f32 %v4557, 1.442695
        %v4993 = vpow.pop %v4992
        %v4994 = vmul.f32 %v4558, 1.442695
        %v4995 = vpow.pop %v4994
        %v4996 = vmul.f32 %v4559, 1.442695
        %v4997 = vpow.pop %v4996
        %v4998 = vmul.f32 %v4560, 1.442695
        %v4999 = vpow.pop %v4998
        %v5000 = vmul.f32 %v4561, 1.442695
        %v5001 = vpow.pop %v5000
        %v5002 = vmul.f32 %v4562, 1.442695
        %v5003 = vpow.pop %v5002
        %v5004 = vmul.f32 %v4563, 1.442695
        %v5005 = vpow.pop %v5004
        %v5006 = vmul.f32 %v4564, 1.442695
        %v5007 = vpow.pop %v5006
        %v5008 = vmul.f32 %v4565, 1.442695
        %v5009 = vpow.pop %v5008
        %v5010 = vmul.f32 %v4566, 1.442695
        %v5011 = vpow.pop %v5010
        %v5012 = vmul.f32 %v4567, 1.442695
        %v5013 = vpow.pop %v5012
        %v5014 = vmul.f32 %v4568, 1.442695
        %v5015 = vpow.pop %v5014
        %v5016 = vmul.f32 %v4569, 1.442695
        %v5017 = vpow.pop %v5016
        %v5018 = vmul.f32 %v4570, 1.442695
        %v5019 = vpow.pop %v5018
        %v5020 = vmul.f32 %v4571, 1.442695
        %v5021 = vpow.pop %v5020
        %v5022 = vmul.f32 %v4572, 1.442695
        %v5023 = vpow.pop %v5022
        %v5024 = vmul.f32 %v4573, 1.442695
        %v5025 = vpow.pop %v5024
        %v5026 = vmul.f32 %v4574, 1.442695
        %v5027 = vpow.pop %v5026
        %v5028 = vmul.f32 %v4575, 1.442695
        %v5029 = vpow.pop %v5028
        %v5030 = vmul.f32 %v4576, 1.442695
        %v5031 = vpow.pop %v5030
        %v5032 = vmul.f32 %v4577, 1.442695
        %v5033 = vpow.pop %v5032
        %v5034 = vmul.f32 %v4578, 1.442695
        %v5035 = vpow.pop %v5034
        %v5036 = vmul.f32 %v4579, 1.442695
        %v5037 = vpow.pop %v5036
        %v5038 = vmul.f32 %v4580, 1.442695
        %v5039 = vpow.pop %v5038
        %v5040 = vmul.f32 %v4581, 1.442695
        %v5041 = vpow.pop %v5040
        %v5042 = vmul.f32 %v4582, 1.442695
        %v5043 = vpow.pop %v5042
        %v5044 = vmul.f32 %v4583, 1.442695
        %v5045 = vpow.pop %v5044
        %v5046 = vmul.f32 %v4584, 1.442695
        %v5047 = vpow.pop %v5046
        %v5048 = vmul.f32 %v4585, 1.442695
        %v5049 = vpow.pop %v5048
        %v5050 = vmul.f32 %v4586, 1.442695
        %v5051 = vpow.pop %v5050
        %v5052 = vmul.f32 %v4587, 1.442695
        %v5053 = vpow.pop %v5052
        %v5054 = vmul.f32 %v4588, 1.442695
        %v5055 = vpow.pop %v5054
        %v5056 = vmul.f32 %v4589, 1.442695
        %v5057 = vpow.pop %v5056
        %v5058 = vmul.f32 %v4590, 1.442695
        %v5059 = vpow.pop %v5058
        %v5060 = vmul.f32 %v4591, 1.442695
        %v5061 = vpow.pop %v5060
        %v5062 = vmul.f32 %v4592, 1.442695
        %v5063 = vpow.pop %v5062
        %v5064 = vmul.f32 %v4593, 1.442695
        %v5065 = vpow.pop %v5064
        %v5066 = vmul.f32 %v4594, 1.442695
        %v5067 = vpow.pop %v5066
        %v5068 = vmul.f32 %v4595, 1.442695
        %v5069 = vpow.pop %v5068
        %v5070 = vmul.f32 %v4596, 1.442695
        %v5071 = vpow.pop %v5070
        %v5072 = vmul.f32 %v4597, 1.442695
        %v5073 = vpow.pop %v5072
        %v5074 = vmul.f32 %v4598, 1.442695
        %v5075 = vpow.pop %v5074
        %v5076 = vmul.f32 %v4599, 1.442695
        %v5077 = vpow.pop %v5076
        %v5078 = vmul.f32 %v4600, 1.442695
        %v5079 = vpow.pop %v5078
        %v5080 = vmul.f32 %v4601, 1.442695
        %v5081 = vpow.pop %v5080
        %v5082 = vmul.f32 %v4602, 1.442695
        %v5083 = vpow.pop %v5082
        %v5084 = vmul.f32 %v4603, 1.442695
        %v5085 = vpow.pop %v5084
        %v5086 = vmul.f32 %v4604, 1.442695
        %v5087 = vpow.pop %v5086
        %v5088 = vmul.f32 %v4605, 1.442695
        %v5089 = vpow.pop %v5088
        %v5090 = vmul.f32 %v4606, 1.442695
        %v5091 = vpow.pop %v5090
        %v5092 = vmul.f32 %v4607, 1.442695
        %v5093 = vpow.pop %v5092
        %v5094 = vmul.f32 %v4608, 1.442695
        %v5095 = vpow.pop %v5094
        %v5096 = vmul.f32 %v4609, 1.442695
        %v5097 = vpow.pop %v5096
        %v5098 = vmul.f32 %v4610, 1.442695
        %v5099 = vpow.pop %v5098
        %v5100 = vmul.f32 %v4611, 1.442695
        %v5101 = vpow.pop %v5100
        %v5102 = vmul.f32 %v4612, 1.442695
        %v5103 = vpow.pop %v5102
        %v5104 = vmul.f32 %v4613, 1.442695
        %v5105 = vpow.pop %v5104
        %v5106 = vmul.f32 %v4614, 1.442695
        %v5107 = vpow.pop %v5106
        %v5108 = vmul.f32 %v4615, 1.442695
        %v5109 = vpow.pop %v5108
        %v5110 = vmul.f32 %v4616, 1.442695
        %v5111 = vpow.pop %v5110
        %v5112 = vmul.f32 %v4617, 1.442695
        %v5113 = vpow.pop %v5112
        %v5114 = vmul.f32 %v4618, 1.442695
        %v5115 = vpow.pop %v5114
        %v5116 = vmul.f32 %v4619, 1.442695
        %v5117 = vpow.pop %v5116
        %v5118 = vmul.f32 %v4620, 1.442695
        %v5119 = vpow.pop %v5118
        %v5120 = vmul.f32 %v4621, 1.442695
        %v5121 = vpow.pop %v5120
        %v5122 = vmul.f32 %v4622, 1.442695
        %v5123 = vpow.pop %v5122
        %v5124 = vmul.f32 %v4623, 1.442695
        %v5125 = vpow.pop %v5124
        %v5126 = vmul.f32 %v4624, 1.442695
        %v5127 = vpow.pop %v5126
        %v5128 = vmul.f32 %v4625, 1.442695
        %v5129 = vpow.pop %v5128
        %v5130 = vmul.f32 %v4626, 1.442695
        %v5131 = vpow.pop %v5130
        %v5132 = vmul.f32 %v4627, 1.442695
        %v5133 = vpow.pop %v5132
        %v5134 = vmul.f32 %v4628, 1.442695
        %v5135 = vpow.pop %v5134
        %v5136 = vmul.f32 %v4629, 1.442695
        %v5137 = vpow.pop %v5136
        %v5138 = vmul.f32 %v4630, 1.442695
        %v5139 = vpow.pop %v5138
        %v5140 = vmul.f32 %v4631, 1.442695
        %v5141 = vpow.pop %v5140
        %v5142 = vmul.f32 %v4632, 1.442695
        %v5143 = vpow.pop %v5142
        %v5144 = vmul.f32 %v4633, 1.442695
        %v5145 = vpow.pop %v5144
        %v5146 = vadd.f32 %v4635, %v4637
        %5147 = vadd.xlane.f32.xlu0 %v5146
        %v5148 = vpop.xlane.xlu0 %5147
        %v5149 = vadd.f32 %v4639, %v4641
        %5150 = vadd.xlane.f32.xlu0 %v5149
        %v5151 = vpop.xlane.xlu0 %5150
        %v5152 = vadd.f32 %v4643, %v4645
        %5153 = vadd.xlane.f32.xlu0 %v5152
        %v5154 = vpop.xlane.xlu0 %5153
        %v5155 = vadd.f32 %v4647, %v4649
        %5156 = vadd.xlane.f32.xlu0 %v5155
        %v5157 = vpop.xlane.xlu0 %5156
        %v5158 = vadd.f32 %v4651, %v4653
        %5159 = vadd.xlane.f32.xlu0 %v5158
        %v5160 = vpop.xlane.xlu0 %5159
        %v5161 = vadd.f32 %v4655, %v4657
        %5162 = vadd.xlane.f32.xlu0 %v5161
        %v5163 = vpop.xlane.xlu0 %5162
        %v5164 = vadd.f32 %v4659, %v4661
        %5165 = vadd.xlane.f32.xlu0 %v5164
        %v5166 = vpop.xlane.xlu0 %5165
        %v5167 = vadd.f32 %v4663, %v4665
        %5168 = vadd.xlane.f32.xlu0 %v5167
        %v5169 = vpop.xlane.xlu0 %5168
        %v5170 = vadd.f32 %v4667, %v4669
        %5171 = vadd.xlane.f32.xlu0 %v5170
        %v5172 = vpop.xlane.xlu0 %5171
        %v5173 = vadd.f32 %v4671, %v4673
        %5174 = vadd.xlane.f32.xlu0 %v5173
        %v5175 = vpop.xlane.xlu0 %5174
        %v5176 = vadd.f32 %v4675, %v4677
        %5177 = vadd.xlane.f32.xlu0 %v5176
        %v5178 = vpop.xlane.xlu0 %5177
        %v5179 = vadd.f32 %v4679, %v4681
        %5180 = vadd.xlane.f32.xlu0 %v5179
        %v5181 = vpop.xlane.xlu0 %5180
        %v5182 = vadd.f32 %v4683, %v4685
        %5183 = vadd.xlane.f32.xlu0 %v5182
        %v5184 = vpop.xlane.xlu0 %5183
        %v5185 = vadd.f32 %v4687, %v4689
        %5186 = vadd.xlane.f32.xlu0 %v5185
        %v5187 = vpop.xlane.xlu0 %5186
        %v5188 = vadd.f32 %v4691, %v4693
        %5189 = vadd.xlane.f32.xlu0 %v5188
        %v5190 = vpop.xlane.xlu0 %5189
        %v5191 = vadd.f32 %v4695, %v4697
        %5192 = vadd.xlane.f32.xlu0 %v5191
        %v5193 = vpop.xlane.xlu0 %5192
        %v5194 = vadd.f32 %v4699, %v4701
        %5195 = vadd.xlane.f32.xlu0 %v5194
        %v5196 = vpop.xlane.xlu0 %5195
        %v5197 = vadd.f32 %v4703, %v4705
        %5198 = vadd.xlane.f32.xlu0 %v5197
        %v5199 = vpop.xlane.xlu0 %5198
        %v5200 = vadd.f32 %v4707, %v4709
        %5201 = vadd.xlane.f32.xlu0 %v5200
        %v5202 = vpop.xlane.xlu0 %5201
        %v5203 = vadd.f32 %v4711, %v4713
        %5204 = vadd.xlane.f32.xlu0 %v5203
        %v5205 = vpop.xlane.xlu0 %5204
        %v5206 = vadd.f32 %v4715, %v4717
        %5207 = vadd.xlane.f32.xlu0 %v5206
        %v5208 = vpop.xlane.xlu0 %5207
        %v5209 = vadd.f32 %v4719, %v4721
        %5210 = vadd.xlane.f32.xlu0 %v5209
        %v5211 = vpop.xlane.xlu0 %5210
        %v5212 = vadd.f32 %v4723, %v4725
        %5213 = vadd.xlane.f32.xlu0 %v5212
        %v5214 = vpop.xlane.xlu0 %5213
        %v5215 = vadd.f32 %v4727, %v4729
        %5216 = vadd.xlane.f32.xlu0 %v5215
        %v5217 = vpop.xlane.xlu0 %5216
        %v5218 = vadd.f32 %v4731, %v4733
        %5219 = vadd.xlane.f32.xlu0 %v5218
        %v5220 = vpop.xlane.xlu0 %5219
        %v5221 = vadd.f32 %v4735, %v4737
        %5222 = vadd.xlane.f32.xlu0 %v5221
        %v5223 = vpop.xlane.xlu0 %5222
        %v5224 = vadd.f32 %v4739, %v4741
        %5225 = vadd.xlane.f32.xlu0 %v5224
        %v5226 = vpop.xlane.xlu0 %5225
        %v5227 = vadd.f32 %v4743, %v4745
        %5228 = vadd.xlane.f32.xlu0 %v5227
        %v5229 = vpop.xlane.xlu0 %5228
        %v5230 = vadd.f32 %v4747, %v4749
        %5231 = vadd.xlane.f32.xlu0 %v5230
        %v5232 = vpop.xlane.xlu0 %5231
        %v5233 = vadd.f32 %v4751, %v4753
        %5234 = vadd.xlane.f32.xlu0 %v5233
        %v5235 = vpop.xlane.xlu0 %5234
        %v5236 = vadd.f32 %v4755, %v4757
        %5237 = vadd.xlane.f32.xlu0 %v5236
        %v5238 = vpop.xlane.xlu0 %5237
        %v5239 = vadd.f32 %v4759, %v4761
        %5240 = vadd.xlane.f32.xlu0 %v5239
        %v5241 = vpop.xlane.xlu0 %5240
        %v5242 = vadd.f32 %v4763, %v4765
        %5243 = vadd.xlane.f32.xlu0 %v5242
        %v5244 = vpop.xlane.xlu0 %5243
        %v5245 = vadd.f32 %v4767, %v4769
        %5246 = vadd.xlane.f32.xlu0 %v5245
        %v5247 = vpop.xlane.xlu0 %5246
        %v5248 = vadd.f32 %v4771, %v4773
        %5249 = vadd.xlane.f32.xlu0 %v5248
        %v5250 = vpop.xlane.xlu0 %5249
        %v5251 = vadd.f32 %v4775, %v4777
        %5252 = vadd.xlane.f32.xlu0 %v5251
        %v5253 = vpop.xlane.xlu0 %5252
        %v5254 = vadd.f32 %v4779, %v4781
        %5255 = vadd.xlane.f32.xlu0 %v5254
        %v5256 = vpop.xlane.xlu0 %5255
        %v5257 = vadd.f32 %v4783, %v4785
        %5258 = vadd.xlane.f32.xlu0 %v5257
        %v5259 = vpop.xlane.xlu0 %5258
        %v5260 = vadd.f32 %v4787, %v4789
        %5261 = vadd.xlane.f32.xlu0 %v5260
        %v5262 = vpop.xlane.xlu0 %5261
        %v5263 = vadd.f32 %v4791, %v4793
        %5264 = vadd.xlane.f32.xlu0 %v5263
        %v5265 = vpop.xlane.xlu0 %5264
        %v5266 = vadd.f32 %v4795, %v4797
        %5267 = vadd.xlane.f32.xlu0 %v5266
        %v5268 = vpop.xlane.xlu0 %5267
        %v5269 = vadd.f32 %v4799, %v4801
        %5270 = vadd.xlane.f32.xlu0 %v5269
        %v5271 = vpop.xlane.xlu0 %5270
        %v5272 = vadd.f32 %v4803, %v4805
        %5273 = vadd.xlane.f32.xlu0 %v5272
        %v5274 = vpop.xlane.xlu0 %5273
        %v5275 = vadd.f32 %v4807, %v4809
        %5276 = vadd.xlane.f32.xlu0 %v5275
        %v5277 = vpop.xlane.xlu0 %5276
        %v5278 = vadd.f32 %v4811, %v4813
        %5279 = vadd.xlane.f32.xlu0 %v5278
        %v5280 = vpop.xlane.xlu0 %5279
        %v5281 = vadd.f32 %v4815, %v4817
        %5282 = vadd.xlane.f32.xlu0 %v5281
        %v5283 = vpop.xlane.xlu0 %5282
        %v5284 = vadd.f32 %v4819, %v4821
        %5285 = vadd.xlane.f32.xlu0 %v5284
        %v5286 = vpop.xlane.xlu0 %5285
        %v5287 = vadd.f32 %v4823, %v4825
        %5288 = vadd.xlane.f32.xlu0 %v5287
        %v5289 = vpop.xlane.xlu0 %5288
        %v5290 = vadd.f32 %v4827, %v4829
        %5291 = vadd.xlane.f32.xlu0 %v5290
        %v5292 = vpop.xlane.xlu0 %5291
        %v5293 = vadd.f32 %v4831, %v4833
        %5294 = vadd.xlane.f32.xlu0 %v5293
        %v5295 = vpop.xlane.xlu0 %5294
        %v5296 = vadd.f32 %v4835, %v4837
        %5297 = vadd.xlane.f32.xlu0 %v5296
        %v5298 = vpop.xlane.xlu0 %5297
        %v5299 = vadd.f32 %v4839, %v4841
        %5300 = vadd.xlane.f32.xlu0 %v5299
        %v5301 = vpop.xlane.xlu0 %5300
        %v5302 = vadd.f32 %v4843, %v4845
        %5303 = vadd.xlane.f32.xlu0 %v5302
        %v5304 = vpop.xlane.xlu0 %5303
        %v5305 = vadd.f32 %v4847, %v4849
        %5306 = vadd.xlane.f32.xlu0 %v5305
        %v5307 = vpop.xlane.xlu0 %5306
        %v5308 = vadd.f32 %v4851, %v4853
        %5309 = vadd.xlane.f32.xlu0 %v5308
        %v5310 = vpop.xlane.xlu0 %5309
        %v5311 = vadd.f32 %v4855, %v4857
        %5312 = vadd.xlane.f32.xlu0 %v5311
        %v5313 = vpop.xlane.xlu0 %5312
        %v5314 = vadd.f32 %v4859, %v4861
        %5315 = vadd.xlane.f32.xlu0 %v5314
        %v5316 = vpop.xlane.xlu0 %5315
        %v5317 = vadd.f32 %v4863, %v4865
        %5318 = vadd.xlane.f32.xlu0 %v5317
        %v5319 = vpop.xlane.xlu0 %5318
        %v5320 = vadd.f32 %v4867, %v4869
        %5321 = vadd.xlane.f32.xlu0 %v5320
        %v5322 = vpop.xlane.xlu0 %5321
        %v5323 = vadd.f32 %v4871, %v4873
        %5324 = vadd.xlane.f32.xlu0 %v5323
        %v5325 = vpop.xlane.xlu0 %5324
        %v5326 = vadd.f32 %v4875, %v4877
        %5327 = vadd.xlane.f32.xlu0 %v5326
        %v5328 = vpop.xlane.xlu0 %5327
        %v5329 = vadd.f32 %v4879, %v4881
        %5330 = vadd.xlane.f32.xlu0 %v5329
        %v5331 = vpop.xlane.xlu0 %5330
        %v5332 = vadd.f32 %v4883, %v4885
        %5333 = vadd.xlane.f32.xlu0 %v5332
        %v5334 = vpop.xlane.xlu0 %5333
        %v5335 = vadd.f32 %v4887, %v4889
        %5336 = vadd.xlane.f32.xlu0 %v5335
        %v5337 = vpop.xlane.xlu0 %5336
        %v5338 = vadd.f32 %v4891, %v4893
        %5339 = vadd.xlane.f32.xlu0 %v5338
        %v5340 = vpop.xlane.xlu0 %5339
        %v5341 = vadd.f32 %v4895, %v4897
        %5342 = vadd.xlane.f32.xlu0 %v5341
        %v5343 = vpop.xlane.xlu0 %5342
        %v5344 = vadd.f32 %v4899, %v4901
        %5345 = vadd.xlane.f32.xlu0 %v5344
        %v5346 = vpop.xlane.xlu0 %5345
        %v5347 = vadd.f32 %v4903, %v4905
        %5348 = vadd.xlane.f32.xlu0 %v5347
        %v5349 = vpop.xlane.xlu0 %5348
        %v5350 = vadd.f32 %v4907, %v4909
        %5351 = vadd.xlane.f32.xlu0 %v5350
        %v5352 = vpop.xlane.xlu0 %5351
        %v5353 = vadd.f32 %v4911, %v4913
        %5354 = vadd.xlane.f32.xlu0 %v5353
        %v5355 = vpop.xlane.xlu0 %5354
        %v5356 = vadd.f32 %v4915, %v4917
        %5357 = vadd.xlane.f32.xlu0 %v5356
        %v5358 = vpop.xlane.xlu0 %5357
        %v5359 = vadd.f32 %v4919, %v4921
        %5360 = vadd.xlane.f32.xlu0 %v5359
        %v5361 = vpop.xlane.xlu0 %5360
        %v5362 = vadd.f32 %v4923, %v4925
        %5363 = vadd.xlane.f32.xlu0 %v5362
        %v5364 = vpop.xlane.xlu0 %5363
        %v5365 = vadd.f32 %v4927, %v4929
        %5366 = vadd.xlane.f32.xlu0 %v5365
        %v5367 = vpop.xlane.xlu0 %5366
        %v5368 = vadd.f32 %v4931, %v4933
        %5369 = vadd.xlane.f32.xlu0 %v5368
        %v5370 = vpop.xlane.xlu0 %5369
        %v5371 = vadd.f32 %v4935, %v4937
        %5372 = vadd.xlane.f32.xlu0 %v5371
        %v5373 = vpop.xlane.xlu0 %5372
        %v5374 = vadd.f32 %v4939, %v4941
        %5375 = vadd.xlane.f32.xlu0 %v5374
        %v5376 = vpop.xlane.xlu0 %5375
        %v5377 = vadd.f32 %v4943, %v4945
        %5378 = vadd.xlane.f32.xlu0 %v5377
        %v5379 = vpop.xlane.xlu0 %5378
        %v5380 = vadd.f32 %v4947, %v4949
        %5381 = vadd.xlane.f32.xlu0 %v5380
        %v5382 = vpop.xlane.xlu0 %5381
        %v5383 = vadd.f32 %v4951, %v4953
        %5384 = vadd.xlane.f32.xlu0 %v5383
        %v5385 = vpop.xlane.xlu0 %5384
        %v5386 = vadd.f32 %v4955, %v4957
        %5387 = vadd.xlane.f32.xlu0 %v5386
        %v5388 = vpop.xlane.xlu0 %5387
        %v5389 = vadd.f32 %v4959, %v4961
        %5390 = vadd.xlane.f32.xlu0 %v5389
        %v5391 = vpop.xlane.xlu0 %5390
        %v5392 = vadd.f32 %v4963, %v4965
        %5393 = vadd.xlane.f32.xlu0 %v5392
        %v5394 = vpop.xlane.xlu0 %5393
        %v5395 = vadd.f32 %v4967, %v4969
        %5396 = vadd.xlane.f32.xlu0 %v5395
        %v5397 = vpop.xlane.xlu0 %5396
        %v5398 = vadd.f32 %v4971, %v4973
        %5399 = vadd.xlane.f32.xlu0 %v5398
        %v5400 = vpop.xlane.xlu0 %5399
        %v5401 = vadd.f32 %v4975, %v4977
        %5402 = vadd.xlane.f32.xlu0 %v5401
        %v5403 = vpop.xlane.xlu0 %5402
        %v5404 = vadd.f32 %v4979, %v4981
        %5405 = vadd.xlane.f32.xlu0 %v5404
        %v5406 = vpop.xlane.xlu0 %5405
        %v5407 = vadd.f32 %v4983, %v4985
        %5408 = vadd.xlane.f32.xlu0 %v5407
        %v5409 = vpop.xlane.xlu0 %5408
        %v5410 = vadd.f32 %v4987, %v4989
        %5411 = vadd.xlane.f32.xlu0 %v5410
        %v5412 = vpop.xlane.xlu0 %5411
        %v5413 = vadd.f32 %v4991, %v4993
        %5414 = vadd.xlane.f32.xlu0 %v5413
        %v5415 = vpop.xlane.xlu0 %5414
        %v5416 = vadd.f32 %v4995, %v4997
        %5417 = vadd.xlane.f32.xlu0 %v5416
        %v5418 = vpop.xlane.xlu0 %5417
        %v5419 = vadd.f32 %v4999, %v5001
        %5420 = vadd.xlane.f32.xlu0 %v5419
        %v5421 = vpop.xlane.xlu0 %5420
        %v5422 = vadd.f32 %v5003, %v5005
        %5423 = vadd.xlane.f32.xlu0 %v5422
        %v5424 = vpop.xlane.xlu0 %5423
        %v5425 = vadd.f32 %v5007, %v5009
        %5426 = vadd.xlane.f32.xlu0 %v5425
        %v5427 = vpop.xlane.xlu0 %5426
        %v5428 = vadd.f32 %v5011, %v5013
        %5429 = vadd.xlane.f32.xlu0 %v5428
        %v5430 = vpop.xlane.xlu0 %5429
        %v5431 = vadd.f32 %v5015, %v5017
        %5432 = vadd.xlane.f32.xlu0 %v5431
        %v5433 = vpop.xlane.xlu0 %5432
        %v5434 = vadd.f32 %v5019, %v5021
        %5435 = vadd.xlane.f32.xlu0 %v5434
        %v5436 = vpop.xlane.xlu0 %5435
        %v5437 = vadd.f32 %v5023, %v5025
        %5438 = vadd.xlane.f32.xlu0 %v5437
        %v5439 = vpop.xlane.xlu0 %5438
        %v5440 = vadd.f32 %v5027, %v5029
        %5441 = vadd.xlane.f32.xlu0 %v5440
        %v5442 = vpop.xlane.xlu0 %5441
        %v5443 = vadd.f32 %v5031, %v5033
        %5444 = vadd.xlane.f32.xlu0 %v5443
        %v5445 = vpop.xlane.xlu0 %5444
        %v5446 = vadd.f32 %v5035, %v5037
        %5447 = vadd.xlane.f32.xlu0 %v5446
        %v5448 = vpop.xlane.xlu0 %5447
        %v5449 = vadd.f32 %v5039, %v5041
        %5450 = vadd.xlane.f32.xlu0 %v5449
        %v5451 = vpop.xlane.xlu0 %5450
        %v5452 = vadd.f32 %v5043, %v5045
        %5453 = vadd.xlane.f32.xlu0 %v5452
        %v5454 = vpop.xlane.xlu0 %5453
        %v5455 = vadd.f32 %v5047, %v5049
        %5456 = vadd.xlane.f32.xlu0 %v5455
        %v5457 = vpop.xlane.xlu0 %5456
        %v5458 = vadd.f32 %v5051, %v5053
        %5459 = vadd.xlane.f32.xlu0 %v5458
        %v5460 = vpop.xlane.xlu0 %5459
        %v5461 = vadd.f32 %v5055, %v5057
        %5462 = vadd.xlane.f32.xlu0 %v5461
        %v5463 = vpop.xlane.xlu0 %5462
        %v5464 = vadd.f32 %v5059, %v5061
        %5465 = vadd.xlane.f32.xlu0 %v5464
        %v5466 = vpop.xlane.xlu0 %5465
        %v5467 = vadd.f32 %v5063, %v5065
        %5468 = vadd.xlane.f32.xlu0 %v5467
        %v5469 = vpop.xlane.xlu0 %5468
        %v5470 = vadd.f32 %v5067, %v5069
        %5471 = vadd.xlane.f32.xlu0 %v5470
        %v5472 = vpop.xlane.xlu0 %5471
        %v5473 = vadd.f32 %v5071, %v5073
        %5474 = vadd.xlane.f32.xlu0 %v5473
        %v5475 = vpop.xlane.xlu0 %5474
        %v5476 = vadd.f32 %v5075, %v5077
        %5477 = vadd.xlane.f32.xlu0 %v5476
        %v5478 = vpop.xlane.xlu0 %5477
        %v5479 = vadd.f32 %v5079, %v5081
        %5480 = vadd.xlane.f32.xlu0 %v5479
        %v5481 = vpop.xlane.xlu0 %5480
        %v5482 = vadd.f32 %v5083, %v5085
        %5483 = vadd.xlane.f32.xlu0 %v5482
        %v5484 = vpop.xlane.xlu0 %5483
        %v5485 = vadd.f32 %v5087, %v5089
        %5486 = vadd.xlane.f32.xlu0 %v5485
        %v5487 = vpop.xlane.xlu0 %5486
        %v5488 = vadd.f32 %v5091, %v5093
        %5489 = vadd.xlane.f32.xlu0 %v5488
        %v5490 = vpop.xlane.xlu0 %5489
        %v5491 = vadd.f32 %v5095, %v5097
        %5492 = vadd.xlane.f32.xlu0 %v5491
        %v5493 = vpop.xlane.xlu0 %5492
        %v5494 = vadd.f32 %v5099, %v5101
        %5495 = vadd.xlane.f32.xlu0 %v5494
        %v5496 = vpop.xlane.xlu0 %5495
        %v5497 = vadd.f32 %v5103, %v5105
        %5498 = vadd.xlane.f32.xlu0 %v5497
        %v5499 = vpop.xlane.xlu0 %5498
        %v5500 = vadd.f32 %v5107, %v5109
        %5501 = vadd.xlane.f32.xlu0 %v5500
        %v5502 = vpop.xlane.xlu0 %5501
        %v5503 = vadd.f32 %v5111, %v5113
        %5504 = vadd.xlane.f32.xlu0 %v5503
        %v5505 = vpop.xlane.xlu0 %5504
        %v5506 = vadd.f32 %v5115, %v5117
        %5507 = vadd.xlane.f32.xlu0 %v5506
        %v5508 = vpop.xlane.xlu0 %5507
        %v5509 = vadd.f32 %v5119, %v5121
        %5510 = vadd.xlane.f32.xlu0 %v5509
        %v5511 = vpop.xlane.xlu0 %5510
        %v5512 = vadd.f32 %v5123, %v5125
        %5513 = vadd.xlane.f32.xlu0 %v5512
        %v5514 = vpop.xlane.xlu0 %5513
        %v5515 = vadd.f32 %v5127, %v5129
        %5516 = vadd.xlane.f32.xlu0 %v5515
        %v5517 = vpop.xlane.xlu0 %5516
        %v5518 = vadd.f32 %v5131, %v5133
        %5519 = vadd.xlane.f32.xlu0 %v5518
        %v5520 = vpop.xlane.xlu0 %5519
        %v5521 = vadd.f32 %v5135, %v5137
        %5522 = vadd.xlane.f32.xlu0 %v5521
        %v5523 = vpop.xlane.xlu0 %5522
        %v5524 = vadd.f32 %v5139, %v5141
        %5525 = vadd.xlane.f32.xlu0 %v5524
        %v5526 = vpop.xlane.xlu0 %5525
        %v5527 = vadd.f32 %v5143, %v5145
        %5528 = vadd.xlane.f32.xlu0 %v5527
        %v5529 = vpop.xlane.xlu0 %5528
        %v5530 = vld [vmem:[#allocation3] sm:$0xff]
        %v5531 = vmul.f32 %v3841, %v5530
        %v5660 = vlaneseq
        %v5661 = vshrl.u32 %v5660, 7
        %v5662 = vsub.s32 %v3160, %v5661
        %v5663 = vrot.slane %v5148, %v5662
        %v5664 = vlaneseq
        %v5665 = vshrl.u32 %v5664, 7
        %v5666 = vsub.s32 %v3165, %v5665
        %v5667 = vrot.slane %v5151, %v5666
        %v5668 = vsel %vm3170, %v5667, %v5663
        %v5669 = vlaneseq
        %v5670 = vshrl.u32 %v5669, 7
        %v5671 = vsub.s32 %v3172, %v5670
        %v5672 = vrot.slane %v5154, %v5671
        %v5673 = vsel %vm3177, %v5672, %v5668
        %v5674 = vlaneseq
        %v5675 = vshrl.u32 %v5674, 7
        %v5676 = vsub.s32 %v3179, %v5675
        %v5677 = vrot.slane %v5157, %v5676
        %v5678 = vsel %vm3184, %v5677, %v5673
        %v5679 = vlaneseq
        %v5680 = vshrl.u32 %v5679, 7
        %v5681 = vsub.s32 %v3186, %v5680
        %v5682 = vrot.slane %v5160, %v5681
        %v5683 = vsel %vm3191, %v5682, %v5678
        %v5684 = vlaneseq
        %v5685 = vshrl.u32 %v5684, 7
        %v5686 = vsub.s32 %v3193, %v5685
        %v5687 = vrot.slane %v5163, %v5686
        %v5688 = vsel %vm3198, %v5687, %v5683
        %v5689 = vlaneseq
        %v5690 = vshrl.u32 %v5689, 7
        %v5691 = vsub.s32 %v3200, %v5690
        %v5692 = vrot.slane %v5166, %v5691
        %v5693 = vsel %vm3205, %v5692, %v5688
        %v5694 = vlaneseq
        %v5695 = vshrl.u32 %v5694, 7
        %v5696 = vsub.s32 %v3207, %v5695
        %v5697 = vrot.slane %v5169, %v5696
        %v5698 = vsel %vm3212, %v5697, %v5693
        %v5699 = vlaneseq
        %v5700 = vshrl.u32 %v5699, 7
        %v5701 = vsub.s32 %v3214, %v5700
        %v5702 = vrot.slane %v5172, %v5701
        %v5703 = vsel %vm3219, %v5702, %v5698
        %v5704 = vlaneseq
        %v5705 = vshrl.u32 %v5704, 7
        %v5706 = vsub.s32 %v3221, %v5705
        %v5707 = vrot.slane %v5175, %v5706
        %v5708 = vsel %vm3226, %v5707, %v5703
        %v5709 = vlaneseq
        %v5710 = vshrl.u32 %v5709, 7
        %v5711 = vsub.s32 %v3228, %v5710
        %v5712 = vrot.slane %v5178, %v5711
        %v5713 = vsel %vm3233, %v5712, %v5708
        %v5714 = vlaneseq
        %v5715 = vshrl.u32 %v5714, 7
        %v5716 = vsub.s32 %v3235, %v5715
        %v5717 = vrot.slane %v5181, %v5716
        %v5718 = vsel %vm3240, %v5717, %v5713
        %v5719 = vlaneseq
        %v5720 = vshrl.u32 %v5719, 7
        %v5721 = vsub.s32 %v3242, %v5720
        %v5722 = vrot.slane %v5184, %v5721
        %v5723 = vsel %vm3247, %v5722, %v5718
        %v5724 = vlaneseq
        %v5725 = vshrl.u32 %v5724, 7
        %v5726 = vsub.s32 %v3249, %v5725
        %v5727 = vrot.slane %v5187, %v5726
        %v5728 = vsel %vm3254, %v5727, %v5723
        %v5729 = vlaneseq
        %v5730 = vshrl.u32 %v5729, 7
        %v5731 = vsub.s32 %v3256, %v5730
        %v5732 = vrot.slane %v5190, %v5731
        %v5733 = vsel %vm3261, %v5732, %v5728
        %v5734 = vlaneseq
        %v5735 = vshrl.u32 %v5734, 7
        %v5736 = vsub.s32 %v3263, %v5735
        %v5737 = vrot.slane %v5193, %v5736
        %v5738 = vsel %vm3268, %v5737, %v5733
        %v5739 = vlaneseq
        %v5740 = vshrl.u32 %v5739, 7
        %v5741 = vsub.s32 %v3160, %v5740
        %v5742 = vrot.slane %v5196, %v5741
        %v5743 = vlaneseq
        %v5744 = vshrl.u32 %v5743, 7
        %v5745 = vsub.s32 %v3165, %v5744
        %v5746 = vrot.slane %v5199, %v5745
        %v5747 = vsel %vm3170, %v5746, %v5742
        %v5748 = vlaneseq
        %v5749 = vshrl.u32 %v5748, 7
        %v5750 = vsub.s32 %v3172, %v5749
        %v5751 = vrot.slane %v5202, %v5750
        %v5752 = vsel %vm3177, %v5751, %v5747
        %v5753 = vlaneseq
        %v5754 = vshrl.u32 %v5753, 7
        %v5755 = vsub.s32 %v3179, %v5754
        %v5756 = vrot.slane %v5205, %v5755
        %v5757 = vsel %vm3184, %v5756, %v5752
        %v5758 = vlaneseq
        %v5759 = vshrl.u32 %v5758, 7
        %v5760 = vsub.s32 %v3186, %v5759
        %v5761 = vrot.slane %v5208, %v5760
        %v5762 = vsel %vm3191, %v5761, %v5757
        %v5763 = vlaneseq
        %v5764 = vshrl.u32 %v5763, 7
        %v5765 = vsub.s32 %v3193, %v5764
        %v5766 = vrot.slane %v5211, %v5765
        %v5767 = vsel %vm3198, %v5766, %v5762
        %v5768 = vlaneseq
        %v5769 = vshrl.u32 %v5768, 7
        %v5770 = vsub.s32 %v3200, %v5769
        %v5771 = vrot.slane %v5214, %v5770
        %v5772 = vsel %vm3205, %v5771, %v5767
        %v5773 = vlaneseq
        %v5774 = vshrl.u32 %v5773, 7
        %v5775 = vsub.s32 %v3207, %v5774
        %v5776 = vrot.slane %v5217, %v5775
        %v5777 = vsel %vm3212, %v5776, %v5772
        %v5778 = vlaneseq
        %v5779 = vshrl.u32 %v5778, 7
        %v5780 = vsub.s32 %v3214, %v5779
        %v5781 = vrot.slane %v5220, %v5780
        %v5782 = vsel %vm3219, %v5781, %v5777
        %v5783 = vlaneseq
        %v5784 = vshrl.u32 %v5783, 7
        %v5785 = vsub.s32 %v3221, %v5784
        %v5786 = vrot.slane %v5223, %v5785
        %v5787 = vsel %vm3226, %v5786, %v5782
        %v5788 = vlaneseq
        %v5789 = vshrl.u32 %v5788, 7
        %v5790 = vsub.s32 %v3228, %v5789
        %v5791 = vrot.slane %v5226, %v5790
        %v5792 = vsel %vm3233, %v5791, %v5787
        %v5793 = vlaneseq
        %v5794 = vshrl.u32 %v5793, 7
        %v5795 = vsub.s32 %v3235, %v5794
        %v5796 = vrot.slane %v5229, %v5795
        %v5797 = vsel %vm3240, %v5796, %v5792
        %v5798 = vlaneseq
        %v5799 = vshrl.u32 %v5798, 7
        %v5800 = vsub.s32 %v3242, %v5799
        %v5801 = vrot.slane %v5232, %v5800
        %v5802 = vsel %vm3247, %v5801, %v5797
        %v5803 = vlaneseq
        %v5804 = vshrl.u32 %v5803, 7
        %v5805 = vsub.s32 %v3249, %v5804
        %v5806 = vrot.slane %v5235, %v5805
        %v5807 = vsel %vm3254, %v5806, %v5802
        %v5808 = vlaneseq
        %v5809 = vshrl.u32 %v5808, 7
        %v5810 = vsub.s32 %v3256, %v5809
        %v5811 = vrot.slane %v5238, %v5810
        %v5812 = vsel %vm3261, %v5811, %v5807
        %v5813 = vlaneseq
        %v5814 = vshrl.u32 %v5813, 7
        %v5815 = vsub.s32 %v3263, %v5814
        %v5816 = vrot.slane %v5241, %v5815
        %v5817 = vsel %vm3268, %v5816, %v5812
        %v5818 = vlaneseq
        %v5819 = vshrl.u32 %v5818, 7
        %v5820 = vsub.s32 %v3160, %v5819
        %v5821 = vrot.slane %v5244, %v5820
        %v5822 = vlaneseq
        %v5823 = vshrl.u32 %v5822, 7
        %v5824 = vsub.s32 %v3165, %v5823
        %v5825 = vrot.slane %v5247, %v5824
        %v5826 = vsel %vm3170, %v5825, %v5821
        %v5827 = vlaneseq
        %v5828 = vshrl.u32 %v5827, 7
        %v5829 = vsub.s32 %v3172, %v5828
        %v5830 = vrot.slane %v5250, %v5829
        %v5831 = vsel %vm3177, %v5830, %v5826
        %v5832 = vlaneseq
        %v5833 = vshrl.u32 %v5832, 7
        %v5834 = vsub.s32 %v3179, %v5833
        %v5835 = vrot.slane %v5253, %v5834
        %v5836 = vsel %vm3184, %v5835, %v5831
        %v5837 = vlaneseq
        %v5838 = vshrl.u32 %v5837, 7
        %v5839 = vsub.s32 %v3186, %v5838
        %v5840 = vrot.slane %v5256, %v5839
        %v5841 = vsel %vm3191, %v5840, %v5836
        %v5842 = vlaneseq
        %v5843 = vshrl.u32 %v5842, 7
        %v5844 = vsub.s32 %v3193, %v5843
        %v5845 = vrot.slane %v5259, %v5844
        %v5846 = vsel %vm3198, %v5845, %v5841
        %v5847 = vlaneseq
        %v5848 = vshrl.u32 %v5847, 7
        %v5849 = vsub.s32 %v3200, %v5848
        %v5850 = vrot.slane %v5262, %v5849
        %v5851 = vsel %vm3205, %v5850, %v5846
        %v5852 = vlaneseq
        %v5853 = vshrl.u32 %v5852, 7
        %v5854 = vsub.s32 %v3207, %v5853
        %v5855 = vrot.slane %v5265, %v5854
        %v5856 = vsel %vm3212, %v5855, %v5851
        %v5857 = vlaneseq
        %v5858 = vshrl.u32 %v5857, 7
        %v5859 = vsub.s32 %v3214, %v5858
        %v5860 = vrot.slane %v5268, %v5859
        %v5861 = vsel %vm3219, %v5860, %v5856
        %v5862 = vlaneseq
        %v5863 = vshrl.u32 %v5862, 7
        %v5864 = vsub.s32 %v3221, %v5863
        %v5865 = vrot.slane %v5271, %v5864
        %v5866 = vsel %vm3226, %v5865, %v5861
        %v5867 = vlaneseq
        %v5868 = vshrl.u32 %v5867, 7
        %v5869 = vsub.s32 %v3228, %v5868
        %v5870 = vrot.slane %v5274, %v5869
        %v5871 = vsel %vm3233, %v5870, %v5866
        %v5872 = vlaneseq
        %v5873 = vshrl.u32 %v5872, 7
        %v5874 = vsub.s32 %v3235, %v5873
        %v5875 = vrot.slane %v5277, %v5874
        %v5876 = vsel %vm3240, %v5875, %v5871
        %v5877 = vlaneseq
        %v5878 = vshrl.u32 %v5877, 7
        %v5879 = vsub.s32 %v3242, %v5878
        %v5880 = vrot.slane %v5280, %v5879
        %v5881 = vsel %vm3247, %v5880, %v5876
        %v5882 = vlaneseq
        %v5883 = vshrl.u32 %v5882, 7
        %v5884 = vsub.s32 %v3249, %v5883
        %v5885 = vrot.slane %v5283, %v5884
        %v5886 = vsel %vm3254, %v5885, %v5881
        %v5887 = vlaneseq
        %v5888 = vshrl.u32 %v5887, 7
        %v5889 = vsub.s32 %v3256, %v5888
        %v5890 = vrot.slane %v5286, %v5889
        %v5891 = vsel %vm3261, %v5890, %v5886
        %v5892 = vlaneseq
        %v5893 = vshrl.u32 %v5892, 7
        %v5894 = vsub.s32 %v3263, %v5893
        %v5895 = vrot.slane %v5289, %v5894
        %v5896 = vsel %vm3268, %v5895, %v5891
        %v5897 = vlaneseq
        %v5898 = vshrl.u32 %v5897, 7
        %v5899 = vsub.s32 %v3160, %v5898
        %v5900 = vrot.slane %v5292, %v5899
        %v5901 = vlaneseq
        %v5902 = vshrl.u32 %v5901, 7
        %v5903 = vsub.s32 %v3165, %v5902
        %v5904 = vrot.slane %v5295, %v5903
        %v5905 = vsel %vm3170, %v5904, %v5900
        %v5906 = vlaneseq
        %v5907 = vshrl.u32 %v5906, 7
        %v5908 = vsub.s32 %v3172, %v5907
        %v5909 = vrot.slane %v5298, %v5908
        %v5910 = vsel %vm3177, %v5909, %v5905
        %v5911 = vlaneseq
        %v5912 = vshrl.u32 %v5911, 7
        %v5913 = vsub.s32 %v3179, %v5912
        %v5914 = vrot.slane %v5301, %v5913
        %v5915 = vsel %vm3184, %v5914, %v5910
        %v5916 = vlaneseq
        %v5917 = vshrl.u32 %v5916, 7
        %v5918 = vsub.s32 %v3186, %v5917
        %v5919 = vrot.slane %v5304, %v5918
        %v5920 = vsel %vm3191, %v5919, %v5915
        %v5921 = vlaneseq
        %v5922 = vshrl.u32 %v5921, 7
        %v5923 = vsub.s32 %v3193, %v5922
        %v5924 = vrot.slane %v5307, %v5923
        %v5925 = vsel %vm3198, %v5924, %v5920
        %v5926 = vlaneseq
        %v5927 = vshrl.u32 %v5926, 7
        %v5928 = vsub.s32 %v3200, %v5927
        %v5929 = vrot.slane %v5310, %v5928
        %v5930 = vsel %vm3205, %v5929, %v5925
        %v5931 = vlaneseq
        %v5932 = vshrl.u32 %v5931, 7
        %v5933 = vsub.s32 %v3207, %v5932
        %v5934 = vrot.slane %v5313, %v5933
        %v5935 = vsel %vm3212, %v5934, %v5930
        %v5936 = vlaneseq
        %v5937 = vshrl.u32 %v5936, 7
        %v5938 = vsub.s32 %v3214, %v5937
        %v5939 = vrot.slane %v5316, %v5938
        %v5940 = vsel %vm3219, %v5939, %v5935
        %v5941 = vlaneseq
        %v5942 = vshrl.u32 %v5941, 7
        %v5943 = vsub.s32 %v3221, %v5942
        %v5944 = vrot.slane %v5319, %v5943
        %v5945 = vsel %vm3226, %v5944, %v5940
        %v5946 = vlaneseq
        %v5947 = vshrl.u32 %v5946, 7
        %v5948 = vsub.s32 %v3228, %v5947
        %v5949 = vrot.slane %v5322, %v5948
        %v5950 = vsel %vm3233, %v5949, %v5945
        %v5951 = vlaneseq
        %v5952 = vshrl.u32 %v5951, 7
        %v5953 = vsub.s32 %v3235, %v5952
        %v5954 = vrot.slane %v5325, %v5953
        %v5955 = vsel %vm3240, %v5954, %v5950
        %v5956 = vlaneseq
        %v5957 = vshrl.u32 %v5956, 7
        %v5958 = vsub.s32 %v3242, %v5957
        %v5959 = vrot.slane %v5328, %v5958
        %v5960 = vsel %vm3247, %v5959, %v5955
        %v5961 = vlaneseq
        %v5962 = vshrl.u32 %v5961, 7
        %v5963 = vsub.s32 %v3249, %v5962
        %v5964 = vrot.slane %v5331, %v5963
        %v5965 = vsel %vm3254, %v5964, %v5960
        %v5966 = vlaneseq
        %v5967 = vshrl.u32 %v5966, 7
        %v5968 = vsub.s32 %v3256, %v5967
        %v5969 = vrot.slane %v5334, %v5968
        %v5970 = vsel %vm3261, %v5969, %v5965
        %v5971 = vlaneseq
        %v5972 = vshrl.u32 %v5971, 7
        %v5973 = vsub.s32 %v3263, %v5972
        %v5974 = vrot.slane %v5337, %v5973
        %v5975 = vsel %vm3268, %v5974, %v5970
        %v5976 = vlaneseq
        %v5977 = vshrl.u32 %v5976, 7
        %v5978 = vsub.s32 %v3160, %v5977
        %v5979 = vrot.slane %v5340, %v5978
        %v5980 = vlaneseq
        %v5981 = vshrl.u32 %v5980, 7
        %v5982 = vsub.s32 %v3165, %v5981
        %v5983 = vrot.slane %v5343, %v5982
        %v5984 = vsel %vm3170, %v5983, %v5979
        %v5985 = vlaneseq
        %v5986 = vshrl.u32 %v5985, 7
        %v5987 = vsub.s32 %v3172, %v5986
        %v5988 = vrot.slane %v5346, %v5987
        %v5989 = vsel %vm3177, %v5988, %v5984
        %v5990 = vlaneseq
        %v5991 = vshrl.u32 %v5990, 7
        %v5992 = vsub.s32 %v3179, %v5991
        %v5993 = vrot.slane %v5349, %v5992
        %v5994 = vsel %vm3184, %v5993, %v5989
        %v5995 = vlaneseq
        %v5996 = vshrl.u32 %v5995, 7
        %v5997 = vsub.s32 %v3186, %v5996
        %v5998 = vrot.slane %v5352, %v5997
        %v5999 = vsel %vm3191, %v5998, %v5994
        %v6000 = vlaneseq
        %v6001 = vshrl.u32 %v6000, 7
        %v6002 = vsub.s32 %v3193, %v6001
        %v6003 = vrot.slane %v5355, %v6002
        %v6004 = vsel %vm3198, %v6003, %v5999
        %v6005 = vlaneseq
        %v6006 = vshrl.u32 %v6005, 7
        %v6007 = vsub.s32 %v3200, %v6006
        %v6008 = vrot.slane %v5358, %v6007
        %v6009 = vsel %vm3205, %v6008, %v6004
        %v6010 = vlaneseq
        %v6011 = vshrl.u32 %v6010, 7
        %v6012 = vsub.s32 %v3207, %v6011
        %v6013 = vrot.slane %v5361, %v6012
        %v6014 = vsel %vm3212, %v6013, %v6009
        %v6015 = vlaneseq
        %v6016 = vshrl.u32 %v6015, 7
        %v6017 = vsub.s32 %v3214, %v6016
        %v6018 = vrot.slane %v5364, %v6017
        %v6019 = vsel %vm3219, %v6018, %v6014
        %v6020 = vlaneseq
        %v6021 = vshrl.u32 %v6020, 7
        %v6022 = vsub.s32 %v3221, %v6021
        %v6023 = vrot.slane %v5367, %v6022
        %v6024 = vsel %vm3226, %v6023, %v6019
        %v6025 = vlaneseq
        %v6026 = vshrl.u32 %v6025, 7
        %v6027 = vsub.s32 %v3228, %v6026
        %v6028 = vrot.slane %v5370, %v6027
        %v6029 = vsel %vm3233, %v6028, %v6024
        %v6030 = vlaneseq
        %v6031 = vshrl.u32 %v6030, 7
        %v6032 = vsub.s32 %v3235, %v6031
        %v6033 = vrot.slane %v5373, %v6032
        %v6034 = vsel %vm3240, %v6033, %v6029
        %v6035 = vlaneseq
        %v6036 = vshrl.u32 %v6035, 7
        %v6037 = vsub.s32 %v3242, %v6036
        %v6038 = vrot.slane %v5376, %v6037
        %v6039 = vsel %vm3247, %v6038, %v6034
        %v6040 = vlaneseq
        %v6041 = vshrl.u32 %v6040, 7
        %v6042 = vsub.s32 %v3249, %v6041
        %v6043 = vrot.slane %v5379, %v6042
        %v6044 = vsel %vm3254, %v6043, %v6039
        %v6045 = vlaneseq
        %v6046 = vshrl.u32 %v6045, 7
        %v6047 = vsub.s32 %v3256, %v6046
        %v6048 = vrot.slane %v5382, %v6047
        %v6049 = vsel %vm3261, %v6048, %v6044
        %v6050 = vlaneseq
        %v6051 = vshrl.u32 %v6050, 7
        %v6052 = vsub.s32 %v3263, %v6051
        %v6053 = vrot.slane %v5385, %v6052
        %v6054 = vsel %vm3268, %v6053, %v6049
        %v6055 = vlaneseq
        %v6056 = vshrl.u32 %v6055, 7
        %v6057 = vsub.s32 %v3160, %v6056
        %v6058 = vrot.slane %v5388, %v6057
        %v6059 = vlaneseq
        %v6060 = vshrl.u32 %v6059, 7
        %v6061 = vsub.s32 %v3165, %v6060
        %v6062 = vrot.slane %v5391, %v6061
        %v6063 = vsel %vm3170, %v6062, %v6058
        %v6064 = vlaneseq
        %v6065 = vshrl.u32 %v6064, 7
        %v6066 = vsub.s32 %v3172, %v6065
        %v6067 = vrot.slane %v5394, %v6066
        %v6068 = vsel %vm3177, %v6067, %v6063
        %v6069 = vlaneseq
        %v6070 = vshrl.u32 %v6069, 7
        %v6071 = vsub.s32 %v3179, %v6070
        %v6072 = vrot.slane %v5397, %v6071
        %v6073 = vsel %vm3184, %v6072, %v6068
        %v6074 = vlaneseq
        %v6075 = vshrl.u32 %v6074, 7
        %v6076 = vsub.s32 %v3186, %v6075
        %v6077 = vrot.slane %v5400, %v6076
        %v6078 = vsel %vm3191, %v6077, %v6073
        %v6079 = vlaneseq
        %v6080 = vshrl.u32 %v6079, 7
        %v6081 = vsub.s32 %v3193, %v6080
        %v6082 = vrot.slane %v5403, %v6081
        %v6083 = vsel %vm3198, %v6082, %v6078
        %v6084 = vlaneseq
        %v6085 = vshrl.u32 %v6084, 7
        %v6086 = vsub.s32 %v3200, %v6085
        %v6087 = vrot.slane %v5406, %v6086
        %v6088 = vsel %vm3205, %v6087, %v6083
        %v6089 = vlaneseq
        %v6090 = vshrl.u32 %v6089, 7
        %v6091 = vsub.s32 %v3207, %v6090
        %v6092 = vrot.slane %v5409, %v6091
        %v6093 = vsel %vm3212, %v6092, %v6088
        %v6094 = vlaneseq
        %v6095 = vshrl.u32 %v6094, 7
        %v6096 = vsub.s32 %v3214, %v6095
        %v6097 = vrot.slane %v5412, %v6096
        %v6098 = vsel %vm3219, %v6097, %v6093
        %v6099 = vlaneseq
        %v6100 = vshrl.u32 %v6099, 7
        %v6101 = vsub.s32 %v3221, %v6100
        %v6102 = vrot.slane %v5415, %v6101
        %v6103 = vsel %vm3226, %v6102, %v6098
        %v6104 = vlaneseq
        %v6105 = vshrl.u32 %v6104, 7
        %v6106 = vsub.s32 %v3228, %v6105
        %v6107 = vrot.slane %v5418, %v6106
        %v6108 = vsel %vm3233, %v6107, %v6103
        %v6109 = vlaneseq
        %v6110 = vshrl.u32 %v6109, 7
        %v6111 = vsub.s32 %v3235, %v6110
        %v6112 = vrot.slane %v5421, %v6111
        %v6113 = vsel %vm3240, %v6112, %v6108
        %v6114 = vlaneseq
        %v6115 = vshrl.u32 %v6114, 7
        %v6116 = vsub.s32 %v3242, %v6115
        %v6117 = vrot.slane %v5424, %v6116
        %v6118 = vsel %vm3247, %v6117, %v6113
        %v6119 = vlaneseq
        %v6120 = vshrl.u32 %v6119, 7
        %v6121 = vsub.s32 %v3249, %v6120
        %v6122 = vrot.slane %v5427, %v6121
        %v6123 = vsel %vm3254, %v6122, %v6118
        %v6124 = vlaneseq
        %v6125 = vshrl.u32 %v6124, 7
        %v6126 = vsub.s32 %v3256, %v6125
        %v6127 = vrot.slane %v5430, %v6126
        %v6128 = vsel %vm3261, %v6127, %v6123
        %v6129 = vlaneseq
        %v6130 = vshrl.u32 %v6129, 7
        %v6131 = vsub.s32 %v3263, %v6130
        %v6132 = vrot.slane %v5433, %v6131
        %v6133 = vsel %vm3268, %v6132, %v6128
        %v6134 = vlaneseq
        %v6135 = vshrl.u32 %v6134, 7
        %v6136 = vsub.s32 %v3160, %v6135
        %v6137 = vrot.slane %v5436, %v6136
        %v6138 = vlaneseq
        %v6139 = vshrl.u32 %v6138, 7
        %v6140 = vsub.s32 %v3165, %v6139
        %v6141 = vrot.slane %v5439, %v6140
        %v6142 = vsel %vm3170, %v6141, %v6137
        %v6143 = vlaneseq
        %v6144 = vshrl.u32 %v6143, 7
        %v6145 = vsub.s32 %v3172, %v6144
        %v6146 = vrot.slane %v5442, %v6145
        %v6147 = vsel %vm3177, %v6146, %v6142
        %v6148 = vlaneseq
        %v6149 = vshrl.u32 %v6148, 7
        %v6150 = vsub.s32 %v3179, %v6149
        %v6151 = vrot.slane %v5445, %v6150
        %v6152 = vsel %vm3184, %v6151, %v6147
        %v6153 = vlaneseq
        %v6154 = vshrl.u32 %v6153, 7
        %v6155 = vsub.s32 %v3186, %v6154
        %v6156 = vrot.slane %v5448, %v6155
        %v6157 = vsel %vm3191, %v6156, %v6152
        %v6158 = vlaneseq
        %v6159 = vshrl.u32 %v6158, 7
        %v6160 = vsub.s32 %v3193, %v6159
        %v6161 = vrot.slane %v5451, %v6160
        %v6162 = vsel %vm3198, %v6161, %v6157
        %v6163 = vlaneseq
        %v6164 = vshrl.u32 %v6163, 7
        %v6165 = vsub.s32 %v3200, %v6164
        %v6166 = vrot.slane %v5454, %v6165
        %v6167 = vsel %vm3205, %v6166, %v6162
        %v6168 = vlaneseq
        %v6169 = vshrl.u32 %v6168, 7
        %v6170 = vsub.s32 %v3207, %v6169
        %v6171 = vrot.slane %v5457, %v6170
        %v6172 = vsel %vm3212, %v6171, %v6167
        %v6173 = vlaneseq
        %v6174 = vshrl.u32 %v6173, 7
        %v6175 = vsub.s32 %v3214, %v6174
        %v6176 = vrot.slane %v5460, %v6175
        %v6177 = vsel %vm3219, %v6176, %v6172
        %v6178 = vlaneseq
        %v6179 = vshrl.u32 %v6178, 7
        %v6180 = vsub.s32 %v3221, %v6179
        %v6181 = vrot.slane %v5463, %v6180
        %v6182 = vsel %vm3226, %v6181, %v6177
        %v6183 = vlaneseq
        %v6184 = vshrl.u32 %v6183, 7
        %v6185 = vsub.s32 %v3228, %v6184
        %v6186 = vrot.slane %v5466, %v6185
        %v6187 = vsel %vm3233, %v6186, %v6182
        %v6188 = vlaneseq
        %v6189 = vshrl.u32 %v6188, 7
        %v6190 = vsub.s32 %v3235, %v6189
        %v6191 = vrot.slane %v5469, %v6190
        %v6192 = vsel %vm3240, %v6191, %v6187
        %v6193 = vlaneseq
        %v6194 = vshrl.u32 %v6193, 7
        %v6195 = vsub.s32 %v3242, %v6194
        %v6196 = vrot.slane %v5472, %v6195
        %v6197 = vsel %vm3247, %v6196, %v6192
        %v6198 = vlaneseq
        %v6199 = vshrl.u32 %v6198, 7
        %v6200 = vsub.s32 %v3249, %v6199
        %v6201 = vrot.slane %v5475, %v6200
        %v6202 = vsel %vm3254, %v6201, %v6197
        %v6203 = vlaneseq
        %v6204 = vshrl.u32 %v6203, 7
        %v6205 = vsub.s32 %v3256, %v6204
        %v6206 = vrot.slane %v5478, %v6205
        %v6207 = vsel %vm3261, %v6206, %v6202
        %v6208 = vlaneseq
        %v6209 = vshrl.u32 %v6208, 7
        %v6210 = vsub.s32 %v3263, %v6209
        %v6211 = vrot.slane %v5481, %v6210
        %v6212 = vsel %vm3268, %v6211, %v6207
        %v6213 = vlaneseq
        %v6214 = vshrl.u32 %v6213, 7
        %v6215 = vsub.s32 %v3160, %v6214
        %v6216 = vrot.slane %v5484, %v6215
        %v6217 = vlaneseq
        %v6218 = vshrl.u32 %v6217, 7
        %v6219 = vsub.s32 %v3165, %v6218
        %v6220 = vrot.slane %v5487, %v6219
        %v6221 = vsel %vm3170, %v6220, %v6216
        %v6222 = vlaneseq
        %v6223 = vshrl.u32 %v6222, 7
        %v6224 = vsub.s32 %v3172, %v6223
        %v6225 = vrot.slane %v5490, %v6224
        %v6226 = vsel %vm3177, %v6225, %v6221
        %v6227 = vlaneseq
        %v6228 = vshrl.u32 %v6227, 7
        %v6229 = vsub.s32 %v3179, %v6228
        %v6230 = vrot.slane %v5493, %v6229
        %v6231 = vsel %vm3184, %v6230, %v6226
        %v6232 = vlaneseq
        %v6233 = vshrl.u32 %v6232, 7
        %v6234 = vsub.s32 %v3186, %v6233
        %v6235 = vrot.slane %v5496, %v6234
        %v6236 = vsel %vm3191, %v6235, %v6231
        %v6237 = vlaneseq
        %v6238 = vshrl.u32 %v6237, 7
        %v6239 = vsub.s32 %v3193, %v6238
        %v6240 = vrot.slane %v5499, %v6239
        %v6241 = vsel %vm3198, %v6240, %v6236
        %v6242 = vlaneseq
        %v6243 = vshrl.u32 %v6242, 7
        %v6244 = vsub.s32 %v3200, %v6243
        %v6245 = vrot.slane %v5502, %v6244
        %v6246 = vsel %vm3205, %v6245, %v6241
        %v6247 = vlaneseq
        %v6248 = vshrl.u32 %v6247, 7
        %v6249 = vsub.s32 %v3207, %v6248
        %v6250 = vrot.slane %v5505, %v6249
        %v6251 = vsel %vm3212, %v6250, %v6246
        %v6252 = vlaneseq
        %v6253 = vshrl.u32 %v6252, 7
        %v6254 = vsub.s32 %v3214, %v6253
        %v6255 = vrot.slane %v5508, %v6254
        %v6256 = vsel %vm3219, %v6255, %v6251
        %v6257 = vlaneseq
        %v6258 = vshrl.u32 %v6257, 7
        %v6259 = vsub.s32 %v3221, %v6258
        %v6260 = vrot.slane %v5511, %v6259
        %v6261 = vsel %vm3226, %v6260, %v6256
        %v6262 = vlaneseq
        %v6263 = vshrl.u32 %v6262, 7
        %v6264 = vsub.s32 %v3228, %v6263
        %v6265 = vrot.slane %v5514, %v6264
        %v6266 = vsel %vm3233, %v6265, %v6261
        %v6267 = vlaneseq
        %v6268 = vshrl.u32 %v6267, 7
        %v6269 = vsub.s32 %v3235, %v6268
        %v6270 = vrot.slane %v5517, %v6269
        %v6271 = vsel %vm3240, %v6270, %v6266
        %v6272 = vlaneseq
        %v6273 = vshrl.u32 %v6272, 7
        %v6274 = vsub.s32 %v3242, %v6273
        %v6275 = vrot.slane %v5520, %v6274
        %v6276 = vsel %vm3247, %v6275, %v6271
        %v6277 = vlaneseq
        %v6278 = vshrl.u32 %v6277, 7
        %v6279 = vsub.s32 %v3249, %v6278
        %v6280 = vrot.slane %v5523, %v6279
        %v6281 = vsel %vm3254, %v6280, %v6276
        %v6282 = vlaneseq
        %v6283 = vshrl.u32 %v6282, 7
        %v6284 = vsub.s32 %v3256, %v6283
        %v6285 = vrot.slane %v5526, %v6284
        %v6286 = vsel %vm3261, %v6285, %v6281
        %v6287 = vlaneseq
        %v6288 = vshrl.u32 %v6287, 7
        %v6289 = vsub.s32 %v3263, %v6288
        %v6290 = vrot.slane %v5529, %v6289
        %v6291 = vsel %vm3268, %v6290, %v6286
        %v6292 = vsel %vm3823, %v5817, %v5738
        %v6293 = vsel %vm3825, %v5896, %v6292
        %v6294 = vsel %vm3827, %v5975, %v6293
        %v6295 = vsel %vm3829, %v6054, %v6294
        %v6296 = vsel %vm3831, %v6133, %v6295
        %v6297 = vsel %vm3833, %v6212, %v6296
        %v6298 = vsel %vm3835, %v6291, %v6297
        %v6300 = vadd.f32 %v5531, %v6298
        %6301 = vst [vmem:[#allocation3] sm:$0xff] %v6300
        %6302 = vst [vmem:[#allocation2] sm:$0xff] %v3838
        // Predicated region
        $region91: #{tpu_custom_call.1} parent=77 // pred_check
          %p6303 = pneg %p2640
        $region92: #{tpu_custom_call.1} parent=77 // pred_check_branch
          %6305 = sbr.rel (%p6303) target = $region94
        $region93: #{tpu_custom_call.1} parent=77 // pred_region
          %s6306 = sld [smem:[#allocation5]]
          %s6307 = sld [smem:[#allocation5 + $0x1]]
          %s6308 = sld [smem:[#allocation5 + $0x2]]
          %v6309 = vld [vmem:[%s2] sm:$0xff]
          %v6311 = vcombine.high %v6309, %v6309
          %v6313 = vunpack.c.l.s4 1966171168
          %v6314 = vunpack.c.0.s8 %v6313
          %v6315 = vlaneseq
          %v6316 = vshrl.u32 %v6315, 7
          %v6317 = vsub.s32 %v6314, %v6316
          %v6318 = vrot.slane %v6309, %v6317
          %v6320 = vunpack.c.l.s4 1966171168
          %v6321 = vunpack.c.0.s8 %v6320
          %v6322 = vlaneseq
          %v6323 = vshrl.u32 %v6322, 7
          %v6324 = vsub.s32 %v6321, %v6323
          %v6325 = vrot.slane %v6311, %v6324
          %v6326 = vcombine.high %v6318, %v6318
          %v6327 = vcombine.high %v6325, %v6325
          %v6329 = vunpack.c.l.s4 1966171168
          %v6330 = vunpack.c.0.s8 %v6329
          %v6331 = vlaneseq
          %v6332 = vshrl.u32 %v6331, 7
          %v6333 = vsub.s32 %v6330, %v6332
          %v6334 = vrot.slane %v6318, %v6333
          %v6336 = vunpack.c.l.s4 1966171168
          %v6337 = vunpack.c.0.s8 %v6336
          %v6338 = vlaneseq
          %v6339 = vshrl.u32 %v6338, 7
          %v6340 = vsub.s32 %v6337, %v6339
          %v6341 = vrot.slane %v6325, %v6340
          %v6343 = vunpack.c.l.s4 1966171168
          %v6344 = vunpack.c.0.s8 %v6343
          %v6345 = vlaneseq
          %v6346 = vshrl.u32 %v6345, 7
          %v6347 = vsub.s32 %v6344, %v6346
          %v6348 = vrot.slane %v6326, %v6347
          %v6350 = vunpack.c.l.s4 1966171168
          %v6351 = vunpack.c.0.s8 %v6350
          %v6352 = vlaneseq
          %v6353 = vshrl.u32 %v6352, 7
          %v6354 = vsub.s32 %v6351, %v6353
          %v6355 = vrot.slane %v6327, %v6354
          %v6356 = vcombine.high %v6334, %v6334
          %v6357 = vcombine.high %v6341, %v6341
          %v6358 = vcombine.high %v6348, %v6348
          %v6359 = vcombine.high %v6355, %v6355
          %v6368 = vstv %s6306
          %v6369 = vmul.f32 %v6368, %v6334
          %v6370 = vmul.f32 %v6368, %v6348
          %v6371 = vmul.f32 %v6368, %v6356
          %v6372 = vmul.f32 %v6368, %v6358
          %v6373 = vmul.f32 %v6368, %v6341
          %v6374 = vmul.f32 %v6368, %v6355
          %v6375 = vmul.f32 %v6368, %v6357
          %v6376 = vmul.f32 %v6368, %v6359
          %v6385 = vlaneseq
          %v6386 = vshrl.u32 %v6385, 7
          %v6387 = vsub.s32 0, %v6386
          %v6388 = vrot.slane %v6369, %v6387
          %v6389 = vlaneseq
          %v6390 = vshrl.u32 %v6389, 7
          %v6391 = vsub.s32 0, %v6390
          %v6392 = vrot.slane %v6370, %v6391
          %v6393 = vlaneseq
          %v6394 = vshrl.u32 %v6393, 7
          %v6395 = vsub.s32 0, %v6394
          %v6396 = vrot.slane %v6371, %v6395
          %v6397 = vlaneseq
          %v6398 = vshrl.u32 %v6397, 7
          %v6399 = vsub.s32 0, %v6398
          %v6400 = vrot.slane %v6372, %v6399
          %v6401 = vlaneseq
          %v6402 = vshrl.u32 %v6401, 7
          %v6403 = vsub.s32 0, %v6402
          %v6404 = vrot.slane %v6373, %v6403
          %v6405 = vlaneseq
          %v6406 = vshrl.u32 %v6405, 7
          %v6407 = vsub.s32 0, %v6406
          %v6408 = vrot.slane %v6374, %v6407
          %v6409 = vlaneseq
          %v6410 = vshrl.u32 %v6409, 7
          %v6411 = vsub.s32 0, %v6410
          %v6412 = vrot.slane %v6375, %v6411
          %v6413 = vlaneseq
          %v6414 = vshrl.u32 %v6413, 7
          %v6415 = vsub.s32 0, %v6414
          %v6416 = vrot.slane %v6376, %v6415
          %v6425 = vadd.f32 %v902, %v6388
          %v6426 = vadd.f32 %v903, %v6388
          %v6427 = vadd.f32 %v904, %v6388
          %v6428 = vadd.f32 %v905, %v6388
          %v6429 = vadd.f32 %v906, %v6388
          %v6430 = vadd.f32 %v907, %v6388
          %v6431 = vadd.f32 %v908, %v6388
          %v6432 = vadd.f32 %v909, %v6388
          %v6433 = vadd.f32 %v910, %v6388
          %v6434 = vadd.f32 %v911, %v6388
          %v6435 = vadd.f32 %v912, %v6388
          %v6436 = vadd.f32 %v913, %v6388
          %v6437 = vadd.f32 %v914, %v6388
          %v6438 = vadd.f32 %v915, %v6388
          %v6439 = vadd.f32 %v916, %v6388
          %v6440 = vadd.f32 %v917, %v6388
          %v6441 = vadd.f32 %v918, %v6392
          %v6442 = vadd.f32 %v919, %v6392
          %v6443 = vadd.f32 %v920, %v6392
          %v6444 = vadd.f32 %v921, %v6392
          %v6445 = vadd.f32 %v922, %v6392
          %v6446 = vadd.f32 %v923, %v6392
          %v6447 = vadd.f32 %v924, %v6392
          %v6448 = vadd.f32 %v925, %v6392
          %v6449 = vadd.f32 %v926, %v6392
          %v6450 = vadd.f32 %v927, %v6392
          %v6451 = vadd.f32 %v928, %v6392
          %v6452 = vadd.f32 %v929, %v6392
          %v6453 = vadd.f32 %v930, %v6392
          %v6454 = vadd.f32 %v931, %v6392
          %v6455 = vadd.f32 %v932, %v6392
          %v6456 = vadd.f32 %v933, %v6392
          %v6457 = vadd.f32 %v934, %v6396
          %v6458 = vadd.f32 %v935, %v6396
          %v6459 = vadd.f32 %v936, %v6396
          %v6460 = vadd.f32 %v937, %v6396
          %v6461 = vadd.f32 %v938, %v6396
          %v6462 = vadd.f32 %v939, %v6396
          %v6463 = vadd.f32 %v940, %v6396
          %v6464 = vadd.f32 %v941, %v6396
          %v6465 = vadd.f32 %v942, %v6396
          %v6466 = vadd.f32 %v943, %v6396
          %v6467 = vadd.f32 %v944, %v6396
          %v6468 = vadd.f32 %v945, %v6396
          %v6469 = vadd.f32 %v946, %v6396
          %v6470 = vadd.f32 %v947, %v6396
          %v6471 = vadd.f32 %v948, %v6396
          %v6472 = vadd.f32 %v949, %v6396
          %v6473 = vadd.f32 %v950, %v6400
          %v6474 = vadd.f32 %v951, %v6400
          %v6475 = vadd.f32 %v952, %v6400
          %v6476 = vadd.f32 %v953, %v6400
          %v6477 = vadd.f32 %v954, %v6400
          %v6478 = vadd.f32 %v955, %v6400
          %v6479 = vadd.f32 %v956, %v6400
          %v6480 = vadd.f32 %v957, %v6400
          %v6481 = vadd.f32 %v958, %v6400
          %v6482 = vadd.f32 %v959, %v6400
          %v6483 = vadd.f32 %v960, %v6400
          %v6484 = vadd.f32 %v961, %v6400
          %v6485 = vadd.f32 %v962, %v6400
          %v6486 = vadd.f32 %v963, %v6400
          %v6487 = vadd.f32 %v964, %v6400
          %v6488 = vadd.f32 %v965, %v6400
          %v6489 = vadd.f32 %v966, %v6404
          %v6490 = vadd.f32 %v967, %v6404
          %v6491 = vadd.f32 %v968, %v6404
          %v6492 = vadd.f32 %v969, %v6404
          %v6493 = vadd.f32 %v970, %v6404
          %v6494 = vadd.f32 %v971, %v6404
          %v6495 = vadd.f32 %v972, %v6404
          %v6496 = vadd.f32 %v973, %v6404
          %v6497 = vadd.f32 %v974, %v6404
          %v6498 = vadd.f32 %v975, %v6404
          %v6499 = vadd.f32 %v976, %v6404
          %v6500 = vadd.f32 %v977, %v6404
          %v6501 = vadd.f32 %v978, %v6404
          %v6502 = vadd.f32 %v979, %v6404
          %v6503 = vadd.f32 %v980, %v6404
          %v6504 = vadd.f32 %v981, %v6404
          %v6505 = vadd.f32 %v982, %v6408
          %v6506 = vadd.f32 %v983, %v6408
          %v6507 = vadd.f32 %v984, %v6408
          %v6508 = vadd.f32 %v985, %v6408
          %v6509 = vadd.f32 %v986, %v6408
          %v6510 = vadd.f32 %v987, %v6408
          %v6511 = vadd.f32 %v988, %v6408
          %v6512 = vadd.f32 %v989, %v6408
          %v6513 = vadd.f32 %v990, %v6408
          %v6514 = vadd.f32 %v991, %v6408
          %v6515 = vadd.f32 %v992, %v6408
          %v6516 = vadd.f32 %v993, %v6408
          %v6517 = vadd.f32 %v994, %v6408
          %v6518 = vadd.f32 %v995, %v6408
          %v6519 = vadd.f32 %v996, %v6408
          %v6520 = vadd.f32 %v997, %v6408
          %v6521 = vadd.f32 %v998, %v6412
          %v6522 = vadd.f32 %v999, %v6412
          %v6523 = vadd.f32 %v1000, %v6412
          %v6524 = vadd.f32 %v1001, %v6412
          %v6525 = vadd.f32 %v1002, %v6412
          %v6526 = vadd.f32 %v1003, %v6412
          %v6527 = vadd.f32 %v1004, %v6412
          %v6528 = vadd.f32 %v1005, %v6412
          %v6529 = vadd.f32 %v1006, %v6412
          %v6530 = vadd.f32 %v1007, %v6412
          %v6531 = vadd.f32 %v1008, %v6412
          %v6532 = vadd.f32 %v1009, %v6412
          %v6533 = vadd.f32 %v1010, %v6412
          %v6534 = vadd.f32 %v1011, %v6412
          %v6535 = vadd.f32 %v1012, %v6412
          %v6536 = vadd.f32 %v1013, %v6412
          %v6537 = vadd.f32 %v1014, %v6416
          %v6538 = vadd.f32 %v1015, %v6416
          %v6539 = vadd.f32 %v1016, %v6416
          %v6540 = vadd.f32 %v1017, %v6416
          %v6541 = vadd.f32 %v1018, %v6416
          %v6542 = vadd.f32 %v1019, %v6416
          %v6543 = vadd.f32 %v1020, %v6416
          %v6544 = vadd.f32 %v1021, %v6416
          %v6545 = vadd.f32 %v1022, %v6416
          %v6546 = vadd.f32 %v1023, %v6416
          %v6547 = vadd.f32 %v1024, %v6416
          %v6548 = vadd.f32 %v1025, %v6416
          %v6549 = vadd.f32 %v1026, %v6416
          %v6550 = vadd.f32 %v1027, %v6416
          %v6551 = vadd.f32 %v1028, %v6416
          %v6552 = vadd.f32 %v1029, %v6416
          %v6553 = vmul.f32 %v902, %v6425
          %v6554 = vmul.f32 %v903, %v6426
          %v6555 = vmul.f32 %v904, %v6427
          %v6556 = vmul.f32 %v905, %v6428
          %v6557 = vmul.f32 %v906, %v6429
          %v6558 = vmul.f32 %v907, %v6430
          %v6559 = vmul.f32 %v908, %v6431
          %v6560 = vmul.f32 %v909, %v6432
          %v6561 = vmul.f32 %v910, %v6433
          %v6562 = vmul.f32 %v911, %v6434
          %v6563 = vmul.f32 %v912, %v6435
          %v6564 = vmul.f32 %v913, %v6436
          %v6565 = vmul.f32 %v914, %v6437
          %v6566 = vmul.f32 %v915, %v6438
          %v6567 = vmul.f32 %v916, %v6439
          %v6568 = vmul.f32 %v917, %v6440
          %v6569 = vmul.f32 %v918, %v6441
          %v6570 = vmul.f32 %v919, %v6442
          %v6571 = vmul.f32 %v920, %v6443
          %v6572 = vmul.f32 %v921, %v6444
          %v6573 = vmul.f32 %v922, %v6445
          %v6574 = vmul.f32 %v923, %v6446
          %v6575 = vmul.f32 %v924, %v6447
          %v6576 = vmul.f32 %v925, %v6448
          %v6577 = vmul.f32 %v926, %v6449
          %v6578 = vmul.f32 %v927, %v6450
          %v6579 = vmul.f32 %v928, %v6451
          %v6580 = vmul.f32 %v929, %v6452
          %v6581 = vmul.f32 %v930, %v6453
          %v6582 = vmul.f32 %v931, %v6454
          %v6583 = vmul.f32 %v932, %v6455
          %v6584 = vmul.f32 %v933, %v6456
          %v6585 = vmul.f32 %v934, %v6457
          %v6586 = vmul.f32 %v935, %v6458
          %v6587 = vmul.f32 %v936, %v6459
          %v6588 = vmul.f32 %v937, %v6460
          %v6589 = vmul.f32 %v938, %v6461
          %v6590 = vmul.f32 %v939, %v6462
          %v6591 = vmul.f32 %v940, %v6463
          %v6592 = vmul.f32 %v941, %v6464
          %v6593 = vmul.f32 %v942, %v6465
          %v6594 = vmul.f32 %v943, %v6466
          %v6595 = vmul.f32 %v944, %v6467
          %v6596 = vmul.f32 %v945, %v6468
          %v6597 = vmul.f32 %v946, %v6469
          %v6598 = vmul.f32 %v947, %v6470
          %v6599 = vmul.f32 %v948, %v6471
          %v6600 = vmul.f32 %v949, %v6472
          %v6601 = vmul.f32 %v950, %v6473
          %v6602 = vmul.f32 %v951, %v6474
          %v6603 = vmul.f32 %v952, %v6475
          %v6604 = vmul.f32 %v953, %v6476
          %v6605 = vmul.f32 %v954, %v6477
          %v6606 = vmul.f32 %v955, %v6478
          %v6607 = vmul.f32 %v956, %v6479
          %v6608 = vmul.f32 %v957, %v6480
          %v6609 = vmul.f32 %v958, %v6481
          %v6610 = vmul.f32 %v959, %v6482
          %v6611 = vmul.f32 %v960, %v6483
          %v6612 = vmul.f32 %v961, %v6484
          %v6613 = vmul.f32 %v962, %v6485
          %v6614 = vmul.f32 %v963, %v6486
          %v6615 = vmul.f32 %v964, %v6487
          %v6616 = vmul.f32 %v965, %v6488
          %v6617 = vmul.f32 %v966, %v6489
          %v6618 = vmul.f32 %v967, %v6490
          %v6619 = vmul.f32 %v968, %v6491
          %v6620 = vmul.f32 %v969, %v6492
          %v6621 = vmul.f32 %v970, %v6493
          %v6622 = vmul.f32 %v971, %v6494
          %v6623 = vmul.f32 %v972, %v6495
          %v6624 = vmul.f32 %v973, %v6496
          %v6625 = vmul.f32 %v974, %v6497
          %v6626 = vmul.f32 %v975, %v6498
          %v6627 = vmul.f32 %v976, %v6499
          %v6628 = vmul.f32 %v977, %v6500
          %v6629 = vmul.f32 %v978, %v6501
          %v6630 = vmul.f32 %v979, %v6502
          %v6631 = vmul.f32 %v980, %v6503
          %v6632 = vmul.f32 %v981, %v6504
          %v6633 = vmul.f32 %v982, %v6505
          %v6634 = vmul.f32 %v983, %v6506
          %v6635 = vmul.f32 %v984, %v6507
          %v6636 = vmul.f32 %v985, %v6508
          %v6637 = vmul.f32 %v986, %v6509
          %v6638 = vmul.f32 %v987, %v6510
          %v6639 = vmul.f32 %v988, %v6511
          %v6640 = vmul.f32 %v989, %v6512
          %v6641 = vmul.f32 %v990, %v6513
          %v6642 = vmul.f32 %v991, %v6514
          %v6643 = vmul.f32 %v992, %v6515
          %v6644 = vmul.f32 %v993, %v6516
          %v6645 = vmul.f32 %v994, %v6517
          %v6646 = vmul.f32 %v995, %v6518
          %v6647 = vmul.f32 %v996, %v6519
          %v6648 = vmul.f32 %v997, %v6520
          %v6649 = vmul.f32 %v998, %v6521
          %v6650 = vmul.f32 %v999, %v6522
          %v6651 = vmul.f32 %v1000, %v6523
          %v6652 = vmul.f32 %v1001, %v6524
          %v6653 = vmul.f32 %v1002, %v6525
          %v6654 = vmul.f32 %v1003, %v6526
          %v6655 = vmul.f32 %v1004, %v6527
          %v6656 = vmul.f32 %v1005, %v6528
          %v6657 = vmul.f32 %v1006, %v6529
          %v6658 = vmul.f32 %v1007, %v6530
          %v6659 = vmul.f32 %v1008, %v6531
          %v6660 = vmul.f32 %v1009, %v6532
          %v6661 = vmul.f32 %v1010, %v6533
          %v6662 = vmul.f32 %v1011, %v6534
          %v6663 = vmul.f32 %v1012, %v6535
          %v6664 = vmul.f32 %v1013, %v6536
          %v6665 = vmul.f32 %v1014, %v6537
          %v6666 = vmul.f32 %v1015, %v6538
          %v6667 = vmul.f32 %v1016, %v6539
          %v6668 = vmul.f32 %v1017, %v6540
          %v6669 = vmul.f32 %v1018, %v6541
          %v6670 = vmul.f32 %v1019, %v6542
          %v6671 = vmul.f32 %v1020, %v6543
          %v6672 = vmul.f32 %v1021, %v6544
          %v6673 = vmul.f32 %v1022, %v6545
          %v6674 = vmul.f32 %v1023, %v6546
          %v6675 = vmul.f32 %v1024, %v6547
          %v6676 = vmul.f32 %v1025, %v6548
          %v6677 = vmul.f32 %v1026, %v6549
          %v6678 = vmul.f32 %v1027, %v6550
          %v6679 = vmul.f32 %v1028, %v6551
          %v6680 = vmul.f32 %v1029, %v6552
          %v6681 = vsel %vm1032, %v6553, 0.0
          %6682 = vadd.xlane.f32.xlu0 %v6681
          %v6683 = vpop.xlane.xlu0 %6682
          %v6684 = vsel %vm1032, %v6554, 0.0
          %6685 = vadd.xlane.f32.xlu0 %v6684
          %v6686 = vpop.xlane.xlu0 %6685
          %v6687 = vsel %vm1032, %v6555, 0.0
          %6688 = vadd.xlane.f32.xlu0 %v6687
          %v6689 = vpop.xlane.xlu0 %6688
          %v6690 = vsel %vm1032, %v6556, 0.0
          %6691 = vadd.xlane.f32.xlu0 %v6690
          %v6692 = vpop.xlane.xlu0 %6691
          %v6693 = vsel %vm1032, %v6557, 0.0
          %6694 = vadd.xlane.f32.xlu0 %v6693
          %v6695 = vpop.xlane.xlu0 %6694
          %v6696 = vsel %vm1032, %v6558, 0.0
          %6697 = vadd.xlane.f32.xlu0 %v6696
          %v6698 = vpop.xlane.xlu0 %6697
          %v6699 = vsel %vm1032, %v6559, 0.0
          %6700 = vadd.xlane.f32.xlu0 %v6699
          %v6701 = vpop.xlane.xlu0 %6700
          %v6702 = vsel %vm1032, %v6560, 0.0
          %6703 = vadd.xlane.f32.xlu0 %v6702
          %v6704 = vpop.xlane.xlu0 %6703
          %v6705 = vsel %vm1032, %v6561, 0.0
          %6706 = vadd.xlane.f32.xlu0 %v6705
          %v6707 = vpop.xlane.xlu0 %6706
          %v6708 = vsel %vm1032, %v6562, 0.0
          %6709 = vadd.xlane.f32.xlu0 %v6708
          %v6710 = vpop.xlane.xlu0 %6709
          %v6711 = vsel %vm1032, %v6563, 0.0
          %6712 = vadd.xlane.f32.xlu0 %v6711
          %v6713 = vpop.xlane.xlu0 %6712
          %v6714 = vsel %vm1032, %v6564, 0.0
          %6715 = vadd.xlane.f32.xlu0 %v6714
          %v6716 = vpop.xlane.xlu0 %6715
          %v6717 = vsel %vm1032, %v6565, 0.0
          %6718 = vadd.xlane.f32.xlu0 %v6717
          %v6719 = vpop.xlane.xlu0 %6718
          %v6720 = vsel %vm1032, %v6566, 0.0
          %6721 = vadd.xlane.f32.xlu0 %v6720
          %v6722 = vpop.xlane.xlu0 %6721
          %v6723 = vsel %vm1032, %v6567, 0.0
          %6724 = vadd.xlane.f32.xlu0 %v6723
          %v6725 = vpop.xlane.xlu0 %6724
          %v6726 = vsel %vm1032, %v6568, 0.0
          %6727 = vadd.xlane.f32.xlu0 %v6726
          %v6728 = vpop.xlane.xlu0 %6727
          %v6729 = vsel %vm1032, %v6569, 0.0
          %6730 = vadd.xlane.f32.xlu0 %v6729
          %v6731 = vpop.xlane.xlu0 %6730
          %v6732 = vsel %vm1032, %v6570, 0.0
          %6733 = vadd.xlane.f32.xlu0 %v6732
          %v6734 = vpop.xlane.xlu0 %6733
          %v6735 = vsel %vm1032, %v6571, 0.0
          %6736 = vadd.xlane.f32.xlu0 %v6735
          %v6737 = vpop.xlane.xlu0 %6736
          %v6738 = vsel %vm1032, %v6572, 0.0
          %6739 = vadd.xlane.f32.xlu0 %v6738
          %v6740 = vpop.xlane.xlu0 %6739
          %v6741 = vsel %vm1032, %v6573, 0.0
          %6742 = vadd.xlane.f32.xlu0 %v6741
          %v6743 = vpop.xlane.xlu0 %6742
          %v6744 = vsel %vm1032, %v6574, 0.0
          %6745 = vadd.xlane.f32.xlu0 %v6744
          %v6746 = vpop.xlane.xlu0 %6745
          %v6747 = vsel %vm1032, %v6575, 0.0
          %6748 = vadd.xlane.f32.xlu0 %v6747
          %v6749 = vpop.xlane.xlu0 %6748
          %v6750 = vsel %vm1032, %v6576, 0.0
          %6751 = vadd.xlane.f32.xlu0 %v6750
          %v6752 = vpop.xlane.xlu0 %6751
          %v6753 = vsel %vm1032, %v6577, 0.0
          %6754 = vadd.xlane.f32.xlu0 %v6753
          %v6755 = vpop.xlane.xlu0 %6754
          %v6756 = vsel %vm1032, %v6578, 0.0
          %6757 = vadd.xlane.f32.xlu0 %v6756
          %v6758 = vpop.xlane.xlu0 %6757
          %v6759 = vsel %vm1032, %v6579, 0.0
          %6760 = vadd.xlane.f32.xlu0 %v6759
          %v6761 = vpop.xlane.xlu0 %6760
          %v6762 = vsel %vm1032, %v6580, 0.0
          %6763 = vadd.xlane.f32.xlu0 %v6762
          %v6764 = vpop.xlane.xlu0 %6763
          %v6765 = vsel %vm1032, %v6581, 0.0
          %6766 = vadd.xlane.f32.xlu0 %v6765
          %v6767 = vpop.xlane.xlu0 %6766
          %v6768 = vsel %vm1032, %v6582, 0.0
          %6769 = vadd.xlane.f32.xlu0 %v6768
          %v6770 = vpop.xlane.xlu0 %6769
          %v6771 = vsel %vm1032, %v6583, 0.0
          %6772 = vadd.xlane.f32.xlu0 %v6771
          %v6773 = vpop.xlane.xlu0 %6772
          %v6774 = vsel %vm1032, %v6584, 0.0
          %6775 = vadd.xlane.f32.xlu0 %v6774
          %v6776 = vpop.xlane.xlu0 %6775
          %v6777 = vsel %vm1032, %v6585, 0.0
          %6778 = vadd.xlane.f32.xlu0 %v6777
          %v6779 = vpop.xlane.xlu0 %6778
          %v6780 = vsel %vm1032, %v6586, 0.0
          %6781 = vadd.xlane.f32.xlu0 %v6780
          %v6782 = vpop.xlane.xlu0 %6781
          %v6783 = vsel %vm1032, %v6587, 0.0
          %6784 = vadd.xlane.f32.xlu0 %v6783
          %v6785 = vpop.xlane.xlu0 %6784
          %v6786 = vsel %vm1032, %v6588, 0.0
          %6787 = vadd.xlane.f32.xlu0 %v6786
          %v6788 = vpop.xlane.xlu0 %6787
          %v6789 = vsel %vm1032, %v6589, 0.0
          %6790 = vadd.xlane.f32.xlu0 %v6789
          %v6791 = vpop.xlane.xlu0 %6790
          %v6792 = vsel %vm1032, %v6590, 0.0
          %6793 = vadd.xlane.f32.xlu0 %v6792
          %v6794 = vpop.xlane.xlu0 %6793
          %v6795 = vsel %vm1032, %v6591, 0.0
          %6796 = vadd.xlane.f32.xlu0 %v6795
          %v6797 = vpop.xlane.xlu0 %6796
          %v6798 = vsel %vm1032, %v6592, 0.0
          %6799 = vadd.xlane.f32.xlu0 %v6798
          %v6800 = vpop.xlane.xlu0 %6799
          %v6801 = vsel %vm1032, %v6593, 0.0
          %6802 = vadd.xlane.f32.xlu0 %v6801
          %v6803 = vpop.xlane.xlu0 %6802
          %v6804 = vsel %vm1032, %v6594, 0.0
          %6805 = vadd.xlane.f32.xlu0 %v6804
          %v6806 = vpop.xlane.xlu0 %6805
          %v6807 = vsel %vm1032, %v6595, 0.0
          %6808 = vadd.xlane.f32.xlu0 %v6807
          %v6809 = vpop.xlane.xlu0 %6808
          %v6810 = vsel %vm1032, %v6596, 0.0
          %6811 = vadd.xlane.f32.xlu0 %v6810
          %v6812 = vpop.xlane.xlu0 %6811
          %v6813 = vsel %vm1032, %v6597, 0.0
          %6814 = vadd.xlane.f32.xlu0 %v6813
          %v6815 = vpop.xlane.xlu0 %6814
          %v6816 = vsel %vm1032, %v6598, 0.0
          %6817 = vadd.xlane.f32.xlu0 %v6816
          %v6818 = vpop.xlane.xlu0 %6817
          %v6819 = vsel %vm1032, %v6599, 0.0
          %6820 = vadd.xlane.f32.xlu0 %v6819
          %v6821 = vpop.xlane.xlu0 %6820
          %v6822 = vsel %vm1032, %v6600, 0.0
          %6823 = vadd.xlane.f32.xlu0 %v6822
          %v6824 = vpop.xlane.xlu0 %6823
          %v6825 = vsel %vm1032, %v6601, 0.0
          %6826 = vadd.xlane.f32.xlu0 %v6825
          %v6827 = vpop.xlane.xlu0 %6826
          %v6828 = vsel %vm1032, %v6602, 0.0
          %6829 = vadd.xlane.f32.xlu0 %v6828
          %v6830 = vpop.xlane.xlu0 %6829
          %v6831 = vsel %vm1032, %v6603, 0.0
          %6832 = vadd.xlane.f32.xlu0 %v6831
          %v6833 = vpop.xlane.xlu0 %6832
          %v6834 = vsel %vm1032, %v6604, 0.0
          %6835 = vadd.xlane.f32.xlu0 %v6834
          %v6836 = vpop.xlane.xlu0 %6835
          %v6837 = vsel %vm1032, %v6605, 0.0
          %6838 = vadd.xlane.f32.xlu0 %v6837
          %v6839 = vpop.xlane.xlu0 %6838
          %v6840 = vsel %vm1032, %v6606, 0.0
          %6841 = vadd.xlane.f32.xlu0 %v6840
          %v6842 = vpop.xlane.xlu0 %6841
          %v6843 = vsel %vm1032, %v6607, 0.0
          %6844 = vadd.xlane.f32.xlu0 %v6843
          %v6845 = vpop.xlane.xlu0 %6844
          %v6846 = vsel %vm1032, %v6608, 0.0
          %6847 = vadd.xlane.f32.xlu0 %v6846
          %v6848 = vpop.xlane.xlu0 %6847
          %v6849 = vsel %vm1032, %v6609, 0.0
          %6850 = vadd.xlane.f32.xlu0 %v6849
          %v6851 = vpop.xlane.xlu0 %6850
          %v6852 = vsel %vm1032, %v6610, 0.0
          %6853 = vadd.xlane.f32.xlu0 %v6852
          %v6854 = vpop.xlane.xlu0 %6853
          %v6855 = vsel %vm1032, %v6611, 0.0
          %6856 = vadd.xlane.f32.xlu0 %v6855
          %v6857 = vpop.xlane.xlu0 %6856
          %v6858 = vsel %vm1032, %v6612, 0.0
          %6859 = vadd.xlane.f32.xlu0 %v6858
          %v6860 = vpop.xlane.xlu0 %6859
          %v6861 = vsel %vm1032, %v6613, 0.0
          %6862 = vadd.xlane.f32.xlu0 %v6861
          %v6863 = vpop.xlane.xlu0 %6862
          %v6864 = vsel %vm1032, %v6614, 0.0
          %6865 = vadd.xlane.f32.xlu0 %v6864
          %v6866 = vpop.xlane.xlu0 %6865
          %v6867 = vsel %vm1032, %v6615, 0.0
          %6868 = vadd.xlane.f32.xlu0 %v6867
          %v6869 = vpop.xlane.xlu0 %6868
          %v6870 = vsel %vm1032, %v6616, 0.0
          %6871 = vadd.xlane.f32.xlu0 %v6870
          %v6872 = vpop.xlane.xlu0 %6871
          %v6873 = vsel %vm1032, %v6617, 0.0
          %6874 = vadd.xlane.f32.xlu0 %v6873
          %v6875 = vpop.xlane.xlu0 %6874
          %v6876 = vsel %vm1032, %v6618, 0.0
          %6877 = vadd.xlane.f32.xlu0 %v6876
          %v6878 = vpop.xlane.xlu0 %6877
          %v6879 = vsel %vm1032, %v6619, 0.0
          %6880 = vadd.xlane.f32.xlu0 %v6879
          %v6881 = vpop.xlane.xlu0 %6880
          %v6882 = vsel %vm1032, %v6620, 0.0
          %6883 = vadd.xlane.f32.xlu0 %v6882
          %v6884 = vpop.xlane.xlu0 %6883
          %v6885 = vsel %vm1032, %v6621, 0.0
          %6886 = vadd.xlane.f32.xlu0 %v6885
          %v6887 = vpop.xlane.xlu0 %6886
          %v6888 = vsel %vm1032, %v6622, 0.0
          %6889 = vadd.xlane.f32.xlu0 %v6888
          %v6890 = vpop.xlane.xlu0 %6889
          %v6891 = vsel %vm1032, %v6623, 0.0
          %6892 = vadd.xlane.f32.xlu0 %v6891
          %v6893 = vpop.xlane.xlu0 %6892
          %v6894 = vsel %vm1032, %v6624, 0.0
          %6895 = vadd.xlane.f32.xlu0 %v6894
          %v6896 = vpop.xlane.xlu0 %6895
          %v6897 = vsel %vm1032, %v6625, 0.0
          %6898 = vadd.xlane.f32.xlu0 %v6897
          %v6899 = vpop.xlane.xlu0 %6898
          %v6900 = vsel %vm1032, %v6626, 0.0
          %6901 = vadd.xlane.f32.xlu0 %v6900
          %v6902 = vpop.xlane.xlu0 %6901
          %v6903 = vsel %vm1032, %v6627, 0.0
          %6904 = vadd.xlane.f32.xlu0 %v6903
          %v6905 = vpop.xlane.xlu0 %6904
          %v6906 = vsel %vm1032, %v6628, 0.0
          %6907 = vadd.xlane.f32.xlu0 %v6906
          %v6908 = vpop.xlane.xlu0 %6907
          %v6909 = vsel %vm1032, %v6629, 0.0
          %6910 = vadd.xlane.f32.xlu0 %v6909
          %v6911 = vpop.xlane.xlu0 %6910
          %v6912 = vsel %vm1032, %v6630, 0.0
          %6913 = vadd.xlane.f32.xlu0 %v6912
          %v6914 = vpop.xlane.xlu0 %6913
          %v6915 = vsel %vm1032, %v6631, 0.0
          %6916 = vadd.xlane.f32.xlu0 %v6915
          %v6917 = vpop.xlane.xlu0 %6916
          %v6918 = vsel %vm1032, %v6632, 0.0
          %6919 = vadd.xlane.f32.xlu0 %v6918
          %v6920 = vpop.xlane.xlu0 %6919
          %v6921 = vsel %vm1032, %v6633, 0.0
          %6922 = vadd.xlane.f32.xlu0 %v6921
          %v6923 = vpop.xlane.xlu0 %6922
          %v6924 = vsel %vm1032, %v6634, 0.0
          %6925 = vadd.xlane.f32.xlu0 %v6924
          %v6926 = vpop.xlane.xlu0 %6925
          %v6927 = vsel %vm1032, %v6635, 0.0
          %6928 = vadd.xlane.f32.xlu0 %v6927
          %v6929 = vpop.xlane.xlu0 %6928
          %v6930 = vsel %vm1032, %v6636, 0.0
          %6931 = vadd.xlane.f32.xlu0 %v6930
          %v6932 = vpop.xlane.xlu0 %6931
          %v6933 = vsel %vm1032, %v6637, 0.0
          %6934 = vadd.xlane.f32.xlu0 %v6933
          %v6935 = vpop.xlane.xlu0 %6934
          %v6936 = vsel %vm1032, %v6638, 0.0
          %6937 = vadd.xlane.f32.xlu0 %v6936
          %v6938 = vpop.xlane.xlu0 %6937
          %v6939 = vsel %vm1032, %v6639, 0.0
          %6940 = vadd.xlane.f32.xlu0 %v6939
          %v6941 = vpop.xlane.xlu0 %6940
          %v6942 = vsel %vm1032, %v6640, 0.0
          %6943 = vadd.xlane.f32.xlu0 %v6942
          %v6944 = vpop.xlane.xlu0 %6943
          %v6945 = vsel %vm1032, %v6641, 0.0
          %6946 = vadd.xlane.f32.xlu0 %v6945
          %v6947 = vpop.xlane.xlu0 %6946
          %v6948 = vsel %vm1032, %v6642, 0.0
          %6949 = vadd.xlane.f32.xlu0 %v6948
          %v6950 = vpop.xlane.xlu0 %6949
          %v6951 = vsel %vm1032, %v6643, 0.0
          %6952 = vadd.xlane.f32.xlu0 %v6951
          %v6953 = vpop.xlane.xlu0 %6952
          %v6954 = vsel %vm1032, %v6644, 0.0
          %6955 = vadd.xlane.f32.xlu0 %v6954
          %v6956 = vpop.xlane.xlu0 %6955
          %v6957 = vsel %vm1032, %v6645, 0.0
          %6958 = vadd.xlane.f32.xlu0 %v6957
          %v6959 = vpop.xlane.xlu0 %6958
          %v6960 = vsel %vm1032, %v6646, 0.0
          %6961 = vadd.xlane.f32.xlu0 %v6960
          %v6962 = vpop.xlane.xlu0 %6961
          %v6963 = vsel %vm1032, %v6647, 0.0
          %6964 = vadd.xlane.f32.xlu0 %v6963
          %v6965 = vpop.xlane.xlu0 %6964
          %v6966 = vsel %vm1032, %v6648, 0.0
          %6967 = vadd.xlane.f32.xlu0 %v6966
          %v6968 = vpop.xlane.xlu0 %6967
          %v6969 = vsel %vm1032, %v6649, 0.0
          %6970 = vadd.xlane.f32.xlu0 %v6969
          %v6971 = vpop.xlane.xlu0 %6970
          %v6972 = vsel %vm1032, %v6650, 0.0
          %6973 = vadd.xlane.f32.xlu0 %v6972
          %v6974 = vpop.xlane.xlu0 %6973
          %v6975 = vsel %vm1032, %v6651, 0.0
          %6976 = vadd.xlane.f32.xlu0 %v6975
          %v6977 = vpop.xlane.xlu0 %6976
          %v6978 = vsel %vm1032, %v6652, 0.0
          %6979 = vadd.xlane.f32.xlu0 %v6978
          %v6980 = vpop.xlane.xlu0 %6979
          %v6981 = vsel %vm1032, %v6653, 0.0
          %6982 = vadd.xlane.f32.xlu0 %v6981
          %v6983 = vpop.xlane.xlu0 %6982
          %v6984 = vsel %vm1032, %v6654, 0.0
          %6985 = vadd.xlane.f32.xlu0 %v6984
          %v6986 = vpop.xlane.xlu0 %6985
          %v6987 = vsel %vm1032, %v6655, 0.0
          %6988 = vadd.xlane.f32.xlu0 %v6987
          %v6989 = vpop.xlane.xlu0 %6988
          %v6990 = vsel %vm1032, %v6656, 0.0
          %6991 = vadd.xlane.f32.xlu0 %v6990
          %v6992 = vpop.xlane.xlu0 %6991
          %v6993 = vsel %vm1032, %v6657, 0.0
          %6994 = vadd.xlane.f32.xlu0 %v6993
          %v6995 = vpop.xlane.xlu0 %6994
          %v6996 = vsel %vm1032, %v6658, 0.0
          %6997 = vadd.xlane.f32.xlu0 %v6996
          %v6998 = vpop.xlane.xlu0 %6997
          %v6999 = vsel %vm1032, %v6659, 0.0
          %7000 = vadd.xlane.f32.xlu0 %v6999
          %v7001 = vpop.xlane.xlu0 %7000
          %v7002 = vsel %vm1032, %v6660, 0.0
          %7003 = vadd.xlane.f32.xlu0 %v7002
          %v7004 = vpop.xlane.xlu0 %7003
          %v7005 = vsel %vm1032, %v6661, 0.0
          %7006 = vadd.xlane.f32.xlu0 %v7005
          %v7007 = vpop.xlane.xlu0 %7006
          %v7008 = vsel %vm1032, %v6662, 0.0
          %7009 = vadd.xlane.f32.xlu0 %v7008
          %v7010 = vpop.xlane.xlu0 %7009
          %v7011 = vsel %vm1032, %v6663, 0.0
          %7012 = vadd.xlane.f32.xlu0 %v7011
          %v7013 = vpop.xlane.xlu0 %7012
          %v7014 = vsel %vm1032, %v6664, 0.0
          %7015 = vadd.xlane.f32.xlu0 %v7014
          %v7016 = vpop.xlane.xlu0 %7015
          %v7017 = vsel %vm1032, %v6665, 0.0
          %7018 = vadd.xlane.f32.xlu0 %v7017
          %v7019 = vpop.xlane.xlu0 %7018
          %v7020 = vsel %vm1032, %v6666, 0.0
          %7021 = vadd.xlane.f32.xlu0 %v7020
          %v7022 = vpop.xlane.xlu0 %7021
          %v7023 = vsel %vm1032, %v6667, 0.0
          %7024 = vadd.xlane.f32.xlu0 %v7023
          %v7025 = vpop.xlane.xlu0 %7024
          %v7026 = vsel %vm1032, %v6668, 0.0
          %7027 = vadd.xlane.f32.xlu0 %v7026
          %v7028 = vpop.xlane.xlu0 %7027
          %v7029 = vsel %vm1032, %v6669, 0.0
          %7030 = vadd.xlane.f32.xlu0 %v7029
          %v7031 = vpop.xlane.xlu0 %7030
          %v7032 = vsel %vm1032, %v6670, 0.0
          %7033 = vadd.xlane.f32.xlu0 %v7032
          %v7034 = vpop.xlane.xlu0 %7033
          %v7035 = vsel %vm1032, %v6671, 0.0
          %7036 = vadd.xlane.f32.xlu0 %v7035
          %v7037 = vpop.xlane.xlu0 %7036
          %v7038 = vsel %vm1032, %v6672, 0.0
          %7039 = vadd.xlane.f32.xlu0 %v7038
          %v7040 = vpop.xlane.xlu0 %7039
          %v7041 = vsel %vm1032, %v6673, 0.0
          %7042 = vadd.xlane.f32.xlu0 %v7041
          %v7043 = vpop.xlane.xlu0 %7042
          %v7044 = vsel %vm1032, %v6674, 0.0
          %7045 = vadd.xlane.f32.xlu0 %v7044
          %v7046 = vpop.xlane.xlu0 %7045
          %v7047 = vsel %vm1032, %v6675, 0.0
          %7048 = vadd.xlane.f32.xlu0 %v7047
          %v7049 = vpop.xlane.xlu0 %7048
          %v7050 = vsel %vm1032, %v6676, 0.0
          %7051 = vadd.xlane.f32.xlu0 %v7050
          %v7052 = vpop.xlane.xlu0 %7051
          %v7053 = vsel %vm1032, %v6677, 0.0
          %7054 = vadd.xlane.f32.xlu0 %v7053
          %v7055 = vpop.xlane.xlu0 %7054
          %v7056 = vsel %vm1032, %v6678, 0.0
          %7057 = vadd.xlane.f32.xlu0 %v7056
          %v7058 = vpop.xlane.xlu0 %7057
          %v7059 = vsel %vm1032, %v6679, 0.0
          %7060 = vadd.xlane.f32.xlu0 %v7059
          %v7061 = vpop.xlane.xlu0 %7060
          %v7062 = vsel %vm1032, %v6680, 0.0
          %7063 = vadd.xlane.f32.xlu0 %v7062
          %v7064 = vpop.xlane.xlu0 %7063
          %v7065 = vstv %s6307
          %v7066 = vmul.f32 %v7065, %v6683
          %v7067 = vmul.f32 %v7065, %v6686
          %v7068 = vmul.f32 %v7065, %v6689
          %v7069 = vmul.f32 %v7065, %v6692
          %v7070 = vmul.f32 %v7065, %v6695
          %v7071 = vmul.f32 %v7065, %v6698
          %v7072 = vmul.f32 %v7065, %v6701
          %v7073 = vmul.f32 %v7065, %v6704
          %v7074 = vmul.f32 %v7065, %v6707
          %v7075 = vmul.f32 %v7065, %v6710
          %v7076 = vmul.f32 %v7065, %v6713
          %v7077 = vmul.f32 %v7065, %v6716
          %v7078 = vmul.f32 %v7065, %v6719
          %v7079 = vmul.f32 %v7065, %v6722
          %v7080 = vmul.f32 %v7065, %v6725
          %v7081 = vmul.f32 %v7065, %v6728
          %v7082 = vmul.f32 %v7065, %v6731
          %v7083 = vmul.f32 %v7065, %v6734
          %v7084 = vmul.f32 %v7065, %v6737
          %v7085 = vmul.f32 %v7065, %v6740
          %v7086 = vmul.f32 %v7065, %v6743
          %v7087 = vmul.f32 %v7065, %v6746
          %v7088 = vmul.f32 %v7065, %v6749
          %v7089 = vmul.f32 %v7065, %v6752
          %v7090 = vmul.f32 %v7065, %v6755
          %v7091 = vmul.f32 %v7065, %v6758
          %v7092 = vmul.f32 %v7065, %v6761
          %v7093 = vmul.f32 %v7065, %v6764
          %v7094 = vmul.f32 %v7065, %v6767
          %v7095 = vmul.f32 %v7065, %v6770
          %v7096 = vmul.f32 %v7065, %v6773
          %v7097 = vmul.f32 %v7065, %v6776
          %v7098 = vmul.f32 %v7065, %v6779
          %v7099 = vmul.f32 %v7065, %v6782
          %v7100 = vmul.f32 %v7065, %v6785
          %v7101 = vmul.f32 %v7065, %v6788
          %v7102 = vmul.f32 %v7065, %v6791
          %v7103 = vmul.f32 %v7065, %v6794
          %v7104 = vmul.f32 %v7065, %v6797
          %v7105 = vmul.f32 %v7065, %v6800
          %v7106 = vmul.f32 %v7065, %v6803
          %v7107 = vmul.f32 %v7065, %v6806
          %v7108 = vmul.f32 %v7065, %v6809
          %v7109 = vmul.f32 %v7065, %v6812
          %v7110 = vmul.f32 %v7065, %v6815
          %v7111 = vmul.f32 %v7065, %v6818
          %v7112 = vmul.f32 %v7065, %v6821
          %v7113 = vmul.f32 %v7065, %v6824
          %v7114 = vmul.f32 %v7065, %v6827
          %v7115 = vmul.f32 %v7065, %v6830
          %v7116 = vmul.f32 %v7065, %v6833
          %v7117 = vmul.f32 %v7065, %v6836
          %v7118 = vmul.f32 %v7065, %v6839
          %v7119 = vmul.f32 %v7065, %v6842
          %v7120 = vmul.f32 %v7065, %v6845
          %v7121 = vmul.f32 %v7065, %v6848
          %v7122 = vmul.f32 %v7065, %v6851
          %v7123 = vmul.f32 %v7065, %v6854
          %v7124 = vmul.f32 %v7065, %v6857
          %v7125 = vmul.f32 %v7065, %v6860
          %v7126 = vmul.f32 %v7065, %v6863
          %v7127 = vmul.f32 %v7065, %v6866
          %v7128 = vmul.f32 %v7065, %v6869
          %v7129 = vmul.f32 %v7065, %v6872
          %v7130 = vmul.f32 %v7065, %v6875
          %v7131 = vmul.f32 %v7065, %v6878
          %v7132 = vmul.f32 %v7065, %v6881
          %v7133 = vmul.f32 %v7065, %v6884
          %v7134 = vmul.f32 %v7065, %v6887
          %v7135 = vmul.f32 %v7065, %v6890
          %v7136 = vmul.f32 %v7065, %v6893
          %v7137 = vmul.f32 %v7065, %v6896
          %v7138 = vmul.f32 %v7065, %v6899
          %v7139 = vmul.f32 %v7065, %v6902
          %v7140 = vmul.f32 %v7065, %v6905
          %v7141 = vmul.f32 %v7065, %v6908
          %v7142 = vmul.f32 %v7065, %v6911
          %v7143 = vmul.f32 %v7065, %v6914
          %v7144 = vmul.f32 %v7065, %v6917
          %v7145 = vmul.f32 %v7065, %v6920
          %v7146 = vmul.f32 %v7065, %v6923
          %v7147 = vmul.f32 %v7065, %v6926
          %v7148 = vmul.f32 %v7065, %v6929
          %v7149 = vmul.f32 %v7065, %v6932
          %v7150 = vmul.f32 %v7065, %v6935
          %v7151 = vmul.f32 %v7065, %v6938
          %v7152 = vmul.f32 %v7065, %v6941
          %v7153 = vmul.f32 %v7065, %v6944
          %v7154 = vmul.f32 %v7065, %v6947
          %v7155 = vmul.f32 %v7065, %v6950
          %v7156 = vmul.f32 %v7065, %v6953
          %v7157 = vmul.f32 %v7065, %v6956
          %v7158 = vmul.f32 %v7065, %v6959
          %v7159 = vmul.f32 %v7065, %v6962
          %v7160 = vmul.f32 %v7065, %v6965
          %v7161 = vmul.f32 %v7065, %v6968
          %v7162 = vmul.f32 %v7065, %v6971
          %v7163 = vmul.f32 %v7065, %v6974
          %v7164 = vmul.f32 %v7065, %v6977
          %v7165 = vmul.f32 %v7065, %v6980
          %v7166 = vmul.f32 %v7065, %v6983
          %v7167 = vmul.f32 %v7065, %v6986
          %v7168 = vmul.f32 %v7065, %v6989
          %v7169 = vmul.f32 %v7065, %v6992
          %v7170 = vmul.f32 %v7065, %v6995
          %v7171 = vmul.f32 %v7065, %v6998
          %v7172 = vmul.f32 %v7065, %v7001
          %v7173 = vmul.f32 %v7065, %v7004
          %v7174 = vmul.f32 %v7065, %v7007
          %v7175 = vmul.f32 %v7065, %v7010
          %v7176 = vmul.f32 %v7065, %v7013
          %v7177 = vmul.f32 %v7065, %v7016
          %v7178 = vmul.f32 %v7065, %v7019
          %v7179 = vmul.f32 %v7065, %v7022
          %v7180 = vmul.f32 %v7065, %v7025
          %v7181 = vmul.f32 %v7065, %v7028
          %v7182 = vmul.f32 %v7065, %v7031
          %v7183 = vmul.f32 %v7065, %v7034
          %v7184 = vmul.f32 %v7065, %v7037
          %v7185 = vmul.f32 %v7065, %v7040
          %v7186 = vmul.f32 %v7065, %v7043
          %v7187 = vmul.f32 %v7065, %v7046
          %v7188 = vmul.f32 %v7065, %v7049
          %v7189 = vmul.f32 %v7065, %v7052
          %v7190 = vmul.f32 %v7065, %v7055
          %v7191 = vmul.f32 %v7065, %v7058
          %v7192 = vmul.f32 %v7065, %v7061
          %v7193 = vmul.f32 %v7065, %v7064
          %v7194 = vstv %s6308
          %v7195 = vadd.f32 %v7194, %v7066
          %v7196 = vadd.f32 %v7194, %v7067
          %v7197 = vadd.f32 %v7194, %v7068
          %v7198 = vadd.f32 %v7194, %v7069
          %v7199 = vadd.f32 %v7194, %v7070
          %v7200 = vadd.f32 %v7194, %v7071
          %v7201 = vadd.f32 %v7194, %v7072
          %v7202 = vadd.f32 %v7194, %v7073
          %v7203 = vadd.f32 %v7194, %v7074
          %v7204 = vadd.f32 %v7194, %v7075
          %v7205 = vadd.f32 %v7194, %v7076
          %v7206 = vadd.f32 %v7194, %v7077
          %v7207 = vadd.f32 %v7194, %v7078
          %v7208 = vadd.f32 %v7194, %v7079
          %v7209 = vadd.f32 %v7194, %v7080
          %v7210 = vadd.f32 %v7194, %v7081
          %v7211 = vadd.f32 %v7194, %v7082
          %v7212 = vadd.f32 %v7194, %v7083
          %v7213 = vadd.f32 %v7194, %v7084
          %v7214 = vadd.f32 %v7194, %v7085
          %v7215 = vadd.f32 %v7194, %v7086
          %v7216 = vadd.f32 %v7194, %v7087
          %v7217 = vadd.f32 %v7194, %v7088
          %v7218 = vadd.f32 %v7194, %v7089
          %v7219 = vadd.f32 %v7194, %v7090
          %v7220 = vadd.f32 %v7194, %v7091
          %v7221 = vadd.f32 %v7194, %v7092
          %v7222 = vadd.f32 %v7194, %v7093
          %v7223 = vadd.f32 %v7194, %v7094
          %v7224 = vadd.f32 %v7194, %v7095
          %v7225 = vadd.f32 %v7194, %v7096
          %v7226 = vadd.f32 %v7194, %v7097
          %v7227 = vadd.f32 %v7194, %v7098
          %v7228 = vadd.f32 %v7194, %v7099
          %v7229 = vadd.f32 %v7194, %v7100
          %v7230 = vadd.f32 %v7194, %v7101
          %v7231 = vadd.f32 %v7194, %v7102
          %v7232 = vadd.f32 %v7194, %v7103
          %v7233 = vadd.f32 %v7194, %v7104
          %v7234 = vadd.f32 %v7194, %v7105
          %v7235 = vadd.f32 %v7194, %v7106
          %v7236 = vadd.f32 %v7194, %v7107
          %v7237 = vadd.f32 %v7194, %v7108
          %v7238 = vadd.f32 %v7194, %v7109
          %v7239 = vadd.f32 %v7194, %v7110
          %v7240 = vadd.f32 %v7194, %v7111
          %v7241 = vadd.f32 %v7194, %v7112
          %v7242 = vadd.f32 %v7194, %v7113
          %v7243 = vadd.f32 %v7194, %v7114
          %v7244 = vadd.f32 %v7194, %v7115
          %v7245 = vadd.f32 %v7194, %v7116
          %v7246 = vadd.f32 %v7194, %v7117
          %v7247 = vadd.f32 %v7194, %v7118
          %v7248 = vadd.f32 %v7194, %v7119
          %v7249 = vadd.f32 %v7194, %v7120
          %v7250 = vadd.f32 %v7194, %v7121
          %v7251 = vadd.f32 %v7194, %v7122
          %v7252 = vadd.f32 %v7194, %v7123
          %v7253 = vadd.f32 %v7194, %v7124
          %v7254 = vadd.f32 %v7194, %v7125
          %v7255 = vadd.f32 %v7194, %v7126
          %v7256 = vadd.f32 %v7194, %v7127
          %v7257 = vadd.f32 %v7194, %v7128
          %v7258 = vadd.f32 %v7194, %v7129
          %v7259 = vadd.f32 %v7194, %v7130
          %v7260 = vadd.f32 %v7194, %v7131
          %v7261 = vadd.f32 %v7194, %v7132
          %v7262 = vadd.f32 %v7194, %v7133
          %v7263 = vadd.f32 %v7194, %v7134
          %v7264 = vadd.f32 %v7194, %v7135
          %v7265 = vadd.f32 %v7194, %v7136
          %v7266 = vadd.f32 %v7194, %v7137
          %v7267 = vadd.f32 %v7194, %v7138
          %v7268 = vadd.f32 %v7194, %v7139
          %v7269 = vadd.f32 %v7194, %v7140
          %v7270 = vadd.f32 %v7194, %v7141
          %v7271 = vadd.f32 %v7194, %v7142
          %v7272 = vadd.f32 %v7194, %v7143
          %v7273 = vadd.f32 %v7194, %v7144
          %v7274 = vadd.f32 %v7194, %v7145
          %v7275 = vadd.f32 %v7194, %v7146
          %v7276 = vadd.f32 %v7194, %v7147
          %v7277 = vadd.f32 %v7194, %v7148
          %v7278 = vadd.f32 %v7194, %v7149
          %v7279 = vadd.f32 %v7194, %v7150
          %v7280 = vadd.f32 %v7194, %v7151
          %v7281 = vadd.f32 %v7194, %v7152
          %v7282 = vadd.f32 %v7194, %v7153
          %v7283 = vadd.f32 %v7194, %v7154
          %v7284 = vadd.f32 %v7194, %v7155
          %v7285 = vadd.f32 %v7194, %v7156
          %v7286 = vadd.f32 %v7194, %v7157
          %v7287 = vadd.f32 %v7194, %v7158
          %v7288 = vadd.f32 %v7194, %v7159
          %v7289 = vadd.f32 %v7194, %v7160
          %v7290 = vadd.f32 %v7194, %v7161
          %v7291 = vadd.f32 %v7194, %v7162
          %v7292 = vadd.f32 %v7194, %v7163
          %v7293 = vadd.f32 %v7194, %v7164
          %v7294 = vadd.f32 %v7194, %v7165
          %v7295 = vadd.f32 %v7194, %v7166
          %v7296 = vadd.f32 %v7194, %v7167
          %v7297 = vadd.f32 %v7194, %v7168
          %v7298 = vadd.f32 %v7194, %v7169
          %v7299 = vadd.f32 %v7194, %v7170
          %v7300 = vadd.f32 %v7194, %v7171
          %v7301 = vadd.f32 %v7194, %v7172
          %v7302 = vadd.f32 %v7194, %v7173
          %v7303 = vadd.f32 %v7194, %v7174
          %v7304 = vadd.f32 %v7194, %v7175
          %v7305 = vadd.f32 %v7194, %v7176
          %v7306 = vadd.f32 %v7194, %v7177
          %v7307 = vadd.f32 %v7194, %v7178
          %v7308 = vadd.f32 %v7194, %v7179
          %v7309 = vadd.f32 %v7194, %v7180
          %v7310 = vadd.f32 %v7194, %v7181
          %v7311 = vadd.f32 %v7194, %v7182
          %v7312 = vadd.f32 %v7194, %v7183
          %v7313 = vadd.f32 %v7194, %v7184
          %v7314 = vadd.f32 %v7194, %v7185
          %v7315 = vadd.f32 %v7194, %v7186
          %v7316 = vadd.f32 %v7194, %v7187
          %v7317 = vadd.f32 %v7194, %v7188
          %v7318 = vadd.f32 %v7194, %v7189
          %v7319 = vadd.f32 %v7194, %v7190
          %v7320 = vadd.f32 %v7194, %v7191
          %v7321 = vadd.f32 %v7194, %v7192
          %v7322 = vadd.f32 %v7194, %v7193
          %v7323 = vld [vmem:[#allocation2] sm:$0xff]
          %v7324 = vld [vmem:[#allocation3] sm:$0xff]
          %v7325 = vlog2.pop %v7324
          %v7326 = vmul.f32 %v7325, 0.6931472
          %v7327 = vadd.f32 %v7323, %v7326
          %v7456 = vlaneseq
          %v7457 = vshrl.u32 %v7456, 7
          %v7458 = vsub.s32 %v3160, %v7457
          %v7459 = vrot.slane %v7195, %v7458
          %v7460 = vlaneseq
          %v7461 = vshrl.u32 %v7460, 7
          %v7462 = vsub.s32 %v3165, %v7461
          %v7463 = vrot.slane %v7196, %v7462
          %v7464 = vsel %vm3170, %v7463, %v7459
          %v7465 = vlaneseq
          %v7466 = vshrl.u32 %v7465, 7
          %v7467 = vsub.s32 %v3172, %v7466
          %v7468 = vrot.slane %v7197, %v7467
          %v7469 = vsel %vm3177, %v7468, %v7464
          %v7470 = vlaneseq
          %v7471 = vshrl.u32 %v7470, 7
          %v7472 = vsub.s32 %v3179, %v7471
          %v7473 = vrot.slane %v7198, %v7472
          %v7474 = vsel %vm3184, %v7473, %v7469
          %v7475 = vlaneseq
          %v7476 = vshrl.u32 %v7475, 7
          %v7477 = vsub.s32 %v3186, %v7476
          %v7478 = vrot.slane %v7199, %v7477
          %v7479 = vsel %vm3191, %v7478, %v7474
          %v7480 = vlaneseq
          %v7481 = vshrl.u32 %v7480, 7
          %v7482 = vsub.s32 %v3193, %v7481
          %v7483 = vrot.slane %v7200, %v7482
          %v7484 = vsel %vm3198, %v7483, %v7479
          %v7485 = vlaneseq
          %v7486 = vshrl.u32 %v7485, 7
          %v7487 = vsub.s32 %v3200, %v7486
          %v7488 = vrot.slane %v7201, %v7487
          %v7489 = vsel %vm3205, %v7488, %v7484
          %v7490 = vlaneseq
          %v7491 = vshrl.u32 %v7490, 7
          %v7492 = vsub.s32 %v3207, %v7491
          %v7493 = vrot.slane %v7202, %v7492
          %v7494 = vsel %vm3212, %v7493, %v7489
          %v7495 = vlaneseq
          %v7496 = vshrl.u32 %v7495, 7
          %v7497 = vsub.s32 %v3214, %v7496
          %v7498 = vrot.slane %v7203, %v7497
          %v7499 = vsel %vm3219, %v7498, %v7494
          %v7500 = vlaneseq
          %v7501 = vshrl.u32 %v7500, 7
          %v7502 = vsub.s32 %v3221, %v7501
          %v7503 = vrot.slane %v7204, %v7502
          %v7504 = vsel %vm3226, %v7503, %v7499
          %v7505 = vlaneseq
          %v7506 = vshrl.u32 %v7505, 7
          %v7507 = vsub.s32 %v3228, %v7506
          %v7508 = vrot.slane %v7205, %v7507
          %v7509 = vsel %vm3233, %v7508, %v7504
          %v7510 = vlaneseq
          %v7511 = vshrl.u32 %v7510, 7
          %v7512 = vsub.s32 %v3235, %v7511
          %v7513 = vrot.slane %v7206, %v7512
          %v7514 = vsel %vm3240, %v7513, %v7509
          %v7515 = vlaneseq
          %v7516 = vshrl.u32 %v7515, 7
          %v7517 = vsub.s32 %v3242, %v7516
          %v7518 = vrot.slane %v7207, %v7517
          %v7519 = vsel %vm3247, %v7518, %v7514
          %v7520 = vlaneseq
          %v7521 = vshrl.u32 %v7520, 7
          %v7522 = vsub.s32 %v3249, %v7521
          %v7523 = vrot.slane %v7208, %v7522
          %v7524 = vsel %vm3254, %v7523, %v7519
          %v7525 = vlaneseq
          %v7526 = vshrl.u32 %v7525, 7
          %v7527 = vsub.s32 %v3256, %v7526
          %v7528 = vrot.slane %v7209, %v7527
          %v7529 = vsel %vm3261, %v7528, %v7524
          %v7530 = vlaneseq
          %v7531 = vshrl.u32 %v7530, 7
          %v7532 = vsub.s32 %v3263, %v7531
          %v7533 = vrot.slane %v7210, %v7532
          %v7534 = vsel %vm3268, %v7533, %v7529
          %v7535 = vlaneseq
          %v7536 = vshrl.u32 %v7535, 7
          %v7537 = vsub.s32 %v3160, %v7536
          %v7538 = vrot.slane %v7211, %v7537
          %v7539 = vlaneseq
          %v7540 = vshrl.u32 %v7539, 7
          %v7541 = vsub.s32 %v3165, %v7540
          %v7542 = vrot.slane %v7212, %v7541
          %v7543 = vsel %vm3170, %v7542, %v7538
          %v7544 = vlaneseq
          %v7545 = vshrl.u32 %v7544, 7
          %v7546 = vsub.s32 %v3172, %v7545
          %v7547 = vrot.slane %v7213, %v7546
          %v7548 = vsel %vm3177, %v7547, %v7543
          %v7549 = vlaneseq
          %v7550 = vshrl.u32 %v7549, 7
          %v7551 = vsub.s32 %v3179, %v7550
          %v7552 = vrot.slane %v7214, %v7551
          %v7553 = vsel %vm3184, %v7552, %v7548
          %v7554 = vlaneseq
          %v7555 = vshrl.u32 %v7554, 7
          %v7556 = vsub.s32 %v3186, %v7555
          %v7557 = vrot.slane %v7215, %v7556
          %v7558 = vsel %vm3191, %v7557, %v7553
          %v7559 = vlaneseq
          %v7560 = vshrl.u32 %v7559, 7
          %v7561 = vsub.s32 %v3193, %v7560
          %v7562 = vrot.slane %v7216, %v7561
          %v7563 = vsel %vm3198, %v7562, %v7558
          %v7564 = vlaneseq
          %v7565 = vshrl.u32 %v7564, 7
          %v7566 = vsub.s32 %v3200, %v7565
          %v7567 = vrot.slane %v7217, %v7566
          %v7568 = vsel %vm3205, %v7567, %v7563
          %v7569 = vlaneseq
          %v7570 = vshrl.u32 %v7569, 7
          %v7571 = vsub.s32 %v3207, %v7570
          %v7572 = vrot.slane %v7218, %v7571
          %v7573 = vsel %vm3212, %v7572, %v7568
          %v7574 = vlaneseq
          %v7575 = vshrl.u32 %v7574, 7
          %v7576 = vsub.s32 %v3214, %v7575
          %v7577 = vrot.slane %v7219, %v7576
          %v7578 = vsel %vm3219, %v7577, %v7573
          %v7579 = vlaneseq
          %v7580 = vshrl.u32 %v7579, 7
          %v7581 = vsub.s32 %v3221, %v7580
          %v7582 = vrot.slane %v7220, %v7581
          %v7583 = vsel %vm3226, %v7582, %v7578
          %v7584 = vlaneseq
          %v7585 = vshrl.u32 %v7584, 7
          %v7586 = vsub.s32 %v3228, %v7585
          %v7587 = vrot.slane %v7221, %v7586
          %v7588 = vsel %vm3233, %v7587, %v7583
          %v7589 = vlaneseq
          %v7590 = vshrl.u32 %v7589, 7
          %v7591 = vsub.s32 %v3235, %v7590
          %v7592 = vrot.slane %v7222, %v7591
          %v7593 = vsel %vm3240, %v7592, %v7588
          %v7594 = vlaneseq
          %v7595 = vshrl.u32 %v7594, 7
          %v7596 = vsub.s32 %v3242, %v7595
          %v7597 = vrot.slane %v7223, %v7596
          %v7598 = vsel %vm3247, %v7597, %v7593
          %v7599 = vlaneseq
          %v7600 = vshrl.u32 %v7599, 7
          %v7601 = vsub.s32 %v3249, %v7600
          %v7602 = vrot.slane %v7224, %v7601
          %v7603 = vsel %vm3254, %v7602, %v7598
          %v7604 = vlaneseq
          %v7605 = vshrl.u32 %v7604, 7
          %v7606 = vsub.s32 %v3256, %v7605
          %v7607 = vrot.slane %v7225, %v7606
          %v7608 = vsel %vm3261, %v7607, %v7603
          %v7609 = vlaneseq
          %v7610 = vshrl.u32 %v7609, 7
          %v7611 = vsub.s32 %v3263, %v7610
          %v7612 = vrot.slane %v7226, %v7611
          %v7613 = vsel %vm3268, %v7612, %v7608
          %v7614 = vlaneseq
          %v7615 = vshrl.u32 %v7614, 7
          %v7616 = vsub.s32 %v3160, %v7615
          %v7617 = vrot.slane %v7227, %v7616
          %v7618 = vlaneseq
          %v7619 = vshrl.u32 %v7618, 7
          %v7620 = vsub.s32 %v3165, %v7619
          %v7621 = vrot.slane %v7228, %v7620
          %v7622 = vsel %vm3170, %v7621, %v7617
          %v7623 = vlaneseq
          %v7624 = vshrl.u32 %v7623, 7
          %v7625 = vsub.s32 %v3172, %v7624
          %v7626 = vrot.slane %v7229, %v7625
          %v7627 = vsel %vm3177, %v7626, %v7622
          %v7628 = vlaneseq
          %v7629 = vshrl.u32 %v7628, 7
          %v7630 = vsub.s32 %v3179, %v7629
          %v7631 = vrot.slane %v7230, %v7630
          %v7632 = vsel %vm3184, %v7631, %v7627
          %v7633 = vlaneseq
          %v7634 = vshrl.u32 %v7633, 7
          %v7635 = vsub.s32 %v3186, %v7634
          %v7636 = vrot.slane %v7231, %v7635
          %v7637 = vsel %vm3191, %v7636, %v7632
          %v7638 = vlaneseq
          %v7639 = vshrl.u32 %v7638, 7
          %v7640 = vsub.s32 %v3193, %v7639
          %v7641 = vrot.slane %v7232, %v7640
          %v7642 = vsel %vm3198, %v7641, %v7637
          %v7643 = vlaneseq
          %v7644 = vshrl.u32 %v7643, 7
          %v7645 = vsub.s32 %v3200, %v7644
          %v7646 = vrot.slane %v7233, %v7645
          %v7647 = vsel %vm3205, %v7646, %v7642
          %v7648 = vlaneseq
          %v7649 = vshrl.u32 %v7648, 7
          %v7650 = vsub.s32 %v3207, %v7649
          %v7651 = vrot.slane %v7234, %v7650
          %v7652 = vsel %vm3212, %v7651, %v7647
          %v7653 = vlaneseq
          %v7654 = vshrl.u32 %v7653, 7
          %v7655 = vsub.s32 %v3214, %v7654
          %v7656 = vrot.slane %v7235, %v7655
          %v7657 = vsel %vm3219, %v7656, %v7652
          %v7658 = vlaneseq
          %v7659 = vshrl.u32 %v7658, 7
          %v7660 = vsub.s32 %v3221, %v7659
          %v7661 = vrot.slane %v7236, %v7660
          %v7662 = vsel %vm3226, %v7661, %v7657
          %v7663 = vlaneseq
          %v7664 = vshrl.u32 %v7663, 7
          %v7665 = vsub.s32 %v3228, %v7664
          %v7666 = vrot.slane %v7237, %v7665
          %v7667 = vsel %vm3233, %v7666, %v7662
          %v7668 = vlaneseq
          %v7669 = vshrl.u32 %v7668, 7
          %v7670 = vsub.s32 %v3235, %v7669
          %v7671 = vrot.slane %v7238, %v7670
          %v7672 = vsel %vm3240, %v7671, %v7667
          %v7673 = vlaneseq
          %v7674 = vshrl.u32 %v7673, 7
          %v7675 = vsub.s32 %v3242, %v7674
          %v7676 = vrot.slane %v7239, %v7675
          %v7677 = vsel %vm3247, %v7676, %v7672
          %v7678 = vlaneseq
          %v7679 = vshrl.u32 %v7678, 7
          %v7680 = vsub.s32 %v3249, %v7679
          %v7681 = vrot.slane %v7240, %v7680
          %v7682 = vsel %vm3254, %v7681, %v7677
          %v7683 = vlaneseq
          %v7684 = vshrl.u32 %v7683, 7
          %v7685 = vsub.s32 %v3256, %v7684
          %v7686 = vrot.slane %v7241, %v7685
          %v7687 = vsel %vm3261, %v7686, %v7682
          %v7688 = vlaneseq
          %v7689 = vshrl.u32 %v7688, 7
          %v7690 = vsub.s32 %v3263, %v7689
          %v7691 = vrot.slane %v7242, %v7690
          %v7692 = vsel %vm3268, %v7691, %v7687
          %v7693 = vlaneseq
          %v7694 = vshrl.u32 %v7693, 7
          %v7695 = vsub.s32 %v3160, %v7694
          %v7696 = vrot.slane %v7243, %v7695
          %v7697 = vlaneseq
          %v7698 = vshrl.u32 %v7697, 7
          %v7699 = vsub.s32 %v3165, %v7698
          %v7700 = vrot.slane %v7244, %v7699
          %v7701 = vsel %vm3170, %v7700, %v7696
          %v7702 = vlaneseq
          %v7703 = vshrl.u32 %v7702, 7
          %v7704 = vsub.s32 %v3172, %v7703
          %v7705 = vrot.slane %v7245, %v7704
          %v7706 = vsel %vm3177, %v7705, %v7701
          %v7707 = vlaneseq
          %v7708 = vshrl.u32 %v7707, 7
          %v7709 = vsub.s32 %v3179, %v7708
          %v7710 = vrot.slane %v7246, %v7709
          %v7711 = vsel %vm3184, %v7710, %v7706
          %v7712 = vlaneseq
          %v7713 = vshrl.u32 %v7712, 7
          %v7714 = vsub.s32 %v3186, %v7713
          %v7715 = vrot.slane %v7247, %v7714
          %v7716 = vsel %vm3191, %v7715, %v7711
          %v7717 = vlaneseq
          %v7718 = vshrl.u32 %v7717, 7
          %v7719 = vsub.s32 %v3193, %v7718
          %v7720 = vrot.slane %v7248, %v7719
          %v7721 = vsel %vm3198, %v7720, %v7716
          %v7722 = vlaneseq
          %v7723 = vshrl.u32 %v7722, 7
          %v7724 = vsub.s32 %v3200, %v7723
          %v7725 = vrot.slane %v7249, %v7724
          %v7726 = vsel %vm3205, %v7725, %v7721
          %v7727 = vlaneseq
          %v7728 = vshrl.u32 %v7727, 7
          %v7729 = vsub.s32 %v3207, %v7728
          %v7730 = vrot.slane %v7250, %v7729
          %v7731 = vsel %vm3212, %v7730, %v7726
          %v7732 = vlaneseq
          %v7733 = vshrl.u32 %v7732, 7
          %v7734 = vsub.s32 %v3214, %v7733
          %v7735 = vrot.slane %v7251, %v7734
          %v7736 = vsel %vm3219, %v7735, %v7731
          %v7737 = vlaneseq
          %v7738 = vshrl.u32 %v7737, 7
          %v7739 = vsub.s32 %v3221, %v7738
          %v7740 = vrot.slane %v7252, %v7739
          %v7741 = vsel %vm3226, %v7740, %v7736
          %v7742 = vlaneseq
          %v7743 = vshrl.u32 %v7742, 7
          %v7744 = vsub.s32 %v3228, %v7743
          %v7745 = vrot.slane %v7253, %v7744
          %v7746 = vsel %vm3233, %v7745, %v7741
          %v7747 = vlaneseq
          %v7748 = vshrl.u32 %v7747, 7
          %v7749 = vsub.s32 %v3235, %v7748
          %v7750 = vrot.slane %v7254, %v7749
          %v7751 = vsel %vm3240, %v7750, %v7746
          %v7752 = vlaneseq
          %v7753 = vshrl.u32 %v7752, 7
          %v7754 = vsub.s32 %v3242, %v7753
          %v7755 = vrot.slane %v7255, %v7754
          %v7756 = vsel %vm3247, %v7755, %v7751
          %v7757 = vlaneseq
          %v7758 = vshrl.u32 %v7757, 7
          %v7759 = vsub.s32 %v3249, %v7758
          %v7760 = vrot.slane %v7256, %v7759
          %v7761 = vsel %vm3254, %v7760, %v7756
          %v7762 = vlaneseq
          %v7763 = vshrl.u32 %v7762, 7
          %v7764 = vsub.s32 %v3256, %v7763
          %v7765 = vrot.slane %v7257, %v7764
          %v7766 = vsel %vm3261, %v7765, %v7761
          %v7767 = vlaneseq
          %v7768 = vshrl.u32 %v7767, 7
          %v7769 = vsub.s32 %v3263, %v7768
          %v7770 = vrot.slane %v7258, %v7769
          %v7771 = vsel %vm3268, %v7770, %v7766
          %v7772 = vlaneseq
          %v7773 = vshrl.u32 %v7772, 7
          %v7774 = vsub.s32 %v3160, %v7773
          %v7775 = vrot.slane %v7259, %v7774
          %v7776 = vlaneseq
          %v7777 = vshrl.u32 %v7776, 7
          %v7778 = vsub.s32 %v3165, %v7777
          %v7779 = vrot.slane %v7260, %v7778
          %v7780 = vsel %vm3170, %v7779, %v7775
          %v7781 = vlaneseq
          %v7782 = vshrl.u32 %v7781, 7
          %v7783 = vsub.s32 %v3172, %v7782
          %v7784 = vrot.slane %v7261, %v7783
          %v7785 = vsel %vm3177, %v7784, %v7780
          %v7786 = vlaneseq
          %v7787 = vshrl.u32 %v7786, 7
          %v7788 = vsub.s32 %v3179, %v7787
          %v7789 = vrot.slane %v7262, %v7788
          %v7790 = vsel %vm3184, %v7789, %v7785
          %v7791 = vlaneseq
          %v7792 = vshrl.u32 %v7791, 7
          %v7793 = vsub.s32 %v3186, %v7792
          %v7794 = vrot.slane %v7263, %v7793
          %v7795 = vsel %vm3191, %v7794, %v7790
          %v7796 = vlaneseq
          %v7797 = vshrl.u32 %v7796, 7
          %v7798 = vsub.s32 %v3193, %v7797
          %v7799 = vrot.slane %v7264, %v7798
          %v7800 = vsel %vm3198, %v7799, %v7795
          %v7801 = vlaneseq
          %v7802 = vshrl.u32 %v7801, 7
          %v7803 = vsub.s32 %v3200, %v7802
          %v7804 = vrot.slane %v7265, %v7803
          %v7805 = vsel %vm3205, %v7804, %v7800
          %v7806 = vlaneseq
          %v7807 = vshrl.u32 %v7806, 7
          %v7808 = vsub.s32 %v3207, %v7807
          %v7809 = vrot.slane %v7266, %v7808
          %v7810 = vsel %vm3212, %v7809, %v7805
          %v7811 = vlaneseq
          %v7812 = vshrl.u32 %v7811, 7
          %v7813 = vsub.s32 %v3214, %v7812
          %v7814 = vrot.slane %v7267, %v7813
          %v7815 = vsel %vm3219, %v7814, %v7810
          %v7816 = vlaneseq
          %v7817 = vshrl.u32 %v7816, 7
          %v7818 = vsub.s32 %v3221, %v7817
          %v7819 = vrot.slane %v7268, %v7818
          %v7820 = vsel %vm3226, %v7819, %v7815
          %v7821 = vlaneseq
          %v7822 = vshrl.u32 %v7821, 7
          %v7823 = vsub.s32 %v3228, %v7822
          %v7824 = vrot.slane %v7269, %v7823
          %v7825 = vsel %vm3233, %v7824, %v7820
          %v7826 = vlaneseq
          %v7827 = vshrl.u32 %v7826, 7
          %v7828 = vsub.s32 %v3235, %v7827
          %v7829 = vrot.slane %v7270, %v7828
          %v7830 = vsel %vm3240, %v7829, %v7825
          %v7831 = vlaneseq
          %v7832 = vshrl.u32 %v7831, 7
          %v7833 = vsub.s32 %v3242, %v7832
          %v7834 = vrot.slane %v7271, %v7833
          %v7835 = vsel %vm3247, %v7834, %v7830
          %v7836 = vlaneseq
          %v7837 = vshrl.u32 %v7836, 7
          %v7838 = vsub.s32 %v3249, %v7837
          %v7839 = vrot.slane %v7272, %v7838
          %v7840 = vsel %vm3254, %v7839, %v7835
          %v7841 = vlaneseq
          %v7842 = vshrl.u32 %v7841, 7
          %v7843 = vsub.s32 %v3256, %v7842
          %v7844 = vrot.slane %v7273, %v7843
          %v7845 = vsel %vm3261, %v7844, %v7840
          %v7846 = vlaneseq
          %v7847 = vshrl.u32 %v7846, 7
          %v7848 = vsub.s32 %v3263, %v7847
          %v7849 = vrot.slane %v7274, %v7848
          %v7850 = vsel %vm3268, %v7849, %v7845
          %v7851 = vlaneseq
          %v7852 = vshrl.u32 %v7851, 7
          %v7853 = vsub.s32 %v3160, %v7852
          %v7854 = vrot.slane %v7275, %v7853
          %v7855 = vlaneseq
          %v7856 = vshrl.u32 %v7855, 7
          %v7857 = vsub.s32 %v3165, %v7856
          %v7858 = vrot.slane %v7276, %v7857
          %v7859 = vsel %vm3170, %v7858, %v7854
          %v7860 = vlaneseq
          %v7861 = vshrl.u32 %v7860, 7
          %v7862 = vsub.s32 %v3172, %v7861
          %v7863 = vrot.slane %v7277, %v7862
          %v7864 = vsel %vm3177, %v7863, %v7859
          %v7865 = vlaneseq
          %v7866 = vshrl.u32 %v7865, 7
          %v7867 = vsub.s32 %v3179, %v7866
          %v7868 = vrot.slane %v7278, %v7867
          %v7869 = vsel %vm3184, %v7868, %v7864
          %v7870 = vlaneseq
          %v7871 = vshrl.u32 %v7870, 7
          %v7872 = vsub.s32 %v3186, %v7871
          %v7873 = vrot.slane %v7279, %v7872
          %v7874 = vsel %vm3191, %v7873, %v7869
          %v7875 = vlaneseq
          %v7876 = vshrl.u32 %v7875, 7
          %v7877 = vsub.s32 %v3193, %v7876
          %v7878 = vrot.slane %v7280, %v7877
          %v7879 = vsel %vm3198, %v7878, %v7874
          %v7880 = vlaneseq
          %v7881 = vshrl.u32 %v7880, 7
          %v7882 = vsub.s32 %v3200, %v7881
          %v7883 = vrot.slane %v7281, %v7882
          %v7884 = vsel %vm3205, %v7883, %v7879
          %v7885 = vlaneseq
          %v7886 = vshrl.u32 %v7885, 7
          %v7887 = vsub.s32 %v3207, %v7886
          %v7888 = vrot.slane %v7282, %v7887
          %v7889 = vsel %vm3212, %v7888, %v7884
          %v7890 = vlaneseq
          %v7891 = vshrl.u32 %v7890, 7
          %v7892 = vsub.s32 %v3214, %v7891
          %v7893 = vrot.slane %v7283, %v7892
          %v7894 = vsel %vm3219, %v7893, %v7889
          %v7895 = vlaneseq
          %v7896 = vshrl.u32 %v7895, 7
          %v7897 = vsub.s32 %v3221, %v7896
          %v7898 = vrot.slane %v7284, %v7897
          %v7899 = vsel %vm3226, %v7898, %v7894
          %v7900 = vlaneseq
          %v7901 = vshrl.u32 %v7900, 7
          %v7902 = vsub.s32 %v3228, %v7901
          %v7903 = vrot.slane %v7285, %v7902
          %v7904 = vsel %vm3233, %v7903, %v7899
          %v7905 = vlaneseq
          %v7906 = vshrl.u32 %v7905, 7
          %v7907 = vsub.s32 %v3235, %v7906
          %v7908 = vrot.slane %v7286, %v7907
          %v7909 = vsel %vm3240, %v7908, %v7904
          %v7910 = vlaneseq
          %v7911 = vshrl.u32 %v7910, 7
          %v7912 = vsub.s32 %v3242, %v7911
          %v7913 = vrot.slane %v7287, %v7912
          %v7914 = vsel %vm3247, %v7913, %v7909
          %v7915 = vlaneseq
          %v7916 = vshrl.u32 %v7915, 7
          %v7917 = vsub.s32 %v3249, %v7916
          %v7918 = vrot.slane %v7288, %v7917
          %v7919 = vsel %vm3254, %v7918, %v7914
          %v7920 = vlaneseq
          %v7921 = vshrl.u32 %v7920, 7
          %v7922 = vsub.s32 %v3256, %v7921
          %v7923 = vrot.slane %v7289, %v7922
          %v7924 = vsel %vm3261, %v7923, %v7919
          %v7925 = vlaneseq
          %v7926 = vshrl.u32 %v7925, 7
          %v7927 = vsub.s32 %v3263, %v7926
          %v7928 = vrot.slane %v7290, %v7927
          %v7929 = vsel %vm3268, %v7928, %v7924
          %v7930 = vlaneseq
          %v7931 = vshrl.u32 %v7930, 7
          %v7932 = vsub.s32 %v3160, %v7931
          %v7933 = vrot.slane %v7291, %v7932
          %v7934 = vlaneseq
          %v7935 = vshrl.u32 %v7934, 7
          %v7936 = vsub.s32 %v3165, %v7935
          %v7937 = vrot.slane %v7292, %v7936
          %v7938 = vsel %vm3170, %v7937, %v7933
          %v7939 = vlaneseq
          %v7940 = vshrl.u32 %v7939, 7
          %v7941 = vsub.s32 %v3172, %v7940
          %v7942 = vrot.slane %v7293, %v7941
          %v7943 = vsel %vm3177, %v7942, %v7938
          %v7944 = vlaneseq
          %v7945 = vshrl.u32 %v7944, 7
          %v7946 = vsub.s32 %v3179, %v7945
          %v7947 = vrot.slane %v7294, %v7946
          %v7948 = vsel %vm3184, %v7947, %v7943
          %v7949 = vlaneseq
          %v7950 = vshrl.u32 %v7949, 7
          %v7951 = vsub.s32 %v3186, %v7950
          %v7952 = vrot.slane %v7295, %v7951
          %v7953 = vsel %vm3191, %v7952, %v7948
          %v7954 = vlaneseq
          %v7955 = vshrl.u32 %v7954, 7
          %v7956 = vsub.s32 %v3193, %v7955
          %v7957 = vrot.slane %v7296, %v7956
          %v7958 = vsel %vm3198, %v7957, %v7953
          %v7959 = vlaneseq
          %v7960 = vshrl.u32 %v7959, 7
          %v7961 = vsub.s32 %v3200, %v7960
          %v7962 = vrot.slane %v7297, %v7961
          %v7963 = vsel %vm3205, %v7962, %v7958
          %v7964 = vlaneseq
          %v7965 = vshrl.u32 %v7964, 7
          %v7966 = vsub.s32 %v3207, %v7965
          %v7967 = vrot.slane %v7298, %v7966
          %v7968 = vsel %vm3212, %v7967, %v7963
          %v7969 = vlaneseq
          %v7970 = vshrl.u32 %v7969, 7
          %v7971 = vsub.s32 %v3214, %v7970
          %v7972 = vrot.slane %v7299, %v7971
          %v7973 = vsel %vm3219, %v7972, %v7968
          %v7974 = vlaneseq
          %v7975 = vshrl.u32 %v7974, 7
          %v7976 = vsub.s32 %v3221, %v7975
          %v7977 = vrot.slane %v7300, %v7976
          %v7978 = vsel %vm3226, %v7977, %v7973
          %v7979 = vlaneseq
          %v7980 = vshrl.u32 %v7979, 7
          %v7981 = vsub.s32 %v3228, %v7980
          %v7982 = vrot.slane %v7301, %v7981
          %v7983 = vsel %vm3233, %v7982, %v7978
          %v7984 = vlaneseq
          %v7985 = vshrl.u32 %v7984, 7
          %v7986 = vsub.s32 %v3235, %v7985
          %v7987 = vrot.slane %v7302, %v7986
          %v7988 = vsel %vm3240, %v7987, %v7983
          %v7989 = vlaneseq
          %v7990 = vshrl.u32 %v7989, 7
          %v7991 = vsub.s32 %v3242, %v7990
          %v7992 = vrot.slane %v7303, %v7991
          %v7993 = vsel %vm3247, %v7992, %v7988
          %v7994 = vlaneseq
          %v7995 = vshrl.u32 %v7994, 7
          %v7996 = vsub.s32 %v3249, %v7995
          %v7997 = vrot.slane %v7304, %v7996
          %v7998 = vsel %vm3254, %v7997, %v7993
          %v7999 = vlaneseq
          %v8000 = vshrl.u32 %v7999, 7
          %v8001 = vsub.s32 %v3256, %v8000
          %v8002 = vrot.slane %v7305, %v8001
          %v8003 = vsel %vm3261, %v8002, %v7998
          %v8004 = vlaneseq
          %v8005 = vshrl.u32 %v8004, 7
          %v8006 = vsub.s32 %v3263, %v8005
          %v8007 = vrot.slane %v7306, %v8006
          %v8008 = vsel %vm3268, %v8007, %v8003
          %v8009 = vlaneseq
          %v8010 = vshrl.u32 %v8009, 7
          %v8011 = vsub.s32 %v3160, %v8010
          %v8012 = vrot.slane %v7307, %v8011
          %v8013 = vlaneseq
          %v8014 = vshrl.u32 %v8013, 7
          %v8015 = vsub.s32 %v3165, %v8014
          %v8016 = vrot.slane %v7308, %v8015
          %v8017 = vsel %vm3170, %v8016, %v8012
          %v8018 = vlaneseq
          %v8019 = vshrl.u32 %v8018, 7
          %v8020 = vsub.s32 %v3172, %v8019
          %v8021 = vrot.slane %v7309, %v8020
          %v8022 = vsel %vm3177, %v8021, %v8017
          %v8023 = vlaneseq
          %v8024 = vshrl.u32 %v8023, 7
          %v8025 = vsub.s32 %v3179, %v8024
          %v8026 = vrot.slane %v7310, %v8025
          %v8027 = vsel %vm3184, %v8026, %v8022
          %v8028 = vlaneseq
          %v8029 = vshrl.u32 %v8028, 7
          %v8030 = vsub.s32 %v3186, %v8029
          %v8031 = vrot.slane %v7311, %v8030
          %v8032 = vsel %vm3191, %v8031, %v8027
          %v8033 = vlaneseq
          %v8034 = vshrl.u32 %v8033, 7
          %v8035 = vsub.s32 %v3193, %v8034
          %v8036 = vrot.slane %v7312, %v8035
          %v8037 = vsel %vm3198, %v8036, %v8032
          %v8038 = vlaneseq
          %v8039 = vshrl.u32 %v8038, 7
          %v8040 = vsub.s32 %v3200, %v8039
          %v8041 = vrot.slane %v7313, %v8040
          %v8042 = vsel %vm3205, %v8041, %v8037
          %v8043 = vlaneseq
          %v8044 = vshrl.u32 %v8043, 7
          %v8045 = vsub.s32 %v3207, %v8044
          %v8046 = vrot.slane %v7314, %v8045
          %v8047 = vsel %vm3212, %v8046, %v8042
          %v8048 = vlaneseq
          %v8049 = vshrl.u32 %v8048, 7
          %v8050 = vsub.s32 %v3214, %v8049
          %v8051 = vrot.slane %v7315, %v8050
          %v8052 = vsel %vm3219, %v8051, %v8047
          %v8053 = vlaneseq
          %v8054 = vshrl.u32 %v8053, 7
          %v8055 = vsub.s32 %v3221, %v8054
          %v8056 = vrot.slane %v7316, %v8055
          %v8057 = vsel %vm3226, %v8056, %v8052
          %v8058 = vlaneseq
          %v8059 = vshrl.u32 %v8058, 7
          %v8060 = vsub.s32 %v3228, %v8059
          %v8061 = vrot.slane %v7317, %v8060
          %v8062 = vsel %vm3233, %v8061, %v8057
          %v8063 = vlaneseq
          %v8064 = vshrl.u32 %v8063, 7
          %v8065 = vsub.s32 %v3235, %v8064
          %v8066 = vrot.slane %v7318, %v8065
          %v8067 = vsel %vm3240, %v8066, %v8062
          %v8068 = vlaneseq
          %v8069 = vshrl.u32 %v8068, 7
          %v8070 = vsub.s32 %v3242, %v8069
          %v8071 = vrot.slane %v7319, %v8070
          %v8072 = vsel %vm3247, %v8071, %v8067
          %v8073 = vlaneseq
          %v8074 = vshrl.u32 %v8073, 7
          %v8075 = vsub.s32 %v3249, %v8074
          %v8076 = vrot.slane %v7320, %v8075
          %v8077 = vsel %vm3254, %v8076, %v8072
          %v8078 = vlaneseq
          %v8079 = vshrl.u32 %v8078, 7
          %v8080 = vsub.s32 %v3256, %v8079
          %v8081 = vrot.slane %v7321, %v8080
          %v8082 = vsel %vm3261, %v8081, %v8077
          %v8083 = vlaneseq
          %v8084 = vshrl.u32 %v8083, 7
          %v8085 = vsub.s32 %v3263, %v8084
          %v8086 = vrot.slane %v7322, %v8085
          %v8087 = vsel %vm3268, %v8086, %v8082
          %v8088 = vsel %vm3823, %v7613, %v7534
          %v8089 = vsel %vm3825, %v7692, %v8088
          %v8090 = vsel %vm3827, %v7771, %v8089
          %v8091 = vsel %vm3829, %v7850, %v8090
          %v8092 = vsel %vm3831, %v7929, %v8091
          %v8093 = vsel %vm3833, %v8008, %v8092
          %v8094 = vsel %vm3835, %v8087, %v8093
          %v8096 = vadd.f32 %v7327, %v8094
          %8097 = vst [vmem:[%s881] sm:$0xff] %v8096
          %v8098 = vld [vmem:[%s4] sm:$0xff]
          %8100 = vset.pattern.permute.xlu0 0
          %8101 = vperm.xlu0 %8100, %v8098
          %v8102 = vpop.permute.xlu0 %8101
          %v8104 = vadd.f32 %v8096, %v8102
          %8105 = vst [vmem:[%s888] sm:$0xff] %v8104
        $region94: #{tpu_custom_call.1} parent=77 // pred_fallthru
          _
        %s8106 = sand.u32 %s187, 1
        %s8107 = scalar_lea.sflag [#allocation6], %s8106
        %s8108 = sand.u32 %s187, 1
        %s8109 = smul.addr %s8108, 8
        %s8110 = scalar_lea.vmem [#allocation8], %s8109
        %s8111 = sand.u32 %s213, 1
        %s8112 = scalar_lea.sflag [#allocation10], %s8111
        %s8113 = sand.u32 %s213, 1
        %s8114 = smul.addr %s8113, 8
        %s8115 = scalar_lea.vmem [#allocation9], %s8114
        // Predicated region
        $region95: #{tpu_custom_call.1} parent=77 // pred_check
          %p8116 = pneg %p197
        $region96: #{tpu_custom_call.1} parent=77 // pred_check_branch
          %8118 = sbr.rel (%p8116) target = $region98
        $region97: #{tpu_custom_call.1} parent=77 // pred_region
          %s8120 = ssub.s32 128, 128
          %8121 = vsyncadd %s8107, %s8120
          %s8122 = smul.addr %s30, 128
          %s8123 = scalar_lea.hbm %s6, %s8122
          %s8125 = sshll.u32 %s8110, 4
          %s8126 = int_to_ptr.vmem [resolvable:$true] %s8125
          %8128 = dma.vmem_to_hbm [thread:$0]  %s8126, 128, %s8123, %s8107
        $region98: #{tpu_custom_call.1} parent=77 // pred_fallthru
          _
        // Predicated region
        $region99: #{tpu_custom_call.1} parent=77 // pred_check
          %p8129 = pneg %p223
        $region100: #{tpu_custom_call.1} parent=77 // pred_check_branch
          %8131 = sbr.rel (%p8129) target = $region102
        $region101: #{tpu_custom_call.1} parent=77 // pred_region
          %s8133 = ssub.s32 128, 128
          %8134 = vsyncadd %s8112, %s8133
          %s8135 = smul.addr %s30, 128
          %s8136 = scalar_lea.hbm %s7, %s8135
          %s8138 = sshll.u32 %s8115, 4
          %s8139 = int_to_ptr.vmem [resolvable:$true] %s8138
          %8141 = dma.vmem_to_hbm [thread:$0]  %s8139, 128, %s8136, %s8112
        $region102: #{tpu_custom_call.1} parent=77 // pred_fallthru
          _
      $region78: #{tpu_custom_call.1} parent=5 // pred_fallthru
        _
      %p8142 = scmp.le.s32.totalorder 2, %s21
      // Predicated region
      $region103: #{tpu_custom_call.1} parent=5 // pred_check
        %p8143 = pneg %p8142
      $region104: #{tpu_custom_call.1} parent=5 // pred_check_branch
        %8145 = sbr.rel (%p8143) target = $region106
      $region105: #{tpu_custom_call.1} parent=5 // pred_region
        %s8146 = ssub.s32 %s21, 2
        // Predicated region
        $region107: #{tpu_custom_call.1} parent=105 // pred_check
          %p8147 = pneg %p203
        $region108: #{tpu_custom_call.1} parent=105 // pred_check_branch
          %8149 = sbr.rel (%p8147) target = $region110
        $region109: #{tpu_custom_call.1} parent=105 // pred_region
          %s8150 = sand.u32 %s188, 1
          %s8151 = scalar_lea.sflag [#allocation6], %s8150
          %s8152 = sand.u32 %s188, 1
          %s8153 = smul.addr %s8152, 8
          %s8154 = scalar_lea.vmem [#allocation8], %s8153
          %8155 = dma.done %s8151, 128
        $region110: #{tpu_custom_call.1} parent=105 // pred_fallthru
          _
        // Predicated region
        $region111: #{tpu_custom_call.1} parent=105 // pred_check
          %p8156 = pneg %p229
        $region112: #{tpu_custom_call.1} parent=105 // pred_check_branch
          %8158 = sbr.rel (%p8156) target = $region114
        $region113: #{tpu_custom_call.1} parent=105 // pred_region
          %s8159 = sand.u32 %s214, 1
          %s8160 = scalar_lea.sflag [#allocation10], %s8159
          %s8161 = sand.u32 %s214, 1
          %s8162 = smul.addr %s8161, 8
          %s8163 = scalar_lea.vmem [#allocation9], %s8162
          %8164 = dma.done %s8160, 128
        $region114: #{tpu_custom_call.1} parent=105 // pred_fallthru
          _
      $region106: #{tpu_custom_call.1} parent=5 // pred_fallthru
        _
    $region6: #{tpu_custom_call.1} parent=1 // loop_footer
      %s25 = sadd.s32 1, %s21
    $region7: #{tpu_custom_call.1} parent=1 // loop_footer_branch
      %20 = sbr.rel target = $region3
    $region8: #{tpu_custom_call.1} parent=1 // loop_exit
      _
    %8165 = vsyncpa [#allocation6], 1
    %s8166 = scalar_lea.sflag [#allocation6], 1
    %8167 = vsyncpa %s8166, 1
    %8168 = vsyncpa [#allocation10], 1
    %s8169 = scalar_lea.sflag [#allocation10], 1
    %8170 = vsyncpa %s8169, 1
    %8171 = vsyncpa [#allocation7], 1
    %s8172 = scalar_lea.sflag [#allocation7], 1
    %8173 = vsyncpa %s8172, 1

</llo_original>
